<compile_context>
chip_gen: v5e
topology: v5e:2x2
jax: 0.10.0
libtpu: 0.0.40
codegen_flags: <defaults>
</compile_context>

<pallas_src>
import functools
import math

import jax
import jax.numpy as jnp
import numpy as np
from jax.experimental import pallas as pl
from jax.experimental.pallas import tpu as pltpu


# --------------------------------------------------------------------------
# Generation-aware VMEM budget
# --------------------------------------------------------------------------
def _vmem_limit_bytes():
    try:
        cap = int(pltpu.get_tpu_info().vmem_capacity_bytes)
    except Exception:
        cap = 64 * 1024 * 1024          # conservative fallback (v7x-sized)
    return int(min(cap * 3 // 4, 100 * 1024 * 1024))


_VMEM_LIMIT = _vmem_limit_bytes()
_COMPUTE_DTYPE = jnp.bfloat16           # MXU input dtype; accumulation is f32


def _choose_tm(m, per_row_bytes, const_bytes=0, cap=4096, budget=None):
    """Row tile for the flat 1x1-conv kernels.  Uses a cdiv grid (last tile may
    be partial); tm is either the full M or a multiple of 256 (lane/sublane
    friendly, no masked-sublane waste)."""
    if budget is None:
        budget = int(_VMEM_LIMIT * 0.7)
    budget = max(budget - const_bytes, 1 << 20)
    if m <= 1024:
        return m
    tm = 256
    while tm * 2 <= min(cap, m) and (tm * 2) * per_row_bytes <= budget:
        tm *= 2
    return tm


def _choose_th(n, h, w, c, budget=None):
    """Largest row-tile height dividing h whose per-step working set fits."""
    if budget is None:
        budget = int(_VMEM_LIMIT * 0.85)

    def est(th):
        rows = th * w
        win = (th + 2) * w * c
        b = 2 * win * 2                     # halo'd input window, dbuf (bf16)
        b += 2 * rows * c * 2               # output tile, dbuf (bf16)
        b += 2 * (20 * c * c + 16 * c)      # w1 + 9C*C w2 (bf16) + s/b (f32), dbuf
        b += win * 2 + win * 4              # window concat (bf16) + h (f32)
        b += (th + 2) * (w + 2) * c * 2     # zero-padded h scratch (bf16)
        b += 2 * rows * c * 2               # ~2 live 3x3 tap copies (bf16)
        b += 2 * rows * c * 4               # f32 accumulator + epilogue
        return b

    divisors = [d for d in range(1, h + 1) if h % d == 0]
    fitting = [d for d in divisors if est(d) <= budget]
    best_any = max(fitting) if fitting else 1
    if n == 1 and h > 1:
        # Keep >= 2 grid steps so both TensorCores get work on v7x.
        cands = [d for d in fitting if d < h]
        if cands and 2 * max(cands) >= best_any:
            return max(cands)
    return best_any


# --------------------------------------------------------------------------
# In-kernel helpers
# --------------------------------------------------------------------------
def _silu(y):
    # sigmoid = 1 / (1 + exp(-y)): exp on the EUP, approx reciprocal on the
    # EUP recip path -> the divide never touches the VALU slots.
    return y * pl.reciprocal(1.0 + jnp.exp(-y), approx=True)


# --------------------------------------------------------------------------
# Pallas kernels
# --------------------------------------------------------------------------
def _dual_conv1x1_kernel(x_ref, w_ref, s_ref, b_ref, *o_refs, hidden, split):
    # x: (TM, Cin) bf16, w: (Cin, 2*hidden) bf16, s/b: (1, 2*hidden) f32
    y = jnp.dot(x_ref[...], w_ref[...], preferred_element_type=jnp.float32)
    y = _silu(y * s_ref[...] + b_ref[...])
    if split:   # only when hidden % 128 == 0 -> both stores stay lane-dense
        o_refs[0][...] = y[:, :hidden].astype(o_refs[0].dtype)
        o_refs[1][...] = y[:, hidden:].astype(o_refs[1].dtype)
    else:       # single lane-dense (TM, 2*hidden) store; split outside (XLA)
        o_refs[0][...] = y.astype(o_refs[0].dtype)


def _bottleneck_kernel(top_ref, ctr_ref, bot_ref, w1_ref, s1_ref, b1_ref,
                       w2_ref, s2_ref, b2_ref, o_ref, h_scr,
                       *, th, w_img, add_residual):
    # top/bot: (1, 1, W, C) clamped halo rows; ctr: (1, th, W, C);
    # w1: (C, C); w2: (9, C, C); s*/b*: (1, C) f32; h_scr: (th+2, W+2, C) bf16
    c = w1_ref.shape[0]
    j = pl.program_id(1)
    last = pl.num_programs(1) - 1

    # ---- assemble (th+2)-row input window (halo rows come straight from HBM
    #      via the clamped BlockSpecs; global-pad row content is irrelevant)
    x_all = jnp.concatenate([top_ref[0], ctr_ref[0], bot_ref[0]], axis=0)

    # ---- 1x1 conv + BN + SiLU over the whole window (h never hits HBM)
    hh = jnp.dot(x_all.reshape((th + 2) * w_img, c), w1_ref[...],
                 preferred_element_type=jnp.float32)
    hh = _silu(hh * s1_ref[...] + b1_ref[...])
    h3 = hh.reshape(th + 2, w_img, c).astype(h_scr.dtype)

    # ---- zero-padded h window in VMEM (reproduces conv2's zero padding);
    #      masking is O(perimeter): edge columns always, halo rows only at the
    #      global image boundary.
    h_scr[:, 1:w_img + 1, :] = h3
    h_scr[:, 0:1, :] = jnp.zeros((th + 2, 1, c), h_scr.dtype)
    h_scr[:, w_img + 1:w_img + 2, :] = jnp.zeros((th + 2, 1, c), h_scr.dtype)

    @pl.when(j == 0)
    def _():
        h_scr[0:1, :, :] = jnp.zeros((1, w_img + 2, c), h_scr.dtype)

    @pl.when(j == last)
    def _():
        h_scr[th + 1:th + 2, :, :] = jnp.zeros((1, w_img + 2, c), h_scr.dtype)

    # ---- 3x3 conv: nine accumulating MXU matmuls (no (th*W, 9C) tensor)
    rows = th * w_img
    acc = jnp.zeros((rows, c), jnp.float32)
    t = 0
    for dy in range(3):
        for dx in range(3):
            tap = h_scr[dy:dy + th, dx:dx + w_img, :].reshape(rows, c)
            acc = acc + jnp.dot(tap, w2_ref[t],
                                preferred_element_type=jnp.float32)
            t += 1

    y2 = _silu(acc * s2_ref[...] + b2_ref[...])
    if add_residual:
        # shortcut comes from the already-loaded center rows (no extra DMA)
        y2 = y2 + ctr_ref[0].reshape(rows, c).astype(jnp.float32)
    o_ref[0] = y2.reshape(th, w_img, c).astype(o_ref.dtype)


def _concat_conv1x1_kernel(y_ref, x2_ref, w_ref, s_ref, b_ref, o_ref):
    # Fused cat([y, x2], -1) @ W3 as ONE dot with K = 2*hidden (MXU depth).
    cat = jnp.concatenate([y_ref[...], x2_ref[...]], axis=-1)
    acc = jnp.dot(cat, w_ref[...], preferred_element_type=jnp.float32)
    acc = acc * s_ref[...] + b_ref[...]
    o_ref[...] = _silu(acc).astype(o_ref.dtype)


# --------------------------------------------------------------------------
# pallas_call wrappers
# --------------------------------------------------------------------------
def dual_conv1x1_bn_silu(x_flat, w_cat, s_cat, b_cat, hidden):
    m, cin = x_flat.shape
    c2 = 2 * hidden
    split = (hidden % 128 == 0)
    per_row = 4 * cin + 12 * c2
    const = (cin * c2 * 2 + c2 * 8) * 2
    tm = _choose_tm(m, per_row, const)
    grid = (pl.cdiv(m, tm),)

    kern = functools.partial(_dual_conv1x1_kernel, hidden=hidden, split=split)
    in_specs = [pl.BlockSpec((tm, cin), lambda i: (i, 0)),
                pl.BlockSpec((cin, c2), lambda i: (0, 0)),
                pl.BlockSpec((1, c2), lambda i: (0, 0)),
                pl.BlockSpec((1, c2), lambda i: (0, 0))]
    if split:
        out_shape = (jax.ShapeDtypeStruct((m, hidden), _COMPUTE_DTYPE),
                     jax.ShapeDtypeStruct((m, hidden), _COMPUTE_DTYPE))
        out_specs = (pl.BlockSpec((tm, hidden), lambda i: (i, 0)),
                     pl.BlockSpec((tm, hidden), lambda i: (i, 0)))
    else:
        out_shape = jax.ShapeDtypeStruct((m, c2), _COMPUTE_DTYPE)
        out_specs = pl.BlockSpec((tm, c2), lambda i: (i, 0))

    res = pl.pallas_call(
        kern, out_shape=out_shape, grid=grid,
        in_specs=in_specs, out_specs=out_specs,
        compiler_params=pltpu.CompilerParams(
            dimension_semantics=("parallel",), vmem_limit_bytes=_VMEM_LIMIT),
    )(x_flat, w_cat, s_cat, b_cat)
    if split:
        return res
    return res[:, :hidden], res[:, hidden:]


def fused_bottleneck(y_nhwc, w1, s1, b1, w2, s2, b2, add_residual=True):
    n, h, w, c = y_nhwc.shape
    th = _choose_th(n, h, w, c)
    g = h // th

    kern = functools.partial(_bottleneck_kernel, th=th, w_img=w,
                             add_residual=add_residual)
    in_specs = [
        # top halo row (clamped at the image top; masked to zero when j == 0)
        pl.BlockSpec((1, 1, w, c),
                     lambda b, j: (b, jnp.maximum(j * th - 1, 0), 0, 0)),
        # center rows (the tile we actually compute / the residual)
        pl.BlockSpec((1, th, w, c), lambda b, j: (b, j, 0, 0)),
        # bottom halo row (clamped at the image bottom; masked when j == last)
        pl.BlockSpec((1, 1, w, c),
                     lambda b, j: (b, jnp.minimum(j * th + th, h - 1), 0, 0)),
        pl.BlockSpec((c, c), lambda b, j: (0, 0)),
        pl.BlockSpec((1, c), lambda b, j: (0, 0)),
        pl.BlockSpec((1, c), lambda b, j: (0, 0)),
        pl.BlockSpec((9, c, c), lambda b, j: (0, 0, 0)),
        pl.BlockSpec((1, c), lambda b, j: (0, 0)),
        pl.BlockSpec((1, c), lambda b, j: (0, 0)),
    ]
    return pl.pallas_call(
        kern,
        out_shape=jax.ShapeDtypeStruct((n, h, w, c), _COMPUTE_DTYPE),
        grid=(n, g),
        in_specs=in_specs,
        out_specs=pl.BlockSpec((1, th, w, c), lambda b, j: (b, j, 0, 0)),
        scratch_shapes=[pltpu.VMEM((th + 2, w + 2, c), _COMPUTE_DTYPE)],
        compiler_params=pltpu.CompilerParams(
            dimension_semantics=("parallel", "parallel"),
            vmem_limit_bytes=_VMEM_LIMIT),
    )(y_nhwc, y_nhwc, y_nhwc, w1, s1, b1, w2, s2, b2)


def concat_conv1x1_bn_silu(y_flat, x2_flat, w3, scale, bias, out_dtype):
    m, hidden = y_flat.shape
    cout = w3.shape[-1]
    per_row = 12 * hidden + 16 * cout
    const = (2 * hidden * cout * 2 + 8 * cout) * 2
    tm = _choose_tm(m, per_row, const)
    grid = (pl.cdiv(m, tm),)
    return pl.pallas_call(
        _concat_conv1x1_kernel,
        out_shape=jax.ShapeDtypeStruct((m, cout), out_dtype),
        grid=grid,
        in_specs=[pl.BlockSpec((tm, hidden), lambda i: (i, 0)),
                  pl.BlockSpec((tm, hidden), lambda i: (i, 0)),
                  pl.BlockSpec((2 * hidden, cout), lambda i: (0, 0)),
                  pl.BlockSpec((1, cout), lambda i: (0, 0)),
                  pl.BlockSpec((1, cout), lambda i: (0, 0))],
        out_specs=pl.BlockSpec((tm, cout), lambda i: (i, 0)),
        compiler_params=pltpu.CompilerParams(
            dimension_semantics=("parallel",), vmem_limit_bytes=_VMEM_LIMIT),
    )(y_flat, x2_flat, w3, scale, bias)


# --------------------------------------------------------------------------
# CSPLayer forward (glue in plain JAX, hot paths in Pallas)
# --------------------------------------------------------------------------
@jax.jit
def csp_layer_forward(x_nchw, params):
    x = jnp.transpose(x_nchw, (0, 2, 3, 1)).astype(_COMPUTE_DTYPE)  # NCHW -> NHWC
    n, h, w, cin = x.shape
    m = n * h * w
    x_flat = x.reshape(m, cin)

    hidden = params['conv1']['w'].shape[-1]
    cout = params['conv3']['w'].shape[-1]

    # ---- conv1 + conv2 fused: one read of x, one kernel.
    w_cat = jnp.concatenate(
        [params['conv1']['w'].reshape(cin, hidden),
         params['conv2']['w'].reshape(cin, hidden)], axis=-1).astype(_COMPUTE_DTYPE)
    s_cat = jnp.concatenate([params['conv1']['scale'], params['conv2']['scale']], axis=-1)
    b_cat = jnp.concatenate([params['conv1']['bias'], params['conv2']['bias']], axis=-1)
    x1, x2 = dual_conv1x1_bn_silu(x_flat, w_cat, s_cat, b_cat, hidden)

    # ---- bottlenecks: fully fused 1x1 -> 3x3 -> residual (h never hits HBM,
    #      halo comes straight from HBM via clamped BlockSpecs, no XLA pad).
    y = x1.reshape(n, h, w, hidden)
    for bp in params['bottlenecks']:
        w1 = bp['conv1']['w'].reshape(hidden, hidden).astype(_COMPUTE_DTYPE)
        w2 = bp['conv2']['w'].reshape(9, hidden, hidden).astype(_COMPUTE_DTYPE)
        y = fused_bottleneck(y, w1, bp['conv1']['scale'], bp['conv1']['bias'],
                             w2, bp['conv2']['scale'], bp['conv2']['bias'],
                             add_residual=True)

    # ---- concat + conv3 fused as one K = 2*hidden matmul.
    w3 = params['conv3']['w'].reshape(2 * hidden, cout).astype(_COMPUTE_DTYPE)
    out_flat = concat_conv1x1_bn_silu(
        y.reshape(m, hidden), x2, w3,
        params['conv3']['scale'], params['conv3']['bias'], jnp.float32)
    return jnp.transpose(out_flat.reshape(n, h, w, cout), (0, 3, 1, 2)).astype(x_nchw.dtype)


# --------------------------------------------------------------------------
# Deterministic parameter init (synthetic; BN folded to scale/bias)
# --------------------------------------------------------------------------
def init_baseconv(key, cin, cout, k):
    kw, kg, kb, km, kv = jax.random.split(key, 5)
    fan_in = cin * k * k
    w = jax.random.normal(kw, (k, k, cin, cout), jnp.float32) / math.sqrt(fan_in)
    gamma = jax.random.uniform(kg, (cout,), jnp.float32, 0.5, 1.5)
    beta = jax.random.normal(kb, (cout,), jnp.float32) * 0.1
    mean = jax.random.normal(km, (cout,), jnp.float32) * 0.1
    var = jax.random.uniform(kv, (cout,), jnp.float32, 0.5, 1.5)
    eps = 1e-5
    scale = gamma / jnp.sqrt(var + eps)
    bias = beta - mean * scale
    return {'w': w, 'scale': scale.reshape(1, cout), 'bias': bias.reshape(1, cout)}


def init_csp_params(key, cin, cout, n):
    hidden = int(cout * 0.5)
    keys = jax.random.split(key, 3 + 2 * n)
    params = {
        'conv1': init_baseconv(keys[0], cin, hidden, 1),
        'conv2': init_baseconv(keys[1], cin, hidden, 1),
        'conv3': init_baseconv(keys[2], 2 * hidden, cout, 1),
        'bottlenecks': [],
    }
    for i in range(n):
        params['bottlenecks'].append({
            'conv1': init_baseconv(keys[3 + 2 * i], hidden, hidden, 1),
            'conv2': init_baseconv(keys[4 + 2 * i], hidden, hidden, 3),
        })
    return params


# --------------------------------------------------------------------------
# Pure-JAX reference (f32, for correctness check)
# --------------------------------------------------------------------------
def _ref_baseconv(x_nhwc, p):
    y = jax.lax.conv_general_dilated(
        x_nhwc, p['w'], window_strides=(1, 1), padding='SAME',
        dimension_numbers=('NHWC', 'HWIO', 'NHWC'))
    y = y * p['scale'].reshape(1, 1, 1, -1) + p['bias'].reshape(1, 1, 1, -1)
    return y * jax.nn.sigmoid(y)


def ref_csp_forward(x_nchw, params):
    x = jnp.transpose(x_nchw, (0, 2, 3, 1))
    x1 = _ref_baseconv(x, params['conv1'])
    x2 = _ref_baseconv(x, params['conv2'])
    y = x1
    for bp in params['bottlenecks']:
        hh = _ref_baseconv(y, bp['conv1'])
        hh = _ref_baseconv(hh, bp['conv2'])
        y = hh + y
    cat = jnp.concatenate([y, x2], axis=-1)
    out = _ref_baseconv(cat, params['conv3'])
    return jnp.transpose(out, (0, 3, 1, 2))


# --------------------------------------------------------------------------
if __name__ == "__main__":
    key = jax.random.PRNGKey(0)
    N, Cin, H, W = 2, 4, 16, 16
    Cout = 8          # hidden_channels = 4
    n_bottlenecks = 1

    k_x, k_p = jax.random.split(key)
    x = jax.random.normal(k_x, (N, Cin, H, W), jnp.float32)
    params = init_csp_params(k_p, Cin, Cout, n_bottlenecks)

    out = csp_layer_forward(x, params)
    out = jax.block_until_ready(out)
    assert out.shape == (N, Cout, H, W)

    ref = ref_csp_forward(x, params)
    # bf16 matmul inputs with f32 accumulation -> slightly looser tolerance.
    np.testing.assert_allclose(np.asarray(out), np.asarray(ref),
                               rtol=2e-2, atol=2e-2)
    print("KERNEL_OK")
</pallas_src>

<mosaic_0001>
module attributes {stable_mosaic.version = 11 : i64} {
  func.func @_dual_conv1x1_kernel(%arg0: i32, %arg1: memref<512x4xbf16, #tpu.memory_space<vmem>>, %arg2: memref<4x8xbf16, #tpu.memory_space<vmem>>, %arg3: memref<1x8xf32, #tpu.memory_space<vmem>>, %arg4: memref<1x8xf32, #tpu.memory_space<vmem>>, %arg5: memref<512x8xbf16, #tpu.memory_space<vmem>>) attributes {dimension_semantics = [#tpu.dimension_semantics<parallel>], iteration_bounds = array<i64: 1>, scalar_prefetch = 0 : i64, scratch_operands = 0 : i64, tpu.core_type = #tpu.core_type<tc>, window_params = [{transform_indices = @transform_0, window_bounds = array<i64: 512, 4>}, {pipeline_mode = #tpu.pipeline_mode<synchronous>, transform_indices = @transform_1, window_bounds = array<i64: 4, 8>}, {pipeline_mode = #tpu.pipeline_mode<synchronous>, transform_indices = @transform_2, window_bounds = array<i64: 1, 8>}, {pipeline_mode = #tpu.pipeline_mode<synchronous>, transform_indices = @transform_3, window_bounds = array<i64: 1, 8>}, {transform_indices = @transform_4, window_bounds = array<i64: 512, 8>}]} {
    %c0 = arith.constant 0 : index
    %c0_0 = arith.constant 0 : index
    %0 = vector.load %arg1[%c0, %c0_0] : memref<512x4xbf16, #tpu.memory_space<vmem>>, vector<512x4xbf16>
    %c0_1 = arith.constant 0 : index
    %c0_2 = arith.constant 0 : index
    %1 = vector.load %arg2[%c0_1, %c0_2] : memref<4x8xbf16, #tpu.memory_space<vmem>>, vector<4x8xbf16>
    %cst = arith.constant dense<0.000000e+00> : vector<512x8xf32>
    %2 = tpu.matmul %0, %1, %cst {dimension_numbers = #tpu.dot_dimension_numbers<[1], [0], [0], [1], [0, 0, 1, 1], [], []>} : vector<512x4xbf16>, vector<4x8xbf16>, vector<512x8xf32> -> vector<512x8xf32>
    %c0_3 = arith.constant 0 : index
    %c0_4 = arith.constant 0 : index
    %3 = vector.load %arg3[%c0_3, %c0_4] : memref<1x8xf32, #tpu.memory_space<vmem>>, vector<1x8xf32>
    %4 = vector.broadcast %3 : vector<1x8xf32> to vector<512x8xf32>
    %5 = arith.mulf %2, %4 : vector<512x8xf32>
    %c0_5 = arith.constant 0 : index
    %c0_6 = arith.constant 0 : index
    %6 = vector.load %arg4[%c0_5, %c0_6] : memref<1x8xf32, #tpu.memory_space<vmem>>, vector<1x8xf32>
    %7 = vector.broadcast %6 : vector<1x8xf32> to vector<512x8xf32>
    %8 = arith.addf %5, %7 : vector<512x8xf32>
    %cst_7 = arith.constant 0.000000e+00 : f32
    %9 = vector.broadcast %cst_7 : f32 to vector<512x8xf32>
    %10 = arith.subf %9, %8 : vector<512x8xf32>
    %11 = math.exp %10 : vector<512x8xf32>
    %cst_8 = arith.constant 1.000000e+00 : f32
    %12 = vector.broadcast %cst_8 : f32 to vector<512x8xf32>
    %13 = arith.addf %12, %11 : vector<512x8xf32>
    %14 = tpu.reciprocal %13 {approx = true} : vector<512x8xf32> -> vector<512x8xf32>
    %15 = arith.mulf %8, %14 : vector<512x8xf32>
    %16 = arith.truncf %15 : vector<512x8xf32> to vector<512x8xbf16>
    %c0_9 = arith.constant 0 : index
    %c0_10 = arith.constant 0 : index
    %17 = vector.load %arg5[%c0_9, %c0_10] : memref<512x8xbf16, #tpu.memory_space<vmem>>, vector<512x8xbf16>
    tpu.vector_store %arg5[%c0_9, %c0_10], %16 {strides = array<i32>} : memref<512x8xbf16, #tpu.memory_space<vmem>>, vector<512x8xbf16>,
    return
  }
  func.func @transform_0(%arg0: i32) -> (i32, i32) {
    %c0_i32 = arith.constant 0 : i32
    %c0_i32_0 = arith.constant 0 : i32
    return %arg0, %c0_i32 : i32, i32
  }
  func.func @transform_1(%arg0: i32) -> (i32, i32) {
    %c0_i32 = arith.constant 0 : i32
    %c0_i32_0 = arith.constant 0 : i32
    %c0_i32_1 = arith.constant 0 : i32
    return %c0_i32, %c0_i32_0 : i32, i32
  }
  func.func @transform_2(%arg0: i32) -> (i32, i32) {
    %c0_i32 = arith.constant 0 : i32
    %c0_i32_0 = arith.constant 0 : i32
    %c0_i32_1 = arith.constant 0 : i32
    return %c0_i32, %c0_i32_0 : i32, i32
  }
  func.func @transform_3(%arg0: i32) -> (i32, i32) {
    %c0_i32 = arith.constant 0 : i32
    %c0_i32_0 = arith.constant 0 : i32
    %c0_i32_1 = arith.constant 0 : i32
    return %c0_i32, %c0_i32_0 : i32, i32
  }
  func.func @transform_4(%arg0: i32) -> (i32, i32) {
    %c0_i32 = arith.constant 0 : i32
    %c0_i32_0 = arith.constant 0 : i32
    return %arg0, %c0_i32 : i32, i32
  }
}

module attributes {stable_mosaic.version = 11 : i64} {
  func.func @_bottleneck_kernel(%arg0: i32, %arg1: i32, %arg2: memref<1x1x16x4xbf16, #tpu.memory_space<vmem>>, %arg3: memref<1x16x16x4xbf16, #tpu.memory_space<vmem>>, %arg4: memref<1x1x16x4xbf16, #tpu.memory_space<vmem>>, %arg5: memref<4x4xbf16, #tpu.memory_space<vmem>>, %arg6: memref<1x4xf32, #tpu.memory_space<vmem>>, %arg7: memref<1x4xf32, #tpu.memory_space<vmem>>, %arg8: memref<9x4x4xbf16, #tpu.memory_space<vmem>>, %arg9: memref<1x4xf32, #tpu.memory_space<vmem>>, %arg10: memref<1x4xf32, #tpu.memory_space<vmem>>, %arg11: memref<1x16x16x4xbf16, #tpu.memory_space<vmem>>, %arg12: memref<18x18x4xbf16, #tpu.memory_space<vmem>>) attributes {dimension_semantics = [#tpu.dimension_semantics<parallel>, #tpu.dimension_semantics<parallel>], iteration_bounds = array<i64: 2, 1>, scalar_prefetch = 0 : i64, scratch_operands = 1 : i64, tpu.core_type = #tpu.core_type<tc>, window_params = [{transform_indices = @transform_0, window_bounds = array<i64: 1, 1, 16, 4>}, {transform_indices = @transform_1, window_bounds = array<i64: 1, 16, 16, 4>}, {transform_indices = @transform_2, window_bounds = array<i64: 1, 1, 16, 4>}, {pipeline_mode = #tpu.pipeline_mode<synchronous>, transform_indices = @transform_3, window_bounds = array<i64: 4, 4>}, {pipeline_mode = #tpu.pipeline_mode<synchronous>, transform_indices = @transform_4, window_bounds = array<i64: 1, 4>}, {pipeline_mode = #tpu.pipeline_mode<synchronous>, transform_indices = @transform_5, window_bounds = array<i64: 1, 4>}, {pipeline_mode = #tpu.pipeline_mode<synchronous>, transform_indices = @transform_6, window_bounds = array<i64: 9, 4, 4>}, {pipeline_mode = #tpu.pipeline_mode<synchronous>, transform_indices = @transform_7, window_bounds = array<i64: 1, 4>}, {pipeline_mode = #tpu.pipeline_mode<synchronous>, transform_indices = @transform_8, window_bounds = array<i64: 1, 4>}, {transform_indices = @transform_9, window_bounds = array<i64: 1, 16, 16, 4>}]} {
    %c0 = arith.constant 0 : index
    %c0_0 = arith.constant 0 : index
    %c0_1 = arith.constant 0 : index
    %c0_2 = arith.constant 0 : index
    %0 = vector.load %arg2[%c0, %c0_0, %c0_1, %c0_2] : memref<1x1x16x4xbf16, #tpu.memory_space<vmem>>, vector<1x1x16x4xbf16>
    %1 = vector.shape_cast %0 : vector<1x1x16x4xbf16> to vector<1x16x4xbf16>
    %c0_3 = arith.constant 0 : index
    %c0_4 = arith.constant 0 : index
    %c0_5 = arith.constant 0 : index
    %c0_6 = arith.constant 0 : index
    %2 = vector.load %arg3[%c0_3, %c0_4, %c0_5, %c0_6] : memref<1x16x16x4xbf16, #tpu.memory_space<vmem>>, vector<1x16x16x4xbf16>
    %3 = vector.shape_cast %2 : vector<1x16x16x4xbf16> to vector<16x16x4xbf16>
    %c0_7 = arith.constant 0 : index
    %c0_8 = arith.constant 0 : index
    %c0_9 = arith.constant 0 : index
    %c0_10 = arith.constant 0 : index
    %4 = vector.load %arg4[%c0_7, %c0_8, %c0_9, %c0_10] : memref<1x1x16x4xbf16, #tpu.memory_space<vmem>>, vector<1x1x16x4xbf16>
    %5 = vector.shape_cast %4 : vector<1x1x16x4xbf16> to vector<1x16x4xbf16>
    %6 = tpu.concatenate %1, %3, %5 in 0 : vector<1x16x4xbf16>, vector<16x16x4xbf16>, vector<1x16x4xbf16> -> vector<18x16x4xbf16>
    %7 = vector.shape_cast %6 : vector<18x16x4xbf16> to vector<288x4xbf16>
    %c0_11 = arith.constant 0 : index
    %c0_12 = arith.constant 0 : index
    %8 = vector.load %arg5[%c0_11, %c0_12] : memref<4x4xbf16, #tpu.memory_space<vmem>>, vector<4x4xbf16>
    %cst = arith.constant dense<0.000000e+00> : vector<288x4xf32>
    %9 = tpu.matmul %7, %8, %cst {dimension_numbers = #tpu.dot_dimension_numbers<[1], [0], [0], [1], [0, 0, 1, 1], [], []>} : vector<288x4xbf16>, vector<4x4xbf16>, vector<288x4xf32> -> vector<288x4xf32>
    %c0_13 = arith.constant 0 : index
    %c0_14 = arith.constant 0 : index
    %10 = vector.load %arg6[%c0_13, %c0_14] : memref<1x4xf32, #tpu.memory_space<vmem>>, vector<1x4xf32>
    %11 = vector.broadcast %10 : vector<1x4xf32> to vector<288x4xf32>
    %12 = arith.mulf %9, %11 : vector<288x4xf32>
    %c0_15 = arith.constant 0 : index
    %c0_16 = arith.constant 0 : index
    %13 = vector.load %arg7[%c0_15, %c0_16] : memref<1x4xf32, #tpu.memory_space<vmem>>, vector<1x4xf32>
    %14 = vector.broadcast %13 : vector<1x4xf32> to vector<288x4xf32>
    %15 = arith.addf %12, %14 : vector<288x4xf32>
    %cst_17 = arith.constant 0.000000e+00 : f32
    %16 = vector.broadcast %cst_17 : f32 to vector<288x4xf32>
    %17 = arith.subf %16, %15 : vector<288x4xf32>
    %18 = math.exp %17 : vector<288x4xf32>
    %cst_18 = arith.constant 1.000000e+00 : f32
    %19 = vector.broadcast %cst_18 : f32 to vector<288x4xf32>
    %20 = arith.addf %19, %18 : vector<288x4xf32>
    %21 = tpu.reciprocal %20 {approx = true} : vector<288x4xf32> -> vector<288x4xf32>
    %22 = arith.mulf %15, %21 : vector<288x4xf32>
    %23 = vector.shape_cast %22 : vector<288x4xf32> to vector<18x16x4xf32>
    %24 = arith.truncf %23 : vector<18x16x4xf32> to vector<18x16x4xbf16>
    %c0_19 = arith.constant 0 : index
    %c1 = arith.constant 1 : index
    %c0_20 = arith.constant 0 : index
    %25 = vector.load %arg12[%c0_19, %c1, %c0_20] : memref<18x18x4xbf16, #tpu.memory_space<vmem>>, vector<18x16x4xbf16>
    tpu.vector_store %arg12[%c0_19, %c1, %c0_20], %24 {strides = array<i32>} : memref<18x18x4xbf16, #tpu.memory_space<vmem>>, vector<18x16x4xbf16>,
    %cst_21 = arith.constant 0.000000e+00 : bf16
    %26 = vector.broadcast %cst_21 : bf16 to vector<18x1x4xbf16>
    %c0_22 = arith.constant 0 : index
    %c0_23 = arith.constant 0 : index
    %c0_24 = arith.constant 0 : index
    %27 = vector.load %arg12[%c0_22, %c0_23, %c0_24] : memref<18x18x4xbf16, #tpu.memory_space<vmem>>, vector<18x1x4xbf16>
    tpu.vector_store %arg12[%c0_22, %c0_23, %c0_24], %26 {strides = array<i32>} : memref<18x18x4xbf16, #tpu.memory_space<vmem>>, vector<18x1x4xbf16>,
    %cst_25 = arith.constant 0.000000e+00 : bf16
    %28 = vector.broadcast %cst_25 : bf16 to vector<18x1x4xbf16>
    %c0_26 = arith.constant 0 : index
    %c17 = arith.constant 17 : index
    %c0_27 = arith.constant 0 : index
    %29 = vector.load %arg12[%c0_26, %c17, %c0_27] : memref<18x18x4xbf16, #tpu.memory_space<vmem>>, vector<18x1x4xbf16>
    tpu.vector_store %arg12[%c0_26, %c17, %c0_27], %28 {strides = array<i32>} : memref<18x18x4xbf16, #tpu.memory_space<vmem>>, vector<18x1x4xbf16>,
    %c0_i32 = arith.constant 0 : i32
    %30 = arith.cmpi eq, %arg1, %c0_i32 : i32
    %31 = arith.extui %30 : i1 to i32
    %c0_i32_28 = arith.constant 0 : i32
    %32 = arith.cmpi ne, %31, %c0_i32_28 : i32
    scf.if %32 {
      %cst_102 = arith.constant 0.000000e+00 : bf16
      %114 = vector.broadcast %cst_102 : bf16 to vector<1x18x4xbf16>
      %c0_103 = arith.constant 0 : index
      %c0_104 = arith.constant 0 : index
      %c0_105 = arith.constant 0 : index
      %115 = vector.load %arg12[%c0_103, %c0_104, %c0_105] : memref<18x18x4xbf16, #tpu.memory_space<vmem>>, vector<1x18x4xbf16>
      tpu.vector_store %arg12[%c0_103, %c0_104, %c0_105], %114 {strides = array<i32>} : memref<18x18x4xbf16, #tpu.memory_space<vmem>>, vector<1x18x4xbf16>,
    } else {
    }
    %c0_i32_29 = arith.constant 0 : i32
    %33 = arith.cmpi eq, %arg1, %c0_i32_29 : i32
    %34 = arith.extui %33 : i1 to i32
    %c0_i32_30 = arith.constant 0 : i32
    %35 = arith.cmpi ne, %34, %c0_i32_30 : i32
    scf.if %35 {
      %cst_102 = arith.constant 0.000000e+00 : bf16
      %114 = vector.broadcast %cst_102 : bf16 to vector<1x18x4xbf16>
      %c17_103 = arith.constant 17 : index
      %c0_104 = arith.constant 0 : index
      %c0_105 = arith.constant 0 : index
      %115 = vector.load %arg12[%c17_103, %c0_104, %c0_105] : memref<18x18x4xbf16, #tpu.memory_space<vmem>>, vector<1x18x4xbf16>
      tpu.vector_store %arg12[%c17_103, %c0_104, %c0_105], %114 {strides = array<i32>} : memref<18x18x4xbf16, #tpu.memory_space<vmem>>, vector<1x18x4xbf16>,
    } else {
    }
    %cst_31 = arith.constant 0.000000e+00 : f32
    %36 = vector.broadcast %cst_31 : f32 to vector<256x4xf32>
    %c0_32 = arith.constant 0 : index
    %c0_33 = arith.constant 0 : index
    %c0_34 = arith.constant 0 : index
    %37 = vector.load %arg12[%c0_32, %c0_33, %c0_34] : memref<18x18x4xbf16, #tpu.memory_space<vmem>>, vector<16x16x4xbf16>
    %38 = vector.shape_cast %37 : vector<16x16x4xbf16> to vector<256x4xbf16>
    %c0_35 = arith.constant 0 : index
    %c0_36 = arith.constant 0 : index
    %c0_37 = arith.constant 0 : index
    %39 = vector.load %arg8[%c0_35, %c0_36, %c0_37] : memref<9x4x4xbf16, #tpu.memory_space<vmem>>, vector<1x4x4xbf16>
    %40 = vector.shape_cast %39 : vector<1x4x4xbf16> to vector<4x4xbf16>
    %cst_38 = arith.constant dense<0.000000e+00> : vector<256x4xf32>
    %41 = tpu.matmul %38, %40, %cst_38 {dimension_numbers = #tpu.dot_dimension_numbers<[1], [0], [0], [1], [0, 0, 1, 1], [], []>} : vector<256x4xbf16>, vector<4x4xbf16>, vector<256x4xf32> -> vector<256x4xf32>
    %42 = arith.addf %36, %41 : vector<256x4xf32>
    %c0_39 = arith.constant 0 : index
    %c1_40 = arith.constant 1 : index
    %c0_41 = arith.constant 0 : index
    %43 = vector.load %arg12[%c0_39, %c1_40, %c0_41] : memref<18x18x4xbf16, #tpu.memory_space<vmem>>, vector<16x16x4xbf16>
    %44 = vector.shape_cast %43 : vector<16x16x4xbf16> to vector<256x4xbf16>
    %c1_42 = arith.constant 1 : index
    %c0_43 = arith.constant 0 : index
    %c0_44 = arith.constant 0 : index
    %45 = vector.load %arg8[%c1_42, %c0_43, %c0_44] : memref<9x4x4xbf16, #tpu.memory_space<vmem>>, vector<1x4x4xbf16>
    %46 = vector.shape_cast %45 : vector<1x4x4xbf16> to vector<4x4xbf16>
    %cst_45 = arith.constant dense<0.000000e+00> : vector<256x4xf32>
    %47 = tpu.matmul %44, %46, %cst_45 {dimension_numbers = #tpu.dot_dimension_numbers<[1], [0], [0], [1], [0, 0, 1, 1], [], []>} : vector<256x4xbf16>, vector<4x4xbf16>, vector<256x4xf32> -> vector<256x4xf32>
    %48 = arith.addf %42, %47 : vector<256x4xf32>
    %c0_46 = arith.constant 0 : index
    %c2 = arith.constant 2 : index
    %c0_47 = arith.constant 0 : index
    %49 = vector.load %arg12[%c0_46, %c2, %c0_47] : memref<18x18x4xbf16, #tpu.memory_space<vmem>>, vector<16x16x4xbf16>
    %50 = vector.shape_cast %49 : vector<16x16x4xbf16> to vector<256x4xbf16>
    %c2_48 = arith.constant 2 : index
    %c0_49 = arith.constant 0 : index
    %c0_50 = arith.constant 0 : index
    %51 = vector.load %arg8[%c2_48, %c0_49, %c0_50] : memref<9x4x4xbf16, #tpu.memory_space<vmem>>, vector<1x4x4xbf16>
    %52 = vector.shape_cast %51 : vector<1x4x4xbf16> to vector<4x4xbf16>
    %cst_51 = arith.constant dense<0.000000e+00> : vector<256x4xf32>
    %53 = tpu.matmul %50, %52, %cst_51 {dimension_numbers = #tpu.dot_dimension_numbers<[1], [0], [0], [1], [0, 0, 1, 1], [], []>} : vector<256x4xbf16>, vector<4x4xbf16>, vector<256x4xf32> -> vector<256x4xf32>
    %54 = arith.addf %48, %53 : vector<256x4xf32>
    %c1_52 = arith.constant 1 : index
    %c0_53 = arith.constant 0 : index
    %c0_54 = arith.constant 0 : index
    %55 = vector.load %arg12[%c1_52, %c0_53, %c0_54] : memref<18x18x4xbf16, #tpu.memory_space<vmem>>, vector<16x16x4xbf16>
    %56 = vector.shape_cast %55 : vector<16x16x4xbf16> to vector<256x4xbf16>
    %c3 = arith.constant 3 : index
    %c0_55 = arith.constant 0 : index
    %c0_56 = arith.constant 0 : index
    %57 = vector.load %arg8[%c3, %c0_55, %c0_56] : memref<9x4x4xbf16, #tpu.memory_space<vmem>>, vector<1x4x4xbf16>
    %58 = vector.shape_cast %57 : vector<1x4x4xbf16> to vector<4x4xbf16>
    %cst_57 = arith.constant dense<0.000000e+00> : vector<256x4xf32>
    %59 = tpu.matmul %56, %58, %cst_57 {dimension_numbers = #tpu.dot_dimension_numbers<[1], [0], [0], [1], [0, 0, 1, 1], [], []>} : vector<256x4xbf16>, vector<4x4xbf16>, vector<256x4xf32> -> vector<256x4xf32>
    %60 = arith.addf %54, %59 : vector<256x4xf32>
    %c1_58 = arith.constant 1 : index
    %c1_59 = arith.constant 1 : index
    %c0_60 = arith.constant 0 : index
    %61 = vector.load %arg12[%c1_58, %c1_59, %c0_60] : memref<18x18x4xbf16, #tpu.memory_space<vmem>>, vector<16x16x4xbf16>
    %62 = vector.shape_cast %61 : vector<16x16x4xbf16> to vector<256x4xbf16>
    %c4 = arith.constant 4 : index
    %c0_61 = arith.constant 0 : index
    %c0_62 = arith.constant 0 : index
    %63 = vector.load %arg8[%c4, %c0_61, %c0_62] : memref<9x4x4xbf16, #tpu.memory_space<vmem>>, vector<1x4x4xbf16>
    %64 = vector.shape_cast %63 : vector<1x4x4xbf16> to vector<4x4xbf16>
    %cst_63 = arith.constant dense<0.000000e+00> : vector<256x4xf32>
    %65 = tpu.matmul %62, %64, %cst_63 {dimension_numbers = #tpu.dot_dimension_numbers<[1], [0], [0], [1], [0, 0, 1, 1], [], []>} : vector<256x4xbf16>, vector<4x4xbf16>, vector<256x4xf32> -> vector<256x4xf32>
    %66 = arith.addf %60, %65 : vector<256x4xf32>
    %c1_64 = arith.constant 1 : index
    %c2_65 = arith.constant 2 : index
    %c0_66 = arith.constant 0 : index
    %67 = vector.load %arg12[%c1_64, %c2_65, %c0_66] : memref<18x18x4xbf16, #tpu.memory_space<vmem>>, vector<16x16x4xbf16>
    %68 = vector.shape_cast %67 : vector<16x16x4xbf16> to vector<256x4xbf16>
    %c5 = arith.constant 5 : index
    %c0_67 = arith.constant 0 : index
    %c0_68 = arith.constant 0 : index
    %69 = vector.load %arg8[%c5, %c0_67, %c0_68] : memref<9x4x4xbf16, #tpu.memory_space<vmem>>, vector<1x4x4xbf16>
    %70 = vector.shape_cast %69 : vector<1x4x4xbf16> to vector<4x4xbf16>
    %cst_69 = arith.constant dense<0.000000e+00> : vector<256x4xf32>
    %71 = tpu.matmul %68, %70, %cst_69 {dimension_numbers = #tpu.dot_dimension_numbers<[1], [0], [0], [1], [0, 0, 1, 1], [], []>} : vector<256x4xbf16>, vector<4x4xbf16>, vector<256x4xf32> -> vector<256x4xf32>
    %72 = arith.addf %66, %71 : vector<256x4xf32>
    %c2_70 = arith.constant 2 : index
    %c0_71 = arith.constant 0 : index
    %c0_72 = arith.constant 0 : index
    %73 = vector.load %arg12[%c2_70, %c0_71, %c0_72] : memref<18x18x4xbf16, #tpu.memory_space<vmem>>, vector<16x16x4xbf16>
    %74 = vector.shape_cast %73 : vector<16x16x4xbf16> to vector<256x4xbf16>
    %c6 = arith.constant 6 : index
    %c0_73 = arith.constant 0 : index
    %c0_74 = arith.constant 0 : index
    %75 = vector.load %arg8[%c6, %c0_73, %c0_74] : memref<9x4x4xbf16, #tpu.memory_space<vmem>>, vector<1x4x4xbf16>
    %76 = vector.shape_cast %75 : vector<1x4x4xbf16> to vector<4x4xbf16>
    %cst_75 = arith.constant dense<0.000000e+00> : vector<256x4xf32>
    %77 = tpu.matmul %74, %76, %cst_75 {dimension_numbers = #tpu.dot_dimension_numbers<[1], [0], [0], [1], [0, 0, 1, 1], [], []>} : vector<256x4xbf16>, vector<4x4xbf16>, vector<256x4xf32> -> vector<256x4xf32>
    %78 = arith.addf %72, %77 : vector<256x4xf32>
    %c2_76 = arith.constant 2 : index
    %c1_77 = arith.constant 1 : index
    %c0_78 = arith.constant 0 : index
    %79 = vector.load %arg12[%c2_76, %c1_77, %c0_78] : memref<18x18x4xbf16, #tpu.memory_space<vmem>>, vector<16x16x4xbf16>
    %80 = vector.shape_cast %79 : vector<16x16x4xbf16> to vector<256x4xbf16>
    %c7 = arith.constant 7 : index
    %c0_79 = arith.constant 0 : index
    %c0_80 = arith.constant 0 : index
    %81 = vector.load %arg8[%c7, %c0_79, %c0_80] : memref<9x4x4xbf16, #tpu.memory_space<vmem>>, vector<1x4x4xbf16>
    %82 = vector.shape_cast %81 : vector<1x4x4xbf16> to vector<4x4xbf16>
    %cst_81 = arith.constant dense<0.000000e+00> : vector<256x4xf32>
    %83 = tpu.matmul %80, %82, %cst_81 {dimension_numbers = #tpu.dot_dimension_numbers<[1], [0], [0], [1], [0, 0, 1, 1], [], []>} : vector<256x4xbf16>, vector<4x4xbf16>, vector<256x4xf32> -> vector<256x4xf32>
    %84 = arith.addf %78, %83 : vector<256x4xf32>
    %c2_82 = arith.constant 2 : index
    %c2_83 = arith.constant 2 : index
    %c0_84 = arith.constant 0 : index
    %85 = vector.load %arg12[%c2_82, %c2_83, %c0_84] : memref<18x18x4xbf16, #tpu.memory_space<vmem>>, vector<16x16x4xbf16>
    %86 = vector.shape_cast %85 : vector<16x16x4xbf16> to vector<256x4xbf16>
    %c8 = arith.constant 8 : index
    %c0_85 = arith.constant 0 : index
    %c0_86 = arith.constant 0 : index
    %87 = vector.load %arg8[%c8, %c0_85, %c0_86] : memref<9x4x4xbf16, #tpu.memory_space<vmem>>, vector<1x4x4xbf16>
    %88 = vector.shape_cast %87 : vector<1x4x4xbf16> to vector<4x4xbf16>
    %cst_87 = arith.constant dense<0.000000e+00> : vector<256x4xf32>
    %89 = tpu.matmul %86, %88, %cst_87 {dimension_numbers = #tpu.dot_dimension_numbers<[1], [0], [0], [1], [0, 0, 1, 1], [], []>} : vector<256x4xbf16>, vector<4x4xbf16>, vector<256x4xf32> -> vector<256x4xf32>
    %90 = arith.addf %84, %89 : vector<256x4xf32>
    %c0_88 = arith.constant 0 : index
    %c0_89 = arith.constant 0 : index
    %91 = vector.load %arg9[%c0_88, %c0_89] : memref<1x4xf32, #tpu.memory_space<vmem>>, vector<1x4xf32>
    %92 = vector.broadcast %91 : vector<1x4xf32> to vector<256x4xf32>
    %93 = arith.mulf %90, %92 : vector<256x4xf32>
    %c0_90 = arith.constant 0 : index
    %c0_91 = arith.constant 0 : index
    %94 = vector.load %arg10[%c0_90, %c0_91] : memref<1x4xf32, #tpu.memory_space<vmem>>, vector<1x4xf32>
    %95 = vector.broadcast %94 : vector<1x4xf32> to vector<256x4xf32>
    %96 = arith.addf %93, %95 : vector<256x4xf32>
    %cst_92 = arith.constant 0.000000e+00 : f32
    %97 = vector.broadcast %cst_92 : f32 to vector<256x4xf32>
    %98 = arith.subf %97, %96 : vector<256x4xf32>
    %99 = math.exp %98 : vector<256x4xf32>
    %cst_93 = arith.constant 1.000000e+00 : f32
    %100 = vector.broadcast %cst_93 : f32 to vector<256x4xf32>
    %101 = arith.addf %100, %99 : vector<256x4xf32>
    %102 = tpu.reciprocal %101 {approx = true} : vector<256x4xf32> -> vector<256x4xf32>
    %103 = arith.mulf %96, %102 : vector<256x4xf32>
    %c0_94 = arith.constant 0 : index
    %c0_95 = arith.constant 0 : index
    %c0_96 = arith.constant 0 : index
    %c0_97 = arith.constant 0 : index
    %104 = vector.load %arg3[%c0_94, %c0_95, %c0_96, %c0_97] : memref<1x16x16x4xbf16, #tpu.memory_space<vmem>>, vector<1x16x16x4xbf16>
    %105 = vector.shape_cast %104 : vector<1x16x16x4xbf16> to vector<16x16x4xbf16>
    %106 = vector.shape_cast %105 : vector<16x16x4xbf16> to vector<256x4xbf16>
    %107 = arith.extf %106 : vector<256x4xbf16> to vector<256x4xf32>
    %108 = arith.addf %103, %107 : vector<256x4xf32>
    %109 = vector.shape_cast %108 : vector<256x4xf32> to vector<16x16x4xf32>
    %110 = arith.truncf %109 : vector<16x16x4xf32> to vector<16x16x4xbf16>
    %c0_98 = arith.constant 0 : index
    %c0_99 = arith.constant 0 : index
    %c0_100 = arith.constant 0 : index
    %c0_101 = arith.constant 0 : index
    %111 = vector.load %arg11[%c0_98, %c0_99, %c0_100, %c0_101] : memref<1x16x16x4xbf16, #tpu.memory_space<vmem>>, vector<1x16x16x4xbf16>
    %112 = vector.shape_cast %111 : vector<1x16x16x4xbf16> to vector<16x16x4xbf16>
    %113 = vector.shape_cast %110 : vector<16x16x4xbf16> to vector<1x16x16x4xbf16>
    tpu.vector_store %arg11[%c0_98, %c0_99, %c0_100, %c0_101], %113 {strides = array<i32>} : memref<1x16x16x4xbf16, #tpu.memory_space<vmem>>, vector<1x16x16x4xbf16>,
    return
  }
  func.func @transform_0(%arg0: i32, %arg1: i32) -> (i32, i32, i32, i32) {
    %c16_i32 = arith.constant 16 : i32
    %0 = arith.muli %arg1, %c16_i32 : i32
    %c1_i32 = arith.constant 1 : i32
    %1 = arith.subi %0, %c1_i32 : i32
    %c0_i32 = arith.constant 0 : i32
    %2 = arith.maxsi %1, %c0_i32 : i32
    %c0_i32_0 = arith.constant 0 : i32
    %c0_i32_1 = arith.constant 0 : i32
    %c0_i32_2 = arith.constant 0 : i32
    return %arg0, %2, %c0_i32_0, %c0_i32_1 : i32, i32, i32, i32
  }
  func.func @transform_1(%arg0: i32, %arg1: i32) -> (i32, i32, i32, i32) {
    %c0_i32 = arith.constant 0 : i32
    %c0_i32_0 = arith.constant 0 : i32
    %c0_i32_1 = arith.constant 0 : i32
    return %arg0, %arg1, %c0_i32, %c0_i32_0 : i32, i32, i32, i32
  }
  func.func @transform_2(%arg0: i32, %arg1: i32) -> (i32, i32, i32, i32) {
    %c16_i32 = arith.constant 16 : i32
    %0 = arith.muli %arg1, %c16_i32 : i32
    %c16_i32_0 = arith.constant 16 : i32
    %1 = arith.addi %0, %c16_i32_0 : i32
    %c15_i32 = arith.constant 15 : i32
    %2 = arith.minsi %1, %c15_i32 : i32
    %c0_i32 = arith.constant 0 : i32
    %c0_i32_1 = arith.constant 0 : i32
    %c0_i32_2 = arith.constant 0 : i32
    return %arg0, %2, %c0_i32, %c0_i32_1 : i32, i32, i32, i32
  }
  func.func @transform_3(%arg0: i32, %arg1: i32) -> (i32, i32) {
    %c0_i32 = arith.constant 0 : i32
    %c0_i32_0 = arith.constant 0 : i32
    %c0_i32_1 = arith.constant 0 : i32
    return %c0_i32, %c0_i32_0 : i32, i32
  }
  func.func @transform_4(%arg0: i32, %arg1: i32) -> (i32, i32) {
    %c0_i32 = arith.constant 0 : i32
    %c0_i32_0 = arith.constant 0 : i32
    %c0_i32_1 = arith.constant 0 : i32
    return %c0_i32, %c0_i32_0 : i32, i32
  }
  func.func @transform_5(%arg0: i32, %arg1: i32) -> (i32, i32) {
    %c0_i32 = arith.constant 0 : i32
    %c0_i32_0 = arith.constant 0 : i32
    %c0_i32_1 = arith.constant 0 : i32
    return %c0_i32, %c0_i32_0 : i32, i32
  }
  func.func @transform_6(%arg0: i32, %arg1: i32) -> (i32, i32, i32) {
    %c0_i32 = arith.constant 0 : i32
    %c0_i32_0 = arith.constant 0 : i32
    %c0_i32_1 = arith.constant 0 : i32
    %c0_i32_2 = arith.constant 0 : i32
    return %c0_i32, %c0_i32_0, %c0_i32_1 : i32, i32, i32
  }
  func.func @transform_7(%arg0: i32, %arg1: i32) -> (i32, i32) {
    %c0_i32 = arith.constant 0 : i32
    %c0_i32_0 = arith.constant 0 : i32
    %c0_i32_1 = arith.constant 0 : i32
    return %c0_i32, %c0_i32_0 : i32, i32
  }
  func.func @transform_8(%arg0: i32, %arg1: i32) -> (i32, i32) {
    %c0_i32 = arith.constant 0 : i32
    %c0_i32_0 = arith.constant 0 : i32
    %c0_i32_1 = arith.constant 0 : i32
    return %c0_i32, %c0_i32_0 : i32, i32
  }
  func.func @transform_9(%arg0: i32, %arg1: i32) -> (i32, i32, i32, i32) {
    %c0_i32 = arith.constant 0 : i32
    %c0_i32_0 = arith.constant 0 : i32
    %c0_i32_1 = arith.constant 0 : i32
    return %arg0, %arg1, %c0_i32, %c0_i32_0 : i32, i32, i32, i32
  }
}

module attributes {stable_mosaic.version = 11 : i64} {
  func.func @_concat_conv1x1_kernel(%arg0: i32, %arg1: memref<512x4xbf16, #tpu.memory_space<vmem>>, %arg2: memref<512x4xbf16, #tpu.memory_space<vmem>>, %arg3: memref<8x8xbf16, #tpu.memory_space<vmem>>, %arg4: memref<1x8xf32, #tpu.memory_space<vmem>>, %arg5: memref<1x8xf32, #tpu.memory_space<vmem>>, %arg6: memref<512x8xf32, #tpu.memory_space<vmem>>) attributes {dimension_semantics = [#tpu.dimension_semantics<parallel>], iteration_bounds = array<i64: 1>, scalar_prefetch = 0 : i64, scratch_operands = 0 : i64, tpu.core_type = #tpu.core_type<tc>, window_params = [{transform_indices = @transform_0, window_bounds = array<i64: 512, 4>}, {transform_indices = @transform_1, window_bounds = array<i64: 512, 4>}, {pipeline_mode = #tpu.pipeline_mode<synchronous>, transform_indices = @transform_2, window_bounds = array<i64: 8, 8>}, {pipeline_mode = #tpu.pipeline_mode<synchronous>, transform_indices = @transform_3, window_bounds = array<i64: 1, 8>}, {pipeline_mode = #tpu.pipeline_mode<synchronous>, transform_indices = @transform_4, window_bounds = array<i64: 1, 8>}, {transform_indices = @transform_5, window_bounds = array<i64: 512, 8>}]} {
    %c0 = arith.constant 0 : index
    %c0_0 = arith.constant 0 : index
    %0 = vector.load %arg1[%c0, %c0_0] : memref<512x4xbf16, #tpu.memory_space<vmem>>, vector<512x4xbf16>
    %c0_1 = arith.constant 0 : index
    %c0_2 = arith.constant 0 : index
    %1 = vector.load %arg2[%c0_1, %c0_2] : memref<512x4xbf16, #tpu.memory_space<vmem>>, vector<512x4xbf16>
    %2 = tpu.concatenate %0, %1 in 1 : vector<512x4xbf16>, vector<512x4xbf16> -> vector<512x8xbf16>
    %c0_3 = arith.constant 0 : index
    %c0_4 = arith.constant 0 : index
    %3 = vector.load %arg3[%c0_3, %c0_4] : memref<8x8xbf16, #tpu.memory_space<vmem>>, vector<8x8xbf16>
    %cst = arith.constant dense<0.000000e+00> : vector<512x8xf32>
    %4 = tpu.matmul %2, %3, %cst {dimension_numbers = #tpu.dot_dimension_numbers<[1], [0], [0], [1], [0, 0, 1, 1], [], []>} : vector<512x8xbf16>, vector<8x8xbf16>, vector<512x8xf32> -> vector<512x8xf32>
    %c0_5 = arith.constant 0 : index
    %c0_6 = arith.constant 0 : index
    %5 = vector.load %arg4[%c0_5, %c0_6] : memref<1x8xf32, #tpu.memory_space<vmem>>, vector<1x8xf32>
    %6 = vector.broadcast %5 : vector<1x8xf32> to vector<512x8xf32>
    %7 = arith.mulf %4, %6 : vector<512x8xf32>
    %c0_7 = arith.constant 0 : index
    %c0_8 = arith.constant 0 : index
    %8 = vector.load %arg5[%c0_7, %c0_8] : memref<1x8xf32, #tpu.memory_space<vmem>>, vector<1x8xf32>
    %9 = vector.broadcast %8 : vector<1x8xf32> to vector<512x8xf32>
    %10 = arith.addf %7, %9 : vector<512x8xf32>
    %cst_9 = arith.constant 0.000000e+00 : f32
    %11 = vector.broadcast %cst_9 : f32 to vector<512x8xf32>
    %12 = arith.subf %11, %10 : vector<512x8xf32>
    %13 = math.exp %12 : vector<512x8xf32>
    %cst_10 = arith.constant 1.000000e+00 : f32
    %14 = vector.broadcast %cst_10 : f32 to vector<512x8xf32>
    %15 = arith.addf %14, %13 : vector<512x8xf32>
    %16 = tpu.reciprocal %15 {approx = true} : vector<512x8xf32> -> vector<512x8xf32>
    %17 = arith.mulf %10, %16 : vector<512x8xf32>
    %c0_11 = arith.constant 0 : index
    %c0_12 = arith.constant 0 : index
    %18 = vector.load %arg6[%c0_11, %c0_12] : memref<512x8xf32, #tpu.memory_space<vmem>>, vector<512x8xf32>
    tpu.vector_store %arg6[%c0_11, %c0_12], %17 {strides = array<i32>} : memref<512x8xf32, #tpu.memory_space<vmem>>, vector<512x8xf32>,
    return
  }
  func.func @transform_0(%arg0: i32) -> (i32, i32) {
    %c0_i32 = arith.constant 0 : i32
    %c0_i32_0 = arith.constant 0 : i32
    return %arg0, %c0_i32 : i32, i32
  }
  func.func @transform_1(%arg0: i32) -> (i32, i32) {
    %c0_i32 = arith.constant 0 : i32
    %c0_i32_0 = arith.constant 0 : i32
    return %arg0, %c0_i32 : i32, i32
  }
  func.func @transform_2(%arg0: i32) -> (i32, i32) {
    %c0_i32 = arith.constant 0 : i32
    %c0_i32_0 = arith.constant 0 : i32
    %c0_i32_1 = arith.constant 0 : i32
    return %c0_i32, %c0_i32_0 : i32, i32
  }
  func.func @transform_3(%arg0: i32) -> (i32, i32) {
    %c0_i32 = arith.constant 0 : i32
    %c0_i32_0 = arith.constant 0 : i32
    %c0_i32_1 = arith.constant 0 : i32
    return %c0_i32, %c0_i32_0 : i32, i32
  }
  func.func @transform_4(%arg0: i32) -> (i32, i32) {
    %c0_i32 = arith.constant 0 : i32
    %c0_i32_0 = arith.constant 0 : i32
    %c0_i32_1 = arith.constant 0 : i32
    return %c0_i32, %c0_i32_0 : i32, i32
  }
  func.func @transform_5(%arg0: i32) -> (i32, i32) {
    %c0_i32 = arith.constant 0 : i32
    %c0_i32_0 = arith.constant 0 : i32
    return %arg0, %c0_i32 : i32, i32
  }
}

</mosaic_0001>

<llo_original>
// kernel: csp_layer_forward.3
$region0: #{csp_layer_forward.3}
  #allocation0 [shape = 'u32[]', space=smem, size = 0x4, offset = 0x4, fixed_abs, tag = 'smem constant byte address 0x4 - core index']
  #allocation1 [shape = 'u32[72,128]{1,0:T(1,128)}', space=vmem, size = 0x9000, scoped, tag = 'internal scratch']
  %s0 = inlined_call_operand.vmem [shape: bf16[512,4], index: 0, kind: input, shape index: {}]
  %s1 = inlined_call_operand.vmem [shape: bf16[4,8], index: 1, kind: input, shape index: {}]
  %s2 = inlined_call_operand.vmem [shape: f32[1,8], index: 2, kind: input, shape index: {}]
  %s3 = inlined_call_operand.vmem [shape: f32[1,8], index: 3, kind: input, shape index: {}]
  %s4 = inlined_call_operand.vmem [shape: bf16[512,8], index: 4, kind: output, shape index: {}]
  %s5 = sld [smem:[#allocation0]]
  $region26: #{csp_layer_forward.3} parent=0
    _
  %s7 = ssub.s32 1, %s5
  %s8 = scalar_select 0, %s7, %s5
  // Predicated region
  $region2: #{csp_layer_forward.3} parent=0 // pred_check
    _
  $region3: #{csp_layer_forward.3} parent=0 // pred_check_branch
    %10 = sbr.rel (0) target = $region5
  $region4: #{csp_layer_forward.3} parent=0 // pred_region
    _
  $region5: #{csp_layer_forward.3} parent=0 // pred_fallthru
    _
  // Predicated region
  $region6: #{csp_layer_forward.3} parent=0 // pred_check
    _
  $region7: #{csp_layer_forward.3} parent=0 // pred_check_branch
    %12 = sbr.rel (0) target = $region9
  $region8: #{csp_layer_forward.3} parent=0 // pred_region
    _
  $region9: #{csp_layer_forward.3} parent=0 // pred_fallthru
    _
  // Predicated region
  $region10: #{csp_layer_forward.3} parent=0 // pred_check
    _
  $region11: #{csp_layer_forward.3} parent=0 // pred_check_branch
    %14 = sbr.rel (0) target = $region13
  $region12: #{csp_layer_forward.3} parent=0 // pred_region
    _
  $region13: #{csp_layer_forward.3} parent=0 // pred_fallthru
    _
  // Predicated region
  $region14: #{csp_layer_forward.3} parent=0 // pred_check
    _
  $region15: #{csp_layer_forward.3} parent=0 // pred_check_branch
    %16 = sbr.rel (0) target = $region17
  $region16: #{csp_layer_forward.3} parent=0 // pred_region
    _
  $region17: #{csp_layer_forward.3} parent=0 // pred_fallthru
    _
  %v18 = vld [vmem:[%s0] sm:$0xf]
  %v19 = vld [vmem:[%s0 + $0x4] sm:$0xf]
  %v20 = vld [vmem:[%s0 + $0x8] sm:$0xf]
  %v21 = vld [vmem:[%s0 + $0xc] sm:$0xf]
  %v22 = vld [vmem:[%s0 + $0x10] sm:$0xf]
  %v23 = vld [vmem:[%s0 + $0x14] sm:$0xf]
  %v24 = vld [vmem:[%s0 + $0x18] sm:$0xf]
  %v25 = vld [vmem:[%s0 + $0x1c] sm:$0xf]
  %v26 = vld [vmem:[%s0 + $0x20] sm:$0xf]
  %v27 = vld [vmem:[%s0 + $0x24] sm:$0xf]
  %v28 = vld [vmem:[%s0 + $0x28] sm:$0xf]
  %v29 = vld [vmem:[%s0 + $0x2c] sm:$0xf]
  %v30 = vld [vmem:[%s0 + $0x30] sm:$0xf]
  %v31 = vld [vmem:[%s0 + $0x34] sm:$0xf]
  %v32 = vld [vmem:[%s0 + $0x38] sm:$0xf]
  %v33 = vld [vmem:[%s0 + $0x3c] sm:$0xf]
  %v34 = vld [vmem:[%s0 + $0x40] sm:$0xf]
  %v35 = vld [vmem:[%s0 + $0x44] sm:$0xf]
  %v36 = vld [vmem:[%s0 + $0x48] sm:$0xf]
  %v37 = vld [vmem:[%s0 + $0x4c] sm:$0xf]
  %v38 = vld [vmem:[%s0 + $0x50] sm:$0xf]
  %v39 = vld [vmem:[%s0 + $0x54] sm:$0xf]
  %v40 = vld [vmem:[%s0 + $0x58] sm:$0xf]
  %v41 = vld [vmem:[%s0 + $0x5c] sm:$0xf]
  %v42 = vld [vmem:[%s0 + $0x60] sm:$0xf]
  %v43 = vld [vmem:[%s0 + $0x64] sm:$0xf]
  %v44 = vld [vmem:[%s0 + $0x68] sm:$0xf]
  %v45 = vld [vmem:[%s0 + $0x6c] sm:$0xf]
  %v46 = vld [vmem:[%s0 + $0x70] sm:$0xf]
  %v47 = vld [vmem:[%s0 + $0x74] sm:$0xf]
  %v48 = vld [vmem:[%s0 + $0x78] sm:$0xf]
  %v49 = vld [vmem:[%s0 + $0x7c] sm:$0xf]
  %v50 = vld [vmem:[%s0 + $0x80] sm:$0xf]
  %v51 = vld [vmem:[%s0 + $0x84] sm:$0xf]
  %v52 = vld [vmem:[%s0 + $0x88] sm:$0xf]
  %v53 = vld [vmem:[%s0 + $0x8c] sm:$0xf]
  %v54 = vld [vmem:[%s0 + $0x90] sm:$0xf]
  %v55 = vld [vmem:[%s0 + $0x94] sm:$0xf]
  %v56 = vld [vmem:[%s0 + $0x98] sm:$0xf]
  %v57 = vld [vmem:[%s0 + $0x9c] sm:$0xf]
  %v58 = vld [vmem:[%s0 + $0xa0] sm:$0xf]
  %v59 = vld [vmem:[%s0 + $0xa4] sm:$0xf]
  %v60 = vld [vmem:[%s0 + $0xa8] sm:$0xf]
  %v61 = vld [vmem:[%s0 + $0xac] sm:$0xf]
  %v62 = vld [vmem:[%s0 + $0xb0] sm:$0xf]
  %v63 = vld [vmem:[%s0 + $0xb4] sm:$0xf]
  %v64 = vld [vmem:[%s0 + $0xb8] sm:$0xf]
  %v65 = vld [vmem:[%s0 + $0xbc] sm:$0xf]
  %v66 = vld [vmem:[%s0 + $0xc0] sm:$0xf]
  %v67 = vld [vmem:[%s0 + $0xc4] sm:$0xf]
  %v68 = vld [vmem:[%s0 + $0xc8] sm:$0xf]
  %v69 = vld [vmem:[%s0 + $0xcc] sm:$0xf]
  %v70 = vld [vmem:[%s0 + $0xd0] sm:$0xf]
  %v71 = vld [vmem:[%s0 + $0xd4] sm:$0xf]
  %v72 = vld [vmem:[%s0 + $0xd8] sm:$0xf]
  %v73 = vld [vmem:[%s0 + $0xdc] sm:$0xf]
  %v74 = vld [vmem:[%s0 + $0xe0] sm:$0xf]
  %v75 = vld [vmem:[%s0 + $0xe4] sm:$0xf]
  %v76 = vld [vmem:[%s0 + $0xe8] sm:$0xf]
  %v77 = vld [vmem:[%s0 + $0xec] sm:$0xf]
  %v78 = vld [vmem:[%s0 + $0xf0] sm:$0xf]
  %v79 = vld [vmem:[%s0 + $0xf4] sm:$0xf]
  %v80 = vld [vmem:[%s0 + $0xf8] sm:$0xf]
  %v81 = vld [vmem:[%s0 + $0xfc] sm:$0xf]
  %v82 = vld [vmem:[%s1] sm:$0x3]
  %v147 = vunpack.c.l.b16 %v18
  %v148 = vunpack.c.l.b16 %v19
  %v149 = vunpack.c.l.b16 %v20
  %v150 = vunpack.c.l.b16 %v21
  %v151 = vunpack.c.l.b16 %v22
  %v152 = vunpack.c.l.b16 %v23
  %v153 = vunpack.c.l.b16 %v24
  %v154 = vunpack.c.l.b16 %v25
  %v155 = vunpack.c.l.b16 %v26
  %v156 = vunpack.c.l.b16 %v27
  %v157 = vunpack.c.l.b16 %v28
  %v158 = vunpack.c.l.b16 %v29
  %v159 = vunpack.c.l.b16 %v30
  %v160 = vunpack.c.l.b16 %v31
  %v161 = vunpack.c.l.b16 %v32
  %v162 = vunpack.c.l.b16 %v33
  %v163 = vunpack.c.l.b16 %v34
  %v164 = vunpack.c.l.b16 %v35
  %v165 = vunpack.c.l.b16 %v36
  %v166 = vunpack.c.l.b16 %v37
  %v167 = vunpack.c.l.b16 %v38
  %v168 = vunpack.c.l.b16 %v39
  %v169 = vunpack.c.l.b16 %v40
  %v170 = vunpack.c.l.b16 %v41
  %v171 = vunpack.c.l.b16 %v42
  %v172 = vunpack.c.l.b16 %v43
  %v173 = vunpack.c.l.b16 %v44
  %v174 = vunpack.c.l.b16 %v45
  %v175 = vunpack.c.l.b16 %v46
  %v176 = vunpack.c.l.b16 %v47
  %v177 = vunpack.c.l.b16 %v48
  %v178 = vunpack.c.l.b16 %v49
  %v179 = vunpack.c.l.b16 %v50
  %v180 = vunpack.c.l.b16 %v51
  %v181 = vunpack.c.l.b16 %v52
  %v182 = vunpack.c.l.b16 %v53
  %v183 = vunpack.c.l.b16 %v54
  %v184 = vunpack.c.l.b16 %v55
  %v185 = vunpack.c.l.b16 %v56
  %v186 = vunpack.c.l.b16 %v57
  %v187 = vunpack.c.l.b16 %v58
  %v188 = vunpack.c.l.b16 %v59
  %v189 = vunpack.c.l.b16 %v60
  %v190 = vunpack.c.l.b16 %v61
  %v191 = vunpack.c.l.b16 %v62
  %v192 = vunpack.c.l.b16 %v63
  %v193 = vunpack.c.l.b16 %v64
  %v194 = vunpack.c.l.b16 %v65
  %v195 = vunpack.c.l.b16 %v66
  %v196 = vunpack.c.l.b16 %v67
  %v197 = vunpack.c.l.b16 %v68
  %v198 = vunpack.c.l.b16 %v69
  %v199 = vunpack.c.l.b16 %v70
  %v200 = vunpack.c.l.b16 %v71
  %v201 = vunpack.c.l.b16 %v72
  %v202 = vunpack.c.l.b16 %v73
  %v203 = vunpack.c.l.b16 %v74
  %v204 = vunpack.c.l.b16 %v75
  %v205 = vunpack.c.l.b16 %v76
  %v206 = vunpack.c.l.b16 %v77
  %v207 = vunpack.c.l.b16 %v78
  %v208 = vunpack.c.l.b16 %v79
  %v209 = vunpack.c.l.b16 %v80
  %v210 = vunpack.c.l.b16 %v81
  %v211 = vpack.c.b16 %v148, %v147
  %v212 = vpack.c.b16 %v150, %v149
  %v213 = vpack.c.b16 %v152, %v151
  %v214 = vpack.c.b16 %v154, %v153
  %v215 = vpack.c.b16 %v156, %v155
  %v216 = vpack.c.b16 %v158, %v157
  %v217 = vpack.c.b16 %v160, %v159
  %v218 = vpack.c.b16 %v162, %v161
  %v219 = vpack.c.b16 %v164, %v163
  %v220 = vpack.c.b16 %v166, %v165
  %v221 = vpack.c.b16 %v168, %v167
  %v222 = vpack.c.b16 %v170, %v169
  %v223 = vpack.c.b16 %v172, %v171
  %v224 = vpack.c.b16 %v174, %v173
  %v225 = vpack.c.b16 %v176, %v175
  %v226 = vpack.c.b16 %v178, %v177
  %v227 = vpack.c.b16 %v180, %v179
  %v228 = vpack.c.b16 %v182, %v181
  %v229 = vpack.c.b16 %v184, %v183
  %v230 = vpack.c.b16 %v186, %v185
  %v231 = vpack.c.b16 %v188, %v187
  %v232 = vpack.c.b16 %v190, %v189
  %v233 = vpack.c.b16 %v192, %v191
  %v234 = vpack.c.b16 %v194, %v193
  %v235 = vpack.c.b16 %v196, %v195
  %v236 = vpack.c.b16 %v198, %v197
  %v237 = vpack.c.b16 %v200, %v199
  %v238 = vpack.c.b16 %v202, %v201
  %v239 = vpack.c.b16 %v204, %v203
  %v240 = vpack.c.b16 %v206, %v205
  %v241 = vpack.c.b16 %v208, %v207
  %v242 = vpack.c.b16 %v210, %v209
  %vm243 = vcmask 31744
  %v245 = vsel %vm243, %v211, 0
  %v248 = vsel %vm243, %v212, 0
  %v251 = vsel %vm243, %v213, 0
  %v254 = vsel %vm243, %v214, 0
  %v257 = vsel %vm243, %v215, 0
  %v260 = vsel %vm243, %v216, 0
  %v263 = vsel %vm243, %v217, 0
  %v266 = vsel %vm243, %v218, 0
  %v269 = vsel %vm243, %v219, 0
  %v272 = vsel %vm243, %v220, 0
  %v275 = vsel %vm243, %v221, 0
  %v278 = vsel %vm243, %v222, 0
  %v281 = vsel %vm243, %v223, 0
  %v284 = vsel %vm243, %v224, 0
  %v287 = vsel %vm243, %v225, 0
  %v290 = vsel %vm243, %v226, 0
  %v293 = vsel %vm243, %v227, 0
  %v296 = vsel %vm243, %v228, 0
  %v299 = vsel %vm243, %v229, 0
  %v302 = vsel %vm243, %v230, 0
  %v305 = vsel %vm243, %v231, 0
  %v308 = vsel %vm243, %v232, 0
  %v311 = vsel %vm243, %v233, 0
  %v314 = vsel %vm243, %v234, 0
  %v317 = vsel %vm243, %v235, 0
  %v320 = vsel %vm243, %v236, 0
  %v323 = vsel %vm243, %v237, 0
  %v326 = vsel %vm243, %v238, 0
  %v329 = vsel %vm243, %v239, 0
  %v332 = vsel %vm243, %v240, 0
  %v335 = vsel %vm243, %v241, 0
  %v338 = vsel %vm243, %v242, 0
  %vm340 = vcmask 1041408
  %v342 = vsel %vm340, %v82, 0
  %344 = vmatpush.bf16.msra.mxu0 0
  %345 = vmatpush.bf16.msra.mxu0 0
  %346 = vmatpush.bf16.msra.mxu0 0
  %347 = vmatpush.bf16.msra.mxu0 0
  %348 = vmatpush.bf16.msra.mxu0 0
  %349 = vmatpush.bf16.msra.mxu0 0
  %350 = vmatpush.bf16.msra.mxu0 0
  %351 = vmatpush.bf16.msra.mxu0 %v342
  %352 = vmatmul.bf16.gmra.mxu0 %v245
  %v353 = vpop.f32.mrf.mxu0
  %v354 = vadd.f32 0.0, %v353
  %v355 = vpop.f32.mrf.mxu0
  %v356 = vadd.f32 0.0, %v355
  %357 = vmatmul.bf16.gmra.mxu0 %v248
  %v358 = vpop.f32.mrf.mxu0
  %v359 = vadd.f32 0.0, %v358
  %v360 = vpop.f32.mrf.mxu0
  %v361 = vadd.f32 0.0, %v360
  %362 = vmatmul.bf16.gmra.mxu0 %v251
  %v363 = vpop.f32.mrf.mxu0
  %v364 = vadd.f32 0.0, %v363
  %v365 = vpop.f32.mrf.mxu0
  %v366 = vadd.f32 0.0, %v365
  %367 = vmatmul.bf16.gmra.mxu0 %v254
  %v368 = vpop.f32.mrf.mxu0
  %v369 = vadd.f32 0.0, %v368
  %v370 = vpop.f32.mrf.mxu0
  %v371 = vadd.f32 0.0, %v370
  %372 = vmatmul.bf16.gmra.mxu0 %v257
  %v373 = vpop.f32.mrf.mxu0
  %v374 = vadd.f32 0.0, %v373
  %v375 = vpop.f32.mrf.mxu0
  %v376 = vadd.f32 0.0, %v375
  %377 = vmatmul.bf16.gmra.mxu0 %v260
  %v378 = vpop.f32.mrf.mxu0
  %v379 = vadd.f32 0.0, %v378
  %v380 = vpop.f32.mrf.mxu0
  %v381 = vadd.f32 0.0, %v380
  %382 = vmatmul.bf16.gmra.mxu0 %v263
  %v383 = vpop.f32.mrf.mxu0
  %v384 = vadd.f32 0.0, %v383
  %v385 = vpop.f32.mrf.mxu0
  %v386 = vadd.f32 0.0, %v385
  %387 = vmatmul.bf16.gmra.mxu0 %v266
  %v388 = vpop.f32.mrf.mxu0
  %v389 = vadd.f32 0.0, %v388
  %v390 = vpop.f32.mrf.mxu0
  %v391 = vadd.f32 0.0, %v390
  %392 = vmatmul.bf16.gmra.mxu0 %v269
  %v393 = vpop.f32.mrf.mxu0
  %v394 = vadd.f32 0.0, %v393
  %v395 = vpop.f32.mrf.mxu0
  %v396 = vadd.f32 0.0, %v395
  %397 = vmatmul.bf16.gmra.mxu0 %v272
  %v398 = vpop.f32.mrf.mxu0
  %v399 = vadd.f32 0.0, %v398
  %v400 = vpop.f32.mrf.mxu0
  %v401 = vadd.f32 0.0, %v400
  %402 = vmatmul.bf16.gmra.mxu0 %v275
  %v403 = vpop.f32.mrf.mxu0
  %v404 = vadd.f32 0.0, %v403
  %v405 = vpop.f32.mrf.mxu0
  %v406 = vadd.f32 0.0, %v405
  %407 = vmatmul.bf16.gmra.mxu0 %v278
  %v408 = vpop.f32.mrf.mxu0
  %v409 = vadd.f32 0.0, %v408
  %v410 = vpop.f32.mrf.mxu0
  %v411 = vadd.f32 0.0, %v410
  %412 = vmatmul.bf16.gmra.mxu0 %v281
  %v413 = vpop.f32.mrf.mxu0
  %v414 = vadd.f32 0.0, %v413
  %v415 = vpop.f32.mrf.mxu0
  %v416 = vadd.f32 0.0, %v415
  %417 = vmatmul.bf16.gmra.mxu0 %v284
  %v418 = vpop.f32.mrf.mxu0
  %v419 = vadd.f32 0.0, %v418
  %v420 = vpop.f32.mrf.mxu0
  %v421 = vadd.f32 0.0, %v420
  %422 = vmatmul.bf16.gmra.mxu0 %v287
  %v423 = vpop.f32.mrf.mxu0
  %v424 = vadd.f32 0.0, %v423
  %v425 = vpop.f32.mrf.mxu0
  %v426 = vadd.f32 0.0, %v425
  %427 = vmatmul.bf16.gmra.mxu0 %v290
  %v428 = vpop.f32.mrf.mxu0
  %v429 = vadd.f32 0.0, %v428
  %v430 = vpop.f32.mrf.mxu0
  %v431 = vadd.f32 0.0, %v430
  %432 = vmatmul.bf16.gmra.mxu0 %v293
  %v433 = vpop.f32.mrf.mxu0
  %v434 = vadd.f32 0.0, %v433
  %v435 = vpop.f32.mrf.mxu0
  %v436 = vadd.f32 0.0, %v435
  %437 = vmatmul.bf16.gmra.mxu0 %v296
  %v438 = vpop.f32.mrf.mxu0
  %v439 = vadd.f32 0.0, %v438
  %v440 = vpop.f32.mrf.mxu0
  %v441 = vadd.f32 0.0, %v440
  %442 = vmatmul.bf16.gmra.mxu0 %v299
  %v443 = vpop.f32.mrf.mxu0
  %v444 = vadd.f32 0.0, %v443
  %v445 = vpop.f32.mrf.mxu0
  %v446 = vadd.f32 0.0, %v445
  %447 = vmatmul.bf16.gmra.mxu0 %v302
  %v448 = vpop.f32.mrf.mxu0
  %v449 = vadd.f32 0.0, %v448
  %v450 = vpop.f32.mrf.mxu0
  %v451 = vadd.f32 0.0, %v450
  %452 = vmatmul.bf16.gmra.mxu0 %v305
  %v453 = vpop.f32.mrf.mxu0
  %v454 = vadd.f32 0.0, %v453
  %v455 = vpop.f32.mrf.mxu0
  %v456 = vadd.f32 0.0, %v455
  %457 = vmatmul.bf16.gmra.mxu0 %v308
  %v458 = vpop.f32.mrf.mxu0
  %v459 = vadd.f32 0.0, %v458
  %v460 = vpop.f32.mrf.mxu0
  %v461 = vadd.f32 0.0, %v460
  %462 = vmatmul.bf16.gmra.mxu0 %v311
  %v463 = vpop.f32.mrf.mxu0
  %v464 = vadd.f32 0.0, %v463
  %v465 = vpop.f32.mrf.mxu0
  %v466 = vadd.f32 0.0, %v465
  %467 = vmatmul.bf16.gmra.mxu0 %v314
  %v468 = vpop.f32.mrf.mxu0
  %v469 = vadd.f32 0.0, %v468
  %v470 = vpop.f32.mrf.mxu0
  %v471 = vadd.f32 0.0, %v470
  %472 = vmatmul.bf16.gmra.mxu0 %v317
  %v473 = vpop.f32.mrf.mxu0
  %v474 = vadd.f32 0.0, %v473
  %v475 = vpop.f32.mrf.mxu0
  %v476 = vadd.f32 0.0, %v475
  %477 = vmatmul.bf16.gmra.mxu0 %v320
  %v478 = vpop.f32.mrf.mxu0
  %v479 = vadd.f32 0.0, %v478
  %v480 = vpop.f32.mrf.mxu0
  %v481 = vadd.f32 0.0, %v480
  %482 = vmatmul.bf16.gmra.mxu0 %v323
  %v483 = vpop.f32.mrf.mxu0
  %v484 = vadd.f32 0.0, %v483
  %v485 = vpop.f32.mrf.mxu0
  %v486 = vadd.f32 0.0, %v485
  %487 = vmatmul.bf16.gmra.mxu0 %v326
  %v488 = vpop.f32.mrf.mxu0
  %v489 = vadd.f32 0.0, %v488
  %v490 = vpop.f32.mrf.mxu0
  %v491 = vadd.f32 0.0, %v490
  %492 = vmatmul.bf16.gmra.mxu0 %v329
  %v493 = vpop.f32.mrf.mxu0
  %v494 = vadd.f32 0.0, %v493
  %v495 = vpop.f32.mrf.mxu0
  %v496 = vadd.f32 0.0, %v495
  %497 = vmatmul.bf16.gmra.mxu0 %v332
  %v498 = vpop.f32.mrf.mxu0
  %v499 = vadd.f32 0.0, %v498
  %v500 = vpop.f32.mrf.mxu0
  %v501 = vadd.f32 0.0, %v500
  %502 = vmatmul.bf16.gmra.mxu0 %v335
  %v503 = vpop.f32.mrf.mxu0
  %v504 = vadd.f32 0.0, %v503
  %v505 = vpop.f32.mrf.mxu0
  %v506 = vadd.f32 0.0, %v505
  %507 = vmatmul.bf16.gmra.mxu0 %v338
  %v508 = vpop.f32.mrf.mxu0
  %v509 = vadd.f32 0.0, %v508
  %v510 = vpop.f32.mrf.mxu0
  %v511 = vadd.f32 0.0, %v510
  %512 = vdwg.mxu0
  %v513 = vld [vmem:[%s2] sm:$0x1]
  %v515 = vperm.slane %v513, 0
  %v517 = vmul.f32 %v354, %v515
  %v518 = vmul.f32 %v356, %v515
  %v519 = vmul.f32 %v359, %v515
  %v520 = vmul.f32 %v361, %v515
  %v521 = vmul.f32 %v364, %v515
  %v522 = vmul.f32 %v366, %v515
  %v523 = vmul.f32 %v369, %v515
  %v524 = vmul.f32 %v371, %v515
  %v525 = vmul.f32 %v374, %v515
  %v526 = vmul.f32 %v376, %v515
  %v527 = vmul.f32 %v379, %v515
  %v528 = vmul.f32 %v381, %v515
  %v529 = vmul.f32 %v384, %v515
  %v530 = vmul.f32 %v386, %v515
  %v531 = vmul.f32 %v389, %v515
  %v532 = vmul.f32 %v391, %v515
  %v533 = vmul.f32 %v394, %v515
  %v534 = vmul.f32 %v396, %v515
  %v535 = vmul.f32 %v399, %v515
  %v536 = vmul.f32 %v401, %v515
  %v537 = vmul.f32 %v404, %v515
  %v538 = vmul.f32 %v406, %v515
  %v539 = vmul.f32 %v409, %v515
  %v540 = vmul.f32 %v411, %v515
  %v541 = vmul.f32 %v414, %v515
  %v542 = vmul.f32 %v416, %v515
  %v543 = vmul.f32 %v419, %v515
  %v544 = vmul.f32 %v421, %v515
  %v545 = vmul.f32 %v424, %v515
  %v546 = vmul.f32 %v426, %v515
  %v547 = vmul.f32 %v429, %v515
  %v548 = vmul.f32 %v431, %v515
  %v549 = vmul.f32 %v434, %v515
  %v550 = vmul.f32 %v436, %v515
  %v551 = vmul.f32 %v439, %v515
  %v552 = vmul.f32 %v441, %v515
  %v553 = vmul.f32 %v444, %v515
  %v554 = vmul.f32 %v446, %v515
  %v555 = vmul.f32 %v449, %v515
  %v556 = vmul.f32 %v451, %v515
  %v557 = vmul.f32 %v454, %v515
  %v558 = vmul.f32 %v456, %v515
  %v559 = vmul.f32 %v459, %v515
  %v560 = vmul.f32 %v461, %v515
  %v561 = vmul.f32 %v464, %v515
  %v562 = vmul.f32 %v466, %v515
  %v563 = vmul.f32 %v469, %v515
  %v564 = vmul.f32 %v471, %v515
  %v565 = vmul.f32 %v474, %v515
  %v566 = vmul.f32 %v476, %v515
  %v567 = vmul.f32 %v479, %v515
  %v568 = vmul.f32 %v481, %v515
  %v569 = vmul.f32 %v484, %v515
  %v570 = vmul.f32 %v486, %v515
  %v571 = vmul.f32 %v489, %v515
  %v572 = vmul.f32 %v491, %v515
  %v573 = vmul.f32 %v494, %v515
  %v574 = vmul.f32 %v496, %v515
  %v575 = vmul.f32 %v499, %v515
  %v576 = vmul.f32 %v501, %v515
  %v577 = vmul.f32 %v504, %v515
  %v578 = vmul.f32 %v506, %v515
  %v579 = vmul.f32 %v509, %v515
  %v580 = vmul.f32 %v511, %v515
  %v581 = vld [vmem:[%s3] sm:$0x1]
  %v583 = vperm.slane %v581, 0
  %v585 = vadd.f32 %v517, %v583
  %v586 = vadd.f32 %v518, %v583
  %v587 = vadd.f32 %v519, %v583
  %v588 = vadd.f32 %v520, %v583
  %v589 = vadd.f32 %v521, %v583
  %v590 = vadd.f32 %v522, %v583
  %v591 = vadd.f32 %v523, %v583
  %v592 = vadd.f32 %v524, %v583
  %v593 = vadd.f32 %v525, %v583
  %v594 = vadd.f32 %v526, %v583
  %v595 = vadd.f32 %v527, %v583
  %v596 = vadd.f32 %v528, %v583
  %v597 = vadd.f32 %v529, %v583
  %v598 = vadd.f32 %v530, %v583
  %v599 = vadd.f32 %v531, %v583
  %v600 = vadd.f32 %v532, %v583
  %v601 = vadd.f32 %v533, %v583
  %v602 = vadd.f32 %v534, %v583
  %v603 = vadd.f32 %v535, %v583
  %v604 = vadd.f32 %v536, %v583
  %v605 = vadd.f32 %v537, %v583
  %v606 = vadd.f32 %v538, %v583
  %v607 = vadd.f32 %v539, %v583
  %v608 = vadd.f32 %v540, %v583
  %v609 = vadd.f32 %v541, %v583
  %v610 = vadd.f32 %v542, %v583
  %v611 = vadd.f32 %v543, %v583
  %v612 = vadd.f32 %v544, %v583
  %v613 = vadd.f32 %v545, %v583
  %v614 = vadd.f32 %v546, %v583
  %v615 = vadd.f32 %v547, %v583
  %v616 = vadd.f32 %v548, %v583
  %v617 = vadd.f32 %v549, %v583
  %v618 = vadd.f32 %v550, %v583
  %v619 = vadd.f32 %v551, %v583
  %v620 = vadd.f32 %v552, %v583
  %v621 = vadd.f32 %v553, %v583
  %v622 = vadd.f32 %v554, %v583
  %v623 = vadd.f32 %v555, %v583
  %v624 = vadd.f32 %v556, %v583
  %v625 = vadd.f32 %v557, %v583
  %v626 = vadd.f32 %v558, %v583
  %v627 = vadd.f32 %v559, %v583
  %v628 = vadd.f32 %v560, %v583
  %v629 = vadd.f32 %v561, %v583
  %v630 = vadd.f32 %v562, %v583
  %v631 = vadd.f32 %v563, %v583
  %v632 = vadd.f32 %v564, %v583
  %v633 = vadd.f32 %v565, %v583
  %v634 = vadd.f32 %v566, %v583
  %v635 = vadd.f32 %v567, %v583
  %v636 = vadd.f32 %v568, %v583
  %v637 = vadd.f32 %v569, %v583
  %v638 = vadd.f32 %v570, %v583
  %v639 = vadd.f32 %v571, %v583
  %v640 = vadd.f32 %v572, %v583
  %v641 = vadd.f32 %v573, %v583
  %v642 = vadd.f32 %v574, %v583
  %v643 = vadd.f32 %v575, %v583
  %v644 = vadd.f32 %v576, %v583
  %v645 = vadd.f32 %v577, %v583
  %v646 = vadd.f32 %v578, %v583
  %v647 = vadd.f32 %v579, %v583
  %v648 = vadd.f32 %v580, %v583
  %v649 = vsub.f32 0.0, %v585
  %v650 = vsub.f32 0.0, %v586
  %v651 = vsub.f32 0.0, %v587
  %v652 = vsub.f32 0.0, %v588
  %v653 = vsub.f32 0.0, %v589
  %v654 = vsub.f32 0.0, %v590
  %v655 = vsub.f32 0.0, %v591
  %v656 = vsub.f32 0.0, %v592
  %v657 = vsub.f32 0.0, %v593
  %v658 = vsub.f32 0.0, %v594
  %v659 = vsub.f32 0.0, %v595
  %v660 = vsub.f32 0.0, %v596
  %v661 = vsub.f32 0.0, %v597
  %v662 = vsub.f32 0.0, %v598
  %v663 = vsub.f32 0.0, %v599
  %v664 = vsub.f32 0.0, %v600
  %v665 = vsub.f32 0.0, %v601
  %v666 = vsub.f32 0.0, %v602
  %v667 = vsub.f32 0.0, %v603
  %v668 = vsub.f32 0.0, %v604
  %v669 = vsub.f32 0.0, %v605
  %v670 = vsub.f32 0.0, %v606
  %v671 = vsub.f32 0.0, %v607
  %v672 = vsub.f32 0.0, %v608
  %v673 = vsub.f32 0.0, %v609
  %v674 = vsub.f32 0.0, %v610
  %v675 = vsub.f32 0.0, %v611
  %v676 = vsub.f32 0.0, %v612
  %v677 = vsub.f32 0.0, %v613
  %v678 = vsub.f32 0.0, %v614
  %v679 = vsub.f32 0.0, %v615
  %v680 = vsub.f32 0.0, %v616
  %v681 = vsub.f32 0.0, %v617
  %v682 = vsub.f32 0.0, %v618
  %v683 = vsub.f32 0.0, %v619
  %v684 = vsub.f32 0.0, %v620
  %v685 = vsub.f32 0.0, %v621
  %v686 = vsub.f32 0.0, %v622
  %v687 = vsub.f32 0.0, %v623
  %v688 = vsub.f32 0.0, %v624
  %v689 = vsub.f32 0.0, %v625
  %v690 = vsub.f32 0.0, %v626
  %v691 = vsub.f32 0.0, %v627
  %v692 = vsub.f32 0.0, %v628
  %v693 = vsub.f32 0.0, %v629
  %v694 = vsub.f32 0.0, %v630
  %v695 = vsub.f32 0.0, %v631
  %v696 = vsub.f32 0.0, %v632
  %v697 = vsub.f32 0.0, %v633
  %v698 = vsub.f32 0.0, %v634
  %v699 = vsub.f32 0.0, %v635
  %v700 = vsub.f32 0.0, %v636
  %v701 = vsub.f32 0.0, %v637
  %v702 = vsub.f32 0.0, %v638
  %v703 = vsub.f32 0.0, %v639
  %v704 = vsub.f32 0.0, %v640
  %v705 = vsub.f32 0.0, %v641
  %v706 = vsub.f32 0.0, %v642
  %v707 = vsub.f32 0.0, %v643
  %v708 = vsub.f32 0.0, %v644
  %v709 = vsub.f32 0.0, %v645
  %v710 = vsub.f32 0.0, %v646
  %v711 = vsub.f32 0.0, %v647
  %v712 = vsub.f32 0.0, %v648
  %v713 = vmul.f32 %v649, 1.442695
  %v714 = vpow.pop %v713
  %v715 = vmul.f32 %v650, 1.442695
  %v716 = vpow.pop %v715
  %v717 = vmul.f32 %v651, 1.442695
  %v718 = vpow.pop %v717
  %v719 = vmul.f32 %v652, 1.442695
  %v720 = vpow.pop %v719
  %v721 = vmul.f32 %v653, 1.442695
  %v722 = vpow.pop %v721
  %v723 = vmul.f32 %v654, 1.442695
  %v724 = vpow.pop %v723
  %v725 = vmul.f32 %v655, 1.442695
  %v726 = vpow.pop %v725
  %v727 = vmul.f32 %v656, 1.442695
  %v728 = vpow.pop %v727
  %v729 = vmul.f32 %v657, 1.442695
  %v730 = vpow.pop %v729
  %v731 = vmul.f32 %v658, 1.442695
  %v732 = vpow.pop %v731
  %v733 = vmul.f32 %v659, 1.442695
  %v734 = vpow.pop %v733
  %v735 = vmul.f32 %v660, 1.442695
  %v736 = vpow.pop %v735
  %v737 = vmul.f32 %v661, 1.442695
  %v738 = vpow.pop %v737
  %v739 = vmul.f32 %v662, 1.442695
  %v740 = vpow.pop %v739
  %v741 = vmul.f32 %v663, 1.442695
  %v742 = vpow.pop %v741
  %v743 = vmul.f32 %v664, 1.442695
  %v744 = vpow.pop %v743
  %v745 = vmul.f32 %v665, 1.442695
  %v746 = vpow.pop %v745
  %v747 = vmul.f32 %v666, 1.442695
  %v748 = vpow.pop %v747
  %v749 = vmul.f32 %v667, 1.442695
  %v750 = vpow.pop %v749
  %v751 = vmul.f32 %v668, 1.442695
  %v752 = vpow.pop %v751
  %v753 = vmul.f32 %v669, 1.442695
  %v754 = vpow.pop %v753
  %v755 = vmul.f32 %v670, 1.442695
  %v756 = vpow.pop %v755
  %v757 = vmul.f32 %v671, 1.442695
  %v758 = vpow.pop %v757
  %v759 = vmul.f32 %v672, 1.442695
  %v760 = vpow.pop %v759
  %v761 = vmul.f32 %v673, 1.442695
  %v762 = vpow.pop %v761
  %v763 = vmul.f32 %v674, 1.442695
  %v764 = vpow.pop %v763
  %v765 = vmul.f32 %v675, 1.442695
  %v766 = vpow.pop %v765
  %v767 = vmul.f32 %v676, 1.442695
  %v768 = vpow.pop %v767
  %v769 = vmul.f32 %v677, 1.442695
  %v770 = vpow.pop %v769
  %v771 = vmul.f32 %v678, 1.442695
  %v772 = vpow.pop %v771
  %v773 = vmul.f32 %v679, 1.442695
  %v774 = vpow.pop %v773
  %v775 = vmul.f32 %v680, 1.442695
  %v776 = vpow.pop %v775
  %v777 = vmul.f32 %v681, 1.442695
  %v778 = vpow.pop %v777
  %v779 = vmul.f32 %v682, 1.442695
  %v780 = vpow.pop %v779
  %v781 = vmul.f32 %v683, 1.442695
  %v782 = vpow.pop %v781
  %v783 = vmul.f32 %v684, 1.442695
  %v784 = vpow.pop %v783
  %v785 = vmul.f32 %v685, 1.442695
  %v786 = vpow.pop %v785
  %v787 = vmul.f32 %v686, 1.442695
  %v788 = vpow.pop %v787
  %v789 = vmul.f32 %v687, 1.442695
  %v790 = vpow.pop %v789
  %v791 = vmul.f32 %v688, 1.442695
  %v792 = vpow.pop %v791
  %v793 = vmul.f32 %v689, 1.442695
  %v794 = vpow.pop %v793
  %v795 = vmul.f32 %v690, 1.442695
  %v796 = vpow.pop %v795
  %v797 = vmul.f32 %v691, 1.442695
  %v798 = vpow.pop %v797
  %v799 = vmul.f32 %v692, 1.442695
  %v800 = vpow.pop %v799
  %v801 = vmul.f32 %v693, 1.442695
  %v802 = vpow.pop %v801
  %v803 = vmul.f32 %v694, 1.442695
  %v804 = vpow.pop %v803
  %v805 = vmul.f32 %v695, 1.442695
  %v806 = vpow.pop %v805
  %v807 = vmul.f32 %v696, 1.442695
  %v808 = vpow.pop %v807
  %v809 = vmul.f32 %v697, 1.442695
  %v810 = vpow.pop %v809
  %v811 = vmul.f32 %v698, 1.442695
  %v812 = vpow.pop %v811
  %v813 = vmul.f32 %v699, 1.442695
  %v814 = vpow.pop %v813
  %v815 = vmul.f32 %v700, 1.442695
  %v816 = vpow.pop %v815
  %v817 = vmul.f32 %v701, 1.442695
  %v818 = vpow.pop %v817
  %v819 = vmul.f32 %v702, 1.442695
  %v820 = vpow.pop %v819
  %v821 = vmul.f32 %v703, 1.442695
  %v822 = vpow.pop %v821
  %v823 = vmul.f32 %v704, 1.442695
  %v824 = vpow.pop %v823
  %v825 = vmul.f32 %v705, 1.442695
  %v826 = vpow.pop %v825
  %v827 = vmul.f32 %v706, 1.442695
  %v828 = vpow.pop %v827
  %v829 = vmul.f32 %v707, 1.442695
  %v830 = vpow.pop %v829
  %v831 = vmul.f32 %v708, 1.442695
  %v832 = vpow.pop %v831
  %v833 = vmul.f32 %v709, 1.442695
  %v834 = vpow.pop %v833
  %v835 = vmul.f32 %v710, 1.442695
  %v836 = vpow.pop %v835
  %v837 = vmul.f32 %v711, 1.442695
  %v838 = vpow.pop %v837
  %v839 = vmul.f32 %v712, 1.442695
  %v840 = vpow.pop %v839
  %v841 = vadd.f32 %v714, 1.0
  %v842 = vadd.f32 %v716, 1.0
  %v843 = vadd.f32 %v718, 1.0
  %v844 = vadd.f32 %v720, 1.0
  %v845 = vadd.f32 %v722, 1.0
  %v846 = vadd.f32 %v724, 1.0
  %v847 = vadd.f32 %v726, 1.0
  %v848 = vadd.f32 %v728, 1.0
  %v849 = vadd.f32 %v730, 1.0
  %v850 = vadd.f32 %v732, 1.0
  %v851 = vadd.f32 %v734, 1.0
  %v852 = vadd.f32 %v736, 1.0
  %v853 = vadd.f32 %v738, 1.0
  %v854 = vadd.f32 %v740, 1.0
  %v855 = vadd.f32 %v742, 1.0
  %v856 = vadd.f32 %v744, 1.0
  %v857 = vadd.f32 %v746, 1.0
  %v858 = vadd.f32 %v748, 1.0
  %v859 = vadd.f32 %v750, 1.0
  %v860 = vadd.f32 %v752, 1.0
  %v861 = vadd.f32 %v754, 1.0
  %v862 = vadd.f32 %v756, 1.0
  %v863 = vadd.f32 %v758, 1.0
  %v864 = vadd.f32 %v760, 1.0
  %v865 = vadd.f32 %v762, 1.0
  %v866 = vadd.f32 %v764, 1.0
  %v867 = vadd.f32 %v766, 1.0
  %v868 = vadd.f32 %v768, 1.0
  %v869 = vadd.f32 %v770, 1.0
  %v870 = vadd.f32 %v772, 1.0
  %v871 = vadd.f32 %v774, 1.0
  %v872 = vadd.f32 %v776, 1.0
  %v873 = vadd.f32 %v778, 1.0
  %v874 = vadd.f32 %v780, 1.0
  %v875 = vadd.f32 %v782, 1.0
  %v876 = vadd.f32 %v784, 1.0
  %v877 = vadd.f32 %v786, 1.0
  %v878 = vadd.f32 %v788, 1.0
  %v879 = vadd.f32 %v790, 1.0
  %v880 = vadd.f32 %v792, 1.0
  %v881 = vadd.f32 %v794, 1.0
  %v882 = vadd.f32 %v796, 1.0
  %v883 = vadd.f32 %v798, 1.0
  %v884 = vadd.f32 %v800, 1.0
  %v885 = vadd.f32 %v802, 1.0
  %v886 = vadd.f32 %v804, 1.0
  %v887 = vadd.f32 %v806, 1.0
  %v888 = vadd.f32 %v808, 1.0
  %v889 = vadd.f32 %v810, 1.0
  %v890 = vadd.f32 %v812, 1.0
  %v891 = vadd.f32 %v814, 1.0
  %v892 = vadd.f32 %v816, 1.0
  %v893 = vadd.f32 %v818, 1.0
  %v894 = vadd.f32 %v820, 1.0
  %v895 = vadd.f32 %v822, 1.0
  %v896 = vadd.f32 %v824, 1.0
  %v897 = vadd.f32 %v826, 1.0
  %v898 = vadd.f32 %v828, 1.0
  %v899 = vadd.f32 %v830, 1.0
  %v900 = vadd.f32 %v832, 1.0
  %v901 = vadd.f32 %v834, 1.0
  %v902 = vadd.f32 %v836, 1.0
  %v903 = vadd.f32 %v838, 1.0
  %v904 = vadd.f32 %v840, 1.0
  %v905 = vrcp.pop %v841
  %v906 = vrcp.pop %v842
  %v907 = vrcp.pop %v843
  %v908 = vrcp.pop %v844
  %v909 = vrcp.pop %v845
  %v910 = vrcp.pop %v846
  %v911 = vrcp.pop %v847
  %v912 = vrcp.pop %v848
  %v913 = vrcp.pop %v849
  %v914 = vrcp.pop %v850
  %v915 = vrcp.pop %v851
  %v916 = vrcp.pop %v852
  %v917 = vrcp.pop %v853
  %v918 = vrcp.pop %v854
  %v919 = vrcp.pop %v855
  %v920 = vrcp.pop %v856
  %v921 = vrcp.pop %v857
  %v922 = vrcp.pop %v858
  %v923 = vrcp.pop %v859
  %v924 = vrcp.pop %v860
  %v925 = vrcp.pop %v861
  %v926 = vrcp.pop %v862
  %v927 = vrcp.pop %v863
  %v928 = vrcp.pop %v864
  %v929 = vrcp.pop %v865
  %v930 = vrcp.pop %v866
  %v931 = vrcp.pop %v867
  %v932 = vrcp.pop %v868
  %v933 = vrcp.pop %v869
  %v934 = vrcp.pop %v870
  %v935 = vrcp.pop %v871
  %v936 = vrcp.pop %v872
  %v937 = vrcp.pop %v873
  %v938 = vrcp.pop %v874
  %v939 = vrcp.pop %v875
  %v940 = vrcp.pop %v876
  %v941 = vrcp.pop %v877
  %v942 = vrcp.pop %v878
  %v943 = vrcp.pop %v879
  %v944 = vrcp.pop %v880
  %v945 = vrcp.pop %v881
  %v946 = vrcp.pop %v882
  %v947 = vrcp.pop %v883
  %v948 = vrcp.pop %v884
  %v949 = vrcp.pop %v885
  %v950 = vrcp.pop %v886
  %v951 = vrcp.pop %v887
  %v952 = vrcp.pop %v888
  %v953 = vrcp.pop %v889
  %v954 = vrcp.pop %v890
  %v955 = vrcp.pop %v891
  %v956 = vrcp.pop %v892
  %v957 = vrcp.pop %v893
  %v958 = vrcp.pop %v894
  %v959 = vrcp.pop %v895
  %v960 = vrcp.pop %v896
  %v961 = vrcp.pop %v897
  %v962 = vrcp.pop %v898
  %v963 = vrcp.pop %v899
  %v964 = vrcp.pop %v900
  %v965 = vrcp.pop %v901
  %v966 = vrcp.pop %v902
  %v967 = vrcp.pop %v903
  %v968 = vrcp.pop %v904
  %v969 = vmul.f32 %v585, %v905
  %v970 = vmul.f32 %v586, %v906
  %v971 = vmul.f32 %v587, %v907
  %v972 = vmul.f32 %v588, %v908
  %v973 = vmul.f32 %v589, %v909
  %v974 = vmul.f32 %v590, %v910
  %v975 = vmul.f32 %v591, %v911
  %v976 = vmul.f32 %v592, %v912
  %v977 = vmul.f32 %v593, %v913
  %v978 = vmul.f32 %v594, %v914
  %v979 = vmul.f32 %v595, %v915
  %v980 = vmul.f32 %v596, %v916
  %v981 = vmul.f32 %v597, %v917
  %v982 = vmul.f32 %v598, %v918
  %v983 = vmul.f32 %v599, %v919
  %v984 = vmul.f32 %v600, %v920
  %v985 = vmul.f32 %v601, %v921
  %v986 = vmul.f32 %v602, %v922
  %v987 = vmul.f32 %v603, %v923
  %v988 = vmul.f32 %v604, %v924
  %v989 = vmul.f32 %v605, %v925
  %v990 = vmul.f32 %v606, %v926
  %v991 = vmul.f32 %v607, %v927
  %v992 = vmul.f32 %v608, %v928
  %v993 = vmul.f32 %v609, %v929
  %v994 = vmul.f32 %v610, %v930
  %v995 = vmul.f32 %v611, %v931
  %v996 = vmul.f32 %v612, %v932
  %v997 = vmul.f32 %v613, %v933
  %v998 = vmul.f32 %v614, %v934
  %v999 = vmul.f32 %v615, %v935
  %v1000 = vmul.f32 %v616, %v936
  %v1001 = vmul.f32 %v617, %v937
  %v1002 = vmul.f32 %v618, %v938
  %v1003 = vmul.f32 %v619, %v939
  %v1004 = vmul.f32 %v620, %v940
  %v1005 = vmul.f32 %v621, %v941
  %v1006 = vmul.f32 %v622, %v942
  %v1007 = vmul.f32 %v623, %v943
  %v1008 = vmul.f32 %v624, %v944
  %v1009 = vmul.f32 %v625, %v945
  %v1010 = vmul.f32 %v626, %v946
  %v1011 = vmul.f32 %v627, %v947
  %v1012 = vmul.f32 %v628, %v948
  %v1013 = vmul.f32 %v629, %v949
  %v1014 = vmul.f32 %v630, %v950
  %v1015 = vmul.f32 %v631, %v951
  %v1016 = vmul.f32 %v632, %v952
  %v1017 = vmul.f32 %v633, %v953
  %v1018 = vmul.f32 %v634, %v954
  %v1019 = vmul.f32 %v635, %v955
  %v1020 = vmul.f32 %v636, %v956
  %v1021 = vmul.f32 %v637, %v957
  %v1022 = vmul.f32 %v638, %v958
  %v1023 = vmul.f32 %v639, %v959
  %v1024 = vmul.f32 %v640, %v960
  %v1025 = vmul.f32 %v641, %v961
  %v1026 = vmul.f32 %v642, %v962
  %v1027 = vmul.f32 %v643, %v963
  %v1028 = vmul.f32 %v644, %v964
  %v1029 = vmul.f32 %v645, %v965
  %v1030 = vmul.f32 %v646, %v966
  %v1031 = vmul.f32 %v647, %v967
  %v1032 = vmul.f32 %v648, %v968
  %v1033 = vpack.c.bf16 %v969, %v969
  %v1034 = vpack.c.bf16 %v970, %v970
  %v1035 = vpack.c.bf16 %v971, %v971
  %v1036 = vpack.c.bf16 %v972, %v972
  %v1037 = vpack.c.bf16 %v973, %v973
  %v1038 = vpack.c.bf16 %v974, %v974
  %v1039 = vpack.c.bf16 %v975, %v975
  %v1040 = vpack.c.bf16 %v976, %v976
  %v1041 = vpack.c.bf16 %v977, %v977
  %v1042 = vpack.c.bf16 %v978, %v978
  %v1043 = vpack.c.bf16 %v979, %v979
  %v1044 = vpack.c.bf16 %v980, %v980
  %v1045 = vpack.c.bf16 %v981, %v981
  %v1046 = vpack.c.bf16 %v982, %v982
  %v1047 = vpack.c.bf16 %v983, %v983
  %v1048 = vpack.c.bf16 %v984, %v984
  %v1049 = vpack.c.bf16 %v985, %v985
  %v1050 = vpack.c.bf16 %v986, %v986
  %v1051 = vpack.c.bf16 %v987, %v987
  %v1052 = vpack.c.bf16 %v988, %v988
  %v1053 = vpack.c.bf16 %v989, %v989
  %v1054 = vpack.c.bf16 %v990, %v990
  %v1055 = vpack.c.bf16 %v991, %v991
  %v1056 = vpack.c.bf16 %v992, %v992
  %v1057 = vpack.c.bf16 %v993, %v993
  %v1058 = vpack.c.bf16 %v994, %v994
  %v1059 = vpack.c.bf16 %v995, %v995
  %v1060 = vpack.c.bf16 %v996, %v996
  %v1061 = vpack.c.bf16 %v997, %v997
  %v1062 = vpack.c.bf16 %v998, %v998
  %v1063 = vpack.c.bf16 %v999, %v999
  %v1064 = vpack.c.bf16 %v1000, %v1000
  %v1065 = vpack.c.bf16 %v1001, %v1001
  %v1066 = vpack.c.bf16 %v1002, %v1002
  %v1067 = vpack.c.bf16 %v1003, %v1003
  %v1068 = vpack.c.bf16 %v1004, %v1004
  %v1069 = vpack.c.bf16 %v1005, %v1005
  %v1070 = vpack.c.bf16 %v1006, %v1006
  %v1071 = vpack.c.bf16 %v1007, %v1007
  %v1072 = vpack.c.bf16 %v1008, %v1008
  %v1073 = vpack.c.bf16 %v1009, %v1009
  %v1074 = vpack.c.bf16 %v1010, %v1010
  %v1075 = vpack.c.bf16 %v1011, %v1011
  %v1076 = vpack.c.bf16 %v1012, %v1012
  %v1077 = vpack.c.bf16 %v1013, %v1013
  %v1078 = vpack.c.bf16 %v1014, %v1014
  %v1079 = vpack.c.bf16 %v1015, %v1015
  %v1080 = vpack.c.bf16 %v1016, %v1016
  %v1081 = vpack.c.bf16 %v1017, %v1017
  %v1082 = vpack.c.bf16 %v1018, %v1018
  %v1083 = vpack.c.bf16 %v1019, %v1019
  %v1084 = vpack.c.bf16 %v1020, %v1020
  %v1085 = vpack.c.bf16 %v1021, %v1021
  %v1086 = vpack.c.bf16 %v1022, %v1022
  %v1087 = vpack.c.bf16 %v1023, %v1023
  %v1088 = vpack.c.bf16 %v1024, %v1024
  %v1089 = vpack.c.bf16 %v1025, %v1025
  %v1090 = vpack.c.bf16 %v1026, %v1026
  %v1091 = vpack.c.bf16 %v1027, %v1027
  %v1092 = vpack.c.bf16 %v1028, %v1028
  %v1093 = vpack.c.bf16 %v1029, %v1029
  %v1094 = vpack.c.bf16 %v1030, %v1030
  %v1095 = vpack.c.bf16 %v1031, %v1031
  %v1096 = vpack.c.bf16 %v1032, %v1032
  %vm1097 = vcmask 60416
  %1098 = vst.msk [vmem:[%s4] sm:$0xf] %vm1097, %v1033
  %1099 = vst.msk [vmem:[%s4 + $0x4] sm:$0xf] %vm1097, %v1034
  %1100 = vst.msk [vmem:[%s4 + $0x8] sm:$0xf] %vm1097, %v1035
  %1101 = vst.msk [vmem:[%s4 + $0xc] sm:$0xf] %vm1097, %v1036
  %1102 = vst.msk [vmem:[%s4 + $0x10] sm:$0xf] %vm1097, %v1037
  %1103 = vst.msk [vmem:[%s4 + $0x14] sm:$0xf] %vm1097, %v1038
  %1104 = vst.msk [vmem:[%s4 + $0x18] sm:$0xf] %vm1097, %v1039
  %1105 = vst.msk [vmem:[%s4 + $0x1c] sm:$0xf] %vm1097, %v1040
  %1106 = vst.msk [vmem:[%s4 + $0x20] sm:$0xf] %vm1097, %v1041
  %1107 = vst.msk [vmem:[%s4 + $0x24] sm:$0xf] %vm1097, %v1042
  %1108 = vst.msk [vmem:[%s4 + $0x28] sm:$0xf] %vm1097, %v1043
  %1109 = vst.msk [vmem:[%s4 + $0x2c] sm:$0xf] %vm1097, %v1044
  %1110 = vst.msk [vmem:[%s4 + $0x30] sm:$0xf] %vm1097, %v1045
  %1111 = vst.msk [vmem:[%s4 + $0x34] sm:$0xf] %vm1097, %v1046
  %1112 = vst.msk [vmem:[%s4 + $0x38] sm:$0xf] %vm1097, %v1047
  %1113 = vst.msk [vmem:[%s4 + $0x3c] sm:$0xf] %vm1097, %v1048
  %1114 = vst.msk [vmem:[%s4 + $0x40] sm:$0xf] %vm1097, %v1049
  %1115 = vst.msk [vmem:[%s4 + $0x44] sm:$0xf] %vm1097, %v1050
  %1116 = vst.msk [vmem:[%s4 + $0x48] sm:$0xf] %vm1097, %v1051
  %1117 = vst.msk [vmem:[%s4 + $0x4c] sm:$0xf] %vm1097, %v1052
  %1118 = vst.msk [vmem:[%s4 + $0x50] sm:$0xf] %vm1097, %v1053
  %1119 = vst.msk [vmem:[%s4 + $0x54] sm:$0xf] %vm1097, %v1054
  %1120 = vst.msk [vmem:[%s4 + $0x58] sm:$0xf] %vm1097, %v1055
  %1121 = vst.msk [vmem:[%s4 + $0x5c] sm:$0xf] %vm1097, %v1056
  %1122 = vst.msk [vmem:[%s4 + $0x60] sm:$0xf] %vm1097, %v1057
  %1123 = vst.msk [vmem:[%s4 + $0x64] sm:$0xf] %vm1097, %v1058
  %1124 = vst.msk [vmem:[%s4 + $0x68] sm:$0xf] %vm1097, %v1059
  %1125 = vst.msk [vmem:[%s4 + $0x6c] sm:$0xf] %vm1097, %v1060
  %1126 = vst.msk [vmem:[%s4 + $0x70] sm:$0xf] %vm1097, %v1061
  %1127 = vst.msk [vmem:[%s4 + $0x74] sm:$0xf] %vm1097, %v1062
  %1128 = vst.msk [vmem:[%s4 + $0x78] sm:$0xf] %vm1097, %v1063
  %1129 = vst.msk [vmem:[%s4 + $0x7c] sm:$0xf] %vm1097, %v1064
  %1130 = vst.msk [vmem:[%s4 + $0x80] sm:$0xf] %vm1097, %v1065
  %1131 = vst.msk [vmem:[%s4 + $0x84] sm:$0xf] %vm1097, %v1066
  %1132 = vst.msk [vmem:[%s4 + $0x88] sm:$0xf] %vm1097, %v1067
  %1133 = vst.msk [vmem:[%s4 + $0x8c] sm:$0xf] %vm1097, %v1068
  %1134 = vst.msk [vmem:[%s4 + $0x90] sm:$0xf] %vm1097, %v1069
  %1135 = vst.msk [vmem:[%s4 + $0x94] sm:$0xf] %vm1097, %v1070
  %1136 = vst.msk [vmem:[%s4 + $0x98] sm:$0xf] %vm1097, %v1071
  %1137 = vst.msk [vmem:[%s4 + $0x9c] sm:$0xf] %vm1097, %v1072
  %1138 = vst.msk [vmem:[%s4 + $0xa0] sm:$0xf] %vm1097, %v1073
  %1139 = vst.msk [vmem:[%s4 + $0xa4] sm:$0xf] %vm1097, %v1074
  %1140 = vst.msk [vmem:[%s4 + $0xa8] sm:$0xf] %vm1097, %v1075
  %1141 = vst.msk [vmem:[%s4 + $0xac] sm:$0xf] %vm1097, %v1076
  %1142 = vst.msk [vmem:[%s4 + $0xb0] sm:$0xf] %vm1097, %v1077
  %1143 = vst.msk [vmem:[%s4 + $0xb4] sm:$0xf] %vm1097, %v1078
  %1144 = vst.msk [vmem:[%s4 + $0xb8] sm:$0xf] %vm1097, %v1079
  %1145 = vst.msk [vmem:[%s4 + $0xbc] sm:$0xf] %vm1097, %v1080
  %1146 = vst.msk [vmem:[%s4 + $0xc0] sm:$0xf] %vm1097, %v1081
  %1147 = vst.msk [vmem:[%s4 + $0xc4] sm:$0xf] %vm1097, %v1082
  %1148 = vst.msk [vmem:[%s4 + $0xc8] sm:$0xf] %vm1097, %v1083
  %1149 = vst.msk [vmem:[%s4 + $0xcc] sm:$0xf] %vm1097, %v1084
  %1150 = vst.msk [vmem:[%s4 + $0xd0] sm:$0xf] %vm1097, %v1085
  %1151 = vst.msk [vmem:[%s4 + $0xd4] sm:$0xf] %vm1097, %v1086
  %1152 = vst.msk [vmem:[%s4 + $0xd8] sm:$0xf] %vm1097, %v1087
  %1153 = vst.msk [vmem:[%s4 + $0xdc] sm:$0xf] %vm1097, %v1088
  %1154 = vst.msk [vmem:[%s4 + $0xe0] sm:$0xf] %vm1097, %v1089
  %1155 = vst.msk [vmem:[%s4 + $0xe4] sm:$0xf] %vm1097, %v1090
  %1156 = vst.msk [vmem:[%s4 + $0xe8] sm:$0xf] %vm1097, %v1091
  %1157 = vst.msk [vmem:[%s4 + $0xec] sm:$0xf] %vm1097, %v1092
  %1158 = vst.msk [vmem:[%s4 + $0xf0] sm:$0xf] %vm1097, %v1093
  %1159 = vst.msk [vmem:[%s4 + $0xf4] sm:$0xf] %vm1097, %v1094
  %1160 = vst.msk [vmem:[%s4 + $0xf8] sm:$0xf] %vm1097, %v1095
  %1161 = vst.msk [vmem:[%s4 + $0xfc] sm:$0xf] %vm1097, %v1096
  // Predicated region
  $region18: #{csp_layer_forward.3} parent=0 // pred_check
    _
  $region19: #{csp_layer_forward.3} parent=0 // pred_check_branch
    %1163 = sbr.rel (0) target = $region21
  $region20: #{csp_layer_forward.3} parent=0 // pred_region
    _
  $region21: #{csp_layer_forward.3} parent=0 // pred_fallthru
    _
  // Predicated region
  $region22: #{csp_layer_forward.3} parent=0 // pred_check
    _
  $region23: #{csp_layer_forward.3} parent=0 // pred_check_branch
    %1165 = sbr.rel (0) target = $region25
  $region24: #{csp_layer_forward.3} parent=0 // pred_region
    _
  $region25: #{csp_layer_forward.3} parent=0 // pred_fallthru
    _

// kernel: csp_layer_forward.5
$region0: #{csp_layer_forward.5}
  #allocation0 [shape = 'u32[]', space=smem, size = 0x4, offset = 0x4, fixed_abs, tag = 'smem constant byte address 0x4 - core index']
  #allocation1 [shape = 'u32[72,128]{1,0:T(1,128)}', space=vmem, size = 0x9000, scoped, tag = 'internal scratch']
  %s0 = inlined_call_operand.vmem [shape: bf16[512,4], index: 0, kind: input, shape index: {}]
  %s1 = inlined_call_operand.vmem [shape: bf16[512,4], index: 1, kind: input, shape index: {}]
  %s2 = inlined_call_operand.vmem [shape: bf16[8,8], index: 2, kind: input, shape index: {}]
  %s3 = inlined_call_operand.vmem [shape: f32[1,8], index: 3, kind: input, shape index: {}]
  %s4 = inlined_call_operand.vmem [shape: f32[1,8], index: 4, kind: input, shape index: {}]
  %s5 = inlined_call_operand.vmem [shape: f32[512,8], index: 5, kind: output, shape index: {}]
  %s6 = sld [smem:[#allocation0]]
  $region30: #{csp_layer_forward.5} parent=0
    _
  %s8 = ssub.s32 1, %s6
  %s9 = scalar_select 0, %s8, %s6
  // Predicated region
  $region2: #{csp_layer_forward.5} parent=0 // pred_check
    _
  $region3: #{csp_layer_forward.5} parent=0 // pred_check_branch
    %11 = sbr.rel (0) target = $region5
  $region4: #{csp_layer_forward.5} parent=0 // pred_region
    _
  $region5: #{csp_layer_forward.5} parent=0 // pred_fallthru
    _
  // Predicated region
  $region6: #{csp_layer_forward.5} parent=0 // pred_check
    _
  $region7: #{csp_layer_forward.5} parent=0 // pred_check_branch
    %13 = sbr.rel (0) target = $region9
  $region8: #{csp_layer_forward.5} parent=0 // pred_region
    _
  $region9: #{csp_layer_forward.5} parent=0 // pred_fallthru
    _
  // Predicated region
  $region10: #{csp_layer_forward.5} parent=0 // pred_check
    _
  $region11: #{csp_layer_forward.5} parent=0 // pred_check_branch
    %15 = sbr.rel (0) target = $region13
  $region12: #{csp_layer_forward.5} parent=0 // pred_region
    _
  $region13: #{csp_layer_forward.5} parent=0 // pred_fallthru
    _
  // Predicated region
  $region14: #{csp_layer_forward.5} parent=0 // pred_check
    _
  $region15: #{csp_layer_forward.5} parent=0 // pred_check_branch
    %17 = sbr.rel (0) target = $region17
  $region16: #{csp_layer_forward.5} parent=0 // pred_region
    _
  $region17: #{csp_layer_forward.5} parent=0 // pred_fallthru
    _
  // Predicated region
  $region18: #{csp_layer_forward.5} parent=0 // pred_check
    _
  $region19: #{csp_layer_forward.5} parent=0 // pred_check_branch
    %19 = sbr.rel (0) target = $region21
  $region20: #{csp_layer_forward.5} parent=0 // pred_region
    _
  $region21: #{csp_layer_forward.5} parent=0 // pred_fallthru
    _
  %v21 = vld [vmem:[%s0] sm:$0xf]
  %v22 = vld [vmem:[%s0 + $0x4] sm:$0xf]
  %v23 = vld [vmem:[%s0 + $0x8] sm:$0xf]
  %v24 = vld [vmem:[%s0 + $0xc] sm:$0xf]
  %v25 = vld [vmem:[%s0 + $0x10] sm:$0xf]
  %v26 = vld [vmem:[%s0 + $0x14] sm:$0xf]
  %v27 = vld [vmem:[%s0 + $0x18] sm:$0xf]
  %v28 = vld [vmem:[%s0 + $0x1c] sm:$0xf]
  %v29 = vld [vmem:[%s0 + $0x20] sm:$0xf]
  %v30 = vld [vmem:[%s0 + $0x24] sm:$0xf]
  %v31 = vld [vmem:[%s0 + $0x28] sm:$0xf]
  %v32 = vld [vmem:[%s0 + $0x2c] sm:$0xf]
  %v33 = vld [vmem:[%s0 + $0x30] sm:$0xf]
  %v34 = vld [vmem:[%s0 + $0x34] sm:$0xf]
  %v35 = vld [vmem:[%s0 + $0x38] sm:$0xf]
  %v36 = vld [vmem:[%s0 + $0x3c] sm:$0xf]
  %v37 = vld [vmem:[%s0 + $0x40] sm:$0xf]
  %v38 = vld [vmem:[%s0 + $0x44] sm:$0xf]
  %v39 = vld [vmem:[%s0 + $0x48] sm:$0xf]
  %v40 = vld [vmem:[%s0 + $0x4c] sm:$0xf]
  %v41 = vld [vmem:[%s0 + $0x50] sm:$0xf]
  %v42 = vld [vmem:[%s0 + $0x54] sm:$0xf]
  %v43 = vld [vmem:[%s0 + $0x58] sm:$0xf]
  %v44 = vld [vmem:[%s0 + $0x5c] sm:$0xf]
  %v45 = vld [vmem:[%s0 + $0x60] sm:$0xf]
  %v46 = vld [vmem:[%s0 + $0x64] sm:$0xf]
  %v47 = vld [vmem:[%s0 + $0x68] sm:$0xf]
  %v48 = vld [vmem:[%s0 + $0x6c] sm:$0xf]
  %v49 = vld [vmem:[%s0 + $0x70] sm:$0xf]
  %v50 = vld [vmem:[%s0 + $0x74] sm:$0xf]
  %v51 = vld [vmem:[%s0 + $0x78] sm:$0xf]
  %v52 = vld [vmem:[%s0 + $0x7c] sm:$0xf]
  %v53 = vld [vmem:[%s0 + $0x80] sm:$0xf]
  %v54 = vld [vmem:[%s0 + $0x84] sm:$0xf]
  %v55 = vld [vmem:[%s0 + $0x88] sm:$0xf]
  %v56 = vld [vmem:[%s0 + $0x8c] sm:$0xf]
  %v57 = vld [vmem:[%s0 + $0x90] sm:$0xf]
  %v58 = vld [vmem:[%s0 + $0x94] sm:$0xf]
  %v59 = vld [vmem:[%s0 + $0x98] sm:$0xf]
  %v60 = vld [vmem:[%s0 + $0x9c] sm:$0xf]
  %v61 = vld [vmem:[%s0 + $0xa0] sm:$0xf]
  %v62 = vld [vmem:[%s0 + $0xa4] sm:$0xf]
  %v63 = vld [vmem:[%s0 + $0xa8] sm:$0xf]
  %v64 = vld [vmem:[%s0 + $0xac] sm:$0xf]
  %v65 = vld [vmem:[%s0 + $0xb0] sm:$0xf]
  %v66 = vld [vmem:[%s0 + $0xb4] sm:$0xf]
  %v67 = vld [vmem:[%s0 + $0xb8] sm:$0xf]
  %v68 = vld [vmem:[%s0 + $0xbc] sm:$0xf]
  %v69 = vld [vmem:[%s0 + $0xc0] sm:$0xf]
  %v70 = vld [vmem:[%s0 + $0xc4] sm:$0xf]
  %v71 = vld [vmem:[%s0 + $0xc8] sm:$0xf]
  %v72 = vld [vmem:[%s0 + $0xcc] sm:$0xf]
  %v73 = vld [vmem:[%s0 + $0xd0] sm:$0xf]
  %v74 = vld [vmem:[%s0 + $0xd4] sm:$0xf]
  %v75 = vld [vmem:[%s0 + $0xd8] sm:$0xf]
  %v76 = vld [vmem:[%s0 + $0xdc] sm:$0xf]
  %v77 = vld [vmem:[%s0 + $0xe0] sm:$0xf]
  %v78 = vld [vmem:[%s0 + $0xe4] sm:$0xf]
  %v79 = vld [vmem:[%s0 + $0xe8] sm:$0xf]
  %v80 = vld [vmem:[%s0 + $0xec] sm:$0xf]
  %v81 = vld [vmem:[%s0 + $0xf0] sm:$0xf]
  %v82 = vld [vmem:[%s0 + $0xf4] sm:$0xf]
  %v83 = vld [vmem:[%s0 + $0xf8] sm:$0xf]
  %v84 = vld [vmem:[%s0 + $0xfc] sm:$0xf]
  %v85 = vld [vmem:[%s1] sm:$0xf]
  %v86 = vld [vmem:[%s1 + $0x4] sm:$0xf]
  %v87 = vld [vmem:[%s1 + $0x8] sm:$0xf]
  %v88 = vld [vmem:[%s1 + $0xc] sm:$0xf]
  %v89 = vld [vmem:[%s1 + $0x10] sm:$0xf]
  %v90 = vld [vmem:[%s1 + $0x14] sm:$0xf]
  %v91 = vld [vmem:[%s1 + $0x18] sm:$0xf]
  %v92 = vld [vmem:[%s1 + $0x1c] sm:$0xf]
  %v93 = vld [vmem:[%s1 + $0x20] sm:$0xf]
  %v94 = vld [vmem:[%s1 + $0x24] sm:$0xf]
  %v95 = vld [vmem:[%s1 + $0x28] sm:$0xf]
  %v96 = vld [vmem:[%s1 + $0x2c] sm:$0xf]
  %v97 = vld [vmem:[%s1 + $0x30] sm:$0xf]
  %v98 = vld [vmem:[%s1 + $0x34] sm:$0xf]
  %v99 = vld [vmem:[%s1 + $0x38] sm:$0xf]
  %v100 = vld [vmem:[%s1 + $0x3c] sm:$0xf]
  %v101 = vld [vmem:[%s1 + $0x40] sm:$0xf]
  %v102 = vld [vmem:[%s1 + $0x44] sm:$0xf]
  %v103 = vld [vmem:[%s1 + $0x48] sm:$0xf]
  %v104 = vld [vmem:[%s1 + $0x4c] sm:$0xf]
  %v105 = vld [vmem:[%s1 + $0x50] sm:$0xf]
  %v106 = vld [vmem:[%s1 + $0x54] sm:$0xf]
  %v107 = vld [vmem:[%s1 + $0x58] sm:$0xf]
  %v108 = vld [vmem:[%s1 + $0x5c] sm:$0xf]
  %v109 = vld [vmem:[%s1 + $0x60] sm:$0xf]
  %v110 = vld [vmem:[%s1 + $0x64] sm:$0xf]
  %v111 = vld [vmem:[%s1 + $0x68] sm:$0xf]
  %v112 = vld [vmem:[%s1 + $0x6c] sm:$0xf]
  %v113 = vld [vmem:[%s1 + $0x70] sm:$0xf]
  %v114 = vld [vmem:[%s1 + $0x74] sm:$0xf]
  %v115 = vld [vmem:[%s1 + $0x78] sm:$0xf]
  %v116 = vld [vmem:[%s1 + $0x7c] sm:$0xf]
  %v117 = vld [vmem:[%s1 + $0x80] sm:$0xf]
  %v118 = vld [vmem:[%s1 + $0x84] sm:$0xf]
  %v119 = vld [vmem:[%s1 + $0x88] sm:$0xf]
  %v120 = vld [vmem:[%s1 + $0x8c] sm:$0xf]
  %v121 = vld [vmem:[%s1 + $0x90] sm:$0xf]
  %v122 = vld [vmem:[%s1 + $0x94] sm:$0xf]
  %v123 = vld [vmem:[%s1 + $0x98] sm:$0xf]
  %v124 = vld [vmem:[%s1 + $0x9c] sm:$0xf]
  %v125 = vld [vmem:[%s1 + $0xa0] sm:$0xf]
  %v126 = vld [vmem:[%s1 + $0xa4] sm:$0xf]
  %v127 = vld [vmem:[%s1 + $0xa8] sm:$0xf]
  %v128 = vld [vmem:[%s1 + $0xac] sm:$0xf]
  %v129 = vld [vmem:[%s1 + $0xb0] sm:$0xf]
  %v130 = vld [vmem:[%s1 + $0xb4] sm:$0xf]
  %v131 = vld [vmem:[%s1 + $0xb8] sm:$0xf]
  %v132 = vld [vmem:[%s1 + $0xbc] sm:$0xf]
  %v133 = vld [vmem:[%s1 + $0xc0] sm:$0xf]
  %v134 = vld [vmem:[%s1 + $0xc4] sm:$0xf]
  %v135 = vld [vmem:[%s1 + $0xc8] sm:$0xf]
  %v136 = vld [vmem:[%s1 + $0xcc] sm:$0xf]
  %v137 = vld [vmem:[%s1 + $0xd0] sm:$0xf]
  %v138 = vld [vmem:[%s1 + $0xd4] sm:$0xf]
  %v139 = vld [vmem:[%s1 + $0xd8] sm:$0xf]
  %v140 = vld [vmem:[%s1 + $0xdc] sm:$0xf]
  %v141 = vld [vmem:[%s1 + $0xe0] sm:$0xf]
  %v142 = vld [vmem:[%s1 + $0xe4] sm:$0xf]
  %v143 = vld [vmem:[%s1 + $0xe8] sm:$0xf]
  %v144 = vld [vmem:[%s1 + $0xec] sm:$0xf]
  %v145 = vld [vmem:[%s1 + $0xf0] sm:$0xf]
  %v146 = vld [vmem:[%s1 + $0xf4] sm:$0xf]
  %v147 = vld [vmem:[%s1 + $0xf8] sm:$0xf]
  %v148 = vld [vmem:[%s1 + $0xfc] sm:$0xf]
  %v213 = vunpack.c.l.b16 %v21
  %v214 = vunpack.c.l.b16 %v22
  %v215 = vunpack.c.l.b16 %v23
  %v216 = vunpack.c.l.b16 %v24
  %v217 = vunpack.c.l.b16 %v25
  %v218 = vunpack.c.l.b16 %v26
  %v219 = vunpack.c.l.b16 %v27
  %v220 = vunpack.c.l.b16 %v28
  %v221 = vunpack.c.l.b16 %v29
  %v222 = vunpack.c.l.b16 %v30
  %v223 = vunpack.c.l.b16 %v31
  %v224 = vunpack.c.l.b16 %v32
  %v225 = vunpack.c.l.b16 %v33
  %v226 = vunpack.c.l.b16 %v34
  %v227 = vunpack.c.l.b16 %v35
  %v228 = vunpack.c.l.b16 %v36
  %v229 = vunpack.c.l.b16 %v37
  %v230 = vunpack.c.l.b16 %v38
  %v231 = vunpack.c.l.b16 %v39
  %v232 = vunpack.c.l.b16 %v40
  %v233 = vunpack.c.l.b16 %v41
  %v234 = vunpack.c.l.b16 %v42
  %v235 = vunpack.c.l.b16 %v43
  %v236 = vunpack.c.l.b16 %v44
  %v237 = vunpack.c.l.b16 %v45
  %v238 = vunpack.c.l.b16 %v46
  %v239 = vunpack.c.l.b16 %v47
  %v240 = vunpack.c.l.b16 %v48
  %v241 = vunpack.c.l.b16 %v49
  %v242 = vunpack.c.l.b16 %v50
  %v243 = vunpack.c.l.b16 %v51
  %v244 = vunpack.c.l.b16 %v52
  %v245 = vunpack.c.l.b16 %v53
  %v246 = vunpack.c.l.b16 %v54
  %v247 = vunpack.c.l.b16 %v55
  %v248 = vunpack.c.l.b16 %v56
  %v249 = vunpack.c.l.b16 %v57
  %v250 = vunpack.c.l.b16 %v58
  %v251 = vunpack.c.l.b16 %v59
  %v252 = vunpack.c.l.b16 %v60
  %v253 = vunpack.c.l.b16 %v61
  %v254 = vunpack.c.l.b16 %v62
  %v255 = vunpack.c.l.b16 %v63
  %v256 = vunpack.c.l.b16 %v64
  %v257 = vunpack.c.l.b16 %v65
  %v258 = vunpack.c.l.b16 %v66
  %v259 = vunpack.c.l.b16 %v67
  %v260 = vunpack.c.l.b16 %v68
  %v261 = vunpack.c.l.b16 %v69
  %v262 = vunpack.c.l.b16 %v70
  %v263 = vunpack.c.l.b16 %v71
  %v264 = vunpack.c.l.b16 %v72
  %v265 = vunpack.c.l.b16 %v73
  %v266 = vunpack.c.l.b16 %v74
  %v267 = vunpack.c.l.b16 %v75
  %v268 = vunpack.c.l.b16 %v76
  %v269 = vunpack.c.l.b16 %v77
  %v270 = vunpack.c.l.b16 %v78
  %v271 = vunpack.c.l.b16 %v79
  %v272 = vunpack.c.l.b16 %v80
  %v273 = vunpack.c.l.b16 %v81
  %v274 = vunpack.c.l.b16 %v82
  %v275 = vunpack.c.l.b16 %v83
  %v276 = vunpack.c.l.b16 %v84
  %v277 = vpack.c.b16 %v214, %v213
  %v278 = vpack.c.b16 %v216, %v215
  %v279 = vpack.c.b16 %v218, %v217
  %v280 = vpack.c.b16 %v220, %v219
  %v281 = vpack.c.b16 %v222, %v221
  %v282 = vpack.c.b16 %v224, %v223
  %v283 = vpack.c.b16 %v226, %v225
  %v284 = vpack.c.b16 %v228, %v227
  %v285 = vpack.c.b16 %v230, %v229
  %v286 = vpack.c.b16 %v232, %v231
  %v287 = vpack.c.b16 %v234, %v233
  %v288 = vpack.c.b16 %v236, %v235
  %v289 = vpack.c.b16 %v238, %v237
  %v290 = vpack.c.b16 %v240, %v239
  %v291 = vpack.c.b16 %v242, %v241
  %v292 = vpack.c.b16 %v244, %v243
  %v293 = vpack.c.b16 %v246, %v245
  %v294 = vpack.c.b16 %v248, %v247
  %v295 = vpack.c.b16 %v250, %v249
  %v296 = vpack.c.b16 %v252, %v251
  %v297 = vpack.c.b16 %v254, %v253
  %v298 = vpack.c.b16 %v256, %v255
  %v299 = vpack.c.b16 %v258, %v257
  %v300 = vpack.c.b16 %v260, %v259
  %v301 = vpack.c.b16 %v262, %v261
  %v302 = vpack.c.b16 %v264, %v263
  %v303 = vpack.c.b16 %v266, %v265
  %v304 = vpack.c.b16 %v268, %v267
  %v305 = vpack.c.b16 %v270, %v269
  %v306 = vpack.c.b16 %v272, %v271
  %v307 = vpack.c.b16 %v274, %v273
  %v308 = vpack.c.b16 %v276, %v275
  %v373 = vunpack.c.l.b16 %v85
  %v374 = vunpack.c.l.b16 %v86
  %v375 = vunpack.c.l.b16 %v87
  %v376 = vunpack.c.l.b16 %v88
  %v377 = vunpack.c.l.b16 %v89
  %v378 = vunpack.c.l.b16 %v90
  %v379 = vunpack.c.l.b16 %v91
  %v380 = vunpack.c.l.b16 %v92
  %v381 = vunpack.c.l.b16 %v93
  %v382 = vunpack.c.l.b16 %v94
  %v383 = vunpack.c.l.b16 %v95
  %v384 = vunpack.c.l.b16 %v96
  %v385 = vunpack.c.l.b16 %v97
  %v386 = vunpack.c.l.b16 %v98
  %v387 = vunpack.c.l.b16 %v99
  %v388 = vunpack.c.l.b16 %v100
  %v389 = vunpack.c.l.b16 %v101
  %v390 = vunpack.c.l.b16 %v102
  %v391 = vunpack.c.l.b16 %v103
  %v392 = vunpack.c.l.b16 %v104
  %v393 = vunpack.c.l.b16 %v105
  %v394 = vunpack.c.l.b16 %v106
  %v395 = vunpack.c.l.b16 %v107
  %v396 = vunpack.c.l.b16 %v108
  %v397 = vunpack.c.l.b16 %v109
  %v398 = vunpack.c.l.b16 %v110
  %v399 = vunpack.c.l.b16 %v111
  %v400 = vunpack.c.l.b16 %v112
  %v401 = vunpack.c.l.b16 %v113
  %v402 = vunpack.c.l.b16 %v114
  %v403 = vunpack.c.l.b16 %v115
  %v404 = vunpack.c.l.b16 %v116
  %v405 = vunpack.c.l.b16 %v117
  %v406 = vunpack.c.l.b16 %v118
  %v407 = vunpack.c.l.b16 %v119
  %v408 = vunpack.c.l.b16 %v120
  %v409 = vunpack.c.l.b16 %v121
  %v410 = vunpack.c.l.b16 %v122
  %v411 = vunpack.c.l.b16 %v123
  %v412 = vunpack.c.l.b16 %v124
  %v413 = vunpack.c.l.b16 %v125
  %v414 = vunpack.c.l.b16 %v126
  %v415 = vunpack.c.l.b16 %v127
  %v416 = vunpack.c.l.b16 %v128
  %v417 = vunpack.c.l.b16 %v129
  %v418 = vunpack.c.l.b16 %v130
  %v419 = vunpack.c.l.b16 %v131
  %v420 = vunpack.c.l.b16 %v132
  %v421 = vunpack.c.l.b16 %v133
  %v422 = vunpack.c.l.b16 %v134
  %v423 = vunpack.c.l.b16 %v135
  %v424 = vunpack.c.l.b16 %v136
  %v425 = vunpack.c.l.b16 %v137
  %v426 = vunpack.c.l.b16 %v138
  %v427 = vunpack.c.l.b16 %v139
  %v428 = vunpack.c.l.b16 %v140
  %v429 = vunpack.c.l.b16 %v141
  %v430 = vunpack.c.l.b16 %v142
  %v431 = vunpack.c.l.b16 %v143
  %v432 = vunpack.c.l.b16 %v144
  %v433 = vunpack.c.l.b16 %v145
  %v434 = vunpack.c.l.b16 %v146
  %v435 = vunpack.c.l.b16 %v147
  %v436 = vunpack.c.l.b16 %v148
  %v437 = vpack.c.b16 %v374, %v373
  %v438 = vpack.c.b16 %v376, %v375
  %v439 = vpack.c.b16 %v378, %v377
  %v440 = vpack.c.b16 %v380, %v379
  %v441 = vpack.c.b16 %v382, %v381
  %v442 = vpack.c.b16 %v384, %v383
  %v443 = vpack.c.b16 %v386, %v385
  %v444 = vpack.c.b16 %v388, %v387
  %v445 = vpack.c.b16 %v390, %v389
  %v446 = vpack.c.b16 %v392, %v391
  %v447 = vpack.c.b16 %v394, %v393
  %v448 = vpack.c.b16 %v396, %v395
  %v449 = vpack.c.b16 %v398, %v397
  %v450 = vpack.c.b16 %v400, %v399
  %v451 = vpack.c.b16 %v402, %v401
  %v452 = vpack.c.b16 %v404, %v403
  %v453 = vpack.c.b16 %v406, %v405
  %v454 = vpack.c.b16 %v408, %v407
  %v455 = vpack.c.b16 %v410, %v409
  %v456 = vpack.c.b16 %v412, %v411
  %v457 = vpack.c.b16 %v414, %v413
  %v458 = vpack.c.b16 %v416, %v415
  %v459 = vpack.c.b16 %v418, %v417
  %v460 = vpack.c.b16 %v420, %v419
  %v461 = vpack.c.b16 %v422, %v421
  %v462 = vpack.c.b16 %v424, %v423
  %v463 = vpack.c.b16 %v426, %v425
  %v464 = vpack.c.b16 %v428, %v427
  %v465 = vpack.c.b16 %v430, %v429
  %v466 = vpack.c.b16 %v432, %v431
  %v467 = vpack.c.b16 %v434, %v433
  %v468 = vpack.c.b16 %v436, %v435
  %469 = vrot.lane.b32.xlu0 %v437, 4
  %v470 = vpop.permute.xlu0 %469
  %471 = vrot.lane.b32.xlu0 %v438, 4
  %v472 = vpop.permute.xlu0 %471
  %473 = vrot.lane.b32.xlu0 %v439, 4
  %v474 = vpop.permute.xlu0 %473
  %475 = vrot.lane.b32.xlu0 %v440, 4
  %v476 = vpop.permute.xlu0 %475
  %477 = vrot.lane.b32.xlu0 %v441, 4
  %v478 = vpop.permute.xlu0 %477
  %479 = vrot.lane.b32.xlu0 %v442, 4
  %v480 = vpop.permute.xlu0 %479
  %481 = vrot.lane.b32.xlu0 %v443, 4
  %v482 = vpop.permute.xlu0 %481
  %483 = vrot.lane.b32.xlu0 %v444, 4
  %v484 = vpop.permute.xlu0 %483
  %485 = vrot.lane.b32.xlu0 %v445, 4
  %v486 = vpop.permute.xlu0 %485
  %487 = vrot.lane.b32.xlu0 %v446, 4
  %v488 = vpop.permute.xlu0 %487
  %489 = vrot.lane.b32.xlu0 %v447, 4
  %v490 = vpop.permute.xlu0 %489
  %491 = vrot.lane.b32.xlu0 %v448, 4
  %v492 = vpop.permute.xlu0 %491
  %493 = vrot.lane.b32.xlu0 %v449, 4
  %v494 = vpop.permute.xlu0 %493
  %495 = vrot.lane.b32.xlu0 %v450, 4
  %v496 = vpop.permute.xlu0 %495
  %497 = vrot.lane.b32.xlu0 %v451, 4
  %v498 = vpop.permute.xlu0 %497
  %499 = vrot.lane.b32.xlu0 %v452, 4
  %v500 = vpop.permute.xlu0 %499
  %501 = vrot.lane.b32.xlu0 %v453, 4
  %v502 = vpop.permute.xlu0 %501
  %503 = vrot.lane.b32.xlu0 %v454, 4
  %v504 = vpop.permute.xlu0 %503
  %505 = vrot.lane.b32.xlu0 %v455, 4
  %v506 = vpop.permute.xlu0 %505
  %507 = vrot.lane.b32.xlu0 %v456, 4
  %v508 = vpop.permute.xlu0 %507
  %509 = vrot.lane.b32.xlu0 %v457, 4
  %v510 = vpop.permute.xlu0 %509
  %511 = vrot.lane.b32.xlu0 %v458, 4
  %v512 = vpop.permute.xlu0 %511
  %513 = vrot.lane.b32.xlu0 %v459, 4
  %v514 = vpop.permute.xlu0 %513
  %515 = vrot.lane.b32.xlu0 %v460, 4
  %v516 = vpop.permute.xlu0 %515
  %517 = vrot.lane.b32.xlu0 %v461, 4
  %v518 = vpop.permute.xlu0 %517
  %519 = vrot.lane.b32.xlu0 %v462, 4
  %v520 = vpop.permute.xlu0 %519
  %521 = vrot.lane.b32.xlu0 %v463, 4
  %v522 = vpop.permute.xlu0 %521
  %523 = vrot.lane.b32.xlu0 %v464, 4
  %v524 = vpop.permute.xlu0 %523
  %525 = vrot.lane.b32.xlu0 %v465, 4
  %v526 = vpop.permute.xlu0 %525
  %527 = vrot.lane.b32.xlu0 %v466, 4
  %v528 = vpop.permute.xlu0 %527
  %529 = vrot.lane.b32.xlu0 %v467, 4
  %v530 = vpop.permute.xlu0 %529
  %531 = vrot.lane.b32.xlu0 %v468, 4
  %v532 = vpop.permute.xlu0 %531
  %vm533 = vcmask 31744
  %v536 = vsel %vm533, %v277, %v470
  %v539 = vsel %vm533, %v278, %v472
  %v542 = vsel %vm533, %v279, %v474
  %v545 = vsel %vm533, %v280, %v476
  %v548 = vsel %vm533, %v281, %v478
  %v551 = vsel %vm533, %v282, %v480
  %v554 = vsel %vm533, %v283, %v482
  %v557 = vsel %vm533, %v284, %v484
  %v560 = vsel %vm533, %v285, %v486
  %v563 = vsel %vm533, %v286, %v488
  %v566 = vsel %vm533, %v287, %v490
  %v569 = vsel %vm533, %v288, %v492
  %v572 = vsel %vm533, %v289, %v494
  %v575 = vsel %vm533, %v290, %v496
  %v578 = vsel %vm533, %v291, %v498
  %v581 = vsel %vm533, %v292, %v500
  %v584 = vsel %vm533, %v293, %v502
  %v587 = vsel %vm533, %v294, %v504
  %v590 = vsel %vm533, %v295, %v506
  %v593 = vsel %vm533, %v296, %v508
  %v596 = vsel %vm533, %v297, %v510
  %v599 = vsel %vm533, %v298, %v512
  %v602 = vsel %vm533, %v299, %v514
  %v605 = vsel %vm533, %v300, %v516
  %v608 = vsel %vm533, %v301, %v518
  %v611 = vsel %vm533, %v302, %v520
  %v614 = vsel %vm533, %v303, %v522
  %v617 = vsel %vm533, %v304, %v524
  %v620 = vsel %vm533, %v305, %v526
  %v623 = vsel %vm533, %v306, %v528
  %v626 = vsel %vm533, %v307, %v530
  %v629 = vsel %vm533, %v308, %v532
  %v630 = vld [vmem:[%s2] sm:$0xf]
  %vm631 = vcmask 64512
  %v632 = vsel %vm631, %v536, 0
  %v634 = vsel %vm631, %v539, 0
  %v636 = vsel %vm631, %v542, 0
  %v638 = vsel %vm631, %v545, 0
  %v640 = vsel %vm631, %v548, 0
  %v642 = vsel %vm631, %v551, 0
  %v644 = vsel %vm631, %v554, 0
  %v646 = vsel %vm631, %v557, 0
  %v648 = vsel %vm631, %v560, 0
  %v650 = vsel %vm631, %v563, 0
  %v652 = vsel %vm631, %v566, 0
  %v654 = vsel %vm631, %v569, 0
  %v656 = vsel %vm631, %v572, 0
  %v658 = vsel %vm631, %v575, 0
  %v660 = vsel %vm631, %v578, 0
  %v662 = vsel %vm631, %v581, 0
  %v664 = vsel %vm631, %v584, 0
  %v666 = vsel %vm631, %v587, 0
  %v668 = vsel %vm631, %v590, 0
  %v670 = vsel %vm631, %v593, 0
  %v672 = vsel %vm631, %v596, 0
  %v674 = vsel %vm631, %v599, 0
  %v676 = vsel %vm631, %v602, 0
  %v678 = vsel %vm631, %v605, 0
  %v680 = vsel %vm631, %v608, 0
  %v682 = vsel %vm631, %v611, 0
  %v684 = vsel %vm631, %v614, 0
  %v686 = vsel %vm631, %v617, 0
  %v688 = vsel %vm631, %v620, 0
  %v690 = vsel %vm631, %v623, 0
  %v692 = vsel %vm631, %v626, 0
  %v694 = vsel %vm631, %v629, 0
  %vm696 = vcmask 1043456
  %v698 = vsel %vm696, %v630, 0
  %700 = vmatpush.bf16.msra.mxu0 0
  %701 = vmatpush.bf16.msra.mxu0 0
  %702 = vmatpush.bf16.msra.mxu0 0
  %703 = vmatpush.bf16.msra.mxu0 0
  %704 = vmatpush.bf16.msra.mxu0 0
  %705 = vmatpush.bf16.msra.mxu0 0
  %706 = vmatpush.bf16.msra.mxu0 0
  %707 = vmatpush.bf16.msra.mxu0 %v698
  %708 = vmatmul.bf16.gmra.mxu0 %v632
  %v709 = vpop.f32.mrf.mxu0
  %v710 = vadd.f32 0.0, %v709
  %v711 = vpop.f32.mrf.mxu0
  %v712 = vadd.f32 0.0, %v711
  %713 = vmatmul.bf16.gmra.mxu0 %v634
  %v714 = vpop.f32.mrf.mxu0
  %v715 = vadd.f32 0.0, %v714
  %v716 = vpop.f32.mrf.mxu0
  %v717 = vadd.f32 0.0, %v716
  %718 = vmatmul.bf16.gmra.mxu0 %v636
  %v719 = vpop.f32.mrf.mxu0
  %v720 = vadd.f32 0.0, %v719
  %v721 = vpop.f32.mrf.mxu0
  %v722 = vadd.f32 0.0, %v721
  %723 = vmatmul.bf16.gmra.mxu0 %v638
  %v724 = vpop.f32.mrf.mxu0
  %v725 = vadd.f32 0.0, %v724
  %v726 = vpop.f32.mrf.mxu0
  %v727 = vadd.f32 0.0, %v726
  %728 = vmatmul.bf16.gmra.mxu0 %v640
  %v729 = vpop.f32.mrf.mxu0
  %v730 = vadd.f32 0.0, %v729
  %v731 = vpop.f32.mrf.mxu0
  %v732 = vadd.f32 0.0, %v731
  %733 = vmatmul.bf16.gmra.mxu0 %v642
  %v734 = vpop.f32.mrf.mxu0
  %v735 = vadd.f32 0.0, %v734
  %v736 = vpop.f32.mrf.mxu0
  %v737 = vadd.f32 0.0, %v736
  %738 = vmatmul.bf16.gmra.mxu0 %v644
  %v739 = vpop.f32.mrf.mxu0
  %v740 = vadd.f32 0.0, %v739
  %v741 = vpop.f32.mrf.mxu0
  %v742 = vadd.f32 0.0, %v741
  %743 = vmatmul.bf16.gmra.mxu0 %v646
  %v744 = vpop.f32.mrf.mxu0
  %v745 = vadd.f32 0.0, %v744
  %v746 = vpop.f32.mrf.mxu0
  %v747 = vadd.f32 0.0, %v746
  %748 = vmatmul.bf16.gmra.mxu0 %v648
  %v749 = vpop.f32.mrf.mxu0
  %v750 = vadd.f32 0.0, %v749
  %v751 = vpop.f32.mrf.mxu0
  %v752 = vadd.f32 0.0, %v751
  %753 = vmatmul.bf16.gmra.mxu0 %v650
  %v754 = vpop.f32.mrf.mxu0
  %v755 = vadd.f32 0.0, %v754
  %v756 = vpop.f32.mrf.mxu0
  %v757 = vadd.f32 0.0, %v756
  %758 = vmatmul.bf16.gmra.mxu0 %v652
  %v759 = vpop.f32.mrf.mxu0
  %v760 = vadd.f32 0.0, %v759
  %v761 = vpop.f32.mrf.mxu0
  %v762 = vadd.f32 0.0, %v761
  %763 = vmatmul.bf16.gmra.mxu0 %v654
  %v764 = vpop.f32.mrf.mxu0
  %v765 = vadd.f32 0.0, %v764
  %v766 = vpop.f32.mrf.mxu0
  %v767 = vadd.f32 0.0, %v766
  %768 = vmatmul.bf16.gmra.mxu0 %v656
  %v769 = vpop.f32.mrf.mxu0
  %v770 = vadd.f32 0.0, %v769
  %v771 = vpop.f32.mrf.mxu0
  %v772 = vadd.f32 0.0, %v771
  %773 = vmatmul.bf16.gmra.mxu0 %v658
  %v774 = vpop.f32.mrf.mxu0
  %v775 = vadd.f32 0.0, %v774
  %v776 = vpop.f32.mrf.mxu0
  %v777 = vadd.f32 0.0, %v776
  %778 = vmatmul.bf16.gmra.mxu0 %v660
  %v779 = vpop.f32.mrf.mxu0
  %v780 = vadd.f32 0.0, %v779
  %v781 = vpop.f32.mrf.mxu0
  %v782 = vadd.f32 0.0, %v781
  %783 = vmatmul.bf16.gmra.mxu0 %v662
  %v784 = vpop.f32.mrf.mxu0
  %v785 = vadd.f32 0.0, %v784
  %v786 = vpop.f32.mrf.mxu0
  %v787 = vadd.f32 0.0, %v786
  %788 = vmatmul.bf16.gmra.mxu0 %v664
  %v789 = vpop.f32.mrf.mxu0
  %v790 = vadd.f32 0.0, %v789
  %v791 = vpop.f32.mrf.mxu0
  %v792 = vadd.f32 0.0, %v791
  %793 = vmatmul.bf16.gmra.mxu0 %v666
  %v794 = vpop.f32.mrf.mxu0
  %v795 = vadd.f32 0.0, %v794
  %v796 = vpop.f32.mrf.mxu0
  %v797 = vadd.f32 0.0, %v796
  %798 = vmatmul.bf16.gmra.mxu0 %v668
  %v799 = vpop.f32.mrf.mxu0
  %v800 = vadd.f32 0.0, %v799
  %v801 = vpop.f32.mrf.mxu0
  %v802 = vadd.f32 0.0, %v801
  %803 = vmatmul.bf16.gmra.mxu0 %v670
  %v804 = vpop.f32.mrf.mxu0
  %v805 = vadd.f32 0.0, %v804
  %v806 = vpop.f32.mrf.mxu0
  %v807 = vadd.f32 0.0, %v806
  %808 = vmatmul.bf16.gmra.mxu0 %v672
  %v809 = vpop.f32.mrf.mxu0
  %v810 = vadd.f32 0.0, %v809
  %v811 = vpop.f32.mrf.mxu0
  %v812 = vadd.f32 0.0, %v811
  %813 = vmatmul.bf16.gmra.mxu0 %v674
  %v814 = vpop.f32.mrf.mxu0
  %v815 = vadd.f32 0.0, %v814
  %v816 = vpop.f32.mrf.mxu0
  %v817 = vadd.f32 0.0, %v816
  %818 = vmatmul.bf16.gmra.mxu0 %v676
  %v819 = vpop.f32.mrf.mxu0
  %v820 = vadd.f32 0.0, %v819
  %v821 = vpop.f32.mrf.mxu0
  %v822 = vadd.f32 0.0, %v821
  %823 = vmatmul.bf16.gmra.mxu0 %v678
  %v824 = vpop.f32.mrf.mxu0
  %v825 = vadd.f32 0.0, %v824
  %v826 = vpop.f32.mrf.mxu0
  %v827 = vadd.f32 0.0, %v826
  %828 = vmatmul.bf16.gmra.mxu0 %v680
  %v829 = vpop.f32.mrf.mxu0
  %v830 = vadd.f32 0.0, %v829
  %v831 = vpop.f32.mrf.mxu0
  %v832 = vadd.f32 0.0, %v831
  %833 = vmatmul.bf16.gmra.mxu0 %v682
  %v834 = vpop.f32.mrf.mxu0
  %v835 = vadd.f32 0.0, %v834
  %v836 = vpop.f32.mrf.mxu0
  %v837 = vadd.f32 0.0, %v836
  %838 = vmatmul.bf16.gmra.mxu0 %v684
  %v839 = vpop.f32.mrf.mxu0
  %v840 = vadd.f32 0.0, %v839
  %v841 = vpop.f32.mrf.mxu0
  %v842 = vadd.f32 0.0, %v841
  %843 = vmatmul.bf16.gmra.mxu0 %v686
  %v844 = vpop.f32.mrf.mxu0
  %v845 = vadd.f32 0.0, %v844
  %v846 = vpop.f32.mrf.mxu0
  %v847 = vadd.f32 0.0, %v846
  %848 = vmatmul.bf16.gmra.mxu0 %v688
  %v849 = vpop.f32.mrf.mxu0
  %v850 = vadd.f32 0.0, %v849
  %v851 = vpop.f32.mrf.mxu0
  %v852 = vadd.f32 0.0, %v851
  %853 = vmatmul.bf16.gmra.mxu0 %v690
  %v854 = vpop.f32.mrf.mxu0
  %v855 = vadd.f32 0.0, %v854
  %v856 = vpop.f32.mrf.mxu0
  %v857 = vadd.f32 0.0, %v856
  %858 = vmatmul.bf16.gmra.mxu0 %v692
  %v859 = vpop.f32.mrf.mxu0
  %v860 = vadd.f32 0.0, %v859
  %v861 = vpop.f32.mrf.mxu0
  %v862 = vadd.f32 0.0, %v861
  %863 = vmatmul.bf16.gmra.mxu0 %v694
  %v864 = vpop.f32.mrf.mxu0
  %v865 = vadd.f32 0.0, %v864
  %v866 = vpop.f32.mrf.mxu0
  %v867 = vadd.f32 0.0, %v866
  %868 = vdwg.mxu0
  %v869 = vld [vmem:[%s3] sm:$0x1]
  %v871 = vperm.slane %v869, 0
  %v873 = vmul.f32 %v710, %v871
  %v874 = vmul.f32 %v712, %v871
  %v875 = vmul.f32 %v715, %v871
  %v876 = vmul.f32 %v717, %v871
  %v877 = vmul.f32 %v720, %v871
  %v878 = vmul.f32 %v722, %v871
  %v879 = vmul.f32 %v725, %v871
  %v880 = vmul.f32 %v727, %v871
  %v881 = vmul.f32 %v730, %v871
  %v882 = vmul.f32 %v732, %v871
  %v883 = vmul.f32 %v735, %v871
  %v884 = vmul.f32 %v737, %v871
  %v885 = vmul.f32 %v740, %v871
  %v886 = vmul.f32 %v742, %v871
  %v887 = vmul.f32 %v745, %v871
  %v888 = vmul.f32 %v747, %v871
  %v889 = vmul.f32 %v750, %v871
  %v890 = vmul.f32 %v752, %v871
  %v891 = vmul.f32 %v755, %v871
  %v892 = vmul.f32 %v757, %v871
  %v893 = vmul.f32 %v760, %v871
  %v894 = vmul.f32 %v762, %v871
  %v895 = vmul.f32 %v765, %v871
  %v896 = vmul.f32 %v767, %v871
  %v897 = vmul.f32 %v770, %v871
  %v898 = vmul.f32 %v772, %v871
  %v899 = vmul.f32 %v775, %v871
  %v900 = vmul.f32 %v777, %v871
  %v901 = vmul.f32 %v780, %v871
  %v902 = vmul.f32 %v782, %v871
  %v903 = vmul.f32 %v785, %v871
  %v904 = vmul.f32 %v787, %v871
  %v905 = vmul.f32 %v790, %v871
  %v906 = vmul.f32 %v792, %v871
  %v907 = vmul.f32 %v795, %v871
  %v908 = vmul.f32 %v797, %v871
  %v909 = vmul.f32 %v800, %v871
  %v910 = vmul.f32 %v802, %v871
  %v911 = vmul.f32 %v805, %v871
  %v912 = vmul.f32 %v807, %v871
  %v913 = vmul.f32 %v810, %v871
  %v914 = vmul.f32 %v812, %v871
  %v915 = vmul.f32 %v815, %v871
  %v916 = vmul.f32 %v817, %v871
  %v917 = vmul.f32 %v820, %v871
  %v918 = vmul.f32 %v822, %v871
  %v919 = vmul.f32 %v825, %v871
  %v920 = vmul.f32 %v827, %v871
  %v921 = vmul.f32 %v830, %v871
  %v922 = vmul.f32 %v832, %v871
  %v923 = vmul.f32 %v835, %v871
  %v924 = vmul.f32 %v837, %v871
  %v925 = vmul.f32 %v840, %v871
  %v926 = vmul.f32 %v842, %v871
  %v927 = vmul.f32 %v845, %v871
  %v928 = vmul.f32 %v847, %v871
  %v929 = vmul.f32 %v850, %v871
  %v930 = vmul.f32 %v852, %v871
  %v931 = vmul.f32 %v855, %v871
  %v932 = vmul.f32 %v857, %v871
  %v933 = vmul.f32 %v860, %v871
  %v934 = vmul.f32 %v862, %v871
  %v935 = vmul.f32 %v865, %v871
  %v936 = vmul.f32 %v867, %v871
  %v937 = vld [vmem:[%s4] sm:$0x1]
  %v939 = vperm.slane %v937, 0
  %v941 = vadd.f32 %v873, %v939
  %v942 = vadd.f32 %v874, %v939
  %v943 = vadd.f32 %v875, %v939
  %v944 = vadd.f32 %v876, %v939
  %v945 = vadd.f32 %v877, %v939
  %v946 = vadd.f32 %v878, %v939
  %v947 = vadd.f32 %v879, %v939
  %v948 = vadd.f32 %v880, %v939
  %v949 = vadd.f32 %v881, %v939
  %v950 = vadd.f32 %v882, %v939
  %v951 = vadd.f32 %v883, %v939
  %v952 = vadd.f32 %v884, %v939
  %v953 = vadd.f32 %v885, %v939
  %v954 = vadd.f32 %v886, %v939
  %v955 = vadd.f32 %v887, %v939
  %v956 = vadd.f32 %v888, %v939
  %v957 = vadd.f32 %v889, %v939
  %v958 = vadd.f32 %v890, %v939
  %v959 = vadd.f32 %v891, %v939
  %v960 = vadd.f32 %v892, %v939
  %v961 = vadd.f32 %v893, %v939
  %v962 = vadd.f32 %v894, %v939
  %v963 = vadd.f32 %v895, %v939
  %v964 = vadd.f32 %v896, %v939
  %v965 = vadd.f32 %v897, %v939
  %v966 = vadd.f32 %v898, %v939
  %v967 = vadd.f32 %v899, %v939
  %v968 = vadd.f32 %v900, %v939
  %v969 = vadd.f32 %v901, %v939
  %v970 = vadd.f32 %v902, %v939
  %v971 = vadd.f32 %v903, %v939
  %v972 = vadd.f32 %v904, %v939
  %v973 = vadd.f32 %v905, %v939
  %v974 = vadd.f32 %v906, %v939
  %v975 = vadd.f32 %v907, %v939
  %v976 = vadd.f32 %v908, %v939
  %v977 = vadd.f32 %v909, %v939
  %v978 = vadd.f32 %v910, %v939
  %v979 = vadd.f32 %v911, %v939
  %v980 = vadd.f32 %v912, %v939
  %v981 = vadd.f32 %v913, %v939
  %v982 = vadd.f32 %v914, %v939
  %v983 = vadd.f32 %v915, %v939
  %v984 = vadd.f32 %v916, %v939
  %v985 = vadd.f32 %v917, %v939
  %v986 = vadd.f32 %v918, %v939
  %v987 = vadd.f32 %v919, %v939
  %v988 = vadd.f32 %v920, %v939
  %v989 = vadd.f32 %v921, %v939
  %v990 = vadd.f32 %v922, %v939
  %v991 = vadd.f32 %v923, %v939
  %v992 = vadd.f32 %v924, %v939
  %v993 = vadd.f32 %v925, %v939
  %v994 = vadd.f32 %v926, %v939
  %v995 = vadd.f32 %v927, %v939
  %v996 = vadd.f32 %v928, %v939
  %v997 = vadd.f32 %v929, %v939
  %v998 = vadd.f32 %v930, %v939
  %v999 = vadd.f32 %v931, %v939
  %v1000 = vadd.f32 %v932, %v939
  %v1001 = vadd.f32 %v933, %v939
  %v1002 = vadd.f32 %v934, %v939
  %v1003 = vadd.f32 %v935, %v939
  %v1004 = vadd.f32 %v936, %v939
  %v1005 = vsub.f32 0.0, %v941
  %v1006 = vsub.f32 0.0, %v942
  %v1007 = vsub.f32 0.0, %v943
  %v1008 = vsub.f32 0.0, %v944
  %v1009 = vsub.f32 0.0, %v945
  %v1010 = vsub.f32 0.0, %v946
  %v1011 = vsub.f32 0.0, %v947
  %v1012 = vsub.f32 0.0, %v948
  %v1013 = vsub.f32 0.0, %v949
  %v1014 = vsub.f32 0.0, %v950
  %v1015 = vsub.f32 0.0, %v951
  %v1016 = vsub.f32 0.0, %v952
  %v1017 = vsub.f32 0.0, %v953
  %v1018 = vsub.f32 0.0, %v954
  %v1019 = vsub.f32 0.0, %v955
  %v1020 = vsub.f32 0.0, %v956
  %v1021 = vsub.f32 0.0, %v957
  %v1022 = vsub.f32 0.0, %v958
  %v1023 = vsub.f32 0.0, %v959
  %v1024 = vsub.f32 0.0, %v960
  %v1025 = vsub.f32 0.0, %v961
  %v1026 = vsub.f32 0.0, %v962
  %v1027 = vsub.f32 0.0, %v963
  %v1028 = vsub.f32 0.0, %v964
  %v1029 = vsub.f32 0.0, %v965
  %v1030 = vsub.f32 0.0, %v966
  %v1031 = vsub.f32 0.0, %v967
  %v1032 = vsub.f32 0.0, %v968
  %v1033 = vsub.f32 0.0, %v969
  %v1034 = vsub.f32 0.0, %v970
  %v1035 = vsub.f32 0.0, %v971
  %v1036 = vsub.f32 0.0, %v972
  %v1037 = vsub.f32 0.0, %v973
  %v1038 = vsub.f32 0.0, %v974
  %v1039 = vsub.f32 0.0, %v975
  %v1040 = vsub.f32 0.0, %v976
  %v1041 = vsub.f32 0.0, %v977
  %v1042 = vsub.f32 0.0, %v978
  %v1043 = vsub.f32 0.0, %v979
  %v1044 = vsub.f32 0.0, %v980
  %v1045 = vsub.f32 0.0, %v981
  %v1046 = vsub.f32 0.0, %v982
  %v1047 = vsub.f32 0.0, %v983
  %v1048 = vsub.f32 0.0, %v984
  %v1049 = vsub.f32 0.0, %v985
  %v1050 = vsub.f32 0.0, %v986
  %v1051 = vsub.f32 0.0, %v987
  %v1052 = vsub.f32 0.0, %v988
  %v1053 = vsub.f32 0.0, %v989
  %v1054 = vsub.f32 0.0, %v990
  %v1055 = vsub.f32 0.0, %v991
  %v1056 = vsub.f32 0.0, %v992
  %v1057 = vsub.f32 0.0, %v993
  %v1058 = vsub.f32 0.0, %v994
  %v1059 = vsub.f32 0.0, %v995
  %v1060 = vsub.f32 0.0, %v996
  %v1061 = vsub.f32 0.0, %v997
  %v1062 = vsub.f32 0.0, %v998
  %v1063 = vsub.f32 0.0, %v999
  %v1064 = vsub.f32 0.0, %v1000
  %v1065 = vsub.f32 0.0, %v1001
  %v1066 = vsub.f32 0.0, %v1002
  %v1067 = vsub.f32 0.0, %v1003
  %v1068 = vsub.f32 0.0, %v1004
  %v1069 = vmul.f32 %v1005, 1.442695
  %v1070 = vpow.pop %v1069
  %v1071 = vmul.f32 %v1006, 1.442695
  %v1072 = vpow.pop %v1071
  %v1073 = vmul.f32 %v1007, 1.442695
  %v1074 = vpow.pop %v1073
  %v1075 = vmul.f32 %v1008, 1.442695
  %v1076 = vpow.pop %v1075
  %v1077 = vmul.f32 %v1009, 1.442695
  %v1078 = vpow.pop %v1077
  %v1079 = vmul.f32 %v1010, 1.442695
  %v1080 = vpow.pop %v1079
  %v1081 = vmul.f32 %v1011, 1.442695
  %v1082 = vpow.pop %v1081
  %v1083 = vmul.f32 %v1012, 1.442695
  %v1084 = vpow.pop %v1083
  %v1085 = vmul.f32 %v1013, 1.442695
  %v1086 = vpow.pop %v1085
  %v1087 = vmul.f32 %v1014, 1.442695
  %v1088 = vpow.pop %v1087
  %v1089 = vmul.f32 %v1015, 1.442695
  %v1090 = vpow.pop %v1089
  %v1091 = vmul.f32 %v1016, 1.442695
  %v1092 = vpow.pop %v1091
  %v1093 = vmul.f32 %v1017, 1.442695
  %v1094 = vpow.pop %v1093
  %v1095 = vmul.f32 %v1018, 1.442695
  %v1096 = vpow.pop %v1095
  %v1097 = vmul.f32 %v1019, 1.442695
  %v1098 = vpow.pop %v1097
  %v1099 = vmul.f32 %v1020, 1.442695
  %v1100 = vpow.pop %v1099
  %v1101 = vmul.f32 %v1021, 1.442695
  %v1102 = vpow.pop %v1101
  %v1103 = vmul.f32 %v1022, 1.442695
  %v1104 = vpow.pop %v1103
  %v1105 = vmul.f32 %v1023, 1.442695
  %v1106 = vpow.pop %v1105
  %v1107 = vmul.f32 %v1024, 1.442695
  %v1108 = vpow.pop %v1107
  %v1109 = vmul.f32 %v1025, 1.442695
  %v1110 = vpow.pop %v1109
  %v1111 = vmul.f32 %v1026, 1.442695
  %v1112 = vpow.pop %v1111
  %v1113 = vmul.f32 %v1027, 1.442695
  %v1114 = vpow.pop %v1113
  %v1115 = vmul.f32 %v1028, 1.442695
  %v1116 = vpow.pop %v1115
  %v1117 = vmul.f32 %v1029, 1.442695
  %v1118 = vpow.pop %v1117
  %v1119 = vmul.f32 %v1030, 1.442695
  %v1120 = vpow.pop %v1119
  %v1121 = vmul.f32 %v1031, 1.442695
  %v1122 = vpow.pop %v1121
  %v1123 = vmul.f32 %v1032, 1.442695
  %v1124 = vpow.pop %v1123
  %v1125 = vmul.f32 %v1033, 1.442695
  %v1126 = vpow.pop %v1125
  %v1127 = vmul.f32 %v1034, 1.442695
  %v1128 = vpow.pop %v1127
  %v1129 = vmul.f32 %v1035, 1.442695
  %v1130 = vpow.pop %v1129
  %v1131 = vmul.f32 %v1036, 1.442695
  %v1132 = vpow.pop %v1131
  %v1133 = vmul.f32 %v1037, 1.442695
  %v1134 = vpow.pop %v1133
  %v1135 = vmul.f32 %v1038, 1.442695
  %v1136 = vpow.pop %v1135
  %v1137 = vmul.f32 %v1039, 1.442695
  %v1138 = vpow.pop %v1137
  %v1139 = vmul.f32 %v1040, 1.442695
  %v1140 = vpow.pop %v1139
  %v1141 = vmul.f32 %v1041, 1.442695
  %v1142 = vpow.pop %v1141
  %v1143 = vmul.f32 %v1042, 1.442695
  %v1144 = vpow.pop %v1143
  %v1145 = vmul.f32 %v1043, 1.442695
  %v1146 = vpow.pop %v1145
  %v1147 = vmul.f32 %v1044, 1.442695
  %v1148 = vpow.pop %v1147
  %v1149 = vmul.f32 %v1045, 1.442695
  %v1150 = vpow.pop %v1149
  %v1151 = vmul.f32 %v1046, 1.442695
  %v1152 = vpow.pop %v1151
  %v1153 = vmul.f32 %v1047, 1.442695
  %v1154 = vpow.pop %v1153
  %v1155 = vmul.f32 %v1048, 1.442695
  %v1156 = vpow.pop %v1155
  %v1157 = vmul.f32 %v1049, 1.442695
  %v1158 = vpow.pop %v1157
  %v1159 = vmul.f32 %v1050, 1.442695
  %v1160 = vpow.pop %v1159
  %v1161 = vmul.f32 %v1051, 1.442695
  %v1162 = vpow.pop %v1161
  %v1163 = vmul.f32 %v1052, 1.442695
  %v1164 = vpow.pop %v1163
  %v1165 = vmul.f32 %v1053, 1.442695
  %v1166 = vpow.pop %v1165
  %v1167 = vmul.f32 %v1054, 1.442695
  %v1168 = vpow.pop %v1167
  %v1169 = vmul.f32 %v1055, 1.442695
  %v1170 = vpow.pop %v1169
  %v1171 = vmul.f32 %v1056, 1.442695
  %v1172 = vpow.pop %v1171
  %v1173 = vmul.f32 %v1057, 1.442695
  %v1174 = vpow.pop %v1173
  %v1175 = vmul.f32 %v1058, 1.442695
  %v1176 = vpow.pop %v1175
  %v1177 = vmul.f32 %v1059, 1.442695
  %v1178 = vpow.pop %v1177
  %v1179 = vmul.f32 %v1060, 1.442695
  %v1180 = vpow.pop %v1179
  %v1181 = vmul.f32 %v1061, 1.442695
  %v1182 = vpow.pop %v1181
  %v1183 = vmul.f32 %v1062, 1.442695
  %v1184 = vpow.pop %v1183
  %v1185 = vmul.f32 %v1063, 1.442695
  %v1186 = vpow.pop %v1185
  %v1187 = vmul.f32 %v1064, 1.442695
  %v1188 = vpow.pop %v1187
  %v1189 = vmul.f32 %v1065, 1.442695
  %v1190 = vpow.pop %v1189
  %v1191 = vmul.f32 %v1066, 1.442695
  %v1192 = vpow.pop %v1191
  %v1193 = vmul.f32 %v1067, 1.442695
  %v1194 = vpow.pop %v1193
  %v1195 = vmul.f32 %v1068, 1.442695
  %v1196 = vpow.pop %v1195
  %v1197 = vadd.f32 %v1070, 1.0
  %v1198 = vadd.f32 %v1072, 1.0
  %v1199 = vadd.f32 %v1074, 1.0
  %v1200 = vadd.f32 %v1076, 1.0
  %v1201 = vadd.f32 %v1078, 1.0
  %v1202 = vadd.f32 %v1080, 1.0
  %v1203 = vadd.f32 %v1082, 1.0
  %v1204 = vadd.f32 %v1084, 1.0
  %v1205 = vadd.f32 %v1086, 1.0
  %v1206 = vadd.f32 %v1088, 1.0
  %v1207 = vadd.f32 %v1090, 1.0
  %v1208 = vadd.f32 %v1092, 1.0
  %v1209 = vadd.f32 %v1094, 1.0
  %v1210 = vadd.f32 %v1096, 1.0
  %v1211 = vadd.f32 %v1098, 1.0
  %v1212 = vadd.f32 %v1100, 1.0
  %v1213 = vadd.f32 %v1102, 1.0
  %v1214 = vadd.f32 %v1104, 1.0
  %v1215 = vadd.f32 %v1106, 1.0
  %v1216 = vadd.f32 %v1108, 1.0
  %v1217 = vadd.f32 %v1110, 1.0
  %v1218 = vadd.f32 %v1112, 1.0
  %v1219 = vadd.f32 %v1114, 1.0
  %v1220 = vadd.f32 %v1116, 1.0
  %v1221 = vadd.f32 %v1118, 1.0
  %v1222 = vadd.f32 %v1120, 1.0
  %v1223 = vadd.f32 %v1122, 1.0
  %v1224 = vadd.f32 %v1124, 1.0
  %v1225 = vadd.f32 %v1126, 1.0
  %v1226 = vadd.f32 %v1128, 1.0
  %v1227 = vadd.f32 %v1130, 1.0
  %v1228 = vadd.f32 %v1132, 1.0
  %v1229 = vadd.f32 %v1134, 1.0
  %v1230 = vadd.f32 %v1136, 1.0
  %v1231 = vadd.f32 %v1138, 1.0
  %v1232 = vadd.f32 %v1140, 1.0
  %v1233 = vadd.f32 %v1142, 1.0
  %v1234 = vadd.f32 %v1144, 1.0
  %v1235 = vadd.f32 %v1146, 1.0
  %v1236 = vadd.f32 %v1148, 1.0
  %v1237 = vadd.f32 %v1150, 1.0
  %v1238 = vadd.f32 %v1152, 1.0
  %v1239 = vadd.f32 %v1154, 1.0
  %v1240 = vadd.f32 %v1156, 1.0
  %v1241 = vadd.f32 %v1158, 1.0
  %v1242 = vadd.f32 %v1160, 1.0
  %v1243 = vadd.f32 %v1162, 1.0
  %v1244 = vadd.f32 %v1164, 1.0
  %v1245 = vadd.f32 %v1166, 1.0
  %v1246 = vadd.f32 %v1168, 1.0
  %v1247 = vadd.f32 %v1170, 1.0
  %v1248 = vadd.f32 %v1172, 1.0
  %v1249 = vadd.f32 %v1174, 1.0
  %v1250 = vadd.f32 %v1176, 1.0
  %v1251 = vadd.f32 %v1178, 1.0
  %v1252 = vadd.f32 %v1180, 1.0
  %v1253 = vadd.f32 %v1182, 1.0
  %v1254 = vadd.f32 %v1184, 1.0
  %v1255 = vadd.f32 %v1186, 1.0
  %v1256 = vadd.f32 %v1188, 1.0
  %v1257 = vadd.f32 %v1190, 1.0
  %v1258 = vadd.f32 %v1192, 1.0
  %v1259 = vadd.f32 %v1194, 1.0
  %v1260 = vadd.f32 %v1196, 1.0
  %v1261 = vrcp.pop %v1197
  %v1262 = vrcp.pop %v1198
  %v1263 = vrcp.pop %v1199
  %v1264 = vrcp.pop %v1200
  %v1265 = vrcp.pop %v1201
  %v1266 = vrcp.pop %v1202
  %v1267 = vrcp.pop %v1203
  %v1268 = vrcp.pop %v1204
  %v1269 = vrcp.pop %v1205
  %v1270 = vrcp.pop %v1206
  %v1271 = vrcp.pop %v1207
  %v1272 = vrcp.pop %v1208
  %v1273 = vrcp.pop %v1209
  %v1274 = vrcp.pop %v1210
  %v1275 = vrcp.pop %v1211
  %v1276 = vrcp.pop %v1212
  %v1277 = vrcp.pop %v1213
  %v1278 = vrcp.pop %v1214
  %v1279 = vrcp.pop %v1215
  %v1280 = vrcp.pop %v1216
  %v1281 = vrcp.pop %v1217
  %v1282 = vrcp.pop %v1218
  %v1283 = vrcp.pop %v1219
  %v1284 = vrcp.pop %v1220
  %v1285 = vrcp.pop %v1221
  %v1286 = vrcp.pop %v1222
  %v1287 = vrcp.pop %v1223
  %v1288 = vrcp.pop %v1224
  %v1289 = vrcp.pop %v1225
  %v1290 = vrcp.pop %v1226
  %v1291 = vrcp.pop %v1227
  %v1292 = vrcp.pop %v1228
  %v1293 = vrcp.pop %v1229
  %v1294 = vrcp.pop %v1230
  %v1295 = vrcp.pop %v1231
  %v1296 = vrcp.pop %v1232
  %v1297 = vrcp.pop %v1233
  %v1298 = vrcp.pop %v1234
  %v1299 = vrcp.pop %v1235
  %v1300 = vrcp.pop %v1236
  %v1301 = vrcp.pop %v1237
  %v1302 = vrcp.pop %v1238
  %v1303 = vrcp.pop %v1239
  %v1304 = vrcp.pop %v1240
  %v1305 = vrcp.pop %v1241
  %v1306 = vrcp.pop %v1242
  %v1307 = vrcp.pop %v1243
  %v1308 = vrcp.pop %v1244
  %v1309 = vrcp.pop %v1245
  %v1310 = vrcp.pop %v1246
  %v1311 = vrcp.pop %v1247
  %v1312 = vrcp.pop %v1248
  %v1313 = vrcp.pop %v1249
  %v1314 = vrcp.pop %v1250
  %v1315 = vrcp.pop %v1251
  %v1316 = vrcp.pop %v1252
  %v1317 = vrcp.pop %v1253
  %v1318 = vrcp.pop %v1254
  %v1319 = vrcp.pop %v1255
  %v1320 = vrcp.pop %v1256
  %v1321 = vrcp.pop %v1257
  %v1322 = vrcp.pop %v1258
  %v1323 = vrcp.pop %v1259
  %v1324 = vrcp.pop %v1260
  %v1325 = vmul.f32 %v941, %v1261
  %v1326 = vmul.f32 %v942, %v1262
  %v1327 = vmul.f32 %v943, %v1263
  %v1328 = vmul.f32 %v944, %v1264
  %v1329 = vmul.f32 %v945, %v1265
  %v1330 = vmul.f32 %v946, %v1266
  %v1331 = vmul.f32 %v947, %v1267
  %v1332 = vmul.f32 %v948, %v1268
  %v1333 = vmul.f32 %v949, %v1269
  %v1334 = vmul.f32 %v950, %v1270
  %v1335 = vmul.f32 %v951, %v1271
  %v1336 = vmul.f32 %v952, %v1272
  %v1337 = vmul.f32 %v953, %v1273
  %v1338 = vmul.f32 %v954, %v1274
  %v1339 = vmul.f32 %v955, %v1275
  %v1340 = vmul.f32 %v956, %v1276
  %v1341 = vmul.f32 %v957, %v1277
  %v1342 = vmul.f32 %v958, %v1278
  %v1343 = vmul.f32 %v959, %v1279
  %v1344 = vmul.f32 %v960, %v1280
  %v1345 = vmul.f32 %v961, %v1281
  %v1346 = vmul.f32 %v962, %v1282
  %v1347 = vmul.f32 %v963, %v1283
  %v1348 = vmul.f32 %v964, %v1284
  %v1349 = vmul.f32 %v965, %v1285
  %v1350 = vmul.f32 %v966, %v1286
  %v1351 = vmul.f32 %v967, %v1287
  %v1352 = vmul.f32 %v968, %v1288
  %v1353 = vmul.f32 %v969, %v1289
  %v1354 = vmul.f32 %v970, %v1290
  %v1355 = vmul.f32 %v971, %v1291
  %v1356 = vmul.f32 %v972, %v1292
  %v1357 = vmul.f32 %v973, %v1293
  %v1358 = vmul.f32 %v974, %v1294
  %v1359 = vmul.f32 %v975, %v1295
  %v1360 = vmul.f32 %v976, %v1296
  %v1361 = vmul.f32 %v977, %v1297
  %v1362 = vmul.f32 %v978, %v1298
  %v1363 = vmul.f32 %v979, %v1299
  %v1364 = vmul.f32 %v980, %v1300
  %v1365 = vmul.f32 %v981, %v1301
  %v1366 = vmul.f32 %v982, %v1302
  %v1367 = vmul.f32 %v983, %v1303
  %v1368 = vmul.f32 %v984, %v1304
  %v1369 = vmul.f32 %v985, %v1305
  %v1370 = vmul.f32 %v986, %v1306
  %v1371 = vmul.f32 %v987, %v1307
  %v1372 = vmul.f32 %v988, %v1308
  %v1373 = vmul.f32 %v989, %v1309
  %v1374 = vmul.f32 %v990, %v1310
  %v1375 = vmul.f32 %v991, %v1311
  %v1376 = vmul.f32 %v992, %v1312
  %v1377 = vmul.f32 %v993, %v1313
  %v1378 = vmul.f32 %v994, %v1314
  %v1379 = vmul.f32 %v995, %v1315
  %v1380 = vmul.f32 %v996, %v1316
  %v1381 = vmul.f32 %v997, %v1317
  %v1382 = vmul.f32 %v998, %v1318
  %v1383 = vmul.f32 %v999, %v1319
  %v1384 = vmul.f32 %v1000, %v1320
  %v1385 = vmul.f32 %v1001, %v1321
  %v1386 = vmul.f32 %v1002, %v1322
  %v1387 = vmul.f32 %v1003, %v1323
  %v1388 = vmul.f32 %v1004, %v1324
  %1389 = vst.msk [vmem:[%s5] sm:$0xff] %vm631, %v1325
  %1390 = vst.msk [vmem:[%s5 + $0x8] sm:$0xff] %vm631, %v1326
  %1391 = vst.msk [vmem:[%s5 + $0x10] sm:$0xff] %vm631, %v1327
  %1392 = vst.msk [vmem:[%s5 + $0x18] sm:$0xff] %vm631, %v1328
  %1393 = vst.msk [vmem:[%s5 + $0x20] sm:$0xff] %vm631, %v1329
  %1394 = vst.msk [vmem:[%s5 + $0x28] sm:$0xff] %vm631, %v1330
  %1395 = vst.msk [vmem:[%s5 + $0x30] sm:$0xff] %vm631, %v1331
  %1396 = vst.msk [vmem:[%s5 + $0x38] sm:$0xff] %vm631, %v1332
  %1397 = vst.msk [vmem:[%s5 + $0x40] sm:$0xff] %vm631, %v1333
  %1398 = vst.msk [vmem:[%s5 + $0x48] sm:$0xff] %vm631, %v1334
  %1399 = vst.msk [vmem:[%s5 + $0x50] sm:$0xff] %vm631, %v1335
  %1400 = vst.msk [vmem:[%s5 + $0x58] sm:$0xff] %vm631, %v1336
  %1401 = vst.msk [vmem:[%s5 + $0x60] sm:$0xff] %vm631, %v1337
  %1402 = vst.msk [vmem:[%s5 + $0x68] sm:$0xff] %vm631, %v1338
  %1403 = vst.msk [vmem:[%s5 + $0x70] sm:$0xff] %vm631, %v1339
  %1404 = vst.msk [vmem:[%s5 + $0x78] sm:$0xff] %vm631, %v1340
  %1405 = vst.msk [vmem:[%s5 + $0x80] sm:$0xff] %vm631, %v1341
  %1406 = vst.msk [vmem:[%s5 + $0x88] sm:$0xff] %vm631, %v1342
  %1407 = vst.msk [vmem:[%s5 + $0x90] sm:$0xff] %vm631, %v1343
  %1408 = vst.msk [vmem:[%s5 + $0x98] sm:$0xff] %vm631, %v1344
  %1409 = vst.msk [vmem:[%s5 + $0xa0] sm:$0xff] %vm631, %v1345
  %1410 = vst.msk [vmem:[%s5 + $0xa8] sm:$0xff] %vm631, %v1346
  %1411 = vst.msk [vmem:[%s5 + $0xb0] sm:$0xff] %vm631, %v1347
  %1412 = vst.msk [vmem:[%s5 + $0xb8] sm:$0xff] %vm631, %v1348
  %1413 = vst.msk [vmem:[%s5 + $0xc0] sm:$0xff] %vm631, %v1349
  %1414 = vst.msk [vmem:[%s5 + $0xc8] sm:$0xff] %vm631, %v1350
  %1415 = vst.msk [vmem:[%s5 + $0xd0] sm:$0xff] %vm631, %v1351
  %1416 = vst.msk [vmem:[%s5 + $0xd8] sm:$0xff] %vm631, %v1352
  %1417 = vst.msk [vmem:[%s5 + $0xe0] sm:$0xff] %vm631, %v1353
  %1418 = vst.msk [vmem:[%s5 + $0xe8] sm:$0xff] %vm631, %v1354
  %1419 = vst.msk [vmem:[%s5 + $0xf0] sm:$0xff] %vm631, %v1355
  %1420 = vst.msk [vmem:[%s5 + $0xf8] sm:$0xff] %vm631, %v1356
  %1421 = vst.msk [vmem:[%s5 + $0x100] sm:$0xff] %vm631, %v1357
  %1422 = vst.msk [vmem:[%s5 + $0x108] sm:$0xff] %vm631, %v1358
  %1423 = vst.msk [vmem:[%s5 + $0x110] sm:$0xff] %vm631, %v1359
  %1424 = vst.msk [vmem:[%s5 + $0x118] sm:$0xff] %vm631, %v1360
  %1425 = vst.msk [vmem:[%s5 + $0x120] sm:$0xff] %vm631, %v1361
  %1426 = vst.msk [vmem:[%s5 + $0x128] sm:$0xff] %vm631, %v1362
  %1427 = vst.msk [vmem:[%s5 + $0x130] sm:$0xff] %vm631, %v1363
  %1428 = vst.msk [vmem:[%s5 + $0x138] sm:$0xff] %vm631, %v1364
  %1429 = vst.msk [vmem:[%s5 + $0x140] sm:$0xff] %vm631, %v1365
  %1430 = vst.msk [vmem:[%s5 + $0x148] sm:$0xff] %vm631, %v1366
  %1431 = vst.msk [vmem:[%s5 + $0x150] sm:$0xff] %vm631, %v1367
  %1432 = vst.msk [vmem:[%s5 + $0x158] sm:$0xff] %vm631, %v1368
  %1433 = vst.msk [vmem:[%s5 + $0x160] sm:$0xff] %vm631, %v1369
  %1434 = vst.msk [vmem:[%s5 + $0x168] sm:$0xff] %vm631, %v1370
  %1435 = vst.msk [vmem:[%s5 + $0x170] sm:$0xff] %vm631, %v1371
  %1436 = vst.msk [vmem:[%s5 + $0x178] sm:$0xff] %vm631, %v1372
  %1437 = vst.msk [vmem:[%s5 + $0x180] sm:$0xff] %vm631, %v1373
  %1438 = vst.msk [vmem:[%s5 + $0x188] sm:$0xff] %vm631, %v1374
  %1439 = vst.msk [vmem:[%s5 + $0x190] sm:$0xff] %vm631, %v1375
  %1440 = vst.msk [vmem:[%s5 + $0x198] sm:$0xff] %vm631, %v1376
  %1441 = vst.msk [vmem:[%s5 + $0x1a0] sm:$0xff] %vm631, %v1377
  %1442 = vst.msk [vmem:[%s5 + $0x1a8] sm:$0xff] %vm631, %v1378
  %1443 = vst.msk [vmem:[%s5 + $0x1b0] sm:$0xff] %vm631, %v1379
  %1444 = vst.msk [vmem:[%s5 + $0x1b8] sm:$0xff] %vm631, %v1380
  %1445 = vst.msk [vmem:[%s5 + $0x1c0] sm:$0xff] %vm631, %v1381
  %1446 = vst.msk [vmem:[%s5 + $0x1c8] sm:$0xff] %vm631, %v1382
  %1447 = vst.msk [vmem:[%s5 + $0x1d0] sm:$0xff] %vm631, %v1383
  %1448 = vst.msk [vmem:[%s5 + $0x1d8] sm:$0xff] %vm631, %v1384
  %1449 = vst.msk [vmem:[%s5 + $0x1e0] sm:$0xff] %vm631, %v1385
  %1450 = vst.msk [vmem:[%s5 + $0x1e8] sm:$0xff] %vm631, %v1386
  %1451 = vst.msk [vmem:[%s5 + $0x1f0] sm:$0xff] %vm631, %v1387
  %1452 = vst.msk [vmem:[%s5 + $0x1f8] sm:$0xff] %vm631, %v1388
  // Predicated region
  $region22: #{csp_layer_forward.5} parent=0 // pred_check
    _
  $region23: #{csp_layer_forward.5} parent=0 // pred_check_branch
    %1454 = sbr.rel (0) target = $region25
  $region24: #{csp_layer_forward.5} parent=0 // pred_region
    _
  $region25: #{csp_layer_forward.5} parent=0 // pred_fallthru
    _
  // Predicated region
  $region26: #{csp_layer_forward.5} parent=0 // pred_check
    _
  $region27: #{csp_layer_forward.5} parent=0 // pred_check_branch
    %1456 = sbr.rel (0) target = $region29
  $region28: #{csp_layer_forward.5} parent=0 // pred_region
    _
  $region29: #{csp_layer_forward.5} parent=0 // pred_fallthru
    _

// kernel: csp_layer_forward.4
$region0: #{csp_layer_forward.4}
  #allocation0 [shape = 'u32[]', space=smem, size = 0x4, offset = 0x4, fixed_abs, tag = 'smem constant byte address 0x4 - core index']
  #allocation1 [shape = 'u32[72,128]{1,0:T(1,128)}', space=vmem, size = 0x9000, scoped, tag = 'internal scratch']
  #allocation2 [shape = 'bf16[18,18,4]{2,1,0:T(8,128)(2,1)}', space=vmem, size = 0x1b000, scoped, tag = 'scratch operand']
  %s0 = inlined_call_operand.vmem [shape: bf16[2,16,16,4], index: 0, kind: input, shape index: {}, may-alias: {0,1,2}]
  %s1 = inlined_call_operand.vmem [shape: bf16[2,16,16,4], index: 1, kind: input, shape index: {}, may-alias: {0,1,2}]
  %s2 = inlined_call_operand.vmem [shape: bf16[2,16,16,4], index: 2, kind: input, shape index: {}, may-alias: {0,1,2}]
  %s3 = inlined_call_operand.vmem [shape: bf16[4,4], index: 3, kind: input, shape index: {}]
  %s4 = inlined_call_operand.vmem [shape: f32[1,4], index: 4, kind: input, shape index: {}]
  %s5 = inlined_call_operand.vmem [shape: f32[1,4], index: 5, kind: input, shape index: {}]
  %s6 = inlined_call_operand.vmem [shape: bf16[9,4,4], index: 6, kind: input, shape index: {}]
  %s7 = inlined_call_operand.vmem [shape: f32[1,4], index: 7, kind: input, shape index: {}]
  %s8 = inlined_call_operand.vmem [shape: f32[1,4], index: 8, kind: input, shape index: {}]
  %s9 = inlined_call_operand.vmem [shape: bf16[2,16,16,4], index: 9, kind: output, shape index: {}]
  %s10 = sld [smem:[#allocation0]]
  $region73: #{csp_layer_forward.4} parent=0
    _
  %s12 = ssub.s32 1, %s10
  %s13 = scalar_select 0, %s12, %s10
  loop: start=0, step=1, limit=4
  $region2: #{csp_layer_forward.4} parent=0 // loop_pre_header
    _
  $region3: #{csp_layer_forward.4} parent=0 // loop_header
    %s15 = sphi 0, %s19
    %p16 = scmp.ge.s32.totalorder %s15, 4
    %s22 = sphi 0, %s34
    %s23 = sphi 0, %s30
    %s24 = sphi 0, %s22
    %s25 = sphi 0, %s23
    %s26 = sphi 0, %s24
    %s27 = sphi 0, %s25
    %s47 = sphi 0, %s49
    %s50 = sphi 0, %s47
    %s51 = sphi 0, %s50
    %s67 = sphi 0, %s51
    %s75 = sphi 0, %s77
    %s78 = sphi 0, %s75
    %s79 = sphi 0, %s78
    %s95 = sphi 0, %s79
    %s111 = sphi 0, %s113
    %s114 = sphi 0, %s111
    %s115 = sphi 0, %s114
    %s131 = sphi 0, %s115
    %s135 = sphi 0, %s135
    %s137 = sphi 0, %s135
    %s138 = sphi 0, %s137
    %s152 = sphi 0, %s138
    %s156 = sphi 0, %s156
    %s158 = sphi 0, %s156
    %s159 = sphi 0, %s158
    %s173 = sphi 0, %s159
    %s177 = sphi 0, %s177
    %s179 = sphi 0, %s177
    %s180 = sphi 0, %s179
    %s194 = sphi 0, %s180
    %s198 = sphi 0, %s198
    %s200 = sphi 0, %s198
    %s201 = sphi 0, %s200
    %s215 = sphi 0, %s201
    %s219 = sphi 0, %s219
    %s221 = sphi 0, %s219
    %s222 = sphi 0, %s221
    %s236 = sphi 0, %s222
    %s240 = sphi 0, %s240
    %s242 = sphi 0, %s240
    %s243 = sphi 0, %s242
    %s257 = sphi 0, %s243
    %s265 = sphi 0, %s267
    %s268 = sphi 0, %s265
    %s269 = sphi 0, %s268
    %s285 = sphi 0, %s269
  $region4: #{csp_layer_forward.4} parent=0 // loop_header_branch
    %18 = sbr.rel (%p16) target = $region8
  $region5: #{csp_layer_forward.4} parent=0 // loop_body
    %s20 = ssub.s32 %s15, 1
    %s21 = ssub.s32 %s15, 2
    %s28 = sadd.s32 1, %s23
    %p29 = scmp.ge.s32.totalorder %s28, 1
    %s30 = scalar_select %p29, 0, %s28
    %s31 = sadd.s32 1, %s22
    %s32 = scalar_select %p29, %s31, %s22
    %p33 = scmp.ge.s32.totalorder %s32, 2
    %s34 = scalar_select %p33, 0, %s32
    %s35 = smul.u32 %s23, 16
    %s36 = ssub.s32 %s35, 1
    %p37 = scmp.gt.s32.totalorder %s36, 0
    %s38 = scalar_select %p37, %s36, 0
    %s39 = smul.u32 %s30, 16
    %s40 = ssub.s32 %s39, 1
    %p41 = scmp.gt.s32.totalorder %s40, 0
    %s42 = scalar_select %p41, %s40, 0
    %s43 = ssub.s32 %s22, %s34
    %s44 = ssub.s32 %s38, %s42
    %s45 = sor.u32 %s43, %s44
    %p46 = scmp.eq.s32.totalorder %s45, 0
    %s48 = sadd.s32 %s47, 1
    %s49 = scalar_select %p46, %s47, %s48
    %p52 = pneg %p46
    %p53 = scmp.eq.s32.totalorder %s15, 1
    %p54 = por %p52, %p53
    %p55 = scmp.ne.s32.totalorder %s47, %s50
    %p56 = scmp.eq.s32.totalorder %s15, 0
    %p57 = por %p55, %p56
    %p58 = scmp.ne.s32.totalorder %s47, %s50
    %p59 = scmp.eq.s32.totalorder %s20, 1
    %p60 = por %p58, %p59
    %p61 = scmp.ne.s32.totalorder %s50, %s51
    %p62 = scmp.eq.s32.totalorder %s20, 0
    %p63 = por %p61, %p62
    %p64 = scmp.ne.s32.totalorder %s50, %s51
    %p65 = scmp.eq.s32.totalorder %s21, 1
    %p66 = por %p64, %p65
    %p68 = scmp.ne.s32.totalorder %s51, %s67
    %p69 = scmp.eq.s32.totalorder %s21, 0
    %p70 = por %p68, %p69
    %s71 = ssub.s32 %s22, %s34
    %s72 = ssub.s32 %s23, %s30
    %s73 = sor.u32 %s71, %s72
    %p74 = scmp.eq.s32.totalorder %s73, 0
    %s76 = sadd.s32 %s75, 1
    %s77 = scalar_select %p74, %s75, %s76
    %p80 = pneg %p74
    %p81 = scmp.eq.s32.totalorder %s15, 1
    %p82 = por %p80, %p81
    %p83 = scmp.ne.s32.totalorder %s75, %s78
    %p84 = scmp.eq.s32.totalorder %s15, 0
    %p85 = por %p83, %p84
    %p86 = scmp.ne.s32.totalorder %s75, %s78
    %p87 = scmp.eq.s32.totalorder %s20, 1
    %p88 = por %p86, %p87
    %p89 = scmp.ne.s32.totalorder %s78, %s79
    %p90 = scmp.eq.s32.totalorder %s20, 0
    %p91 = por %p89, %p90
    %p92 = scmp.ne.s32.totalorder %s78, %s79
    %p93 = scmp.eq.s32.totalorder %s21, 1
    %p94 = por %p92, %p93
    %p96 = scmp.ne.s32.totalorder %s79, %s95
    %p97 = scmp.eq.s32.totalorder %s21, 0
    %p98 = por %p96, %p97
    %s99 = smul.u32 %s23, 16
    %s100 = sadd.s32 %s99, 16
    %p101 = scmp.lt.s32.totalorder %s100, 15
    %s102 = scalar_select %p101, %s100, 15
    %s103 = smul.u32 %s30, 16
    %s104 = sadd.s32 %s103, 16
    %p105 = scmp.lt.s32.totalorder %s104, 15
    %s106 = scalar_select %p105, %s104, 15
    %s107 = ssub.s32 %s22, %s34
    %s108 = ssub.s32 %s102, %s106
    %s109 = sor.u32 %s107, %s108
    %p110 = scmp.eq.s32.totalorder %s109, 0
    %s112 = sadd.s32 %s111, 1
    %s113 = scalar_select %p110, %s111, %s112
    %p116 = pneg %p110
    %p117 = scmp.eq.s32.totalorder %s15, 1
    %p118 = por %p116, %p117
    %p119 = scmp.ne.s32.totalorder %s111, %s114
    %p120 = scmp.eq.s32.totalorder %s15, 0
    %p121 = por %p119, %p120
    %p122 = scmp.ne.s32.totalorder %s111, %s114
    %p123 = scmp.eq.s32.totalorder %s20, 1
    %p124 = por %p122, %p123
    %p125 = scmp.ne.s32.totalorder %s114, %s115
    %p126 = scmp.eq.s32.totalorder %s20, 0
    %p127 = por %p125, %p126
    %p128 = scmp.ne.s32.totalorder %s114, %s115
    %p129 = scmp.eq.s32.totalorder %s21, 1
    %p130 = por %p128, %p129
    %p132 = scmp.ne.s32.totalorder %s115, %s131
    %p133 = scmp.eq.s32.totalorder %s21, 0
    %p134 = por %p132, %p133
    %s136 = sadd.s32 %s135, 1
    %p139 = scmp.eq.s32.totalorder %s15, 1
    %p140 = scmp.ne.s32.totalorder %s135, %s137
    %p141 = scmp.eq.s32.totalorder %s15, 0
    %p142 = por %p140, %p141
    %p143 = scmp.ne.s32.totalorder %s135, %s137
    %p144 = scmp.eq.s32.totalorder %s20, 1
    %p145 = por %p143, %p144
    %p146 = scmp.ne.s32.totalorder %s137, %s138
    %p147 = scmp.eq.s32.totalorder %s20, 0
    %p148 = por %p146, %p147
    %p149 = scmp.ne.s32.totalorder %s137, %s138
    %p150 = scmp.eq.s32.totalorder %s21, 1
    %p151 = por %p149, %p150
    %p153 = scmp.ne.s32.totalorder %s138, %s152
    %p154 = scmp.eq.s32.totalorder %s21, 0
    %p155 = por %p153, %p154
    %s157 = sadd.s32 %s156, 1
    %p160 = scmp.eq.s32.totalorder %s15, 1
    %p161 = scmp.ne.s32.totalorder %s156, %s158
    %p162 = scmp.eq.s32.totalorder %s15, 0
    %p163 = por %p161, %p162
    %p164 = scmp.ne.s32.totalorder %s156, %s158
    %p165 = scmp.eq.s32.totalorder %s20, 1
    %p166 = por %p164, %p165
    %p167 = scmp.ne.s32.totalorder %s158, %s159
    %p168 = scmp.eq.s32.totalorder %s20, 0
    %p169 = por %p167, %p168
    %p170 = scmp.ne.s32.totalorder %s158, %s159
    %p171 = scmp.eq.s32.totalorder %s21, 1
    %p172 = por %p170, %p171
    %p174 = scmp.ne.s32.totalorder %s159, %s173
    %p175 = scmp.eq.s32.totalorder %s21, 0
    %p176 = por %p174, %p175
    %s178 = sadd.s32 %s177, 1
    %p181 = scmp.eq.s32.totalorder %s15, 1
    %p182 = scmp.ne.s32.totalorder %s177, %s179
    %p183 = scmp.eq.s32.totalorder %s15, 0
    %p184 = por %p182, %p183
    %p185 = scmp.ne.s32.totalorder %s177, %s179
    %p186 = scmp.eq.s32.totalorder %s20, 1
    %p187 = por %p185, %p186
    %p188 = scmp.ne.s32.totalorder %s179, %s180
    %p189 = scmp.eq.s32.totalorder %s20, 0
    %p190 = por %p188, %p189
    %p191 = scmp.ne.s32.totalorder %s179, %s180
    %p192 = scmp.eq.s32.totalorder %s21, 1
    %p193 = por %p191, %p192
    %p195 = scmp.ne.s32.totalorder %s180, %s194
    %p196 = scmp.eq.s32.totalorder %s21, 0
    %p197 = por %p195, %p196
    %s199 = sadd.s32 %s198, 1
    %p202 = scmp.eq.s32.totalorder %s15, 1
    %p203 = scmp.ne.s32.totalorder %s198, %s200
    %p204 = scmp.eq.s32.totalorder %s15, 0
    %p205 = por %p203, %p204
    %p206 = scmp.ne.s32.totalorder %s198, %s200
    %p207 = scmp.eq.s32.totalorder %s20, 1
    %p208 = por %p206, %p207
    %p209 = scmp.ne.s32.totalorder %s200, %s201
    %p210 = scmp.eq.s32.totalorder %s20, 0
    %p211 = por %p209, %p210
    %p212 = scmp.ne.s32.totalorder %s200, %s201
    %p213 = scmp.eq.s32.totalorder %s21, 1
    %p214 = por %p212, %p213
    %p216 = scmp.ne.s32.totalorder %s201, %s215
    %p217 = scmp.eq.s32.totalorder %s21, 0
    %p218 = por %p216, %p217
    %s220 = sadd.s32 %s219, 1
    %p223 = scmp.eq.s32.totalorder %s15, 1
    %p224 = scmp.ne.s32.totalorder %s219, %s221
    %p225 = scmp.eq.s32.totalorder %s15, 0
    %p226 = por %p224, %p225
    %p227 = scmp.ne.s32.totalorder %s219, %s221
    %p228 = scmp.eq.s32.totalorder %s20, 1
    %p229 = por %p227, %p228
    %p230 = scmp.ne.s32.totalorder %s221, %s222
    %p231 = scmp.eq.s32.totalorder %s20, 0
    %p232 = por %p230, %p231
    %p233 = scmp.ne.s32.totalorder %s221, %s222
    %p234 = scmp.eq.s32.totalorder %s21, 1
    %p235 = por %p233, %p234
    %p237 = scmp.ne.s32.totalorder %s222, %s236
    %p238 = scmp.eq.s32.totalorder %s21, 0
    %p239 = por %p237, %p238
    %s241 = sadd.s32 %s240, 1
    %p244 = scmp.eq.s32.totalorder %s15, 1
    %p245 = scmp.ne.s32.totalorder %s240, %s242
    %p246 = scmp.eq.s32.totalorder %s15, 0
    %p247 = por %p245, %p246
    %p248 = scmp.ne.s32.totalorder %s240, %s242
    %p249 = scmp.eq.s32.totalorder %s20, 1
    %p250 = por %p248, %p249
    %p251 = scmp.ne.s32.totalorder %s242, %s243
    %p252 = scmp.eq.s32.totalorder %s20, 0
    %p253 = por %p251, %p252
    %p254 = scmp.ne.s32.totalorder %s242, %s243
    %p255 = scmp.eq.s32.totalorder %s21, 1
    %p256 = por %p254, %p255
    %p258 = scmp.ne.s32.totalorder %s243, %s257
    %p259 = scmp.eq.s32.totalorder %s21, 0
    %p260 = por %p258, %p259
    %s261 = ssub.s32 %s22, %s34
    %s262 = ssub.s32 %s23, %s30
    %s263 = sor.u32 %s261, %s262
    %p264 = scmp.eq.s32.totalorder %s263, 0
    %s266 = sadd.s32 %s265, 1
    %s267 = scalar_select %p264, %s265, %s266
    %p270 = pneg %p264
    %p271 = scmp.eq.s32.totalorder %s15, 1
    %p272 = por %p270, %p271
    %p273 = scmp.ne.s32.totalorder %s265, %s268
    %p274 = scmp.eq.s32.totalorder %s15, 0
    %p275 = por %p273, %p274
    %p276 = scmp.ne.s32.totalorder %s265, %s268
    %p277 = scmp.eq.s32.totalorder %s20, 1
    %p278 = por %p276, %p277
    %p279 = scmp.ne.s32.totalorder %s268, %s269
    %p280 = scmp.eq.s32.totalorder %s20, 0
    %p281 = por %p279, %p280
    %p282 = scmp.ne.s32.totalorder %s268, %s269
    %p283 = scmp.eq.s32.totalorder %s21, 1
    %p284 = por %p282, %p283
    %p286 = scmp.ne.s32.totalorder %s269, %s285
    %p287 = scmp.eq.s32.totalorder %s21, 0
    %p288 = por %p286, %p287
    %p289 = scmp.le.s32.totalorder 1, %s15
    %p290 = scmp.lt.s32.totalorder %s15, 3
    %p291 = pnand %p289, %p290
    %p292 = pneg %p291
    // Predicated region
    $region9: #{csp_layer_forward.4} parent=5 // pred_check
      _
    $region10: #{csp_layer_forward.4} parent=5 // pred_check_branch
      %294 = sbr.rel (%p291) target = $region12
    $region11: #{csp_layer_forward.4} parent=5 // pred_region
      %s295 = ssub.s32 %s15, 1
      // Predicated region
      $region13: #{csp_layer_forward.4} parent=11 // pred_check
        %p296 = pneg %p148
      $region14: #{csp_layer_forward.4} parent=11 // pred_check_branch
        %298 = sbr.rel (%p296) target = $region16
      $region15: #{csp_layer_forward.4} parent=11 // pred_region
        _
      $region16: #{csp_layer_forward.4} parent=11 // pred_fallthru
        _
      // Predicated region
      $region17: #{csp_layer_forward.4} parent=11 // pred_check
        %p299 = pneg %p169
      $region18: #{csp_layer_forward.4} parent=11 // pred_check_branch
        %301 = sbr.rel (%p299) target = $region20
      $region19: #{csp_layer_forward.4} parent=11 // pred_region
        _
      $region20: #{csp_layer_forward.4} parent=11 // pred_fallthru
        _
      // Predicated region
      $region21: #{csp_layer_forward.4} parent=11 // pred_check
        %p302 = pneg %p190
      $region22: #{csp_layer_forward.4} parent=11 // pred_check_branch
        %304 = sbr.rel (%p302) target = $region24
      $region23: #{csp_layer_forward.4} parent=11 // pred_region
        _
      $region24: #{csp_layer_forward.4} parent=11 // pred_fallthru
        _
      // Predicated region
      $region25: #{csp_layer_forward.4} parent=11 // pred_check
        %p305 = pneg %p211
      $region26: #{csp_layer_forward.4} parent=11 // pred_check_branch
        %307 = sbr.rel (%p305) target = $region28
      $region27: #{csp_layer_forward.4} parent=11 // pred_region
        _
      $region28: #{csp_layer_forward.4} parent=11 // pred_fallthru
        _
      // Predicated region
      $region29: #{csp_layer_forward.4} parent=11 // pred_check
        %p308 = pneg %p232
      $region30: #{csp_layer_forward.4} parent=11 // pred_check_branch
        %310 = sbr.rel (%p308) target = $region32
      $region31: #{csp_layer_forward.4} parent=11 // pred_region
        _
      $region32: #{csp_layer_forward.4} parent=11 // pred_fallthru
        _
      // Predicated region
      $region33: #{csp_layer_forward.4} parent=11 // pred_check
        %p311 = pneg %p253
      $region34: #{csp_layer_forward.4} parent=11 // pred_check_branch
        %313 = sbr.rel (%p311) target = $region36
      $region35: #{csp_layer_forward.4} parent=11 // pred_region
        _
      $region36: #{csp_layer_forward.4} parent=11 // pred_fallthru
        _
    $region12: #{csp_layer_forward.4} parent=5 // pred_fallthru
      _
    %p314 = scmp.lt.s32.totalorder %s15, 2
    // Predicated region
    $region37: #{csp_layer_forward.4} parent=5 // pred_check
      %p315 = pneg %p314
    $region38: #{csp_layer_forward.4} parent=5 // pred_check_branch
      %317 = sbr.rel (%p315) target = $region40
    $region39: #{csp_layer_forward.4} parent=5 // pred_region
      // Predicated region
      $region41: #{csp_layer_forward.4} parent=39 // pred_check
        %p318 = pneg %p57
      $region42: #{csp_layer_forward.4} parent=39 // pred_check_branch
        %320 = sbr.rel (%p318) target = $region44
      $region43: #{csp_layer_forward.4} parent=39 // pred_region
        %s321 = smul.u32 %s23, 16
        %s322 = ssub.s32 %s321, 1
        %p323 = scmp.gt.s32.totalorder %s322, 0
        %s324 = scalar_select %p323, %s322, 0
        %p325 = scmp.lt.s32.totalorder %s22, 1
        %s326 = scalar_select %p325, %s22, 1
        %p327 = scmp.lt.s32.totalorder %s324, 15
        %s328 = scalar_select %p327, %s324, 15
        %s329 = smul.addr %s328, 2
        %s330 = smul.addr %s326, 32
        %s331 = sadd.s32 %s329, %s330
        %s332 = smul.addr %s331, 4
        %s333 = scalar_lea.vmem %s0, %s332
        %s334 = smul.u32 %s23, 16
        %s335 = ssub.s32 %s334, 1
        %p336 = scmp.gt.s32.totalorder %s335, 0
        %s337 = scalar_select %p336, %s335, 0
      $region44: #{csp_layer_forward.4} parent=39 // pred_fallthru
        _
      // Predicated region
      $region45: #{csp_layer_forward.4} parent=39 // pred_check
        %p338 = pneg %p85
      $region46: #{csp_layer_forward.4} parent=39 // pred_check_branch
        %340 = sbr.rel (%p338) target = $region48
      $region47: #{csp_layer_forward.4} parent=39 // pred_region
        %s341 = smul.u32 16, %s23
        %p342 = scmp.lt.s32.totalorder %s22, 1
        %s343 = scalar_select %p342, %s22, 1
        %p344 = scmp.lt.s32.totalorder %s341, 15
        %s345 = scalar_select %p344, %s341, 15
        %s346 = smul.addr %s345, 2
        %s347 = smul.addr %s343, 32
        %s348 = sadd.s32 %s346, %s347
        %s349 = smul.addr %s348, 4
        %s350 = scalar_lea.vmem %s1, %s349
        %s351 = smul.u32 16, %s23
      $region48: #{csp_layer_forward.4} parent=39 // pred_fallthru
        _
      // Predicated region
      $region49: #{csp_layer_forward.4} parent=39 // pred_check
        %p352 = pneg %p121
      $region50: #{csp_layer_forward.4} parent=39 // pred_check_branch
        %354 = sbr.rel (%p352) target = $region52
      $region51: #{csp_layer_forward.4} parent=39 // pred_region
        %s355 = smul.u32 %s23, 16
        %s356 = sadd.s32 %s355, 16
        %p357 = scmp.lt.s32.totalorder %s356, 15
        %s358 = scalar_select %p357, %s356, 15
        %p359 = scmp.lt.s32.totalorder %s22, 1
        %s360 = scalar_select %p359, %s22, 1
        %p361 = scmp.lt.s32.totalorder %s358, 15
        %s362 = scalar_select %p361, %s358, 15
        %s363 = smul.addr %s362, 2
        %s364 = smul.addr %s360, 32
        %s365 = sadd.s32 %s363, %s364
        %s366 = smul.addr %s365, 4
        %s367 = scalar_lea.vmem %s2, %s366
        %s368 = smul.u32 %s23, 16
        %s369 = sadd.s32 %s368, 16
        %p370 = scmp.lt.s32.totalorder %s369, 15
        %s371 = scalar_select %p370, %s369, 15
      $region52: #{csp_layer_forward.4} parent=39 // pred_fallthru
        _
    $region40: #{csp_layer_forward.4} parent=5 // pred_fallthru
      _
    %p372 = scmp.le.s32.totalorder 1, %s15
    %p373 = scmp.lt.s32.totalorder %s15, 3
    %p374 = pnand %p372, %p373
    %p375 = pneg %p374
    // Predicated region
    $region53: #{csp_layer_forward.4} parent=5 // pred_check
      _
    $region54: #{csp_layer_forward.4} parent=5 // pred_check_branch
      %377 = sbr.rel (%p374) target = $region56
    $region55: #{csp_layer_forward.4} parent=5 // pred_region
      %s378 = ssub.s32 %s15, 1
      %s379 = smul.u32 %s25, 16
      %s380 = ssub.s32 %s379, 1
      %p381 = scmp.gt.s32.totalorder %s380, 0
      %s382 = scalar_select %p381, %s380, 0
      %p383 = scmp.lt.s32.totalorder %s24, 1
      %s384 = scalar_select %p383, %s24, 1
      %p385 = scmp.lt.s32.totalorder %s382, 15
      %s386 = scalar_select %p385, %s382, 15
      %s387 = smul.addr %s386, 2
      %s388 = smul.addr %s384, 32
      %s389 = sadd.s32 %s387, %s388
      %s390 = smul.addr %s389, 4
      %s391 = scalar_lea.vmem %s0, %s390
      %p392 = pneg %p63
      %p393 = pneg %p60
      %s394 = smul.u32 16, %s25
      %p395 = scmp.lt.s32.totalorder %s24, 1
      %s396 = scalar_select %p395, %s24, 1
      %p397 = scmp.lt.s32.totalorder %s394, 15
      %s398 = scalar_select %p397, %s394, 15
      %s399 = smul.addr %s398, 2
      %s400 = smul.addr %s396, 32
      %s401 = sadd.s32 %s399, %s400
      %s402 = smul.addr %s401, 4
      %s403 = scalar_lea.vmem %s1, %s402
      %p404 = pneg %p91
      %p405 = pneg %p88
      %s406 = smul.u32 %s25, 16
      %s407 = sadd.s32 %s406, 16
      %p408 = scmp.lt.s32.totalorder %s407, 15
      %s409 = scalar_select %p408, %s407, 15
      %p410 = scmp.lt.s32.totalorder %s24, 1
      %s411 = scalar_select %p410, %s24, 1
      %p412 = scmp.lt.s32.totalorder %s409, 15
      %s413 = scalar_select %p412, %s409, 15
      %s414 = smul.addr %s413, 2
      %s415 = smul.addr %s411, 32
      %s416 = sadd.s32 %s414, %s415
      %s417 = smul.addr %s416, 4
      %s418 = scalar_lea.vmem %s2, %s417
      %p419 = pneg %p127
      %p420 = pneg %p124
      %p421 = pneg %p148
      %p422 = pneg %p145
      %p423 = pneg %p169
      %p424 = pneg %p166
      %p425 = pneg %p190
      %p426 = pneg %p187
      %p427 = pneg %p211
      %p428 = pneg %p208
      %p429 = pneg %p232
      %p430 = pneg %p229
      %p431 = pneg %p253
      %p432 = pneg %p250
      %p433 = pneg %p281
      %p434 = pneg %p278
      %s435 = smul.u32 16, %s25
      %p436 = scmp.lt.s32.totalorder %s24, 1
      %s437 = scalar_select %p436, %s24, 1
      %p438 = scmp.lt.s32.totalorder %s435, 15
      %s439 = scalar_select %p438, %s435, 15
      %s440 = smul.addr %s439, 2
      %s441 = smul.addr %s437, 32
      %s442 = sadd.s32 %s440, %s441
      %s443 = smul.addr %s442, 4
      %s444 = scalar_lea.vmem %s9, %s443
      %s445 = smul.u32 %s25, 16
      %s446 = ssub.s32 %s445, 1
      %p447 = scmp.gt.s32.totalorder %s446, 0
      %s448 = scalar_select %p447, %s446, 0
      %p449 = scmp.lt.s32.totalorder %s24, 1
      %s450 = scalar_select %p449, %s24, 1
      %p451 = scmp.lt.s32.totalorder %s448, 15
      %s452 = scalar_select %p451, %s448, 15
      %s453 = smul.addr %s452, 2
      %s454 = smul.addr %s450, 32
      %s455 = sadd.s32 %s453, %s454
      %s456 = smul.addr %s455, 4
      %s457 = scalar_lea.vmem %s0, %s456
      %s458 = smul.u32 %s25, 16
      %s459 = ssub.s32 %s458, 1
      %p460 = scmp.gt.s32.totalorder %s459, 0
      %s461 = scalar_select %p460, %s459, 0
      %s462 = smul.u32 16, %s25
      %p463 = scmp.lt.s32.totalorder %s24, 1
      %s464 = scalar_select %p463, %s24, 1
      %p465 = scmp.lt.s32.totalorder %s462, 15
      %s466 = scalar_select %p465, %s462, 15
      %s467 = smul.addr %s466, 2
      %s468 = smul.addr %s464, 32
      %s469 = sadd.s32 %s467, %s468
      %s470 = smul.addr %s469, 4
      %s471 = scalar_lea.vmem %s1, %s470
      %s472 = smul.u32 16, %s25
      %s473 = smul.u32 %s25, 16
      %s474 = sadd.s32 %s473, 16
      %p475 = scmp.lt.s32.totalorder %s474, 15
      %s476 = scalar_select %p475, %s474, 15
      %p477 = scmp.lt.s32.totalorder %s24, 1
      %s478 = scalar_select %p477, %s24, 1
      %p479 = scmp.lt.s32.totalorder %s476, 15
      %s480 = scalar_select %p479, %s476, 15
      %s481 = smul.addr %s480, 2
      %s482 = smul.addr %s478, 32
      %s483 = sadd.s32 %s481, %s482
      %s484 = smul.addr %s483, 4
      %s485 = scalar_lea.vmem %s2, %s484
      %s486 = smul.u32 %s25, 16
      %s487 = sadd.s32 %s486, 16
      %p488 = scmp.lt.s32.totalorder %s487, 15
      %s489 = scalar_select %p488, %s487, 15
      %s490 = smul.u32 16, %s25
      %p491 = scmp.lt.s32.totalorder %s24, 1
      %s492 = scalar_select %p491, %s24, 1
      %p493 = scmp.lt.s32.totalorder %s490, 15
      %s494 = scalar_select %p493, %s490, 15
      %s495 = smul.addr %s494, 2
      %s496 = smul.addr %s492, 32
      %s497 = sadd.s32 %s495, %s496
      %s498 = smul.addr %s497, 4
      %s499 = scalar_lea.vmem %s9, %s498
      %s500 = smul.u32 16, %s25
      %v502 = vld [vmem:[%s457] sm:$0xf]
      %v503 = vld [vmem:[%s457 + $0x4] sm:$0xf]
      %v504 = vld [vmem:[%s471] sm:$0xf]
      %v505 = vld [vmem:[%s471 + $0x4] sm:$0xf]
      %v506 = vld [vmem:[%s471 + $0x8] sm:$0xf]
      %v507 = vld [vmem:[%s471 + $0xc] sm:$0xf]
      %v508 = vld [vmem:[%s471 + $0x10] sm:$0xf]
      %v509 = vld [vmem:[%s471 + $0x14] sm:$0xf]
      %v510 = vld [vmem:[%s471 + $0x18] sm:$0xf]
      %v511 = vld [vmem:[%s471 + $0x1c] sm:$0xf]
      %v512 = vld [vmem:[%s471 + $0x20] sm:$0xf]
      %v513 = vld [vmem:[%s471 + $0x24] sm:$0xf]
      %v514 = vld [vmem:[%s471 + $0x28] sm:$0xf]
      %v515 = vld [vmem:[%s471 + $0x2c] sm:$0xf]
      %v516 = vld [vmem:[%s471 + $0x30] sm:$0xf]
      %v517 = vld [vmem:[%s471 + $0x34] sm:$0xf]
      %v518 = vld [vmem:[%s471 + $0x38] sm:$0xf]
      %v519 = vld [vmem:[%s471 + $0x3c] sm:$0xf]
      %v520 = vld [vmem:[%s471 + $0x40] sm:$0xf]
      %v521 = vld [vmem:[%s471 + $0x44] sm:$0xf]
      %v522 = vld [vmem:[%s471 + $0x48] sm:$0xf]
      %v523 = vld [vmem:[%s471 + $0x4c] sm:$0xf]
      %v524 = vld [vmem:[%s471 + $0x50] sm:$0xf]
      %v525 = vld [vmem:[%s471 + $0x54] sm:$0xf]
      %v526 = vld [vmem:[%s471 + $0x58] sm:$0xf]
      %v527 = vld [vmem:[%s471 + $0x5c] sm:$0xf]
      %v528 = vld [vmem:[%s471 + $0x60] sm:$0xf]
      %v529 = vld [vmem:[%s471 + $0x64] sm:$0xf]
      %v530 = vld [vmem:[%s471 + $0x68] sm:$0xf]
      %v531 = vld [vmem:[%s471 + $0x6c] sm:$0xf]
      %v532 = vld [vmem:[%s471 + $0x70] sm:$0xf]
      %v533 = vld [vmem:[%s471 + $0x74] sm:$0xf]
      %v534 = vld [vmem:[%s471 + $0x78] sm:$0xf]
      %v535 = vld [vmem:[%s471 + $0x7c] sm:$0xf]
      %v536 = vld [vmem:[%s485] sm:$0xf]
      %v537 = vld [vmem:[%s485 + $0x4] sm:$0xf]
      %v538 = vld [vmem:[%s3] sm:$0x3]
      %v575 = vunpack.c.l.b16 %v502
      %v576 = vunpack.c.l.b16 %v503
      %v577 = vunpack.c.l.b16 %v504
      %v578 = vunpack.c.l.b16 %v505
      %v579 = vunpack.c.l.b16 %v506
      %v580 = vunpack.c.l.b16 %v507
      %v581 = vunpack.c.l.b16 %v508
      %v582 = vunpack.c.l.b16 %v509
      %v583 = vunpack.c.l.b16 %v510
      %v584 = vunpack.c.l.b16 %v511
      %v585 = vunpack.c.l.b16 %v512
      %v586 = vunpack.c.l.b16 %v513
      %v587 = vunpack.c.l.b16 %v514
      %v588 = vunpack.c.l.b16 %v515
      %v589 = vunpack.c.l.b16 %v516
      %v590 = vunpack.c.l.b16 %v517
      %v591 = vunpack.c.l.b16 %v518
      %v592 = vunpack.c.l.b16 %v519
      %v593 = vunpack.c.l.b16 %v520
      %v594 = vunpack.c.l.b16 %v521
      %v595 = vunpack.c.l.b16 %v522
      %v596 = vunpack.c.l.b16 %v523
      %v597 = vunpack.c.l.b16 %v524
      %v598 = vunpack.c.l.b16 %v525
      %v599 = vunpack.c.l.b16 %v526
      %v600 = vunpack.c.l.b16 %v527
      %v601 = vunpack.c.l.b16 %v528
      %v602 = vunpack.c.l.b16 %v529
      %v603 = vunpack.c.l.b16 %v530
      %v604 = vunpack.c.l.b16 %v531
      %v605 = vunpack.c.l.b16 %v532
      %v606 = vunpack.c.l.b16 %v533
      %v607 = vunpack.c.l.b16 %v534
      %v608 = vunpack.c.l.b16 %v535
      %v609 = vunpack.c.l.b16 %v536
      %v610 = vunpack.c.l.b16 %v537
      %v611 = vpack.c.b16 %v576, %v575
      %v612 = vpack.c.b16 %v578, %v577
      %v613 = vpack.c.b16 %v580, %v579
      %v614 = vpack.c.b16 %v582, %v581
      %v615 = vpack.c.b16 %v584, %v583
      %v616 = vpack.c.b16 %v586, %v585
      %v617 = vpack.c.b16 %v588, %v587
      %v618 = vpack.c.b16 %v590, %v589
      %v619 = vpack.c.b16 %v592, %v591
      %v620 = vpack.c.b16 %v594, %v593
      %v621 = vpack.c.b16 %v596, %v595
      %v622 = vpack.c.b16 %v598, %v597
      %v623 = vpack.c.b16 %v600, %v599
      %v624 = vpack.c.b16 %v602, %v601
      %v625 = vpack.c.b16 %v604, %v603
      %v626 = vpack.c.b16 %v606, %v605
      %v627 = vpack.c.b16 %v608, %v607
      %v628 = vpack.c.b16 %v610, %v609
      %vm629 = vcmask 31744
      %v631 = vsel %vm629, %v611, 0
      %v634 = vsel %vm629, %v612, 0
      %v637 = vsel %vm629, %v613, 0
      %v640 = vsel %vm629, %v614, 0
      %v643 = vsel %vm629, %v615, 0
      %v646 = vsel %vm629, %v616, 0
      %v649 = vsel %vm629, %v617, 0
      %v652 = vsel %vm629, %v618, 0
      %v655 = vsel %vm629, %v619, 0
      %v658 = vsel %vm629, %v620, 0
      %v661 = vsel %vm629, %v621, 0
      %v664 = vsel %vm629, %v622, 0
      %v667 = vsel %vm629, %v623, 0
      %v670 = vsel %vm629, %v624, 0
      %v673 = vsel %vm629, %v625, 0
      %v676 = vsel %vm629, %v626, 0
      %v679 = vsel %vm629, %v627, 0
      %v682 = vsel %vm629, %v628, 0
      %vm684 = vcmask 1041408
      %v686 = vsel %vm684, %v538, 0
      %688 = vmatpush.bf16.msra.mxu0 0
      %689 = vmatpush.bf16.msra.mxu0 0
      %690 = vmatpush.bf16.msra.mxu0 0
      %691 = vmatpush.bf16.msra.mxu0 0
      %692 = vmatpush.bf16.msra.mxu0 0
      %693 = vmatpush.bf16.msra.mxu0 0
      %694 = vmatpush.bf16.msra.mxu0 0
      %695 = vmatpush.bf16.msra.mxu0 %v686
      %696 = vmatmul.bf16.gmra.mxu0 %v631
      %v697 = vpop.f32.mrf.mxu0
      %v698 = vadd.f32 0.0, %v697
      %v699 = vpop.f32.mrf.mxu0
      %v700 = vadd.f32 0.0, %v699
      %701 = vmatmul.bf16.gmra.mxu0 %v634
      %v702 = vpop.f32.mrf.mxu0
      %v703 = vadd.f32 0.0, %v702
      %v704 = vpop.f32.mrf.mxu0
      %v705 = vadd.f32 0.0, %v704
      %706 = vmatmul.bf16.gmra.mxu0 %v637
      %v707 = vpop.f32.mrf.mxu0
      %v708 = vadd.f32 0.0, %v707
      %v709 = vpop.f32.mrf.mxu0
      %v710 = vadd.f32 0.0, %v709
      %711 = vmatmul.bf16.gmra.mxu0 %v640
      %v712 = vpop.f32.mrf.mxu0
      %v713 = vadd.f32 0.0, %v712
      %v714 = vpop.f32.mrf.mxu0
      %v715 = vadd.f32 0.0, %v714
      %716 = vmatmul.bf16.gmra.mxu0 %v643
      %v717 = vpop.f32.mrf.mxu0
      %v718 = vadd.f32 0.0, %v717
      %v719 = vpop.f32.mrf.mxu0
      %v720 = vadd.f32 0.0, %v719
      %721 = vmatmul.bf16.gmra.mxu0 %v646
      %v722 = vpop.f32.mrf.mxu0
      %v723 = vadd.f32 0.0, %v722
      %v724 = vpop.f32.mrf.mxu0
      %v725 = vadd.f32 0.0, %v724
      %726 = vmatmul.bf16.gmra.mxu0 %v649
      %v727 = vpop.f32.mrf.mxu0
      %v728 = vadd.f32 0.0, %v727
      %v729 = vpop.f32.mrf.mxu0
      %v730 = vadd.f32 0.0, %v729
      %731 = vmatmul.bf16.gmra.mxu0 %v652
      %v732 = vpop.f32.mrf.mxu0
      %v733 = vadd.f32 0.0, %v732
      %v734 = vpop.f32.mrf.mxu0
      %v735 = vadd.f32 0.0, %v734
      %736 = vmatmul.bf16.gmra.mxu0 %v655
      %v737 = vpop.f32.mrf.mxu0
      %v738 = vadd.f32 0.0, %v737
      %v739 = vpop.f32.mrf.mxu0
      %v740 = vadd.f32 0.0, %v739
      %741 = vmatmul.bf16.gmra.mxu0 %v658
      %v742 = vpop.f32.mrf.mxu0
      %v743 = vadd.f32 0.0, %v742
      %v744 = vpop.f32.mrf.mxu0
      %v745 = vadd.f32 0.0, %v744
      %746 = vmatmul.bf16.gmra.mxu0 %v661
      %v747 = vpop.f32.mrf.mxu0
      %v748 = vadd.f32 0.0, %v747
      %v749 = vpop.f32.mrf.mxu0
      %v750 = vadd.f32 0.0, %v749
      %751 = vmatmul.bf16.gmra.mxu0 %v664
      %v752 = vpop.f32.mrf.mxu0
      %v753 = vadd.f32 0.0, %v752
      %v754 = vpop.f32.mrf.mxu0
      %v755 = vadd.f32 0.0, %v754
      %756 = vmatmul.bf16.gmra.mxu0 %v667
      %v757 = vpop.f32.mrf.mxu0
      %v758 = vadd.f32 0.0, %v757
      %v759 = vpop.f32.mrf.mxu0
      %v760 = vadd.f32 0.0, %v759
      %761 = vmatmul.bf16.gmra.mxu0 %v670
      %v762 = vpop.f32.mrf.mxu0
      %v763 = vadd.f32 0.0, %v762
      %v764 = vpop.f32.mrf.mxu0
      %v765 = vadd.f32 0.0, %v764
      %766 = vmatmul.bf16.gmra.mxu0 %v673
      %v767 = vpop.f32.mrf.mxu0
      %v768 = vadd.f32 0.0, %v767
      %v769 = vpop.f32.mrf.mxu0
      %v770 = vadd.f32 0.0, %v769
      %771 = vmatmul.bf16.gmra.mxu0 %v676
      %v772 = vpop.f32.mrf.mxu0
      %v773 = vadd.f32 0.0, %v772
      %v774 = vpop.f32.mrf.mxu0
      %v775 = vadd.f32 0.0, %v774
      %776 = vmatmul.bf16.gmra.mxu0 %v679
      %v777 = vpop.f32.mrf.mxu0
      %v778 = vadd.f32 0.0, %v777
      %v779 = vpop.f32.mrf.mxu0
      %v780 = vadd.f32 0.0, %v779
      %781 = vmatmul.bf16.gmra.mxu0 %v682
      %v782 = vpop.f32.mrf.mxu0
      %v783 = vadd.f32 0.0, %v782
      %v784 = vpop.f32.mrf.mxu0
      %v785 = vadd.f32 0.0, %v784
      %786 = vdwg.mxu0
      %v787 = vld [vmem:[%s4] sm:$0x1]
      %v789 = vperm.slane %v787, 0
      %v791 = vmul.f32 %v698, %v789
      %v792 = vmul.f32 %v700, %v789
      %v793 = vmul.f32 %v703, %v789
      %v794 = vmul.f32 %v705, %v789
      %v795 = vmul.f32 %v708, %v789
      %v796 = vmul.f32 %v710, %v789
      %v797 = vmul.f32 %v713, %v789
      %v798 = vmul.f32 %v715, %v789
      %v799 = vmul.f32 %v718, %v789
      %v800 = vmul.f32 %v720, %v789
      %v801 = vmul.f32 %v723, %v789
      %v802 = vmul.f32 %v725, %v789
      %v803 = vmul.f32 %v728, %v789
      %v804 = vmul.f32 %v730, %v789
      %v805 = vmul.f32 %v733, %v789
      %v806 = vmul.f32 %v735, %v789
      %v807 = vmul.f32 %v738, %v789
      %v808 = vmul.f32 %v740, %v789
      %v809 = vmul.f32 %v743, %v789
      %v810 = vmul.f32 %v745, %v789
      %v811 = vmul.f32 %v748, %v789
      %v812 = vmul.f32 %v750, %v789
      %v813 = vmul.f32 %v753, %v789
      %v814 = vmul.f32 %v755, %v789
      %v815 = vmul.f32 %v758, %v789
      %v816 = vmul.f32 %v760, %v789
      %v817 = vmul.f32 %v763, %v789
      %v818 = vmul.f32 %v765, %v789
      %v819 = vmul.f32 %v768, %v789
      %v820 = vmul.f32 %v770, %v789
      %v821 = vmul.f32 %v773, %v789
      %v822 = vmul.f32 %v775, %v789
      %v823 = vmul.f32 %v778, %v789
      %v824 = vmul.f32 %v780, %v789
      %v825 = vmul.f32 %v783, %v789
      %v826 = vmul.f32 %v785, %v789
      %v827 = vld [vmem:[%s5] sm:$0x1]
      %v829 = vperm.slane %v827, 0
      %v831 = vadd.f32 %v791, %v829
      %v832 = vadd.f32 %v792, %v829
      %v833 = vadd.f32 %v793, %v829
      %v834 = vadd.f32 %v794, %v829
      %v835 = vadd.f32 %v795, %v829
      %v836 = vadd.f32 %v796, %v829
      %v837 = vadd.f32 %v797, %v829
      %v838 = vadd.f32 %v798, %v829
      %v839 = vadd.f32 %v799, %v829
      %v840 = vadd.f32 %v800, %v829
      %v841 = vadd.f32 %v801, %v829
      %v842 = vadd.f32 %v802, %v829
      %v843 = vadd.f32 %v803, %v829
      %v844 = vadd.f32 %v804, %v829
      %v845 = vadd.f32 %v805, %v829
      %v846 = vadd.f32 %v806, %v829
      %v847 = vadd.f32 %v807, %v829
      %v848 = vadd.f32 %v808, %v829
      %v849 = vadd.f32 %v809, %v829
      %v850 = vadd.f32 %v810, %v829
      %v851 = vadd.f32 %v811, %v829
      %v852 = vadd.f32 %v812, %v829
      %v853 = vadd.f32 %v813, %v829
      %v854 = vadd.f32 %v814, %v829
      %v855 = vadd.f32 %v815, %v829
      %v856 = vadd.f32 %v816, %v829
      %v857 = vadd.f32 %v817, %v829
      %v858 = vadd.f32 %v818, %v829
      %v859 = vadd.f32 %v819, %v829
      %v860 = vadd.f32 %v820, %v829
      %v861 = vadd.f32 %v821, %v829
      %v862 = vadd.f32 %v822, %v829
      %v863 = vadd.f32 %v823, %v829
      %v864 = vadd.f32 %v824, %v829
      %v865 = vadd.f32 %v825, %v829
      %v866 = vadd.f32 %v826, %v829
      %v867 = vsub.f32 0.0, %v831
      %v868 = vsub.f32 0.0, %v832
      %v869 = vsub.f32 0.0, %v833
      %v870 = vsub.f32 0.0, %v834
      %v871 = vsub.f32 0.0, %v835
      %v872 = vsub.f32 0.0, %v836
      %v873 = vsub.f32 0.0, %v837
      %v874 = vsub.f32 0.0, %v838
      %v875 = vsub.f32 0.0, %v839
      %v876 = vsub.f32 0.0, %v840
      %v877 = vsub.f32 0.0, %v841
      %v878 = vsub.f32 0.0, %v842
      %v879 = vsub.f32 0.0, %v843
      %v880 = vsub.f32 0.0, %v844
      %v881 = vsub.f32 0.0, %v845
      %v882 = vsub.f32 0.0, %v846
      %v883 = vsub.f32 0.0, %v847
      %v884 = vsub.f32 0.0, %v848
      %v885 = vsub.f32 0.0, %v849
      %v886 = vsub.f32 0.0, %v850
      %v887 = vsub.f32 0.0, %v851
      %v888 = vsub.f32 0.0, %v852
      %v889 = vsub.f32 0.0, %v853
      %v890 = vsub.f32 0.0, %v854
      %v891 = vsub.f32 0.0, %v855
      %v892 = vsub.f32 0.0, %v856
      %v893 = vsub.f32 0.0, %v857
      %v894 = vsub.f32 0.0, %v858
      %v895 = vsub.f32 0.0, %v859
      %v896 = vsub.f32 0.0, %v860
      %v897 = vsub.f32 0.0, %v861
      %v898 = vsub.f32 0.0, %v862
      %v899 = vsub.f32 0.0, %v863
      %v900 = vsub.f32 0.0, %v864
      %v901 = vsub.f32 0.0, %v865
      %v902 = vsub.f32 0.0, %v866
      %v903 = vmul.f32 %v867, 1.442695
      %v904 = vpow.pop %v903
      %v905 = vmul.f32 %v868, 1.442695
      %v906 = vpow.pop %v905
      %v907 = vmul.f32 %v869, 1.442695
      %v908 = vpow.pop %v907
      %v909 = vmul.f32 %v870, 1.442695
      %v910 = vpow.pop %v909
      %v911 = vmul.f32 %v871, 1.442695
      %v912 = vpow.pop %v911
      %v913 = vmul.f32 %v872, 1.442695
      %v914 = vpow.pop %v913
      %v915 = vmul.f32 %v873, 1.442695
      %v916 = vpow.pop %v915
      %v917 = vmul.f32 %v874, 1.442695
      %v918 = vpow.pop %v917
      %v919 = vmul.f32 %v875, 1.442695
      %v920 = vpow.pop %v919
      %v921 = vmul.f32 %v876, 1.442695
      %v922 = vpow.pop %v921
      %v923 = vmul.f32 %v877, 1.442695
      %v924 = vpow.pop %v923
      %v925 = vmul.f32 %v878, 1.442695
      %v926 = vpow.pop %v925
      %v927 = vmul.f32 %v879, 1.442695
      %v928 = vpow.pop %v927
      %v929 = vmul.f32 %v880, 1.442695
      %v930 = vpow.pop %v929
      %v931 = vmul.f32 %v881, 1.442695
      %v932 = vpow.pop %v931
      %v933 = vmul.f32 %v882, 1.442695
      %v934 = vpow.pop %v933
      %v935 = vmul.f32 %v883, 1.442695
      %v936 = vpow.pop %v935
      %v937 = vmul.f32 %v884, 1.442695
      %v938 = vpow.pop %v937
      %v939 = vmul.f32 %v885, 1.442695
      %v940 = vpow.pop %v939
      %v941 = vmul.f32 %v886, 1.442695
      %v942 = vpow.pop %v941
      %v943 = vmul.f32 %v887, 1.442695
      %v944 = vpow.pop %v943
      %v945 = vmul.f32 %v888, 1.442695
      %v946 = vpow.pop %v945
      %v947 = vmul.f32 %v889, 1.442695
      %v948 = vpow.pop %v947
      %v949 = vmul.f32 %v890, 1.442695
      %v950 = vpow.pop %v949
      %v951 = vmul.f32 %v891, 1.442695
      %v952 = vpow.pop %v951
      %v953 = vmul.f32 %v892, 1.442695
      %v954 = vpow.pop %v953
      %v955 = vmul.f32 %v893, 1.442695
      %v956 = vpow.pop %v955
      %v957 = vmul.f32 %v894, 1.442695
      %v958 = vpow.pop %v957
      %v959 = vmul.f32 %v895, 1.442695
      %v960 = vpow.pop %v959
      %v961 = vmul.f32 %v896, 1.442695
      %v962 = vpow.pop %v961
      %v963 = vmul.f32 %v897, 1.442695
      %v964 = vpow.pop %v963
      %v965 = vmul.f32 %v898, 1.442695
      %v966 = vpow.pop %v965
      %v967 = vmul.f32 %v899, 1.442695
      %v968 = vpow.pop %v967
      %v969 = vmul.f32 %v900, 1.442695
      %v970 = vpow.pop %v969
      %v971 = vmul.f32 %v901, 1.442695
      %v972 = vpow.pop %v971
      %v973 = vmul.f32 %v902, 1.442695
      %v974 = vpow.pop %v973
      %v975 = vadd.f32 %v904, 1.0
      %v976 = vadd.f32 %v906, 1.0
      %v977 = vadd.f32 %v908, 1.0
      %v978 = vadd.f32 %v910, 1.0
      %v979 = vadd.f32 %v912, 1.0
      %v980 = vadd.f32 %v914, 1.0
      %v981 = vadd.f32 %v916, 1.0
      %v982 = vadd.f32 %v918, 1.0
      %v983 = vadd.f32 %v920, 1.0
      %v984 = vadd.f32 %v922, 1.0
      %v985 = vadd.f32 %v924, 1.0
      %v986 = vadd.f32 %v926, 1.0
      %v987 = vadd.f32 %v928, 1.0
      %v988 = vadd.f32 %v930, 1.0
      %v989 = vadd.f32 %v932, 1.0
      %v990 = vadd.f32 %v934, 1.0
      %v991 = vadd.f32 %v936, 1.0
      %v992 = vadd.f32 %v938, 1.0
      %v993 = vadd.f32 %v940, 1.0
      %v994 = vadd.f32 %v942, 1.0
      %v995 = vadd.f32 %v944, 1.0
      %v996 = vadd.f32 %v946, 1.0
      %v997 = vadd.f32 %v948, 1.0
      %v998 = vadd.f32 %v950, 1.0
      %v999 = vadd.f32 %v952, 1.0
      %v1000 = vadd.f32 %v954, 1.0
      %v1001 = vadd.f32 %v956, 1.0
      %v1002 = vadd.f32 %v958, 1.0
      %v1003 = vadd.f32 %v960, 1.0
      %v1004 = vadd.f32 %v962, 1.0
      %v1005 = vadd.f32 %v964, 1.0
      %v1006 = vadd.f32 %v966, 1.0
      %v1007 = vadd.f32 %v968, 1.0
      %v1008 = vadd.f32 %v970, 1.0
      %v1009 = vadd.f32 %v972, 1.0
      %v1010 = vadd.f32 %v974, 1.0
      %v1011 = vrcp.pop %v975
      %v1012 = vrcp.pop %v976
      %v1013 = vrcp.pop %v977
      %v1014 = vrcp.pop %v978
      %v1015 = vrcp.pop %v979
      %v1016 = vrcp.pop %v980
      %v1017 = vrcp.pop %v981
      %v1018 = vrcp.pop %v982
      %v1019 = vrcp.pop %v983
      %v1020 = vrcp.pop %v984
      %v1021 = vrcp.pop %v985
      %v1022 = vrcp.pop %v986
      %v1023 = vrcp.pop %v987
      %v1024 = vrcp.pop %v988
      %v1025 = vrcp.pop %v989
      %v1026 = vrcp.pop %v990
      %v1027 = vrcp.pop %v991
      %v1028 = vrcp.pop %v992
      %v1029 = vrcp.pop %v993
      %v1030 = vrcp.pop %v994
      %v1031 = vrcp.pop %v995
      %v1032 = vrcp.pop %v996
      %v1033 = vrcp.pop %v997
      %v1034 = vrcp.pop %v998
      %v1035 = vrcp.pop %v999
      %v1036 = vrcp.pop %v1000
      %v1037 = vrcp.pop %v1001
      %v1038 = vrcp.pop %v1002
      %v1039 = vrcp.pop %v1003
      %v1040 = vrcp.pop %v1004
      %v1041 = vrcp.pop %v1005
      %v1042 = vrcp.pop %v1006
      %v1043 = vrcp.pop %v1007
      %v1044 = vrcp.pop %v1008
      %v1045 = vrcp.pop %v1009
      %v1046 = vrcp.pop %v1010
      %v1047 = vmul.f32 %v831, %v1011
      %v1048 = vmul.f32 %v832, %v1012
      %v1049 = vmul.f32 %v833, %v1013
      %v1050 = vmul.f32 %v834, %v1014
      %v1051 = vmul.f32 %v835, %v1015
      %v1052 = vmul.f32 %v836, %v1016
      %v1053 = vmul.f32 %v837, %v1017
      %v1054 = vmul.f32 %v838, %v1018
      %v1055 = vmul.f32 %v839, %v1019
      %v1056 = vmul.f32 %v840, %v1020
      %v1057 = vmul.f32 %v841, %v1021
      %v1058 = vmul.f32 %v842, %v1022
      %v1059 = vmul.f32 %v843, %v1023
      %v1060 = vmul.f32 %v844, %v1024
      %v1061 = vmul.f32 %v845, %v1025
      %v1062 = vmul.f32 %v846, %v1026
      %v1063 = vmul.f32 %v847, %v1027
      %v1064 = vmul.f32 %v848, %v1028
      %v1065 = vmul.f32 %v849, %v1029
      %v1066 = vmul.f32 %v850, %v1030
      %v1067 = vmul.f32 %v851, %v1031
      %v1068 = vmul.f32 %v852, %v1032
      %v1069 = vmul.f32 %v853, %v1033
      %v1070 = vmul.f32 %v854, %v1034
      %v1071 = vmul.f32 %v855, %v1035
      %v1072 = vmul.f32 %v856, %v1036
      %v1073 = vmul.f32 %v857, %v1037
      %v1074 = vmul.f32 %v858, %v1038
      %v1075 = vmul.f32 %v859, %v1039
      %v1076 = vmul.f32 %v860, %v1040
      %v1077 = vmul.f32 %v861, %v1041
      %v1078 = vmul.f32 %v862, %v1042
      %v1079 = vmul.f32 %v863, %v1043
      %v1080 = vmul.f32 %v864, %v1044
      %v1081 = vmul.f32 %v865, %v1045
      %v1082 = vmul.f32 %v866, %v1046
      %v1083 = vpack.c.bf16 %v1047, %v1047
      %v1084 = vpack.c.bf16 %v1048, %v1048
      %v1085 = vpack.c.bf16 %v1049, %v1049
      %v1086 = vpack.c.bf16 %v1050, %v1050
      %v1087 = vpack.c.bf16 %v1051, %v1051
      %v1088 = vpack.c.bf16 %v1052, %v1052
      %v1089 = vpack.c.bf16 %v1053, %v1053
      %v1090 = vpack.c.bf16 %v1054, %v1054
      %v1091 = vpack.c.bf16 %v1055, %v1055
      %v1092 = vpack.c.bf16 %v1056, %v1056
      %v1093 = vpack.c.bf16 %v1057, %v1057
      %v1094 = vpack.c.bf16 %v1058, %v1058
      %v1095 = vpack.c.bf16 %v1059, %v1059
      %v1096 = vpack.c.bf16 %v1060, %v1060
      %v1097 = vpack.c.bf16 %v1061, %v1061
      %v1098 = vpack.c.bf16 %v1062, %v1062
      %v1099 = vpack.c.bf16 %v1063, %v1063
      %v1100 = vpack.c.bf16 %v1064, %v1064
      %v1101 = vpack.c.bf16 %v1065, %v1065
      %v1102 = vpack.c.bf16 %v1066, %v1066
      %v1103 = vpack.c.bf16 %v1067, %v1067
      %v1104 = vpack.c.bf16 %v1068, %v1068
      %v1105 = vpack.c.bf16 %v1069, %v1069
      %v1106 = vpack.c.bf16 %v1070, %v1070
      %v1107 = vpack.c.bf16 %v1071, %v1071
      %v1108 = vpack.c.bf16 %v1072, %v1072
      %v1109 = vpack.c.bf16 %v1073, %v1073
      %v1110 = vpack.c.bf16 %v1074, %v1074
      %v1111 = vpack.c.bf16 %v1075, %v1075
      %v1112 = vpack.c.bf16 %v1076, %v1076
      %v1113 = vpack.c.bf16 %v1077, %v1077
      %v1114 = vpack.c.bf16 %v1078, %v1078
      %v1115 = vpack.c.bf16 %v1079, %v1079
      %v1116 = vpack.c.bf16 %v1080, %v1080
      %v1117 = vpack.c.bf16 %v1081, %v1081
      %v1118 = vpack.c.bf16 %v1082, %v1082
      %vm1119 = vsmask.f32 256
      %vm1120 = vsmask.f32 4368
      %vm1121 = vmor %vm1119, %vm1120
      %v1123 = vshrl.u32 %v1083, 16
      %v1125 = vrot.slane %v1123, 7
      %v1126 = vshll.u32 %v1083, 16
      %v1128 = vor.u32 %v1125, %v1126
      %v1129 = vrot.slane %v1125, 4
      %v1131 = vshrl.u32 %v1084, 16
      %v1133 = vrot.slane %v1131, 7
      %v1134 = vshll.u32 %v1084, 16
      %v1136 = vor.u32 %v1133, %v1134
      %v1137 = vsel %vm1121, %v1129, %v1136
      %v1138 = vrot.slane %v1133, 4
      %v1140 = vshrl.u32 %v1085, 16
      %v1142 = vrot.slane %v1140, 7
      %v1143 = vshll.u32 %v1085, 16
      %v1145 = vor.u32 %v1142, %v1143
      %v1146 = vrot.slane %v1142, 4
      %v1148 = vshrl.u32 %v1086, 16
      %v1150 = vrot.slane %v1148, 7
      %v1151 = vshll.u32 %v1086, 16
      %v1153 = vor.u32 %v1150, %v1151
      %v1154 = vsel %vm1121, %v1146, %v1153
      %v1155 = vrot.slane %v1150, 4
      %v1157 = vshrl.u32 %v1087, 16
      %v1159 = vrot.slane %v1157, 7
      %v1160 = vshll.u32 %v1087, 16
      %v1162 = vor.u32 %v1159, %v1160
      %v1163 = vrot.slane %v1159, 4
      %v1165 = vshrl.u32 %v1088, 16
      %v1167 = vrot.slane %v1165, 7
      %v1168 = vshll.u32 %v1088, 16
      %v1170 = vor.u32 %v1167, %v1168
      %v1171 = vsel %vm1121, %v1163, %v1170
      %v1172 = vrot.slane %v1167, 4
      %v1174 = vshrl.u32 %v1089, 16
      %v1176 = vrot.slane %v1174, 7
      %v1177 = vshll.u32 %v1089, 16
      %v1179 = vor.u32 %v1176, %v1177
      %v1180 = vrot.slane %v1176, 4
      %v1182 = vshrl.u32 %v1090, 16
      %v1184 = vrot.slane %v1182, 7
      %v1185 = vshll.u32 %v1090, 16
      %v1187 = vor.u32 %v1184, %v1185
      %v1188 = vsel %vm1121, %v1180, %v1187
      %v1189 = vrot.slane %v1184, 4
      %v1191 = vshrl.u32 %v1091, 16
      %v1193 = vrot.slane %v1191, 7
      %v1194 = vshll.u32 %v1091, 16
      %v1196 = vor.u32 %v1193, %v1194
      %v1197 = vrot.slane %v1193, 4
      %v1199 = vshrl.u32 %v1092, 16
      %v1201 = vrot.slane %v1199, 7
      %v1202 = vshll.u32 %v1092, 16
      %v1204 = vor.u32 %v1201, %v1202
      %v1205 = vsel %vm1121, %v1197, %v1204
      %v1206 = vrot.slane %v1201, 4
      %v1208 = vshrl.u32 %v1093, 16
      %v1210 = vrot.slane %v1208, 7
      %v1211 = vshll.u32 %v1093, 16
      %v1213 = vor.u32 %v1210, %v1211
      %v1214 = vrot.slane %v1210, 4
      %v1216 = vshrl.u32 %v1094, 16
      %v1218 = vrot.slane %v1216, 7
      %v1219 = vshll.u32 %v1094, 16
      %v1221 = vor.u32 %v1218, %v1219
      %v1222 = vsel %vm1121, %v1214, %v1221
      %v1223 = vrot.slane %v1218, 4
      %v1225 = vshrl.u32 %v1095, 16
      %v1227 = vrot.slane %v1225, 7
      %v1228 = vshll.u32 %v1095, 16
      %v1230 = vor.u32 %v1227, %v1228
      %v1231 = vrot.slane %v1227, 4
      %v1233 = vshrl.u32 %v1096, 16
      %v1235 = vrot.slane %v1233, 7
      %v1236 = vshll.u32 %v1096, 16
      %v1238 = vor.u32 %v1235, %v1236
      %v1239 = vsel %vm1121, %v1231, %v1238
      %v1240 = vrot.slane %v1235, 4
      %v1242 = vshrl.u32 %v1097, 16
      %v1244 = vrot.slane %v1242, 7
      %v1245 = vshll.u32 %v1097, 16
      %v1247 = vor.u32 %v1244, %v1245
      %v1248 = vrot.slane %v1244, 4
      %v1250 = vshrl.u32 %v1098, 16
      %v1252 = vrot.slane %v1250, 7
      %v1253 = vshll.u32 %v1098, 16
      %v1255 = vor.u32 %v1252, %v1253
      %v1256 = vsel %vm1121, %v1248, %v1255
      %v1257 = vrot.slane %v1252, 4
      %v1259 = vshrl.u32 %v1099, 16
      %v1261 = vrot.slane %v1259, 7
      %v1262 = vshll.u32 %v1099, 16
      %v1264 = vor.u32 %v1261, %v1262
      %v1265 = vrot.slane %v1261, 4
      %v1267 = vshrl.u32 %v1100, 16
      %v1269 = vrot.slane %v1267, 7
      %v1270 = vshll.u32 %v1100, 16
      %v1272 = vor.u32 %v1269, %v1270
      %v1273 = vsel %vm1121, %v1265, %v1272
      %v1274 = vrot.slane %v1269, 4
      %v1276 = vshrl.u32 %v1101, 16
      %v1278 = vrot.slane %v1276, 7
      %v1279 = vshll.u32 %v1101, 16
      %v1281 = vor.u32 %v1278, %v1279
      %v1282 = vrot.slane %v1278, 4
      %v1284 = vshrl.u32 %v1102, 16
      %v1286 = vrot.slane %v1284, 7
      %v1287 = vshll.u32 %v1102, 16
      %v1289 = vor.u32 %v1286, %v1287
      %v1290 = vsel %vm1121, %v1282, %v1289
      %v1291 = vrot.slane %v1286, 4
      %v1293 = vshrl.u32 %v1103, 16
      %v1295 = vrot.slane %v1293, 7
      %v1296 = vshll.u32 %v1103, 16
      %v1298 = vor.u32 %v1295, %v1296
      %v1299 = vrot.slane %v1295, 4
      %v1301 = vshrl.u32 %v1104, 16
      %v1303 = vrot.slane %v1301, 7
      %v1304 = vshll.u32 %v1104, 16
      %v1306 = vor.u32 %v1303, %v1304
      %v1307 = vsel %vm1121, %v1299, %v1306
      %v1308 = vrot.slane %v1303, 4
      %v1310 = vshrl.u32 %v1105, 16
      %v1312 = vrot.slane %v1310, 7
      %v1313 = vshll.u32 %v1105, 16
      %v1315 = vor.u32 %v1312, %v1313
      %v1316 = vrot.slane %v1312, 4
      %v1318 = vshrl.u32 %v1106, 16
      %v1320 = vrot.slane %v1318, 7
      %v1321 = vshll.u32 %v1106, 16
      %v1323 = vor.u32 %v1320, %v1321
      %v1324 = vsel %vm1121, %v1316, %v1323
      %v1325 = vrot.slane %v1320, 4
      %v1327 = vshrl.u32 %v1107, 16
      %v1329 = vrot.slane %v1327, 7
      %v1330 = vshll.u32 %v1107, 16
      %v1332 = vor.u32 %v1329, %v1330
      %v1333 = vrot.slane %v1329, 4
      %v1335 = vshrl.u32 %v1108, 16
      %v1337 = vrot.slane %v1335, 7
      %v1338 = vshll.u32 %v1108, 16
      %v1340 = vor.u32 %v1337, %v1338
      %v1341 = vsel %vm1121, %v1333, %v1340
      %v1342 = vrot.slane %v1337, 4
      %v1344 = vshrl.u32 %v1109, 16
      %v1346 = vrot.slane %v1344, 7
      %v1347 = vshll.u32 %v1109, 16
      %v1349 = vor.u32 %v1346, %v1347
      %v1350 = vrot.slane %v1346, 4
      %v1352 = vshrl.u32 %v1110, 16
      %v1354 = vrot.slane %v1352, 7
      %v1355 = vshll.u32 %v1110, 16
      %v1357 = vor.u32 %v1354, %v1355
      %v1358 = vsel %vm1121, %v1350, %v1357
      %v1359 = vrot.slane %v1354, 4
      %v1361 = vshrl.u32 %v1111, 16
      %v1363 = vrot.slane %v1361, 7
      %v1364 = vshll.u32 %v1111, 16
      %v1366 = vor.u32 %v1363, %v1364
      %v1367 = vrot.slane %v1363, 4
      %v1369 = vshrl.u32 %v1112, 16
      %v1371 = vrot.slane %v1369, 7
      %v1372 = vshll.u32 %v1112, 16
      %v1374 = vor.u32 %v1371, %v1372
      %v1375 = vsel %vm1121, %v1367, %v1374
      %v1376 = vrot.slane %v1371, 4
      %v1378 = vshrl.u32 %v1113, 16
      %v1380 = vrot.slane %v1378, 7
      %v1381 = vshll.u32 %v1113, 16
      %v1383 = vor.u32 %v1380, %v1381
      %v1384 = vrot.slane %v1380, 4
      %v1386 = vshrl.u32 %v1114, 16
      %v1388 = vrot.slane %v1386, 7
      %v1389 = vshll.u32 %v1114, 16
      %v1391 = vor.u32 %v1388, %v1389
      %v1392 = vsel %vm1121, %v1384, %v1391
      %v1393 = vrot.slane %v1388, 4
      %v1395 = vshrl.u32 %v1115, 16
      %v1397 = vrot.slane %v1395, 7
      %v1398 = vshll.u32 %v1115, 16
      %v1400 = vor.u32 %v1397, %v1398
      %v1401 = vrot.slane %v1397, 4
      %v1403 = vshrl.u32 %v1116, 16
      %v1405 = vrot.slane %v1403, 7
      %v1406 = vshll.u32 %v1116, 16
      %v1408 = vor.u32 %v1405, %v1406
      %v1409 = vsel %vm1121, %v1401, %v1408
      %v1410 = vrot.slane %v1405, 4
      %v1412 = vshrl.u32 %v1117, 16
      %v1414 = vrot.slane %v1412, 7
      %v1415 = vshll.u32 %v1117, 16
      %v1417 = vor.u32 %v1414, %v1415
      %v1418 = vrot.slane %v1414, 4
      %v1420 = vshrl.u32 %v1118, 16
      %v1422 = vrot.slane %v1420, 7
      %v1423 = vshll.u32 %v1118, 16
      %v1425 = vor.u32 %v1422, %v1423
      %v1426 = vsel %vm1121, %v1418, %v1425
      %v1427 = vrot.slane %v1422, 4
      %vm1482 = vcmask 27648
      %vm1483 = vsmask.f32 7938
      %vm1484 = vmand %vm1482, %vm1483
      %v1485 = vld [vmem:[#allocation2] sm:$0xf]
      %v1486 = vsel %vm1484, %v1128, %v1485
      %1487 = vst [vmem:[#allocation2] sm:$0xf] %v1486
      %vm1488 = vcmask 27648
      %1489 = vst.msk [vmem:[#allocation2 + $0x4] sm:$0xf] %vm1488, %v1137
      %vm1490 = vcmask 24576
      %vm1491 = vmand %vm1490, %vm1119
      %v1492 = vld [vmem:[#allocation2 + $0x8] sm:$0x1]
      %v1493 = vsel %vm1491, %v1138, %v1492
      %1494 = vst [vmem:[#allocation2 + $0x8] sm:$0x1] %v1493
      %v1495 = vld [vmem:[#allocation2 + $0xc] sm:$0xf]
      %v1496 = vsel %vm1484, %v1145, %v1495
      %1497 = vst [vmem:[#allocation2 + $0xc] sm:$0xf] %v1496
      %1498 = vst.msk [vmem:[#allocation2 + $0x10] sm:$0xf] %vm1488, %v1154
      %v1499 = vld [vmem:[#allocation2 + $0x14] sm:$0x1]
      %v1500 = vsel %vm1491, %v1155, %v1499
      %1501 = vst [vmem:[#allocation2 + $0x14] sm:$0x1] %v1500
      %v1502 = vld [vmem:[#allocation2 + $0x18] sm:$0xf]
      %v1503 = vsel %vm1484, %v1162, %v1502
      %1504 = vst [vmem:[#allocation2 + $0x18] sm:$0xf] %v1503
      %1505 = vst.msk [vmem:[#allocation2 + $0x1c] sm:$0xf] %vm1488, %v1171
      %v1506 = vld [vmem:[#allocation2 + $0x20] sm:$0x1]
      %v1507 = vsel %vm1491, %v1172, %v1506
      %1508 = vst [vmem:[#allocation2 + $0x20] sm:$0x1] %v1507
      %v1509 = vld [vmem:[#allocation2 + $0x24] sm:$0xf]
      %v1510 = vsel %vm1484, %v1179, %v1509
      %1511 = vst [vmem:[#allocation2 + $0x24] sm:$0xf] %v1510
      %1512 = vst.msk [vmem:[#allocation2 + $0x28] sm:$0xf] %vm1488, %v1188
      %v1513 = vld [vmem:[#allocation2 + $0x2c] sm:$0x1]
      %v1514 = vsel %vm1491, %v1189, %v1513
      %1515 = vst [vmem:[#allocation2 + $0x2c] sm:$0x1] %v1514
      %v1516 = vld [vmem:[#allocation2 + $0x30] sm:$0xf]
      %v1517 = vsel %vm1484, %v1196, %v1516
      %1518 = vst [vmem:[#allocation2 + $0x30] sm:$0xf] %v1517
      %1519 = vst.msk [vmem:[#allocation2 + $0x34] sm:$0xf] %vm1488, %v1205
      %v1520 = vld [vmem:[#allocation2 + $0x38] sm:$0x1]
      %v1521 = vsel %vm1491, %v1206, %v1520
      %1522 = vst [vmem:[#allocation2 + $0x38] sm:$0x1] %v1521
      %v1523 = vld [vmem:[#allocation2 + $0x3c] sm:$0xf]
      %v1524 = vsel %vm1484, %v1213, %v1523
      %1525 = vst [vmem:[#allocation2 + $0x3c] sm:$0xf] %v1524
      %1526 = vst.msk [vmem:[#allocation2 + $0x40] sm:$0xf] %vm1488, %v1222
      %v1527 = vld [vmem:[#allocation2 + $0x44] sm:$0x1]
      %v1528 = vsel %vm1491, %v1223, %v1527
      %1529 = vst [vmem:[#allocation2 + $0x44] sm:$0x1] %v1528
      %v1530 = vld [vmem:[#allocation2 + $0x48] sm:$0xf]
      %v1531 = vsel %vm1484, %v1230, %v1530
      %1532 = vst [vmem:[#allocation2 + $0x48] sm:$0xf] %v1531
      %1533 = vst.msk [vmem:[#allocation2 + $0x4c] sm:$0xf] %vm1488, %v1239
      %v1534 = vld [vmem:[#allocation2 + $0x50] sm:$0x1]
      %v1535 = vsel %vm1491, %v1240, %v1534
      %1536 = vst [vmem:[#allocation2 + $0x50] sm:$0x1] %v1535
      %v1537 = vld [vmem:[#allocation2 + $0x54] sm:$0xf]
      %v1538 = vsel %vm1484, %v1247, %v1537
      %1539 = vst [vmem:[#allocation2 + $0x54] sm:$0xf] %v1538
      %1540 = vst.msk [vmem:[#allocation2 + $0x58] sm:$0xf] %vm1488, %v1256
      %v1541 = vld [vmem:[#allocation2 + $0x5c] sm:$0x1]
      %v1542 = vsel %vm1491, %v1257, %v1541
      %1543 = vst [vmem:[#allocation2 + $0x5c] sm:$0x1] %v1542
      %v1544 = vld [vmem:[#allocation2 + $0x60] sm:$0xf]
      %v1545 = vsel %vm1484, %v1264, %v1544
      %1546 = vst [vmem:[#allocation2 + $0x60] sm:$0xf] %v1545
      %1547 = vst.msk [vmem:[#allocation2 + $0x64] sm:$0xf] %vm1488, %v1273
      %v1548 = vld [vmem:[#allocation2 + $0x68] sm:$0x1]
      %v1549 = vsel %vm1491, %v1274, %v1548
      %1550 = vst [vmem:[#allocation2 + $0x68] sm:$0x1] %v1549
      %v1551 = vld [vmem:[#allocation2 + $0x6c] sm:$0xf]
      %v1552 = vsel %vm1484, %v1281, %v1551
      %1553 = vst [vmem:[#allocation2 + $0x6c] sm:$0xf] %v1552
      %1554 = vst.msk [vmem:[#allocation2 + $0x70] sm:$0xf] %vm1488, %v1290
      %v1555 = vld [vmem:[#allocation2 + $0x74] sm:$0x1]
      %v1556 = vsel %vm1491, %v1291, %v1555
      %1557 = vst [vmem:[#allocation2 + $0x74] sm:$0x1] %v1556
      %v1558 = vld [vmem:[#allocation2 + $0x78] sm:$0xf]
      %v1559 = vsel %vm1484, %v1298, %v1558
      %1560 = vst [vmem:[#allocation2 + $0x78] sm:$0xf] %v1559
      %1561 = vst.msk [vmem:[#allocation2 + $0x7c] sm:$0xf] %vm1488, %v1307
      %v1562 = vld [vmem:[#allocation2 + $0x80] sm:$0x1]
      %v1563 = vsel %vm1491, %v1308, %v1562
      %1564 = vst [vmem:[#allocation2 + $0x80] sm:$0x1] %v1563
      %v1565 = vld [vmem:[#allocation2 + $0x84] sm:$0xf]
      %v1566 = vsel %vm1484, %v1315, %v1565
      %1567 = vst [vmem:[#allocation2 + $0x84] sm:$0xf] %v1566
      %1568 = vst.msk [vmem:[#allocation2 + $0x88] sm:$0xf] %vm1488, %v1324
      %v1569 = vld [vmem:[#allocation2 + $0x8c] sm:$0x1]
      %v1570 = vsel %vm1491, %v1325, %v1569
      %1571 = vst [vmem:[#allocation2 + $0x8c] sm:$0x1] %v1570
      %v1572 = vld [vmem:[#allocation2 + $0x90] sm:$0xf]
      %v1573 = vsel %vm1484, %v1332, %v1572
      %1574 = vst [vmem:[#allocation2 + $0x90] sm:$0xf] %v1573
      %1575 = vst.msk [vmem:[#allocation2 + $0x94] sm:$0xf] %vm1488, %v1341
      %v1576 = vld [vmem:[#allocation2 + $0x98] sm:$0x1]
      %v1577 = vsel %vm1491, %v1342, %v1576
      %1578 = vst [vmem:[#allocation2 + $0x98] sm:$0x1] %v1577
      %v1579 = vld [vmem:[#allocation2 + $0x9c] sm:$0xf]
      %v1580 = vsel %vm1484, %v1349, %v1579
      %1581 = vst [vmem:[#allocation2 + $0x9c] sm:$0xf] %v1580
      %1582 = vst.msk [vmem:[#allocation2 + $0xa0] sm:$0xf] %vm1488, %v1358
      %v1583 = vld [vmem:[#allocation2 + $0xa4] sm:$0x1]
      %v1584 = vsel %vm1491, %v1359, %v1583
      %1585 = vst [vmem:[#allocation2 + $0xa4] sm:$0x1] %v1584
      %v1586 = vld [vmem:[#allocation2 + $0xa8] sm:$0xf]
      %v1587 = vsel %vm1484, %v1366, %v1586
      %1588 = vst [vmem:[#allocation2 + $0xa8] sm:$0xf] %v1587
      %1589 = vst.msk [vmem:[#allocation2 + $0xac] sm:$0xf] %vm1488, %v1375
      %v1590 = vld [vmem:[#allocation2 + $0xb0] sm:$0x1]
      %v1591 = vsel %vm1491, %v1376, %v1590
      %1592 = vst [vmem:[#allocation2 + $0xb0] sm:$0x1] %v1591
      %v1593 = vld [vmem:[#allocation2 + $0xb4] sm:$0xf]
      %v1594 = vsel %vm1484, %v1383, %v1593
      %1595 = vst [vmem:[#allocation2 + $0xb4] sm:$0xf] %v1594
      %1596 = vst.msk [vmem:[#allocation2 + $0xb8] sm:$0xf] %vm1488, %v1392
      %v1597 = vld [vmem:[#allocation2 + $0xbc] sm:$0x1]
      %v1598 = vsel %vm1491, %v1393, %v1597
      %1599 = vst [vmem:[#allocation2 + $0xbc] sm:$0x1] %v1598
      %v1600 = vld [vmem:[#allocation2 + $0xc0] sm:$0xf]
      %v1601 = vsel %vm1484, %v1400, %v1600
      %1602 = vst [vmem:[#allocation2 + $0xc0] sm:$0xf] %v1601
      %1603 = vst.msk [vmem:[#allocation2 + $0xc4] sm:$0xf] %vm1488, %v1409
      %v1604 = vld [vmem:[#allocation2 + $0xc8] sm:$0x1]
      %v1605 = vsel %vm1491, %v1410, %v1604
      %1606 = vst [vmem:[#allocation2 + $0xc8] sm:$0x1] %v1605
      %v1607 = vld [vmem:[#allocation2 + $0xcc] sm:$0xf]
      %v1608 = vsel %vm1484, %v1417, %v1607
      %1609 = vst [vmem:[#allocation2 + $0xcc] sm:$0xf] %v1608
      %1610 = vst.msk [vmem:[#allocation2 + $0xd0] sm:$0xf] %vm1488, %v1426
      %v1611 = vld [vmem:[#allocation2 + $0xd4] sm:$0x1]
      %v1612 = vsel %vm1491, %v1427, %v1611
      %1613 = vst [vmem:[#allocation2 + $0xd4] sm:$0x1] %v1612
      %v1614 = vld [vmem:[#allocation2] sm:$0x1]
      %v1615 = vsel %vm1491, 0, %v1614
      %1616 = vst [vmem:[#allocation2] sm:$0x1] %v1615
      %v1617 = vld [vmem:[#allocation2 + $0xc] sm:$0x1]
      %v1618 = vsel %vm1491, 0, %v1617
      %1619 = vst [vmem:[#allocation2 + $0xc] sm:$0x1] %v1618
      %v1620 = vld [vmem:[#allocation2 + $0x18] sm:$0x1]
      %v1621 = vsel %vm1491, 0, %v1620
      %1622 = vst [vmem:[#allocation2 + $0x18] sm:$0x1] %v1621
      %v1623 = vld [vmem:[#allocation2 + $0x24] sm:$0x1]
      %v1624 = vsel %vm1491, 0, %v1623
      %1625 = vst [vmem:[#allocation2 + $0x24] sm:$0x1] %v1624
      %v1626 = vld [vmem:[#allocation2 + $0x30] sm:$0x1]
      %v1627 = vsel %vm1491, 0, %v1626
      %1628 = vst [vmem:[#allocation2 + $0x30] sm:$0x1] %v1627
      %v1629 = vld [vmem:[#allocation2 + $0x3c] sm:$0x1]
      %v1630 = vsel %vm1491, 0, %v1629
      %1631 = vst [vmem:[#allocation2 + $0x3c] sm:$0x1] %v1630
      %v1632 = vld [vmem:[#allocation2 + $0x48] sm:$0x1]
      %v1633 = vsel %vm1491, 0, %v1632
      %1634 = vst [vmem:[#allocation2 + $0x48] sm:$0x1] %v1633
      %v1635 = vld [vmem:[#allocation2 + $0x54] sm:$0x1]
      %v1636 = vsel %vm1491, 0, %v1635
      %1637 = vst [vmem:[#allocation2 + $0x54] sm:$0x1] %v1636
      %v1638 = vld [vmem:[#allocation2 + $0x60] sm:$0x1]
      %v1639 = vsel %vm1491, 0, %v1638
      %1640 = vst [vmem:[#allocation2 + $0x60] sm:$0x1] %v1639
      %v1641 = vld [vmem:[#allocation2 + $0x6c] sm:$0x1]
      %v1642 = vsel %vm1491, 0, %v1641
      %1643 = vst [vmem:[#allocation2 + $0x6c] sm:$0x1] %v1642
      %v1644 = vld [vmem:[#allocation2 + $0x78] sm:$0x1]
      %v1645 = vsel %vm1491, 0, %v1644
      %1646 = vst [vmem:[#allocation2 + $0x78] sm:$0x1] %v1645
      %v1647 = vld [vmem:[#allocation2 + $0x84] sm:$0x1]
      %v1648 = vsel %vm1491, 0, %v1647
      %1649 = vst [vmem:[#allocation2 + $0x84] sm:$0x1] %v1648
      %v1650 = vld [vmem:[#allocation2 + $0x90] sm:$0x1]
      %v1651 = vsel %vm1491, 0, %v1650
      %1652 = vst [vmem:[#allocation2 + $0x90] sm:$0x1] %v1651
      %v1653 = vld [vmem:[#allocation2 + $0x9c] sm:$0x1]
      %v1654 = vsel %vm1491, 0, %v1653
      %1655 = vst [vmem:[#allocation2 + $0x9c] sm:$0x1] %v1654
      %v1656 = vld [vmem:[#allocation2 + $0xa8] sm:$0x1]
      %v1657 = vsel %vm1491, 0, %v1656
      %1658 = vst [vmem:[#allocation2 + $0xa8] sm:$0x1] %v1657
      %v1659 = vld [vmem:[#allocation2 + $0xb4] sm:$0x1]
      %v1660 = vsel %vm1491, 0, %v1659
      %1661 = vst [vmem:[#allocation2 + $0xb4] sm:$0x1] %v1660
      %v1662 = vld [vmem:[#allocation2 + $0xc0] sm:$0x1]
      %v1663 = vsel %vm1491, 0, %v1662
      %1664 = vst [vmem:[#allocation2 + $0xc0] sm:$0x1] %v1663
      %v1665 = vld [vmem:[#allocation2 + $0xcc] sm:$0x1]
      %v1666 = vsel %vm1491, 0, %v1665
      %1667 = vst [vmem:[#allocation2 + $0xcc] sm:$0x1] %v1666
      %vm1668 = vmand %vm1490, %vm1483
      %v1669 = vld [vmem:[#allocation2 + $0x8] sm:$0x1]
      %v1670 = vsel %vm1668, 0, %v1669
      %1671 = vst [vmem:[#allocation2 + $0x8] sm:$0x1] %v1670
      %v1672 = vld [vmem:[#allocation2 + $0x14] sm:$0x1]
      %v1673 = vsel %vm1668, 0, %v1672
      %1674 = vst [vmem:[#allocation2 + $0x14] sm:$0x1] %v1673
      %v1675 = vld [vmem:[#allocation2 + $0x20] sm:$0x1]
      %v1676 = vsel %vm1668, 0, %v1675
      %1677 = vst [vmem:[#allocation2 + $0x20] sm:$0x1] %v1676
      %v1678 = vld [vmem:[#allocation2 + $0x2c] sm:$0x1]
      %v1679 = vsel %vm1668, 0, %v1678
      %1680 = vst [vmem:[#allocation2 + $0x2c] sm:$0x1] %v1679
      %v1681 = vld [vmem:[#allocation2 + $0x38] sm:$0x1]
      %v1682 = vsel %vm1668, 0, %v1681
      %1683 = vst [vmem:[#allocation2 + $0x38] sm:$0x1] %v1682
      %v1684 = vld [vmem:[#allocation2 + $0x44] sm:$0x1]
      %v1685 = vsel %vm1668, 0, %v1684
      %1686 = vst [vmem:[#allocation2 + $0x44] sm:$0x1] %v1685
      %v1687 = vld [vmem:[#allocation2 + $0x50] sm:$0x1]
      %v1688 = vsel %vm1668, 0, %v1687
      %1689 = vst [vmem:[#allocation2 + $0x50] sm:$0x1] %v1688
      %v1690 = vld [vmem:[#allocation2 + $0x5c] sm:$0x1]
      %v1691 = vsel %vm1668, 0, %v1690
      %1692 = vst [vmem:[#allocation2 + $0x5c] sm:$0x1] %v1691
      %v1693 = vld [vmem:[#allocation2 + $0x68] sm:$0x1]
      %v1694 = vsel %vm1668, 0, %v1693
      %1695 = vst [vmem:[#allocation2 + $0x68] sm:$0x1] %v1694
      %v1696 = vld [vmem:[#allocation2 + $0x74] sm:$0x1]
      %v1697 = vsel %vm1668, 0, %v1696
      %1698 = vst [vmem:[#allocation2 + $0x74] sm:$0x1] %v1697
      %v1699 = vld [vmem:[#allocation2 + $0x80] sm:$0x1]
      %v1700 = vsel %vm1668, 0, %v1699
      %1701 = vst [vmem:[#allocation2 + $0x80] sm:$0x1] %v1700
      %v1702 = vld [vmem:[#allocation2 + $0x8c] sm:$0x1]
      %v1703 = vsel %vm1668, 0, %v1702
      %1704 = vst [vmem:[#allocation2 + $0x8c] sm:$0x1] %v1703
      %v1705 = vld [vmem:[#allocation2 + $0x98] sm:$0x1]
      %v1706 = vsel %vm1668, 0, %v1705
      %1707 = vst [vmem:[#allocation2 + $0x98] sm:$0x1] %v1706
      %v1708 = vld [vmem:[#allocation2 + $0xa4] sm:$0x1]
      %v1709 = vsel %vm1668, 0, %v1708
      %1710 = vst [vmem:[#allocation2 + $0xa4] sm:$0x1] %v1709
      %v1711 = vld [vmem:[#allocation2 + $0xb0] sm:$0x1]
      %v1712 = vsel %vm1668, 0, %v1711
      %1713 = vst [vmem:[#allocation2 + $0xb0] sm:$0x1] %v1712
      %v1714 = vld [vmem:[#allocation2 + $0xbc] sm:$0x1]
      %v1715 = vsel %vm1668, 0, %v1714
      %1716 = vst [vmem:[#allocation2 + $0xbc] sm:$0x1] %v1715
      %v1717 = vld [vmem:[#allocation2 + $0xc8] sm:$0x1]
      %v1718 = vsel %vm1668, 0, %v1717
      %1719 = vst [vmem:[#allocation2 + $0xc8] sm:$0x1] %v1718
      %v1720 = vld [vmem:[#allocation2 + $0xd4] sm:$0x1]
      %v1721 = vsel %vm1668, 0, %v1720
      %1722 = vst [vmem:[#allocation2 + $0xd4] sm:$0x1] %v1721
      %p1723 = scmp.eq.s32.totalorder %s25, 0
      // Predicated region
      $region57: #{csp_layer_forward.4} parent=55 // pred_check
        %p1724 = pneg %p1723
      $region58: #{csp_layer_forward.4} parent=55 // pred_check_branch
        %1726 = sbr.rel (%p1724) target = $region60
      $region59: #{csp_layer_forward.4} parent=55 // pred_region
        %1727 = vst.msk [vmem:[#allocation2] sm:$0xf] %vm1488, 0
        %1728 = vst.msk [vmem:[#allocation2 + $0x4] sm:$0xf] %vm1488, 0
        %vm1729 = vcmask 24576
        %1730 = vst.msk [vmem:[#allocation2 + $0x8] sm:$0x1] %vm1729, 0
        %s1731 = scalar_lea.vmem [#allocation2], 204
        %1732 = vst.msk [vmem:[%s1731] sm:$0xf] %vm1488, 0
        %1733 = vst.msk [vmem:[%s1731 + $0x4] sm:$0xf] %vm1488, 0
        %1734 = vst.msk [vmem:[%s1731 + $0x8] sm:$0x1] %vm1729, 0
      $region60: #{csp_layer_forward.4} parent=55 // pred_fallthru
        _
      %v1735 = vld [vmem:[#allocation2] sm:$0xf]
      %v1736 = vld [vmem:[#allocation2 + $0x4] sm:$0xf]
      %v1737 = vld [vmem:[#allocation2 + $0xc] sm:$0xf]
      %v1738 = vld [vmem:[#allocation2 + $0x10] sm:$0xf]
      %v1739 = vld [vmem:[#allocation2 + $0x18] sm:$0xf]
      %v1740 = vld [vmem:[#allocation2 + $0x1c] sm:$0xf]
      %v1741 = vld [vmem:[#allocation2 + $0x24] sm:$0xf]
      %v1742 = vld [vmem:[#allocation2 + $0x28] sm:$0xf]
      %v1743 = vld [vmem:[#allocation2 + $0x30] sm:$0xf]
      %v1744 = vld [vmem:[#allocation2 + $0x34] sm:$0xf]
      %v1745 = vld [vmem:[#allocation2 + $0x3c] sm:$0xf]
      %v1746 = vld [vmem:[#allocation2 + $0x40] sm:$0xf]
      %v1747 = vld [vmem:[#allocation2 + $0x48] sm:$0xf]
      %v1748 = vld [vmem:[#allocation2 + $0x4c] sm:$0xf]
      %v1749 = vld [vmem:[#allocation2 + $0x54] sm:$0xf]
      %v1750 = vld [vmem:[#allocation2 + $0x58] sm:$0xf]
      %v1751 = vld [vmem:[#allocation2 + $0x60] sm:$0xf]
      %v1752 = vld [vmem:[#allocation2 + $0x64] sm:$0xf]
      %v1753 = vld [vmem:[#allocation2 + $0x6c] sm:$0xf]
      %v1754 = vld [vmem:[#allocation2 + $0x70] sm:$0xf]
      %v1755 = vld [vmem:[#allocation2 + $0x78] sm:$0xf]
      %v1756 = vld [vmem:[#allocation2 + $0x7c] sm:$0xf]
      %v1757 = vld [vmem:[#allocation2 + $0x84] sm:$0xf]
      %v1758 = vld [vmem:[#allocation2 + $0x88] sm:$0xf]
      %v1759 = vld [vmem:[#allocation2 + $0x90] sm:$0xf]
      %v1760 = vld [vmem:[#allocation2 + $0x94] sm:$0xf]
      %v1761 = vld [vmem:[#allocation2 + $0x9c] sm:$0xf]
      %v1762 = vld [vmem:[#allocation2 + $0xa0] sm:$0xf]
      %v1763 = vld [vmem:[#allocation2 + $0xa8] sm:$0xf]
      %v1764 = vld [vmem:[#allocation2 + $0xac] sm:$0xf]
      %v1765 = vld [vmem:[#allocation2 + $0xb4] sm:$0xf]
      %v1766 = vld [vmem:[#allocation2 + $0xb8] sm:$0xf]
      %v1767 = vld [vmem:[%s6] sm:$0x3]
      %v1768 = vld [vmem:[#allocation2 + $0x8] sm:$0x1]
      %v1769 = vld [vmem:[#allocation2 + $0x14] sm:$0x1]
      %v1770 = vld [vmem:[#allocation2 + $0x20] sm:$0x1]
      %v1771 = vld [vmem:[#allocation2 + $0x2c] sm:$0x1]
      %v1772 = vld [vmem:[#allocation2 + $0x38] sm:$0x1]
      %v1773 = vld [vmem:[#allocation2 + $0x44] sm:$0x1]
      %v1774 = vld [vmem:[#allocation2 + $0x50] sm:$0x1]
      %v1775 = vld [vmem:[#allocation2 + $0x5c] sm:$0x1]
      %v1776 = vld [vmem:[#allocation2 + $0x68] sm:$0x1]
      %v1777 = vld [vmem:[#allocation2 + $0x74] sm:$0x1]
      %v1778 = vld [vmem:[#allocation2 + $0x80] sm:$0x1]
      %v1779 = vld [vmem:[#allocation2 + $0x8c] sm:$0x1]
      %v1780 = vld [vmem:[#allocation2 + $0x98] sm:$0x1]
      %v1781 = vld [vmem:[#allocation2 + $0xa4] sm:$0x1]
      %v1782 = vld [vmem:[#allocation2 + $0xb0] sm:$0x1]
      %v1783 = vld [vmem:[#allocation2 + $0xbc] sm:$0x1]
      %vm1784 = vsmask.f32 3328
      %vm1785 = vsmask.f32 7440
      %vm1786 = vmor %vm1784, %vm1785
      %v1788 = vshrl.u32 %v1735, 16
      %v1790 = vrot.slane %v1788, 4
      %v1791 = vshll.u32 %v1735, 16
      %v1793 = vrot.slane %v1791, 5
      %v1794 = vor.u32 %v1790, %v1793
      %v1795 = vrot.slane %v1794, 4
      %v1797 = vshll.u32 %v1736, 16
      %v1799 = vrot.slane %v1797, 5
      %v1800 = vsel %vm1786, %v1795, %v1799
      %v1801 = vshrl.u32 %v1736, 16
      %v1803 = vrot.slane %v1801, 4
      %v1804 = vor.u32 %v1803, %v1799
      %v1805 = vrot.slane %v1804, 4
      %v1807 = vshll.u32 %v1768, 16
      %v1809 = vrot.slane %v1807, 5
      %v1810 = vsel %vm1786, %v1805, %v1809
      %v1812 = vshrl.u32 %v1737, 16
      %v1814 = vrot.slane %v1812, 4
      %v1815 = vshll.u32 %v1737, 16
      %v1817 = vrot.slane %v1815, 5
      %v1818 = vor.u32 %v1814, %v1817
      %v1819 = vrot.slane %v1818, 4
      %v1821 = vshll.u32 %v1738, 16
      %v1823 = vrot.slane %v1821, 5
      %v1824 = vsel %vm1786, %v1819, %v1823
      %v1825 = vshrl.u32 %v1738, 16
      %v1827 = vrot.slane %v1825, 4
      %v1828 = vor.u32 %v1827, %v1823
      %v1829 = vrot.slane %v1828, 4
      %v1831 = vshll.u32 %v1769, 16
      %v1833 = vrot.slane %v1831, 5
      %v1834 = vsel %vm1786, %v1829, %v1833
      %v1836 = vshrl.u32 %v1739, 16
      %v1838 = vrot.slane %v1836, 4
      %v1839 = vshll.u32 %v1739, 16
      %v1841 = vrot.slane %v1839, 5
      %v1842 = vor.u32 %v1838, %v1841
      %v1843 = vrot.slane %v1842, 4
      %v1845 = vshll.u32 %v1740, 16
      %v1847 = vrot.slane %v1845, 5
      %v1848 = vsel %vm1786, %v1843, %v1847
      %v1849 = vshrl.u32 %v1740, 16
      %v1851 = vrot.slane %v1849, 4
      %v1852 = vor.u32 %v1851, %v1847
      %v1853 = vrot.slane %v1852, 4
      %v1855 = vshll.u32 %v1770, 16
      %v1857 = vrot.slane %v1855, 5
      %v1858 = vsel %vm1786, %v1853, %v1857
      %v1860 = vshrl.u32 %v1741, 16
      %v1862 = vrot.slane %v1860, 4
      %v1863 = vshll.u32 %v1741, 16
      %v1865 = vrot.slane %v1863, 5
      %v1866 = vor.u32 %v1862, %v1865
      %v1867 = vrot.slane %v1866, 4
      %v1869 = vshll.u32 %v1742, 16
      %v1871 = vrot.slane %v1869, 5
      %v1872 = vsel %vm1786, %v1867, %v1871
      %v1873 = vshrl.u32 %v1742, 16
      %v1875 = vrot.slane %v1873, 4
      %v1876 = vor.u32 %v1875, %v1871
      %v1877 = vrot.slane %v1876, 4
      %v1879 = vshll.u32 %v1771, 16
      %v1881 = vrot.slane %v1879, 5
      %v1882 = vsel %vm1786, %v1877, %v1881
      %v1884 = vshrl.u32 %v1743, 16
      %v1886 = vrot.slane %v1884, 4
      %v1887 = vshll.u32 %v1743, 16
      %v1889 = vrot.slane %v1887, 5
      %v1890 = vor.u32 %v1886, %v1889
      %v1891 = vrot.slane %v1890, 4
      %v1893 = vshll.u32 %v1744, 16
      %v1895 = vrot.slane %v1893, 5
      %v1896 = vsel %vm1786, %v1891, %v1895
      %v1897 = vshrl.u32 %v1744, 16
      %v1899 = vrot.slane %v1897, 4
      %v1900 = vor.u32 %v1899, %v1895
      %v1901 = vrot.slane %v1900, 4
      %v1903 = vshll.u32 %v1772, 16
      %v1905 = vrot.slane %v1903, 5
      %v1906 = vsel %vm1786, %v1901, %v1905
      %v1908 = vshrl.u32 %v1745, 16
      %v1910 = vrot.slane %v1908, 4
      %v1911 = vshll.u32 %v1745, 16
      %v1913 = vrot.slane %v1911, 5
      %v1914 = vor.u32 %v1910, %v1913
      %v1915 = vrot.slane %v1914, 4
      %v1917 = vshll.u32 %v1746, 16
      %v1919 = vrot.slane %v1917, 5
      %v1920 = vsel %vm1786, %v1915, %v1919
      %v1921 = vshrl.u32 %v1746, 16
      %v1923 = vrot.slane %v1921, 4
      %v1924 = vor.u32 %v1923, %v1919
      %v1925 = vrot.slane %v1924, 4
      %v1927 = vshll.u32 %v1773, 16
      %v1929 = vrot.slane %v1927, 5
      %v1930 = vsel %vm1786, %v1925, %v1929
      %v1932 = vshrl.u32 %v1747, 16
      %v1934 = vrot.slane %v1932, 4
      %v1935 = vshll.u32 %v1747, 16
      %v1937 = vrot.slane %v1935, 5
      %v1938 = vor.u32 %v1934, %v1937
      %v1939 = vrot.slane %v1938, 4
      %v1941 = vshll.u32 %v1748, 16
      %v1943 = vrot.slane %v1941, 5
      %v1944 = vsel %vm1786, %v1939, %v1943
      %v1945 = vshrl.u32 %v1748, 16
      %v1947 = vrot.slane %v1945, 4
      %v1948 = vor.u32 %v1947, %v1943
      %v1949 = vrot.slane %v1948, 4
      %v1951 = vshll.u32 %v1774, 16
      %v1953 = vrot.slane %v1951, 5
      %v1954 = vsel %vm1786, %v1949, %v1953
      %v1956 = vshrl.u32 %v1749, 16
      %v1958 = vrot.slane %v1956, 4
      %v1959 = vshll.u32 %v1749, 16
      %v1961 = vrot.slane %v1959, 5
      %v1962 = vor.u32 %v1958, %v1961
      %v1963 = vrot.slane %v1962, 4
      %v1965 = vshll.u32 %v1750, 16
      %v1967 = vrot.slane %v1965, 5
      %v1968 = vsel %vm1786, %v1963, %v1967
      %v1969 = vshrl.u32 %v1750, 16
      %v1971 = vrot.slane %v1969, 4
      %v1972 = vor.u32 %v1971, %v1967
      %v1973 = vrot.slane %v1972, 4
      %v1975 = vshll.u32 %v1775, 16
      %v1977 = vrot.slane %v1975, 5
      %v1978 = vsel %vm1786, %v1973, %v1977
      %v1980 = vshrl.u32 %v1751, 16
      %v1982 = vrot.slane %v1980, 4
      %v1983 = vshll.u32 %v1751, 16
      %v1985 = vrot.slane %v1983, 5
      %v1986 = vor.u32 %v1982, %v1985
      %v1987 = vrot.slane %v1986, 4
      %v1989 = vshll.u32 %v1752, 16
      %v1991 = vrot.slane %v1989, 5
      %v1992 = vsel %vm1786, %v1987, %v1991
      %v1993 = vshrl.u32 %v1752, 16
      %v1995 = vrot.slane %v1993, 4
      %v1996 = vor.u32 %v1995, %v1991
      %v1997 = vrot.slane %v1996, 4
      %v1999 = vshll.u32 %v1776, 16
      %v2001 = vrot.slane %v1999, 5
      %v2002 = vsel %vm1786, %v1997, %v2001
      %v2004 = vshrl.u32 %v1753, 16
      %v2006 = vrot.slane %v2004, 4
      %v2007 = vshll.u32 %v1753, 16
      %v2009 = vrot.slane %v2007, 5
      %v2010 = vor.u32 %v2006, %v2009
      %v2011 = vrot.slane %v2010, 4
      %v2013 = vshll.u32 %v1754, 16
      %v2015 = vrot.slane %v2013, 5
      %v2016 = vsel %vm1786, %v2011, %v2015
      %v2017 = vshrl.u32 %v1754, 16
      %v2019 = vrot.slane %v2017, 4
      %v2020 = vor.u32 %v2019, %v2015
      %v2021 = vrot.slane %v2020, 4
      %v2023 = vshll.u32 %v1777, 16
      %v2025 = vrot.slane %v2023, 5
      %v2026 = vsel %vm1786, %v2021, %v2025
      %v2028 = vshrl.u32 %v1755, 16
      %v2030 = vrot.slane %v2028, 4
      %v2031 = vshll.u32 %v1755, 16
      %v2033 = vrot.slane %v2031, 5
      %v2034 = vor.u32 %v2030, %v2033
      %v2035 = vrot.slane %v2034, 4
      %v2037 = vshll.u32 %v1756, 16
      %v2039 = vrot.slane %v2037, 5
      %v2040 = vsel %vm1786, %v2035, %v2039
      %v2041 = vshrl.u32 %v1756, 16
      %v2043 = vrot.slane %v2041, 4
      %v2044 = vor.u32 %v2043, %v2039
      %v2045 = vrot.slane %v2044, 4
      %v2047 = vshll.u32 %v1778, 16
      %v2049 = vrot.slane %v2047, 5
      %v2050 = vsel %vm1786, %v2045, %v2049
      %v2052 = vshrl.u32 %v1757, 16
      %v2054 = vrot.slane %v2052, 4
      %v2055 = vshll.u32 %v1757, 16
      %v2057 = vrot.slane %v2055, 5
      %v2058 = vor.u32 %v2054, %v2057
      %v2059 = vrot.slane %v2058, 4
      %v2061 = vshll.u32 %v1758, 16
      %v2063 = vrot.slane %v2061, 5
      %v2064 = vsel %vm1786, %v2059, %v2063
      %v2065 = vshrl.u32 %v1758, 16
      %v2067 = vrot.slane %v2065, 4
      %v2068 = vor.u32 %v2067, %v2063
      %v2069 = vrot.slane %v2068, 4
      %v2071 = vshll.u32 %v1779, 16
      %v2073 = vrot.slane %v2071, 5
      %v2074 = vsel %vm1786, %v2069, %v2073
      %v2076 = vshrl.u32 %v1759, 16
      %v2078 = vrot.slane %v2076, 4
      %v2079 = vshll.u32 %v1759, 16
      %v2081 = vrot.slane %v2079, 5
      %v2082 = vor.u32 %v2078, %v2081
      %v2083 = vrot.slane %v2082, 4
      %v2085 = vshll.u32 %v1760, 16
      %v2087 = vrot.slane %v2085, 5
      %v2088 = vsel %vm1786, %v2083, %v2087
      %v2089 = vshrl.u32 %v1760, 16
      %v2091 = vrot.slane %v2089, 4
      %v2092 = vor.u32 %v2091, %v2087
      %v2093 = vrot.slane %v2092, 4
      %v2095 = vshll.u32 %v1780, 16
      %v2097 = vrot.slane %v2095, 5
      %v2098 = vsel %vm1786, %v2093, %v2097
      %v2100 = vshrl.u32 %v1761, 16
      %v2102 = vrot.slane %v2100, 4
      %v2103 = vshll.u32 %v1761, 16
      %v2105 = vrot.slane %v2103, 5
      %v2106 = vor.u32 %v2102, %v2105
      %v2107 = vrot.slane %v2106, 4
      %v2109 = vshll.u32 %v1762, 16
      %v2111 = vrot.slane %v2109, 5
      %v2112 = vsel %vm1786, %v2107, %v2111
      %v2113 = vshrl.u32 %v1762, 16
      %v2115 = vrot.slane %v2113, 4
      %v2116 = vor.u32 %v2115, %v2111
      %v2117 = vrot.slane %v2116, 4
      %v2119 = vshll.u32 %v1781, 16
      %v2121 = vrot.slane %v2119, 5
      %v2122 = vsel %vm1786, %v2117, %v2121
      %v2124 = vshrl.u32 %v1763, 16
      %v2126 = vrot.slane %v2124, 4
      %v2127 = vshll.u32 %v1763, 16
      %v2129 = vrot.slane %v2127, 5
      %v2130 = vor.u32 %v2126, %v2129
      %v2131 = vrot.slane %v2130, 4
      %v2133 = vshll.u32 %v1764, 16
      %v2135 = vrot.slane %v2133, 5
      %v2136 = vsel %vm1786, %v2131, %v2135
      %v2137 = vshrl.u32 %v1764, 16
      %v2139 = vrot.slane %v2137, 4
      %v2140 = vor.u32 %v2139, %v2135
      %v2141 = vrot.slane %v2140, 4
      %v2143 = vshll.u32 %v1782, 16
      %v2145 = vrot.slane %v2143, 5
      %v2146 = vsel %vm1786, %v2141, %v2145
      %v2148 = vshrl.u32 %v1765, 16
      %v2150 = vrot.slane %v2148, 4
      %v2151 = vshll.u32 %v1765, 16
      %v2153 = vrot.slane %v2151, 5
      %v2154 = vor.u32 %v2150, %v2153
      %v2155 = vrot.slane %v2154, 4
      %v2157 = vshll.u32 %v1766, 16
      %v2159 = vrot.slane %v2157, 5
      %v2160 = vsel %vm1786, %v2155, %v2159
      %v2161 = vshrl.u32 %v1766, 16
      %v2163 = vrot.slane %v2161, 4
      %v2164 = vor.u32 %v2163, %v2159
      %v2165 = vrot.slane %v2164, 4
      %v2167 = vshll.u32 %v1783, 16
      %v2169 = vrot.slane %v2167, 5
      %v2170 = vsel %vm1786, %v2165, %v2169
      %s2171 = scalar_lea.vmem %s6, 2
      %v2172 = vld [vmem:[%s2171] sm:$0x3]
      %v2173 = vunpack.c.l.b16 %v1800
      %v2174 = vunpack.c.l.b16 %v1810
      %v2175 = vunpack.c.l.b16 %v1824
      %v2176 = vunpack.c.l.b16 %v1834
      %v2177 = vunpack.c.l.b16 %v1848
      %v2178 = vunpack.c.l.b16 %v1858
      %v2179 = vunpack.c.l.b16 %v1872
      %v2180 = vunpack.c.l.b16 %v1882
      %v2181 = vunpack.c.l.b16 %v1896
      %v2182 = vunpack.c.l.b16 %v1906
      %v2183 = vunpack.c.l.b16 %v1920
      %v2184 = vunpack.c.l.b16 %v1930
      %v2185 = vunpack.c.l.b16 %v1944
      %v2186 = vunpack.c.l.b16 %v1954
      %v2187 = vunpack.c.l.b16 %v1968
      %v2188 = vunpack.c.l.b16 %v1978
      %v2189 = vunpack.c.l.b16 %v1992
      %v2190 = vunpack.c.l.b16 %v2002
      %v2191 = vunpack.c.l.b16 %v2016
      %v2192 = vunpack.c.l.b16 %v2026
      %v2193 = vunpack.c.l.b16 %v2040
      %v2194 = vunpack.c.l.b16 %v2050
      %v2195 = vunpack.c.l.b16 %v2064
      %v2196 = vunpack.c.l.b16 %v2074
      %v2197 = vunpack.c.l.b16 %v2088
      %v2198 = vunpack.c.l.b16 %v2098
      %v2199 = vunpack.c.l.b16 %v2112
      %v2200 = vunpack.c.l.b16 %v2122
      %v2201 = vunpack.c.l.b16 %v2136
      %v2202 = vunpack.c.l.b16 %v2146
      %v2203 = vunpack.c.l.b16 %v2160
      %v2204 = vunpack.c.l.b16 %v2170
      %v2205 = vpack.c.b16 %v2174, %v2173
      %v2206 = vpack.c.b16 %v2176, %v2175
      %v2207 = vpack.c.b16 %v2178, %v2177
      %v2208 = vpack.c.b16 %v2180, %v2179
      %v2209 = vpack.c.b16 %v2182, %v2181
      %v2210 = vpack.c.b16 %v2184, %v2183
      %v2211 = vpack.c.b16 %v2186, %v2185
      %v2212 = vpack.c.b16 %v2188, %v2187
      %v2213 = vpack.c.b16 %v2190, %v2189
      %v2214 = vpack.c.b16 %v2192, %v2191
      %v2215 = vpack.c.b16 %v2194, %v2193
      %v2216 = vpack.c.b16 %v2196, %v2195
      %v2217 = vpack.c.b16 %v2198, %v2197
      %v2218 = vpack.c.b16 %v2200, %v2199
      %v2219 = vpack.c.b16 %v2202, %v2201
      %v2220 = vpack.c.b16 %v2204, %v2203
      %v2222 = vsel %vm629, %v2205, 0
      %v2225 = vsel %vm629, %v2206, 0
      %v2228 = vsel %vm629, %v2207, 0
      %v2231 = vsel %vm629, %v2208, 0
      %v2234 = vsel %vm629, %v2209, 0
      %v2237 = vsel %vm629, %v2210, 0
      %v2240 = vsel %vm629, %v2211, 0
      %v2243 = vsel %vm629, %v2212, 0
      %v2246 = vsel %vm629, %v2213, 0
      %v2249 = vsel %vm629, %v2214, 0
      %v2252 = vsel %vm629, %v2215, 0
      %v2255 = vsel %vm629, %v2216, 0
      %v2258 = vsel %vm629, %v2217, 0
      %v2261 = vsel %vm629, %v2218, 0
      %v2264 = vsel %vm629, %v2219, 0
      %v2267 = vsel %vm629, %v2220, 0
      %v2270 = vsel %vm684, %v2172, 0
      %2272 = vmatpush.bf16.msra.mxu0 0
      %2273 = vmatpush.bf16.msra.mxu0 0
      %2274 = vmatpush.bf16.msra.mxu0 0
      %2275 = vmatpush.bf16.msra.mxu0 0
      %2276 = vmatpush.bf16.msra.mxu0 0
      %2277 = vmatpush.bf16.msra.mxu0 0
      %2278 = vmatpush.bf16.msra.mxu0 0
      %2279 = vmatpush.bf16.msra.mxu0 %v2270
      %2280 = vmatmul.bf16.gmra.mxu0 %v2222
      %v2281 = vpop.f32.mrf.mxu0
      %v2282 = vadd.f32 0.0, %v2281
      %v2283 = vpop.f32.mrf.mxu0
      %v2284 = vadd.f32 0.0, %v2283
      %2285 = vmatmul.bf16.gmra.mxu0 %v2225
      %v2286 = vpop.f32.mrf.mxu0
      %v2287 = vadd.f32 0.0, %v2286
      %v2288 = vpop.f32.mrf.mxu0
      %v2289 = vadd.f32 0.0, %v2288
      %2290 = vmatmul.bf16.gmra.mxu0 %v2228
      %v2291 = vpop.f32.mrf.mxu0
      %v2292 = vadd.f32 0.0, %v2291
      %v2293 = vpop.f32.mrf.mxu0
      %v2294 = vadd.f32 0.0, %v2293
      %2295 = vmatmul.bf16.gmra.mxu0 %v2231
      %v2296 = vpop.f32.mrf.mxu0
      %v2297 = vadd.f32 0.0, %v2296
      %v2298 = vpop.f32.mrf.mxu0
      %v2299 = vadd.f32 0.0, %v2298
      %2300 = vmatmul.bf16.gmra.mxu0 %v2234
      %v2301 = vpop.f32.mrf.mxu0
      %v2302 = vadd.f32 0.0, %v2301
      %v2303 = vpop.f32.mrf.mxu0
      %v2304 = vadd.f32 0.0, %v2303
      %2305 = vmatmul.bf16.gmra.mxu0 %v2237
      %v2306 = vpop.f32.mrf.mxu0
      %v2307 = vadd.f32 0.0, %v2306
      %v2308 = vpop.f32.mrf.mxu0
      %v2309 = vadd.f32 0.0, %v2308
      %2310 = vmatmul.bf16.gmra.mxu0 %v2240
      %v2311 = vpop.f32.mrf.mxu0
      %v2312 = vadd.f32 0.0, %v2311
      %v2313 = vpop.f32.mrf.mxu0
      %v2314 = vadd.f32 0.0, %v2313
      %2315 = vmatmul.bf16.gmra.mxu0 %v2243
      %v2316 = vpop.f32.mrf.mxu0
      %v2317 = vadd.f32 0.0, %v2316
      %v2318 = vpop.f32.mrf.mxu0
      %v2319 = vadd.f32 0.0, %v2318
      %2320 = vmatmul.bf16.gmra.mxu0 %v2246
      %v2321 = vpop.f32.mrf.mxu0
      %v2322 = vadd.f32 0.0, %v2321
      %v2323 = vpop.f32.mrf.mxu0
      %v2324 = vadd.f32 0.0, %v2323
      %2325 = vmatmul.bf16.gmra.mxu0 %v2249
      %v2326 = vpop.f32.mrf.mxu0
      %v2327 = vadd.f32 0.0, %v2326
      %v2328 = vpop.f32.mrf.mxu0
      %v2329 = vadd.f32 0.0, %v2328
      %2330 = vmatmul.bf16.gmra.mxu0 %v2252
      %v2331 = vpop.f32.mrf.mxu0
      %v2332 = vadd.f32 0.0, %v2331
      %v2333 = vpop.f32.mrf.mxu0
      %v2334 = vadd.f32 0.0, %v2333
      %2335 = vmatmul.bf16.gmra.mxu0 %v2255
      %v2336 = vpop.f32.mrf.mxu0
      %v2337 = vadd.f32 0.0, %v2336
      %v2338 = vpop.f32.mrf.mxu0
      %v2339 = vadd.f32 0.0, %v2338
      %2340 = vmatmul.bf16.gmra.mxu0 %v2258
      %v2341 = vpop.f32.mrf.mxu0
      %v2342 = vadd.f32 0.0, %v2341
      %v2343 = vpop.f32.mrf.mxu0
      %v2344 = vadd.f32 0.0, %v2343
      %2345 = vmatmul.bf16.gmra.mxu0 %v2261
      %v2346 = vpop.f32.mrf.mxu0
      %v2347 = vadd.f32 0.0, %v2346
      %v2348 = vpop.f32.mrf.mxu0
      %v2349 = vadd.f32 0.0, %v2348
      %2350 = vmatmul.bf16.gmra.mxu0 %v2264
      %v2351 = vpop.f32.mrf.mxu0
      %v2352 = vadd.f32 0.0, %v2351
      %v2353 = vpop.f32.mrf.mxu0
      %v2354 = vadd.f32 0.0, %v2353
      %2355 = vmatmul.bf16.gmra.mxu0 %v2267
      %v2356 = vpop.f32.mrf.mxu0
      %v2357 = vadd.f32 0.0, %v2356
      %v2358 = vpop.f32.mrf.mxu0
      %v2359 = vadd.f32 0.0, %v2358
      %2360 = vdwg.mxu0
      %v2393 = vunpack.c.l.b16 %v1735
      %v2394 = vunpack.c.l.b16 %v1736
      %v2395 = vunpack.c.l.b16 %v1737
      %v2396 = vunpack.c.l.b16 %v1738
      %v2397 = vunpack.c.l.b16 %v1739
      %v2398 = vunpack.c.l.b16 %v1740
      %v2399 = vunpack.c.l.b16 %v1741
      %v2400 = vunpack.c.l.b16 %v1742
      %v2401 = vunpack.c.l.b16 %v1743
      %v2402 = vunpack.c.l.b16 %v1744
      %v2403 = vunpack.c.l.b16 %v1745
      %v2404 = vunpack.c.l.b16 %v1746
      %v2405 = vunpack.c.l.b16 %v1747
      %v2406 = vunpack.c.l.b16 %v1748
      %v2407 = vunpack.c.l.b16 %v1749
      %v2408 = vunpack.c.l.b16 %v1750
      %v2409 = vunpack.c.l.b16 %v1751
      %v2410 = vunpack.c.l.b16 %v1752
      %v2411 = vunpack.c.l.b16 %v1753
      %v2412 = vunpack.c.l.b16 %v1754
      %v2413 = vunpack.c.l.b16 %v1755
      %v2414 = vunpack.c.l.b16 %v1756
      %v2415 = vunpack.c.l.b16 %v1757
      %v2416 = vunpack.c.l.b16 %v1758
      %v2417 = vunpack.c.l.b16 %v1759
      %v2418 = vunpack.c.l.b16 %v1760
      %v2419 = vunpack.c.l.b16 %v1761
      %v2420 = vunpack.c.l.b16 %v1762
      %v2421 = vunpack.c.l.b16 %v1763
      %v2422 = vunpack.c.l.b16 %v1764
      %v2423 = vunpack.c.l.b16 %v1765
      %v2424 = vunpack.c.l.b16 %v1766
      %v2425 = vpack.c.b16 %v2394, %v2393
      %v2426 = vpack.c.b16 %v2396, %v2395
      %v2427 = vpack.c.b16 %v2398, %v2397
      %v2428 = vpack.c.b16 %v2400, %v2399
      %v2429 = vpack.c.b16 %v2402, %v2401
      %v2430 = vpack.c.b16 %v2404, %v2403
      %v2431 = vpack.c.b16 %v2406, %v2405
      %v2432 = vpack.c.b16 %v2408, %v2407
      %v2433 = vpack.c.b16 %v2410, %v2409
      %v2434 = vpack.c.b16 %v2412, %v2411
      %v2435 = vpack.c.b16 %v2414, %v2413
      %v2436 = vpack.c.b16 %v2416, %v2415
      %v2437 = vpack.c.b16 %v2418, %v2417
      %v2438 = vpack.c.b16 %v2420, %v2419
      %v2439 = vpack.c.b16 %v2422, %v2421
      %v2440 = vpack.c.b16 %v2424, %v2423
      %v2442 = vsel %vm629, %v2425, 0
      %v2445 = vsel %vm629, %v2426, 0
      %v2448 = vsel %vm629, %v2427, 0
      %v2451 = vsel %vm629, %v2428, 0
      %v2454 = vsel %vm629, %v2429, 0
      %v2457 = vsel %vm629, %v2430, 0
      %v2460 = vsel %vm629, %v2431, 0
      %v2463 = vsel %vm629, %v2432, 0
      %v2466 = vsel %vm629, %v2433, 0
      %v2469 = vsel %vm629, %v2434, 0
      %v2472 = vsel %vm629, %v2435, 0
      %v2475 = vsel %vm629, %v2436, 0
      %v2478 = vsel %vm629, %v2437, 0
      %v2481 = vsel %vm629, %v2438, 0
      %v2484 = vsel %vm629, %v2439, 0
      %v2487 = vsel %vm629, %v2440, 0
      %v2490 = vsel %vm684, %v1767, 0
      %2492 = vmatpush.bf16.msra.mxu0 0
      %2493 = vmatpush.bf16.msra.mxu0 0
      %2494 = vmatpush.bf16.msra.mxu0 0
      %2495 = vmatpush.bf16.msra.mxu0 0
      %2496 = vmatpush.bf16.msra.mxu0 0
      %2497 = vmatpush.bf16.msra.mxu0 0
      %2498 = vmatpush.bf16.msra.mxu0 0
      %2499 = vmatpush.bf16.msra.mxu0 %v2490
      %2500 = vmatmul.bf16.gmra.mxu0 %v2442
      %v2501 = vpop.f32.mrf.mxu0
      %v2502 = vadd.f32 %v2282, %v2501
      %v2503 = vpop.f32.mrf.mxu0
      %v2504 = vadd.f32 %v2284, %v2503
      %2505 = vmatmul.bf16.gmra.mxu0 %v2445
      %v2506 = vpop.f32.mrf.mxu0
      %v2507 = vadd.f32 %v2287, %v2506
      %v2508 = vpop.f32.mrf.mxu0
      %v2509 = vadd.f32 %v2289, %v2508
      %2510 = vmatmul.bf16.gmra.mxu0 %v2448
      %v2511 = vpop.f32.mrf.mxu0
      %v2512 = vadd.f32 %v2292, %v2511
      %v2513 = vpop.f32.mrf.mxu0
      %v2514 = vadd.f32 %v2294, %v2513
      %2515 = vmatmul.bf16.gmra.mxu0 %v2451
      %v2516 = vpop.f32.mrf.mxu0
      %v2517 = vadd.f32 %v2297, %v2516
      %v2518 = vpop.f32.mrf.mxu0
      %v2519 = vadd.f32 %v2299, %v2518
      %2520 = vmatmul.bf16.gmra.mxu0 %v2454
      %v2521 = vpop.f32.mrf.mxu0
      %v2522 = vadd.f32 %v2302, %v2521
      %v2523 = vpop.f32.mrf.mxu0
      %v2524 = vadd.f32 %v2304, %v2523
      %2525 = vmatmul.bf16.gmra.mxu0 %v2457
      %v2526 = vpop.f32.mrf.mxu0
      %v2527 = vadd.f32 %v2307, %v2526
      %v2528 = vpop.f32.mrf.mxu0
      %v2529 = vadd.f32 %v2309, %v2528
      %2530 = vmatmul.bf16.gmra.mxu0 %v2460
      %v2531 = vpop.f32.mrf.mxu0
      %v2532 = vadd.f32 %v2312, %v2531
      %v2533 = vpop.f32.mrf.mxu0
      %v2534 = vadd.f32 %v2314, %v2533
      %2535 = vmatmul.bf16.gmra.mxu0 %v2463
      %v2536 = vpop.f32.mrf.mxu0
      %v2537 = vadd.f32 %v2317, %v2536
      %v2538 = vpop.f32.mrf.mxu0
      %v2539 = vadd.f32 %v2319, %v2538
      %2540 = vmatmul.bf16.gmra.mxu0 %v2466
      %v2541 = vpop.f32.mrf.mxu0
      %v2542 = vadd.f32 %v2322, %v2541
      %v2543 = vpop.f32.mrf.mxu0
      %v2544 = vadd.f32 %v2324, %v2543
      %2545 = vmatmul.bf16.gmra.mxu0 %v2469
      %v2546 = vpop.f32.mrf.mxu0
      %v2547 = vadd.f32 %v2327, %v2546
      %v2548 = vpop.f32.mrf.mxu0
      %v2549 = vadd.f32 %v2329, %v2548
      %2550 = vmatmul.bf16.gmra.mxu0 %v2472
      %v2551 = vpop.f32.mrf.mxu0
      %v2552 = vadd.f32 %v2332, %v2551
      %v2553 = vpop.f32.mrf.mxu0
      %v2554 = vadd.f32 %v2334, %v2553
      %2555 = vmatmul.bf16.gmra.mxu0 %v2475
      %v2556 = vpop.f32.mrf.mxu0
      %v2557 = vadd.f32 %v2337, %v2556
      %v2558 = vpop.f32.mrf.mxu0
      %v2559 = vadd.f32 %v2339, %v2558
      %2560 = vmatmul.bf16.gmra.mxu0 %v2478
      %v2561 = vpop.f32.mrf.mxu0
      %v2562 = vadd.f32 %v2342, %v2561
      %v2563 = vpop.f32.mrf.mxu0
      %v2564 = vadd.f32 %v2344, %v2563
      %2565 = vmatmul.bf16.gmra.mxu0 %v2481
      %v2566 = vpop.f32.mrf.mxu0
      %v2567 = vadd.f32 %v2347, %v2566
      %v2568 = vpop.f32.mrf.mxu0
      %v2569 = vadd.f32 %v2349, %v2568
      %2570 = vmatmul.bf16.gmra.mxu0 %v2484
      %v2571 = vpop.f32.mrf.mxu0
      %v2572 = vadd.f32 %v2352, %v2571
      %v2573 = vpop.f32.mrf.mxu0
      %v2574 = vadd.f32 %v2354, %v2573
      %2575 = vmatmul.bf16.gmra.mxu0 %v2487
      %v2576 = vpop.f32.mrf.mxu0
      %v2577 = vadd.f32 %v2357, %v2576
      %v2578 = vpop.f32.mrf.mxu0
      %v2579 = vadd.f32 %v2359, %v2578
      %2580 = vdwg.mxu0
      %v2581 = vld [vmem:[#allocation2] sm:$0xe]
      %v2582 = vld [vmem:[#allocation2 + $0xc] sm:$0xe]
      %v2583 = vld [vmem:[#allocation2 + $0x18] sm:$0xe]
      %v2584 = vld [vmem:[#allocation2 + $0x24] sm:$0xe]
      %v2585 = vld [vmem:[#allocation2 + $0x30] sm:$0xe]
      %v2586 = vld [vmem:[#allocation2 + $0x3c] sm:$0xe]
      %v2587 = vld [vmem:[#allocation2 + $0x48] sm:$0xe]
      %v2588 = vld [vmem:[#allocation2 + $0x54] sm:$0xe]
      %v2589 = vld [vmem:[#allocation2 + $0x60] sm:$0xe]
      %v2590 = vld [vmem:[#allocation2 + $0x6c] sm:$0xe]
      %v2591 = vld [vmem:[#allocation2 + $0x78] sm:$0xe]
      %v2592 = vld [vmem:[#allocation2 + $0x84] sm:$0xe]
      %v2593 = vld [vmem:[#allocation2 + $0x90] sm:$0xe]
      %v2594 = vld [vmem:[#allocation2 + $0x9c] sm:$0xe]
      %v2595 = vld [vmem:[#allocation2 + $0xa8] sm:$0xe]
      %v2596 = vld [vmem:[#allocation2 + $0xb4] sm:$0xe]
      %vm2629 = vcmask 1042432
      %vm2630 = vcmask 1046532
      %vm2631 = vmor %vm2629, %vm2630
      %v2632 = vrot.slane %v2581, 5
      %v2633 = vrot.slane %v2632, 4
      %v2634 = vrot.slane %v1736, 5
      %v2635 = vsel %vm2631, %v2633, %v2634
      %v2636 = vrot.slane %v2634, 4
      %v2637 = vrot.slane %v1768, 5
      %v2638 = vsel %vm2631, %v2636, %v2637
      %v2639 = vrot.slane %v2582, 5
      %v2640 = vrot.slane %v2639, 4
      %v2641 = vrot.slane %v1738, 5
      %v2642 = vsel %vm2631, %v2640, %v2641
      %v2643 = vrot.slane %v2641, 4
      %v2644 = vrot.slane %v1769, 5
      %v2645 = vsel %vm2631, %v2643, %v2644
      %v2646 = vrot.slane %v2583, 5
      %v2647 = vrot.slane %v2646, 4
      %v2648 = vrot.slane %v1740, 5
      %v2649 = vsel %vm2631, %v2647, %v2648
      %v2650 = vrot.slane %v2648, 4
      %v2651 = vrot.slane %v1770, 5
      %v2652 = vsel %vm2631, %v2650, %v2651
      %v2653 = vrot.slane %v2584, 5
      %v2654 = vrot.slane %v2653, 4
      %v2655 = vrot.slane %v1742, 5
      %v2656 = vsel %vm2631, %v2654, %v2655
      %v2657 = vrot.slane %v2655, 4
      %v2658 = vrot.slane %v1771, 5
      %v2659 = vsel %vm2631, %v2657, %v2658
      %v2660 = vrot.slane %v2585, 5
      %v2661 = vrot.slane %v2660, 4
      %v2662 = vrot.slane %v1744, 5
      %v2663 = vsel %vm2631, %v2661, %v2662
      %v2664 = vrot.slane %v2662, 4
      %v2665 = vrot.slane %v1772, 5
      %v2666 = vsel %vm2631, %v2664, %v2665
      %v2667 = vrot.slane %v2586, 5
      %v2668 = vrot.slane %v2667, 4
      %v2669 = vrot.slane %v1746, 5
      %v2670 = vsel %vm2631, %v2668, %v2669
      %v2671 = vrot.slane %v2669, 4
      %v2672 = vrot.slane %v1773, 5
      %v2673 = vsel %vm2631, %v2671, %v2672
      %v2674 = vrot.slane %v2587, 5
      %v2675 = vrot.slane %v2674, 4
      %v2676 = vrot.slane %v1748, 5
      %v2677 = vsel %vm2631, %v2675, %v2676
      %v2678 = vrot.slane %v2676, 4
      %v2679 = vrot.slane %v1774, 5
      %v2680 = vsel %vm2631, %v2678, %v2679
      %v2681 = vrot.slane %v2588, 5
      %v2682 = vrot.slane %v2681, 4
      %v2683 = vrot.slane %v1750, 5
      %v2684 = vsel %vm2631, %v2682, %v2683
      %v2685 = vrot.slane %v2683, 4
      %v2686 = vrot.slane %v1775, 5
      %v2687 = vsel %vm2631, %v2685, %v2686
      %v2688 = vrot.slane %v2589, 5
      %v2689 = vrot.slane %v2688, 4
      %v2690 = vrot.slane %v1752, 5
      %v2691 = vsel %vm2631, %v2689, %v2690
      %v2692 = vrot.slane %v2690, 4
      %v2693 = vrot.slane %v1776, 5
      %v2694 = vsel %vm2631, %v2692, %v2693
      %v2695 = vrot.slane %v2590, 5
      %v2696 = vrot.slane %v2695, 4
      %v2697 = vrot.slane %v1754, 5
      %v2698 = vsel %vm2631, %v2696, %v2697
      %v2699 = vrot.slane %v2697, 4
      %v2700 = vrot.slane %v1777, 5
      %v2701 = vsel %vm2631, %v2699, %v2700
      %v2702 = vrot.slane %v2591, 5
      %v2703 = vrot.slane %v2702, 4
      %v2704 = vrot.slane %v1756, 5
      %v2705 = vsel %vm2631, %v2703, %v2704
      %v2706 = vrot.slane %v2704, 4
      %v2707 = vrot.slane %v1778, 5
      %v2708 = vsel %vm2631, %v2706, %v2707
      %v2709 = vrot.slane %v2592, 5
      %v2710 = vrot.slane %v2709, 4
      %v2711 = vrot.slane %v1758, 5
      %v2712 = vsel %vm2631, %v2710, %v2711
      %v2713 = vrot.slane %v2711, 4
      %v2714 = vrot.slane %v1779, 5
      %v2715 = vsel %vm2631, %v2713, %v2714
      %v2716 = vrot.slane %v2593, 5
      %v2717 = vrot.slane %v2716, 4
      %v2718 = vrot.slane %v1760, 5
      %v2719 = vsel %vm2631, %v2717, %v2718
      %v2720 = vrot.slane %v2718, 4
      %v2721 = vrot.slane %v1780, 5
      %v2722 = vsel %vm2631, %v2720, %v2721
      %v2723 = vrot.slane %v2594, 5
      %v2724 = vrot.slane %v2723, 4
      %v2725 = vrot.slane %v1762, 5
      %v2726 = vsel %vm2631, %v2724, %v2725
      %v2727 = vrot.slane %v2725, 4
      %v2728 = vrot.slane %v1781, 5
      %v2729 = vsel %vm2631, %v2727, %v2728
      %v2730 = vrot.slane %v2595, 5
      %v2731 = vrot.slane %v2730, 4
      %v2732 = vrot.slane %v1764, 5
      %v2733 = vsel %vm2631, %v2731, %v2732
      %v2734 = vrot.slane %v2732, 4
      %v2735 = vrot.slane %v1782, 5
      %v2736 = vsel %vm2631, %v2734, %v2735
      %v2737 = vrot.slane %v2596, 5
      %v2738 = vrot.slane %v2737, 4
      %v2739 = vrot.slane %v1766, 5
      %v2740 = vsel %vm2631, %v2738, %v2739
      %v2741 = vrot.slane %v2739, 4
      %v2742 = vrot.slane %v1783, 5
      %v2743 = vsel %vm2631, %v2741, %v2742
      %s2744 = scalar_lea.vmem %s6, 4
      %v2745 = vld [vmem:[%s2744] sm:$0x3]
      %v2746 = vunpack.c.l.b16 %v2635
      %v2747 = vunpack.c.l.b16 %v2638
      %v2748 = vunpack.c.l.b16 %v2642
      %v2749 = vunpack.c.l.b16 %v2645
      %v2750 = vunpack.c.l.b16 %v2649
      %v2751 = vunpack.c.l.b16 %v2652
      %v2752 = vunpack.c.l.b16 %v2656
      %v2753 = vunpack.c.l.b16 %v2659
      %v2754 = vunpack.c.l.b16 %v2663
      %v2755 = vunpack.c.l.b16 %v2666
      %v2756 = vunpack.c.l.b16 %v2670
      %v2757 = vunpack.c.l.b16 %v2673
      %v2758 = vunpack.c.l.b16 %v2677
      %v2759 = vunpack.c.l.b16 %v2680
      %v2760 = vunpack.c.l.b16 %v2684
      %v2761 = vunpack.c.l.b16 %v2687
      %v2762 = vunpack.c.l.b16 %v2691
      %v2763 = vunpack.c.l.b16 %v2694
      %v2764 = vunpack.c.l.b16 %v2698
      %v2765 = vunpack.c.l.b16 %v2701
      %v2766 = vunpack.c.l.b16 %v2705
      %v2767 = vunpack.c.l.b16 %v2708
      %v2768 = vunpack.c.l.b16 %v2712
      %v2769 = vunpack.c.l.b16 %v2715
      %v2770 = vunpack.c.l.b16 %v2719
      %v2771 = vunpack.c.l.b16 %v2722
      %v2772 = vunpack.c.l.b16 %v2726
      %v2773 = vunpack.c.l.b16 %v2729
      %v2774 = vunpack.c.l.b16 %v2733
      %v2775 = vunpack.c.l.b16 %v2736
      %v2776 = vunpack.c.l.b16 %v2740
      %v2777 = vunpack.c.l.b16 %v2743
      %v2778 = vpack.c.b16 %v2747, %v2746
      %v2779 = vpack.c.b16 %v2749, %v2748
      %v2780 = vpack.c.b16 %v2751, %v2750
      %v2781 = vpack.c.b16 %v2753, %v2752
      %v2782 = vpack.c.b16 %v2755, %v2754
      %v2783 = vpack.c.b16 %v2757, %v2756
      %v2784 = vpack.c.b16 %v2759, %v2758
      %v2785 = vpack.c.b16 %v2761, %v2760
      %v2786 = vpack.c.b16 %v2763, %v2762
      %v2787 = vpack.c.b16 %v2765, %v2764
      %v2788 = vpack.c.b16 %v2767, %v2766
      %v2789 = vpack.c.b16 %v2769, %v2768
      %v2790 = vpack.c.b16 %v2771, %v2770
      %v2791 = vpack.c.b16 %v2773, %v2772
      %v2792 = vpack.c.b16 %v2775, %v2774
      %v2793 = vpack.c.b16 %v2777, %v2776
      %v2795 = vsel %vm629, %v2778, 0
      %v2798 = vsel %vm629, %v2779, 0
      %v2801 = vsel %vm629, %v2780, 0
      %v2804 = vsel %vm629, %v2781, 0
      %v2807 = vsel %vm629, %v2782, 0
      %v2810 = vsel %vm629, %v2783, 0
      %v2813 = vsel %vm629, %v2784, 0
      %v2816 = vsel %vm629, %v2785, 0
      %v2819 = vsel %vm629, %v2786, 0
      %v2822 = vsel %vm629, %v2787, 0
      %v2825 = vsel %vm629, %v2788, 0
      %v2828 = vsel %vm629, %v2789, 0
      %v2831 = vsel %vm629, %v2790, 0
      %v2834 = vsel %vm629, %v2791, 0
      %v2837 = vsel %vm629, %v2792, 0
      %v2840 = vsel %vm629, %v2793, 0
      %v2843 = vsel %vm684, %v2745, 0
      %2845 = vmatpush.bf16.msra.mxu0 0
      %2846 = vmatpush.bf16.msra.mxu0 0
      %2847 = vmatpush.bf16.msra.mxu0 0
      %2848 = vmatpush.bf16.msra.mxu0 0
      %2849 = vmatpush.bf16.msra.mxu0 0
      %2850 = vmatpush.bf16.msra.mxu0 0
      %2851 = vmatpush.bf16.msra.mxu0 0
      %2852 = vmatpush.bf16.msra.mxu0 %v2843
      %2853 = vmatmul.bf16.gmra.mxu0 %v2795
      %v2854 = vpop.f32.mrf.mxu0
      %v2855 = vadd.f32 0.0, %v2854
      %v2856 = vpop.f32.mrf.mxu0
      %v2857 = vadd.f32 0.0, %v2856
      %2858 = vmatmul.bf16.gmra.mxu0 %v2798
      %v2859 = vpop.f32.mrf.mxu0
      %v2860 = vadd.f32 0.0, %v2859
      %v2861 = vpop.f32.mrf.mxu0
      %v2862 = vadd.f32 0.0, %v2861
      %2863 = vmatmul.bf16.gmra.mxu0 %v2801
      %v2864 = vpop.f32.mrf.mxu0
      %v2865 = vadd.f32 0.0, %v2864
      %v2866 = vpop.f32.mrf.mxu0
      %v2867 = vadd.f32 0.0, %v2866
      %2868 = vmatmul.bf16.gmra.mxu0 %v2804
      %v2869 = vpop.f32.mrf.mxu0
      %v2870 = vadd.f32 0.0, %v2869
      %v2871 = vpop.f32.mrf.mxu0
      %v2872 = vadd.f32 0.0, %v2871
      %2873 = vmatmul.bf16.gmra.mxu0 %v2807
      %v2874 = vpop.f32.mrf.mxu0
      %v2875 = vadd.f32 0.0, %v2874
      %v2876 = vpop.f32.mrf.mxu0
      %v2877 = vadd.f32 0.0, %v2876
      %2878 = vmatmul.bf16.gmra.mxu0 %v2810
      %v2879 = vpop.f32.mrf.mxu0
      %v2880 = vadd.f32 0.0, %v2879
      %v2881 = vpop.f32.mrf.mxu0
      %v2882 = vadd.f32 0.0, %v2881
      %2883 = vmatmul.bf16.gmra.mxu0 %v2813
      %v2884 = vpop.f32.mrf.mxu0
      %v2885 = vadd.f32 0.0, %v2884
      %v2886 = vpop.f32.mrf.mxu0
      %v2887 = vadd.f32 0.0, %v2886
      %2888 = vmatmul.bf16.gmra.mxu0 %v2816
      %v2889 = vpop.f32.mrf.mxu0
      %v2890 = vadd.f32 0.0, %v2889
      %v2891 = vpop.f32.mrf.mxu0
      %v2892 = vadd.f32 0.0, %v2891
      %2893 = vmatmul.bf16.gmra.mxu0 %v2819
      %v2894 = vpop.f32.mrf.mxu0
      %v2895 = vadd.f32 0.0, %v2894
      %v2896 = vpop.f32.mrf.mxu0
      %v2897 = vadd.f32 0.0, %v2896
      %2898 = vmatmul.bf16.gmra.mxu0 %v2822
      %v2899 = vpop.f32.mrf.mxu0
      %v2900 = vadd.f32 0.0, %v2899
      %v2901 = vpop.f32.mrf.mxu0
      %v2902 = vadd.f32 0.0, %v2901
      %2903 = vmatmul.bf16.gmra.mxu0 %v2825
      %v2904 = vpop.f32.mrf.mxu0
      %v2905 = vadd.f32 0.0, %v2904
      %v2906 = vpop.f32.mrf.mxu0
      %v2907 = vadd.f32 0.0, %v2906
      %2908 = vmatmul.bf16.gmra.mxu0 %v2828
      %v2909 = vpop.f32.mrf.mxu0
      %v2910 = vadd.f32 0.0, %v2909
      %v2911 = vpop.f32.mrf.mxu0
      %v2912 = vadd.f32 0.0, %v2911
      %2913 = vmatmul.bf16.gmra.mxu0 %v2831
      %v2914 = vpop.f32.mrf.mxu0
      %v2915 = vadd.f32 0.0, %v2914
      %v2916 = vpop.f32.mrf.mxu0
      %v2917 = vadd.f32 0.0, %v2916
      %2918 = vmatmul.bf16.gmra.mxu0 %v2834
      %v2919 = vpop.f32.mrf.mxu0
      %v2920 = vadd.f32 0.0, %v2919
      %v2921 = vpop.f32.mrf.mxu0
      %v2922 = vadd.f32 0.0, %v2921
      %2923 = vmatmul.bf16.gmra.mxu0 %v2837
      %v2924 = vpop.f32.mrf.mxu0
      %v2925 = vadd.f32 0.0, %v2924
      %v2926 = vpop.f32.mrf.mxu0
      %v2927 = vadd.f32 0.0, %v2926
      %2928 = vmatmul.bf16.gmra.mxu0 %v2840
      %v2929 = vpop.f32.mrf.mxu0
      %v2930 = vadd.f32 0.0, %v2929
      %v2931 = vpop.f32.mrf.mxu0
      %v2932 = vadd.f32 0.0, %v2931
      %2933 = vdwg.mxu0
      %v2934 = vadd.f32 %v2502, %v2855
      %v2935 = vadd.f32 %v2504, %v2857
      %v2936 = vadd.f32 %v2507, %v2860
      %v2937 = vadd.f32 %v2509, %v2862
      %v2938 = vadd.f32 %v2512, %v2865
      %v2939 = vadd.f32 %v2514, %v2867
      %v2940 = vadd.f32 %v2517, %v2870
      %v2941 = vadd.f32 %v2519, %v2872
      %v2942 = vadd.f32 %v2522, %v2875
      %v2943 = vadd.f32 %v2524, %v2877
      %v2944 = vadd.f32 %v2527, %v2880
      %v2945 = vadd.f32 %v2529, %v2882
      %v2946 = vadd.f32 %v2532, %v2885
      %v2947 = vadd.f32 %v2534, %v2887
      %v2948 = vadd.f32 %v2537, %v2890
      %v2949 = vadd.f32 %v2539, %v2892
      %v2950 = vadd.f32 %v2542, %v2895
      %v2951 = vadd.f32 %v2544, %v2897
      %v2952 = vadd.f32 %v2547, %v2900
      %v2953 = vadd.f32 %v2549, %v2902
      %v2954 = vadd.f32 %v2552, %v2905
      %v2955 = vadd.f32 %v2554, %v2907
      %v2956 = vadd.f32 %v2557, %v2910
      %v2957 = vadd.f32 %v2559, %v2912
      %v2958 = vadd.f32 %v2562, %v2915
      %v2959 = vadd.f32 %v2564, %v2917
      %v2960 = vadd.f32 %v2567, %v2920
      %v2961 = vadd.f32 %v2569, %v2922
      %v2962 = vadd.f32 %v2572, %v2925
      %v2963 = vadd.f32 %v2574, %v2927
      %v2964 = vadd.f32 %v2577, %v2930
      %v2965 = vadd.f32 %v2579, %v2932
      %s2966 = scalar_lea.vmem [#allocation2], 12
      %v2967 = vld [vmem:[%s2966] sm:$0xf]
      %v2968 = vld [vmem:[%s2966 + $0x4] sm:$0xf]
      %v2969 = vld [vmem:[%s2966 + $0xc] sm:$0xf]
      %v2970 = vld [vmem:[%s2966 + $0x10] sm:$0xf]
      %v2971 = vld [vmem:[%s2966 + $0x18] sm:$0xf]
      %v2972 = vld [vmem:[%s2966 + $0x1c] sm:$0xf]
      %v2973 = vld [vmem:[%s2966 + $0x24] sm:$0xf]
      %v2974 = vld [vmem:[%s2966 + $0x28] sm:$0xf]
      %v2975 = vld [vmem:[%s2966 + $0x30] sm:$0xf]
      %v2976 = vld [vmem:[%s2966 + $0x34] sm:$0xf]
      %v2977 = vld [vmem:[%s2966 + $0x3c] sm:$0xf]
      %v2978 = vld [vmem:[%s2966 + $0x40] sm:$0xf]
      %v2979 = vld [vmem:[%s2966 + $0x48] sm:$0xf]
      %v2980 = vld [vmem:[%s2966 + $0x4c] sm:$0xf]
      %v2981 = vld [vmem:[%s2966 + $0x54] sm:$0xf]
      %v2982 = vld [vmem:[%s2966 + $0x58] sm:$0xf]
      %v2983 = vld [vmem:[%s2966 + $0x60] sm:$0xf]
      %v2984 = vld [vmem:[%s2966 + $0x64] sm:$0xf]
      %v2985 = vld [vmem:[%s2966 + $0x6c] sm:$0xf]
      %v2986 = vld [vmem:[%s2966 + $0x70] sm:$0xf]
      %v2987 = vld [vmem:[%s2966 + $0x78] sm:$0xf]
      %v2988 = vld [vmem:[%s2966 + $0x7c] sm:$0xf]
      %v2989 = vld [vmem:[%s2966 + $0x84] sm:$0xf]
      %v2990 = vld [vmem:[%s2966 + $0x88] sm:$0xf]
      %v2991 = vld [vmem:[%s2966 + $0x90] sm:$0xf]
      %v2992 = vld [vmem:[%s2966 + $0x94] sm:$0xf]
      %v2993 = vld [vmem:[%s2966 + $0x9c] sm:$0xf]
      %v2994 = vld [vmem:[%s2966 + $0xa0] sm:$0xf]
      %v2995 = vld [vmem:[%s2966 + $0xa8] sm:$0xf]
      %v2996 = vld [vmem:[%s2966 + $0xac] sm:$0xf]
      %v2997 = vld [vmem:[%s2966 + $0xb4] sm:$0xf]
      %v2998 = vld [vmem:[%s2966 + $0xb8] sm:$0xf]
      %s2999 = scalar_lea.vmem %s6, 6
      %v3000 = vld [vmem:[%s2999] sm:$0x3]
      %v3033 = vunpack.c.l.b16 %v2967
      %v3034 = vunpack.c.l.b16 %v2968
      %v3035 = vunpack.c.l.b16 %v2969
      %v3036 = vunpack.c.l.b16 %v2970
      %v3037 = vunpack.c.l.b16 %v2971
      %v3038 = vunpack.c.l.b16 %v2972
      %v3039 = vunpack.c.l.b16 %v2973
      %v3040 = vunpack.c.l.b16 %v2974
      %v3041 = vunpack.c.l.b16 %v2975
      %v3042 = vunpack.c.l.b16 %v2976
      %v3043 = vunpack.c.l.b16 %v2977
      %v3044 = vunpack.c.l.b16 %v2978
      %v3045 = vunpack.c.l.b16 %v2979
      %v3046 = vunpack.c.l.b16 %v2980
      %v3047 = vunpack.c.l.b16 %v2981
      %v3048 = vunpack.c.l.b16 %v2982
      %v3049 = vunpack.c.l.b16 %v2983
      %v3050 = vunpack.c.l.b16 %v2984
      %v3051 = vunpack.c.l.b16 %v2985
      %v3052 = vunpack.c.l.b16 %v2986
      %v3053 = vunpack.c.l.b16 %v2987
      %v3054 = vunpack.c.l.b16 %v2988
      %v3055 = vunpack.c.l.b16 %v2989
      %v3056 = vunpack.c.l.b16 %v2990
      %v3057 = vunpack.c.l.b16 %v2991
      %v3058 = vunpack.c.l.b16 %v2992
      %v3059 = vunpack.c.l.b16 %v2993
      %v3060 = vunpack.c.l.b16 %v2994
      %v3061 = vunpack.c.l.b16 %v2995
      %v3062 = vunpack.c.l.b16 %v2996
      %v3063 = vunpack.c.l.b16 %v2997
      %v3064 = vunpack.c.l.b16 %v2998
      %v3065 = vpack.c.b16 %v3034, %v3033
      %v3066 = vpack.c.b16 %v3036, %v3035
      %v3067 = vpack.c.b16 %v3038, %v3037
      %v3068 = vpack.c.b16 %v3040, %v3039
      %v3069 = vpack.c.b16 %v3042, %v3041
      %v3070 = vpack.c.b16 %v3044, %v3043
      %v3071 = vpack.c.b16 %v3046, %v3045
      %v3072 = vpack.c.b16 %v3048, %v3047
      %v3073 = vpack.c.b16 %v3050, %v3049
      %v3074 = vpack.c.b16 %v3052, %v3051
      %v3075 = vpack.c.b16 %v3054, %v3053
      %v3076 = vpack.c.b16 %v3056, %v3055
      %v3077 = vpack.c.b16 %v3058, %v3057
      %v3078 = vpack.c.b16 %v3060, %v3059
      %v3079 = vpack.c.b16 %v3062, %v3061
      %v3080 = vpack.c.b16 %v3064, %v3063
      %v3082 = vsel %vm629, %v3065, 0
      %v3085 = vsel %vm629, %v3066, 0
      %v3088 = vsel %vm629, %v3067, 0
      %v3091 = vsel %vm629, %v3068, 0
      %v3094 = vsel %vm629, %v3069, 0
      %v3097 = vsel %vm629, %v3070, 0
      %v3100 = vsel %vm629, %v3071, 0
      %v3103 = vsel %vm629, %v3072, 0
      %v3106 = vsel %vm629, %v3073, 0
      %v3109 = vsel %vm629, %v3074, 0
      %v3112 = vsel %vm629, %v3075, 0
      %v3115 = vsel %vm629, %v3076, 0
      %v3118 = vsel %vm629, %v3077, 0
      %v3121 = vsel %vm629, %v3078, 0
      %v3124 = vsel %vm629, %v3079, 0
      %v3127 = vsel %vm629, %v3080, 0
      %v3130 = vsel %vm684, %v3000, 0
      %3132 = vmatpush.bf16.msra.mxu0 0
      %3133 = vmatpush.bf16.msra.mxu0 0
      %3134 = vmatpush.bf16.msra.mxu0 0
      %3135 = vmatpush.bf16.msra.mxu0 0
      %3136 = vmatpush.bf16.msra.mxu0 0
      %3137 = vmatpush.bf16.msra.mxu0 0
      %3138 = vmatpush.bf16.msra.mxu0 0
      %3139 = vmatpush.bf16.msra.mxu0 %v3130
      %3140 = vmatmul.bf16.gmra.mxu0 %v3082
      %v3141 = vpop.f32.mrf.mxu0
      %v3142 = vadd.f32 0.0, %v3141
      %v3143 = vpop.f32.mrf.mxu0
      %v3144 = vadd.f32 0.0, %v3143
      %3145 = vmatmul.bf16.gmra.mxu0 %v3085
      %v3146 = vpop.f32.mrf.mxu0
      %v3147 = vadd.f32 0.0, %v3146
      %v3148 = vpop.f32.mrf.mxu0
      %v3149 = vadd.f32 0.0, %v3148
      %3150 = vmatmul.bf16.gmra.mxu0 %v3088
      %v3151 = vpop.f32.mrf.mxu0
      %v3152 = vadd.f32 0.0, %v3151
      %v3153 = vpop.f32.mrf.mxu0
      %v3154 = vadd.f32 0.0, %v3153
      %3155 = vmatmul.bf16.gmra.mxu0 %v3091
      %v3156 = vpop.f32.mrf.mxu0
      %v3157 = vadd.f32 0.0, %v3156
      %v3158 = vpop.f32.mrf.mxu0
      %v3159 = vadd.f32 0.0, %v3158
      %3160 = vmatmul.bf16.gmra.mxu0 %v3094
      %v3161 = vpop.f32.mrf.mxu0
      %v3162 = vadd.f32 0.0, %v3161
      %v3163 = vpop.f32.mrf.mxu0
      %v3164 = vadd.f32 0.0, %v3163
      %3165 = vmatmul.bf16.gmra.mxu0 %v3097
      %v3166 = vpop.f32.mrf.mxu0
      %v3167 = vadd.f32 0.0, %v3166
      %v3168 = vpop.f32.mrf.mxu0
      %v3169 = vadd.f32 0.0, %v3168
      %3170 = vmatmul.bf16.gmra.mxu0 %v3100
      %v3171 = vpop.f32.mrf.mxu0
      %v3172 = vadd.f32 0.0, %v3171
      %v3173 = vpop.f32.mrf.mxu0
      %v3174 = vadd.f32 0.0, %v3173
      %3175 = vmatmul.bf16.gmra.mxu0 %v3103
      %v3176 = vpop.f32.mrf.mxu0
      %v3177 = vadd.f32 0.0, %v3176
      %v3178 = vpop.f32.mrf.mxu0
      %v3179 = vadd.f32 0.0, %v3178
      %3180 = vmatmul.bf16.gmra.mxu0 %v3106
      %v3181 = vpop.f32.mrf.mxu0
      %v3182 = vadd.f32 0.0, %v3181
      %v3183 = vpop.f32.mrf.mxu0
      %v3184 = vadd.f32 0.0, %v3183
      %3185 = vmatmul.bf16.gmra.mxu0 %v3109
      %v3186 = vpop.f32.mrf.mxu0
      %v3187 = vadd.f32 0.0, %v3186
      %v3188 = vpop.f32.mrf.mxu0
      %v3189 = vadd.f32 0.0, %v3188
      %3190 = vmatmul.bf16.gmra.mxu0 %v3112
      %v3191 = vpop.f32.mrf.mxu0
      %v3192 = vadd.f32 0.0, %v3191
      %v3193 = vpop.f32.mrf.mxu0
      %v3194 = vadd.f32 0.0, %v3193
      %3195 = vmatmul.bf16.gmra.mxu0 %v3115
      %v3196 = vpop.f32.mrf.mxu0
      %v3197 = vadd.f32 0.0, %v3196
      %v3198 = vpop.f32.mrf.mxu0
      %v3199 = vadd.f32 0.0, %v3198
      %3200 = vmatmul.bf16.gmra.mxu0 %v3118
      %v3201 = vpop.f32.mrf.mxu0
      %v3202 = vadd.f32 0.0, %v3201
      %v3203 = vpop.f32.mrf.mxu0
      %v3204 = vadd.f32 0.0, %v3203
      %3205 = vmatmul.bf16.gmra.mxu0 %v3121
      %v3206 = vpop.f32.mrf.mxu0
      %v3207 = vadd.f32 0.0, %v3206
      %v3208 = vpop.f32.mrf.mxu0
      %v3209 = vadd.f32 0.0, %v3208
      %3210 = vmatmul.bf16.gmra.mxu0 %v3124
      %v3211 = vpop.f32.mrf.mxu0
      %v3212 = vadd.f32 0.0, %v3211
      %v3213 = vpop.f32.mrf.mxu0
      %v3214 = vadd.f32 0.0, %v3213
      %3215 = vmatmul.bf16.gmra.mxu0 %v3127
      %v3216 = vpop.f32.mrf.mxu0
      %v3217 = vadd.f32 0.0, %v3216
      %v3218 = vpop.f32.mrf.mxu0
      %v3219 = vadd.f32 0.0, %v3218
      %3220 = vdwg.mxu0
      %v3221 = vadd.f32 %v2934, %v3142
      %v3222 = vadd.f32 %v2935, %v3144
      %v3223 = vadd.f32 %v2936, %v3147
      %v3224 = vadd.f32 %v2937, %v3149
      %v3225 = vadd.f32 %v2938, %v3152
      %v3226 = vadd.f32 %v2939, %v3154
      %v3227 = vadd.f32 %v2940, %v3157
      %v3228 = vadd.f32 %v2941, %v3159
      %v3229 = vadd.f32 %v2942, %v3162
      %v3230 = vadd.f32 %v2943, %v3164
      %v3231 = vadd.f32 %v2944, %v3167
      %v3232 = vadd.f32 %v2945, %v3169
      %v3233 = vadd.f32 %v2946, %v3172
      %v3234 = vadd.f32 %v2947, %v3174
      %v3235 = vadd.f32 %v2948, %v3177
      %v3236 = vadd.f32 %v2949, %v3179
      %v3237 = vadd.f32 %v2950, %v3182
      %v3238 = vadd.f32 %v2951, %v3184
      %v3239 = vadd.f32 %v2952, %v3187
      %v3240 = vadd.f32 %v2953, %v3189
      %v3241 = vadd.f32 %v2954, %v3192
      %v3242 = vadd.f32 %v2955, %v3194
      %v3243 = vadd.f32 %v2956, %v3197
      %v3244 = vadd.f32 %v2957, %v3199
      %v3245 = vadd.f32 %v2958, %v3202
      %v3246 = vadd.f32 %v2959, %v3204
      %v3247 = vadd.f32 %v2960, %v3207
      %v3248 = vadd.f32 %v2961, %v3209
      %v3249 = vadd.f32 %v2962, %v3212
      %v3250 = vadd.f32 %v2963, %v3214
      %v3251 = vadd.f32 %v2964, %v3217
      %v3252 = vadd.f32 %v2965, %v3219
      %v3253 = vld [vmem:[%s2966] sm:$0xf]
      %v3254 = vld [vmem:[%s2966 + $0x4] sm:$0xf]
      %v3255 = vld [vmem:[%s2966 + $0x8] sm:$0x1]
      %v3256 = vld [vmem:[%s2966 + $0xc] sm:$0xf]
      %v3257 = vld [vmem:[%s2966 + $0x10] sm:$0xf]
      %v3258 = vld [vmem:[%s2966 + $0x14] sm:$0x1]
      %v3259 = vld [vmem:[%s2966 + $0x18] sm:$0xf]
      %v3260 = vld [vmem:[%s2966 + $0x1c] sm:$0xf]
      %v3261 = vld [vmem:[%s2966 + $0x20] sm:$0x1]
      %v3262 = vld [vmem:[%s2966 + $0x24] sm:$0xf]
      %v3263 = vld [vmem:[%s2966 + $0x28] sm:$0xf]
      %v3264 = vld [vmem:[%s2966 + $0x2c] sm:$0x1]
      %v3265 = vld [vmem:[%s2966 + $0x30] sm:$0xf]
      %v3266 = vld [vmem:[%s2966 + $0x34] sm:$0xf]
      %v3267 = vld [vmem:[%s2966 + $0x38] sm:$0x1]
      %v3268 = vld [vmem:[%s2966 + $0x3c] sm:$0xf]
      %v3269 = vld [vmem:[%s2966 + $0x40] sm:$0xf]
      %v3270 = vld [vmem:[%s2966 + $0x44] sm:$0x1]
      %v3271 = vld [vmem:[%s2966 + $0x48] sm:$0xf]
      %v3272 = vld [vmem:[%s2966 + $0x4c] sm:$0xf]
      %v3273 = vld [vmem:[%s2966 + $0x50] sm:$0x1]
      %v3274 = vld [vmem:[%s2966 + $0x54] sm:$0xf]
      %v3275 = vld [vmem:[%s2966 + $0x58] sm:$0xf]
      %v3276 = vld [vmem:[%s2966 + $0x5c] sm:$0x1]
      %v3277 = vld [vmem:[%s2966 + $0x60] sm:$0xf]
      %v3278 = vld [vmem:[%s2966 + $0x64] sm:$0xf]
      %v3279 = vld [vmem:[%s2966 + $0x68] sm:$0x1]
      %v3280 = vld [vmem:[%s2966 + $0x6c] sm:$0xf]
      %v3281 = vld [vmem:[%s2966 + $0x70] sm:$0xf]
      %v3282 = vld [vmem:[%s2966 + $0x74] sm:$0x1]
      %v3283 = vld [vmem:[%s2966 + $0x78] sm:$0xf]
      %v3284 = vld [vmem:[%s2966 + $0x7c] sm:$0xf]
      %v3285 = vld [vmem:[%s2966 + $0x80] sm:$0x1]
      %v3286 = vld [vmem:[%s2966 + $0x84] sm:$0xf]
      %v3287 = vld [vmem:[%s2966 + $0x88] sm:$0xf]
      %v3288 = vld [vmem:[%s2966 + $0x8c] sm:$0x1]
      %v3289 = vld [vmem:[%s2966 + $0x90] sm:$0xf]
      %v3290 = vld [vmem:[%s2966 + $0x94] sm:$0xf]
      %v3291 = vld [vmem:[%s2966 + $0x98] sm:$0x1]
      %v3292 = vld [vmem:[%s2966 + $0x9c] sm:$0xf]
      %v3293 = vld [vmem:[%s2966 + $0xa0] sm:$0xf]
      %v3294 = vld [vmem:[%s2966 + $0xa4] sm:$0x1]
      %v3295 = vld [vmem:[%s2966 + $0xa8] sm:$0xf]
      %v3296 = vld [vmem:[%s2966 + $0xac] sm:$0xf]
      %v3297 = vld [vmem:[%s2966 + $0xb0] sm:$0x1]
      %v3298 = vld [vmem:[%s2966 + $0xb4] sm:$0xf]
      %v3299 = vld [vmem:[%s2966 + $0xb8] sm:$0xf]
      %v3300 = vld [vmem:[%s2966 + $0xbc] sm:$0x1]
      %v3302 = vshrl.u32 %v3253, 16
      %v3304 = vrot.slane %v3302, 4
      %v3305 = vshll.u32 %v3253, 16
      %v3307 = vrot.slane %v3305, 5
      %v3308 = vor.u32 %v3304, %v3307
      %v3309 = vrot.slane %v3308, 4
      %v3311 = vshll.u32 %v3254, 16
      %v3313 = vrot.slane %v3311, 5
      %v3314 = vsel %vm1786, %v3309, %v3313
      %v3315 = vshrl.u32 %v3254, 16
      %v3317 = vrot.slane %v3315, 4
      %v3318 = vor.u32 %v3317, %v3313
      %v3319 = vrot.slane %v3318, 4
      %v3321 = vshll.u32 %v3255, 16
      %v3323 = vrot.slane %v3321, 5
      %v3324 = vsel %vm1786, %v3319, %v3323
      %v3326 = vshrl.u32 %v3256, 16
      %v3328 = vrot.slane %v3326, 4
      %v3329 = vshll.u32 %v3256, 16
      %v3331 = vrot.slane %v3329, 5
      %v3332 = vor.u32 %v3328, %v3331
      %v3333 = vrot.slane %v3332, 4
      %v3335 = vshll.u32 %v3257, 16
      %v3337 = vrot.slane %v3335, 5
      %v3338 = vsel %vm1786, %v3333, %v3337
      %v3339 = vshrl.u32 %v3257, 16
      %v3341 = vrot.slane %v3339, 4
      %v3342 = vor.u32 %v3341, %v3337
      %v3343 = vrot.slane %v3342, 4
      %v3345 = vshll.u32 %v3258, 16
      %v3347 = vrot.slane %v3345, 5
      %v3348 = vsel %vm1786, %v3343, %v3347
      %v3350 = vshrl.u32 %v3259, 16
      %v3352 = vrot.slane %v3350, 4
      %v3353 = vshll.u32 %v3259, 16
      %v3355 = vrot.slane %v3353, 5
      %v3356 = vor.u32 %v3352, %v3355
      %v3357 = vrot.slane %v3356, 4
      %v3359 = vshll.u32 %v3260, 16
      %v3361 = vrot.slane %v3359, 5
      %v3362 = vsel %vm1786, %v3357, %v3361
      %v3363 = vshrl.u32 %v3260, 16
      %v3365 = vrot.slane %v3363, 4
      %v3366 = vor.u32 %v3365, %v3361
      %v3367 = vrot.slane %v3366, 4
      %v3369 = vshll.u32 %v3261, 16
      %v3371 = vrot.slane %v3369, 5
      %v3372 = vsel %vm1786, %v3367, %v3371
      %v3374 = vshrl.u32 %v3262, 16
      %v3376 = vrot.slane %v3374, 4
      %v3377 = vshll.u32 %v3262, 16
      %v3379 = vrot.slane %v3377, 5
      %v3380 = vor.u32 %v3376, %v3379
      %v3381 = vrot.slane %v3380, 4
      %v3383 = vshll.u32 %v3263, 16
      %v3385 = vrot.slane %v3383, 5
      %v3386 = vsel %vm1786, %v3381, %v3385
      %v3387 = vshrl.u32 %v3263, 16
      %v3389 = vrot.slane %v3387, 4
      %v3390 = vor.u32 %v3389, %v3385
      %v3391 = vrot.slane %v3390, 4
      %v3393 = vshll.u32 %v3264, 16
      %v3395 = vrot.slane %v3393, 5
      %v3396 = vsel %vm1786, %v3391, %v3395
      %v3398 = vshrl.u32 %v3265, 16
      %v3400 = vrot.slane %v3398, 4
      %v3401 = vshll.u32 %v3265, 16
      %v3403 = vrot.slane %v3401, 5
      %v3404 = vor.u32 %v3400, %v3403
      %v3405 = vrot.slane %v3404, 4
      %v3407 = vshll.u32 %v3266, 16
      %v3409 = vrot.slane %v3407, 5
      %v3410 = vsel %vm1786, %v3405, %v3409
      %v3411 = vshrl.u32 %v3266, 16
      %v3413 = vrot.slane %v3411, 4
      %v3414 = vor.u32 %v3413, %v3409
      %v3415 = vrot.slane %v3414, 4
      %v3417 = vshll.u32 %v3267, 16
      %v3419 = vrot.slane %v3417, 5
      %v3420 = vsel %vm1786, %v3415, %v3419
      %v3422 = vshrl.u32 %v3268, 16
      %v3424 = vrot.slane %v3422, 4
      %v3425 = vshll.u32 %v3268, 16
      %v3427 = vrot.slane %v3425, 5
      %v3428 = vor.u32 %v3424, %v3427
      %v3429 = vrot.slane %v3428, 4
      %v3431 = vshll.u32 %v3269, 16
      %v3433 = vrot.slane %v3431, 5
      %v3434 = vsel %vm1786, %v3429, %v3433
      %v3435 = vshrl.u32 %v3269, 16
      %v3437 = vrot.slane %v3435, 4
      %v3438 = vor.u32 %v3437, %v3433
      %v3439 = vrot.slane %v3438, 4
      %v3441 = vshll.u32 %v3270, 16
      %v3443 = vrot.slane %v3441, 5
      %v3444 = vsel %vm1786, %v3439, %v3443
      %v3446 = vshrl.u32 %v3271, 16
      %v3448 = vrot.slane %v3446, 4
      %v3449 = vshll.u32 %v3271, 16
      %v3451 = vrot.slane %v3449, 5
      %v3452 = vor.u32 %v3448, %v3451
      %v3453 = vrot.slane %v3452, 4
      %v3455 = vshll.u32 %v3272, 16
      %v3457 = vrot.slane %v3455, 5
      %v3458 = vsel %vm1786, %v3453, %v3457
      %v3459 = vshrl.u32 %v3272, 16
      %v3461 = vrot.slane %v3459, 4
      %v3462 = vor.u32 %v3461, %v3457
      %v3463 = vrot.slane %v3462, 4
      %v3465 = vshll.u32 %v3273, 16
      %v3467 = vrot.slane %v3465, 5
      %v3468 = vsel %vm1786, %v3463, %v3467
      %v3470 = vshrl.u32 %v3274, 16
      %v3472 = vrot.slane %v3470, 4
      %v3473 = vshll.u32 %v3274, 16
      %v3475 = vrot.slane %v3473, 5
      %v3476 = vor.u32 %v3472, %v3475
      %v3477 = vrot.slane %v3476, 4
      %v3479 = vshll.u32 %v3275, 16
      %v3481 = vrot.slane %v3479, 5
      %v3482 = vsel %vm1786, %v3477, %v3481
      %v3483 = vshrl.u32 %v3275, 16
      %v3485 = vrot.slane %v3483, 4
      %v3486 = vor.u32 %v3485, %v3481
      %v3487 = vrot.slane %v3486, 4
      %v3489 = vshll.u32 %v3276, 16
      %v3491 = vrot.slane %v3489, 5
      %v3492 = vsel %vm1786, %v3487, %v3491
      %v3494 = vshrl.u32 %v3277, 16
      %v3496 = vrot.slane %v3494, 4
      %v3497 = vshll.u32 %v3277, 16
      %v3499 = vrot.slane %v3497, 5
      %v3500 = vor.u32 %v3496, %v3499
      %v3501 = vrot.slane %v3500, 4
      %v3503 = vshll.u32 %v3278, 16
      %v3505 = vrot.slane %v3503, 5
      %v3506 = vsel %vm1786, %v3501, %v3505
      %v3507 = vshrl.u32 %v3278, 16
      %v3509 = vrot.slane %v3507, 4
      %v3510 = vor.u32 %v3509, %v3505
      %v3511 = vrot.slane %v3510, 4
      %v3513 = vshll.u32 %v3279, 16
      %v3515 = vrot.slane %v3513, 5
      %v3516 = vsel %vm1786, %v3511, %v3515
      %v3518 = vshrl.u32 %v3280, 16
      %v3520 = vrot.slane %v3518, 4
      %v3521 = vshll.u32 %v3280, 16
      %v3523 = vrot.slane %v3521, 5
      %v3524 = vor.u32 %v3520, %v3523
      %v3525 = vrot.slane %v3524, 4
      %v3527 = vshll.u32 %v3281, 16
      %v3529 = vrot.slane %v3527, 5
      %v3530 = vsel %vm1786, %v3525, %v3529
      %v3531 = vshrl.u32 %v3281, 16
      %v3533 = vrot.slane %v3531, 4
      %v3534 = vor.u32 %v3533, %v3529
      %v3535 = vrot.slane %v3534, 4
      %v3537 = vshll.u32 %v3282, 16
      %v3539 = vrot.slane %v3537, 5
      %v3540 = vsel %vm1786, %v3535, %v3539
      %v3542 = vshrl.u32 %v3283, 16
      %v3544 = vrot.slane %v3542, 4
      %v3545 = vshll.u32 %v3283, 16
      %v3547 = vrot.slane %v3545, 5
      %v3548 = vor.u32 %v3544, %v3547
      %v3549 = vrot.slane %v3548, 4
      %v3551 = vshll.u32 %v3284, 16
      %v3553 = vrot.slane %v3551, 5
      %v3554 = vsel %vm1786, %v3549, %v3553
      %v3555 = vshrl.u32 %v3284, 16
      %v3557 = vrot.slane %v3555, 4
      %v3558 = vor.u32 %v3557, %v3553
      %v3559 = vrot.slane %v3558, 4
      %v3561 = vshll.u32 %v3285, 16
      %v3563 = vrot.slane %v3561, 5
      %v3564 = vsel %vm1786, %v3559, %v3563
      %v3566 = vshrl.u32 %v3286, 16
      %v3568 = vrot.slane %v3566, 4
      %v3569 = vshll.u32 %v3286, 16
      %v3571 = vrot.slane %v3569, 5
      %v3572 = vor.u32 %v3568, %v3571
      %v3573 = vrot.slane %v3572, 4
      %v3575 = vshll.u32 %v3287, 16
      %v3577 = vrot.slane %v3575, 5
      %v3578 = vsel %vm1786, %v3573, %v3577
      %v3579 = vshrl.u32 %v3287, 16
      %v3581 = vrot.slane %v3579, 4
      %v3582 = vor.u32 %v3581, %v3577
      %v3583 = vrot.slane %v3582, 4
      %v3585 = vshll.u32 %v3288, 16
      %v3587 = vrot.slane %v3585, 5
      %v3588 = vsel %vm1786, %v3583, %v3587
      %v3590 = vshrl.u32 %v3289, 16
      %v3592 = vrot.slane %v3590, 4
      %v3593 = vshll.u32 %v3289, 16
      %v3595 = vrot.slane %v3593, 5
      %v3596 = vor.u32 %v3592, %v3595
      %v3597 = vrot.slane %v3596, 4
      %v3599 = vshll.u32 %v3290, 16
      %v3601 = vrot.slane %v3599, 5
      %v3602 = vsel %vm1786, %v3597, %v3601
      %v3603 = vshrl.u32 %v3290, 16
      %v3605 = vrot.slane %v3603, 4
      %v3606 = vor.u32 %v3605, %v3601
      %v3607 = vrot.slane %v3606, 4
      %v3609 = vshll.u32 %v3291, 16
      %v3611 = vrot.slane %v3609, 5
      %v3612 = vsel %vm1786, %v3607, %v3611
      %v3614 = vshrl.u32 %v3292, 16
      %v3616 = vrot.slane %v3614, 4
      %v3617 = vshll.u32 %v3292, 16
      %v3619 = vrot.slane %v3617, 5
      %v3620 = vor.u32 %v3616, %v3619
      %v3621 = vrot.slane %v3620, 4
      %v3623 = vshll.u32 %v3293, 16
      %v3625 = vrot.slane %v3623, 5
      %v3626 = vsel %vm1786, %v3621, %v3625
      %v3627 = vshrl.u32 %v3293, 16
      %v3629 = vrot.slane %v3627, 4
      %v3630 = vor.u32 %v3629, %v3625
      %v3631 = vrot.slane %v3630, 4
      %v3633 = vshll.u32 %v3294, 16
      %v3635 = vrot.slane %v3633, 5
      %v3636 = vsel %vm1786, %v3631, %v3635
      %v3638 = vshrl.u32 %v3295, 16
      %v3640 = vrot.slane %v3638, 4
      %v3641 = vshll.u32 %v3295, 16
      %v3643 = vrot.slane %v3641, 5
      %v3644 = vor.u32 %v3640, %v3643
      %v3645 = vrot.slane %v3644, 4
      %v3647 = vshll.u32 %v3296, 16
      %v3649 = vrot.slane %v3647, 5
      %v3650 = vsel %vm1786, %v3645, %v3649
      %v3651 = vshrl.u32 %v3296, 16
      %v3653 = vrot.slane %v3651, 4
      %v3654 = vor.u32 %v3653, %v3649
      %v3655 = vrot.slane %v3654, 4
      %v3657 = vshll.u32 %v3297, 16
      %v3659 = vrot.slane %v3657, 5
      %v3660 = vsel %vm1786, %v3655, %v3659
      %v3662 = vshrl.u32 %v3298, 16
      %v3664 = vrot.slane %v3662, 4
      %v3665 = vshll.u32 %v3298, 16
      %v3667 = vrot.slane %v3665, 5
      %v3668 = vor.u32 %v3664, %v3667
      %v3669 = vrot.slane %v3668, 4
      %v3671 = vshll.u32 %v3299, 16
      %v3673 = vrot.slane %v3671, 5
      %v3674 = vsel %vm1786, %v3669, %v3673
      %v3675 = vshrl.u32 %v3299, 16
      %v3677 = vrot.slane %v3675, 4
      %v3678 = vor.u32 %v3677, %v3673
      %v3679 = vrot.slane %v3678, 4
      %v3681 = vshll.u32 %v3300, 16
      %v3683 = vrot.slane %v3681, 5
      %v3684 = vsel %vm1786, %v3679, %v3683
      %s3685 = scalar_lea.vmem %s6, 8
      %v3686 = vld [vmem:[%s3685] sm:$0x3]
      %v3687 = vunpack.c.l.b16 %v3314
      %v3688 = vunpack.c.l.b16 %v3324
      %v3689 = vunpack.c.l.b16 %v3338
      %v3690 = vunpack.c.l.b16 %v3348
      %v3691 = vunpack.c.l.b16 %v3362
      %v3692 = vunpack.c.l.b16 %v3372
      %v3693 = vunpack.c.l.b16 %v3386
      %v3694 = vunpack.c.l.b16 %v3396
      %v3695 = vunpack.c.l.b16 %v3410
      %v3696 = vunpack.c.l.b16 %v3420
      %v3697 = vunpack.c.l.b16 %v3434
      %v3698 = vunpack.c.l.b16 %v3444
      %v3699 = vunpack.c.l.b16 %v3458
      %v3700 = vunpack.c.l.b16 %v3468
      %v3701 = vunpack.c.l.b16 %v3482
      %v3702 = vunpack.c.l.b16 %v3492
      %v3703 = vunpack.c.l.b16 %v3506
      %v3704 = vunpack.c.l.b16 %v3516
      %v3705 = vunpack.c.l.b16 %v3530
      %v3706 = vunpack.c.l.b16 %v3540
      %v3707 = vunpack.c.l.b16 %v3554
      %v3708 = vunpack.c.l.b16 %v3564
      %v3709 = vunpack.c.l.b16 %v3578
      %v3710 = vunpack.c.l.b16 %v3588
      %v3711 = vunpack.c.l.b16 %v3602
      %v3712 = vunpack.c.l.b16 %v3612
      %v3713 = vunpack.c.l.b16 %v3626
      %v3714 = vunpack.c.l.b16 %v3636
      %v3715 = vunpack.c.l.b16 %v3650
      %v3716 = vunpack.c.l.b16 %v3660
      %v3717 = vunpack.c.l.b16 %v3674
      %v3718 = vunpack.c.l.b16 %v3684
      %v3719 = vpack.c.b16 %v3688, %v3687
      %v3720 = vpack.c.b16 %v3690, %v3689
      %v3721 = vpack.c.b16 %v3692, %v3691
      %v3722 = vpack.c.b16 %v3694, %v3693
      %v3723 = vpack.c.b16 %v3696, %v3695
      %v3724 = vpack.c.b16 %v3698, %v3697
      %v3725 = vpack.c.b16 %v3700, %v3699
      %v3726 = vpack.c.b16 %v3702, %v3701
      %v3727 = vpack.c.b16 %v3704, %v3703
      %v3728 = vpack.c.b16 %v3706, %v3705
      %v3729 = vpack.c.b16 %v3708, %v3707
      %v3730 = vpack.c.b16 %v3710, %v3709
      %v3731 = vpack.c.b16 %v3712, %v3711
      %v3732 = vpack.c.b16 %v3714, %v3713
      %v3733 = vpack.c.b16 %v3716, %v3715
      %v3734 = vpack.c.b16 %v3718, %v3717
      %v3736 = vsel %vm629, %v3719, 0
      %v3739 = vsel %vm629, %v3720, 0
      %v3742 = vsel %vm629, %v3721, 0
      %v3745 = vsel %vm629, %v3722, 0
      %v3748 = vsel %vm629, %v3723, 0
      %v3751 = vsel %vm629, %v3724, 0
      %v3754 = vsel %vm629, %v3725, 0
      %v3757 = vsel %vm629, %v3726, 0
      %v3760 = vsel %vm629, %v3727, 0
      %v3763 = vsel %vm629, %v3728, 0
      %v3766 = vsel %vm629, %v3729, 0
      %v3769 = vsel %vm629, %v3730, 0
      %v3772 = vsel %vm629, %v3731, 0
      %v3775 = vsel %vm629, %v3732, 0
      %v3778 = vsel %vm629, %v3733, 0
      %v3781 = vsel %vm629, %v3734, 0
      %v3784 = vsel %vm684, %v3686, 0
      %3786 = vmatpush.bf16.msra.mxu0 0
      %3787 = vmatpush.bf16.msra.mxu0 0
      %3788 = vmatpush.bf16.msra.mxu0 0
      %3789 = vmatpush.bf16.msra.mxu0 0
      %3790 = vmatpush.bf16.msra.mxu0 0
      %3791 = vmatpush.bf16.msra.mxu0 0
      %3792 = vmatpush.bf16.msra.mxu0 0
      %3793 = vmatpush.bf16.msra.mxu0 %v3784
      %3794 = vmatmul.bf16.gmra.mxu0 %v3736
      %v3795 = vpop.f32.mrf.mxu0
      %v3796 = vadd.f32 0.0, %v3795
      %v3797 = vpop.f32.mrf.mxu0
      %v3798 = vadd.f32 0.0, %v3797
      %3799 = vmatmul.bf16.gmra.mxu0 %v3739
      %v3800 = vpop.f32.mrf.mxu0
      %v3801 = vadd.f32 0.0, %v3800
      %v3802 = vpop.f32.mrf.mxu0
      %v3803 = vadd.f32 0.0, %v3802
      %3804 = vmatmul.bf16.gmra.mxu0 %v3742
      %v3805 = vpop.f32.mrf.mxu0
      %v3806 = vadd.f32 0.0, %v3805
      %v3807 = vpop.f32.mrf.mxu0
      %v3808 = vadd.f32 0.0, %v3807
      %3809 = vmatmul.bf16.gmra.mxu0 %v3745
      %v3810 = vpop.f32.mrf.mxu0
      %v3811 = vadd.f32 0.0, %v3810
      %v3812 = vpop.f32.mrf.mxu0
      %v3813 = vadd.f32 0.0, %v3812
      %3814 = vmatmul.bf16.gmra.mxu0 %v3748
      %v3815 = vpop.f32.mrf.mxu0
      %v3816 = vadd.f32 0.0, %v3815
      %v3817 = vpop.f32.mrf.mxu0
      %v3818 = vadd.f32 0.0, %v3817
      %3819 = vmatmul.bf16.gmra.mxu0 %v3751
      %v3820 = vpop.f32.mrf.mxu0
      %v3821 = vadd.f32 0.0, %v3820
      %v3822 = vpop.f32.mrf.mxu0
      %v3823 = vadd.f32 0.0, %v3822
      %3824 = vmatmul.bf16.gmra.mxu0 %v3754
      %v3825 = vpop.f32.mrf.mxu0
      %v3826 = vadd.f32 0.0, %v3825
      %v3827 = vpop.f32.mrf.mxu0
      %v3828 = vadd.f32 0.0, %v3827
      %3829 = vmatmul.bf16.gmra.mxu0 %v3757
      %v3830 = vpop.f32.mrf.mxu0
      %v3831 = vadd.f32 0.0, %v3830
      %v3832 = vpop.f32.mrf.mxu0
      %v3833 = vadd.f32 0.0, %v3832
      %3834 = vmatmul.bf16.gmra.mxu0 %v3760
      %v3835 = vpop.f32.mrf.mxu0
      %v3836 = vadd.f32 0.0, %v3835
      %v3837 = vpop.f32.mrf.mxu0
      %v3838 = vadd.f32 0.0, %v3837
      %3839 = vmatmul.bf16.gmra.mxu0 %v3763
      %v3840 = vpop.f32.mrf.mxu0
      %v3841 = vadd.f32 0.0, %v3840
      %v3842 = vpop.f32.mrf.mxu0
      %v3843 = vadd.f32 0.0, %v3842
      %3844 = vmatmul.bf16.gmra.mxu0 %v3766
      %v3845 = vpop.f32.mrf.mxu0
      %v3846 = vadd.f32 0.0, %v3845
      %v3847 = vpop.f32.mrf.mxu0
      %v3848 = vadd.f32 0.0, %v3847
      %3849 = vmatmul.bf16.gmra.mxu0 %v3769
      %v3850 = vpop.f32.mrf.mxu0
      %v3851 = vadd.f32 0.0, %v3850
      %v3852 = vpop.f32.mrf.mxu0
      %v3853 = vadd.f32 0.0, %v3852
      %3854 = vmatmul.bf16.gmra.mxu0 %v3772
      %v3855 = vpop.f32.mrf.mxu0
      %v3856 = vadd.f32 0.0, %v3855
      %v3857 = vpop.f32.mrf.mxu0
      %v3858 = vadd.f32 0.0, %v3857
      %3859 = vmatmul.bf16.gmra.mxu0 %v3775
      %v3860 = vpop.f32.mrf.mxu0
      %v3861 = vadd.f32 0.0, %v3860
      %v3862 = vpop.f32.mrf.mxu0
      %v3863 = vadd.f32 0.0, %v3862
      %3864 = vmatmul.bf16.gmra.mxu0 %v3778
      %v3865 = vpop.f32.mrf.mxu0
      %v3866 = vadd.f32 0.0, %v3865
      %v3867 = vpop.f32.mrf.mxu0
      %v3868 = vadd.f32 0.0, %v3867
      %3869 = vmatmul.bf16.gmra.mxu0 %v3781
      %v3870 = vpop.f32.mrf.mxu0
      %v3871 = vadd.f32 0.0, %v3870
      %v3872 = vpop.f32.mrf.mxu0
      %v3873 = vadd.f32 0.0, %v3872
      %3874 = vdwg.mxu0
      %v3875 = vadd.f32 %v3221, %v3796
      %v3876 = vadd.f32 %v3222, %v3798
      %v3877 = vadd.f32 %v3223, %v3801
      %v3878 = vadd.f32 %v3224, %v3803
      %v3879 = vadd.f32 %v3225, %v3806
      %v3880 = vadd.f32 %v3226, %v3808
      %v3881 = vadd.f32 %v3227, %v3811
      %v3882 = vadd.f32 %v3228, %v3813
      %v3883 = vadd.f32 %v3229, %v3816
      %v3884 = vadd.f32 %v3230, %v3818
      %v3885 = vadd.f32 %v3231, %v3821
      %v3886 = vadd.f32 %v3232, %v3823
      %v3887 = vadd.f32 %v3233, %v3826
      %v3888 = vadd.f32 %v3234, %v3828
      %v3889 = vadd.f32 %v3235, %v3831
      %v3890 = vadd.f32 %v3236, %v3833
      %v3891 = vadd.f32 %v3237, %v3836
      %v3892 = vadd.f32 %v3238, %v3838
      %v3893 = vadd.f32 %v3239, %v3841
      %v3894 = vadd.f32 %v3240, %v3843
      %v3895 = vadd.f32 %v3241, %v3846
      %v3896 = vadd.f32 %v3242, %v3848
      %v3897 = vadd.f32 %v3243, %v3851
      %v3898 = vadd.f32 %v3244, %v3853
      %v3899 = vadd.f32 %v3245, %v3856
      %v3900 = vadd.f32 %v3246, %v3858
      %v3901 = vadd.f32 %v3247, %v3861
      %v3902 = vadd.f32 %v3248, %v3863
      %v3903 = vadd.f32 %v3249, %v3866
      %v3904 = vadd.f32 %v3250, %v3868
      %v3905 = vadd.f32 %v3251, %v3871
      %v3906 = vadd.f32 %v3252, %v3873
      %v3907 = vld [vmem:[%s2966] sm:$0xe]
      %v3908 = vld [vmem:[%s2966 + $0xc] sm:$0xe]
      %v3909 = vld [vmem:[%s2966 + $0x18] sm:$0xe]
      %v3910 = vld [vmem:[%s2966 + $0x24] sm:$0xe]
      %v3911 = vld [vmem:[%s2966 + $0x30] sm:$0xe]
      %v3912 = vld [vmem:[%s2966 + $0x3c] sm:$0xe]
      %v3913 = vld [vmem:[%s2966 + $0x48] sm:$0xe]
      %v3914 = vld [vmem:[%s2966 + $0x54] sm:$0xe]
      %v3915 = vld [vmem:[%s2966 + $0x60] sm:$0xe]
      %v3916 = vld [vmem:[%s2966 + $0x6c] sm:$0xe]
      %v3917 = vld [vmem:[%s2966 + $0x78] sm:$0xe]
      %v3918 = vld [vmem:[%s2966 + $0x84] sm:$0xe]
      %v3919 = vld [vmem:[%s2966 + $0x90] sm:$0xe]
      %v3920 = vld [vmem:[%s2966 + $0x9c] sm:$0xe]
      %v3921 = vld [vmem:[%s2966 + $0xa8] sm:$0xe]
      %v3922 = vld [vmem:[%s2966 + $0xb4] sm:$0xe]
      %v3971 = vrot.slane %v3907, 5
      %v3972 = vrot.slane %v3971, 4
      %v3973 = vrot.slane %v3254, 5
      %v3974 = vsel %vm2631, %v3972, %v3973
      %v3975 = vrot.slane %v3973, 4
      %v3976 = vrot.slane %v3255, 5
      %v3977 = vsel %vm2631, %v3975, %v3976
      %v3978 = vrot.slane %v3908, 5
      %v3979 = vrot.slane %v3978, 4
      %v3980 = vrot.slane %v3257, 5
      %v3981 = vsel %vm2631, %v3979, %v3980
      %v3982 = vrot.slane %v3980, 4
      %v3983 = vrot.slane %v3258, 5
      %v3984 = vsel %vm2631, %v3982, %v3983
      %v3985 = vrot.slane %v3909, 5
      %v3986 = vrot.slane %v3985, 4
      %v3987 = vrot.slane %v3260, 5
      %v3988 = vsel %vm2631, %v3986, %v3987
      %v3989 = vrot.slane %v3987, 4
      %v3990 = vrot.slane %v3261, 5
      %v3991 = vsel %vm2631, %v3989, %v3990
      %v3992 = vrot.slane %v3910, 5
      %v3993 = vrot.slane %v3992, 4
      %v3994 = vrot.slane %v3263, 5
      %v3995 = vsel %vm2631, %v3993, %v3994
      %v3996 = vrot.slane %v3994, 4
      %v3997 = vrot.slane %v3264, 5
      %v3998 = vsel %vm2631, %v3996, %v3997
      %v3999 = vrot.slane %v3911, 5
      %v4000 = vrot.slane %v3999, 4
      %v4001 = vrot.slane %v3266, 5
      %v4002 = vsel %vm2631, %v4000, %v4001
      %v4003 = vrot.slane %v4001, 4
      %v4004 = vrot.slane %v3267, 5
      %v4005 = vsel %vm2631, %v4003, %v4004
      %v4006 = vrot.slane %v3912, 5
      %v4007 = vrot.slane %v4006, 4
      %v4008 = vrot.slane %v3269, 5
      %v4009 = vsel %vm2631, %v4007, %v4008
      %v4010 = vrot.slane %v4008, 4
      %v4011 = vrot.slane %v3270, 5
      %v4012 = vsel %vm2631, %v4010, %v4011
      %v4013 = vrot.slane %v3913, 5
      %v4014 = vrot.slane %v4013, 4
      %v4015 = vrot.slane %v3272, 5
      %v4016 = vsel %vm2631, %v4014, %v4015
      %v4017 = vrot.slane %v4015, 4
      %v4018 = vrot.slane %v3273, 5
      %v4019 = vsel %vm2631, %v4017, %v4018
      %v4020 = vrot.slane %v3914, 5
      %v4021 = vrot.slane %v4020, 4
      %v4022 = vrot.slane %v3275, 5
      %v4023 = vsel %vm2631, %v4021, %v4022
      %v4024 = vrot.slane %v4022, 4
      %v4025 = vrot.slane %v3276, 5
      %v4026 = vsel %vm2631, %v4024, %v4025
      %v4027 = vrot.slane %v3915, 5
      %v4028 = vrot.slane %v4027, 4
      %v4029 = vrot.slane %v3278, 5
      %v4030 = vsel %vm2631, %v4028, %v4029
      %v4031 = vrot.slane %v4029, 4
      %v4032 = vrot.slane %v3279, 5
      %v4033 = vsel %vm2631, %v4031, %v4032
      %v4034 = vrot.slane %v3916, 5
      %v4035 = vrot.slane %v4034, 4
      %v4036 = vrot.slane %v3281, 5
      %v4037 = vsel %vm2631, %v4035, %v4036
      %v4038 = vrot.slane %v4036, 4
      %v4039 = vrot.slane %v3282, 5
      %v4040 = vsel %vm2631, %v4038, %v4039
      %v4041 = vrot.slane %v3917, 5
      %v4042 = vrot.slane %v4041, 4
      %v4043 = vrot.slane %v3284, 5
      %v4044 = vsel %vm2631, %v4042, %v4043
      %v4045 = vrot.slane %v4043, 4
      %v4046 = vrot.slane %v3285, 5
      %v4047 = vsel %vm2631, %v4045, %v4046
      %v4048 = vrot.slane %v3918, 5
      %v4049 = vrot.slane %v4048, 4
      %v4050 = vrot.slane %v3287, 5
      %v4051 = vsel %vm2631, %v4049, %v4050
      %v4052 = vrot.slane %v4050, 4
      %v4053 = vrot.slane %v3288, 5
      %v4054 = vsel %vm2631, %v4052, %v4053
      %v4055 = vrot.slane %v3919, 5
      %v4056 = vrot.slane %v4055, 4
      %v4057 = vrot.slane %v3290, 5
      %v4058 = vsel %vm2631, %v4056, %v4057
      %v4059 = vrot.slane %v4057, 4
      %v4060 = vrot.slane %v3291, 5
      %v4061 = vsel %vm2631, %v4059, %v4060
      %v4062 = vrot.slane %v3920, 5
      %v4063 = vrot.slane %v4062, 4
      %v4064 = vrot.slane %v3293, 5
      %v4065 = vsel %vm2631, %v4063, %v4064
      %v4066 = vrot.slane %v4064, 4
      %v4067 = vrot.slane %v3294, 5
      %v4068 = vsel %vm2631, %v4066, %v4067
      %v4069 = vrot.slane %v3921, 5
      %v4070 = vrot.slane %v4069, 4
      %v4071 = vrot.slane %v3296, 5
      %v4072 = vsel %vm2631, %v4070, %v4071
      %v4073 = vrot.slane %v4071, 4
      %v4074 = vrot.slane %v3297, 5
      %v4075 = vsel %vm2631, %v4073, %v4074
      %v4076 = vrot.slane %v3922, 5
      %v4077 = vrot.slane %v4076, 4
      %v4078 = vrot.slane %v3299, 5
      %v4079 = vsel %vm2631, %v4077, %v4078
      %v4080 = vrot.slane %v4078, 4
      %v4081 = vrot.slane %v3300, 5
      %v4082 = vsel %vm2631, %v4080, %v4081
      %s4083 = scalar_lea.vmem %s6, 10
      %v4084 = vld [vmem:[%s4083] sm:$0x3]
      %v4085 = vunpack.c.l.b16 %v3974
      %v4086 = vunpack.c.l.b16 %v3977
      %v4087 = vunpack.c.l.b16 %v3981
      %v4088 = vunpack.c.l.b16 %v3984
      %v4089 = vunpack.c.l.b16 %v3988
      %v4090 = vunpack.c.l.b16 %v3991
      %v4091 = vunpack.c.l.b16 %v3995
      %v4092 = vunpack.c.l.b16 %v3998
      %v4093 = vunpack.c.l.b16 %v4002
      %v4094 = vunpack.c.l.b16 %v4005
      %v4095 = vunpack.c.l.b16 %v4009
      %v4096 = vunpack.c.l.b16 %v4012
      %v4097 = vunpack.c.l.b16 %v4016
      %v4098 = vunpack.c.l.b16 %v4019
      %v4099 = vunpack.c.l.b16 %v4023
      %v4100 = vunpack.c.l.b16 %v4026
      %v4101 = vunpack.c.l.b16 %v4030
      %v4102 = vunpack.c.l.b16 %v4033
      %v4103 = vunpack.c.l.b16 %v4037
      %v4104 = vunpack.c.l.b16 %v4040
      %v4105 = vunpack.c.l.b16 %v4044
      %v4106 = vunpack.c.l.b16 %v4047
      %v4107 = vunpack.c.l.b16 %v4051
      %v4108 = vunpack.c.l.b16 %v4054
      %v4109 = vunpack.c.l.b16 %v4058
      %v4110 = vunpack.c.l.b16 %v4061
      %v4111 = vunpack.c.l.b16 %v4065
      %v4112 = vunpack.c.l.b16 %v4068
      %v4113 = vunpack.c.l.b16 %v4072
      %v4114 = vunpack.c.l.b16 %v4075
      %v4115 = vunpack.c.l.b16 %v4079
      %v4116 = vunpack.c.l.b16 %v4082
      %v4117 = vpack.c.b16 %v4086, %v4085
      %v4118 = vpack.c.b16 %v4088, %v4087
      %v4119 = vpack.c.b16 %v4090, %v4089
      %v4120 = vpack.c.b16 %v4092, %v4091
      %v4121 = vpack.c.b16 %v4094, %v4093
      %v4122 = vpack.c.b16 %v4096, %v4095
      %v4123 = vpack.c.b16 %v4098, %v4097
      %v4124 = vpack.c.b16 %v4100, %v4099
      %v4125 = vpack.c.b16 %v4102, %v4101
      %v4126 = vpack.c.b16 %v4104, %v4103
      %v4127 = vpack.c.b16 %v4106, %v4105
      %v4128 = vpack.c.b16 %v4108, %v4107
      %v4129 = vpack.c.b16 %v4110, %v4109
      %v4130 = vpack.c.b16 %v4112, %v4111
      %v4131 = vpack.c.b16 %v4114, %v4113
      %v4132 = vpack.c.b16 %v4116, %v4115
      %v4134 = vsel %vm629, %v4117, 0
      %v4137 = vsel %vm629, %v4118, 0
      %v4140 = vsel %vm629, %v4119, 0
      %v4143 = vsel %vm629, %v4120, 0
      %v4146 = vsel %vm629, %v4121, 0
      %v4149 = vsel %vm629, %v4122, 0
      %v4152 = vsel %vm629, %v4123, 0
      %v4155 = vsel %vm629, %v4124, 0
      %v4158 = vsel %vm629, %v4125, 0
      %v4161 = vsel %vm629, %v4126, 0
      %v4164 = vsel %vm629, %v4127, 0
      %v4167 = vsel %vm629, %v4128, 0
      %v4170 = vsel %vm629, %v4129, 0
      %v4173 = vsel %vm629, %v4130, 0
      %v4176 = vsel %vm629, %v4131, 0
      %v4179 = vsel %vm629, %v4132, 0
      %v4182 = vsel %vm684, %v4084, 0
      %4184 = vmatpush.bf16.msra.mxu0 0
      %4185 = vmatpush.bf16.msra.mxu0 0
      %4186 = vmatpush.bf16.msra.mxu0 0
      %4187 = vmatpush.bf16.msra.mxu0 0
      %4188 = vmatpush.bf16.msra.mxu0 0
      %4189 = vmatpush.bf16.msra.mxu0 0
      %4190 = vmatpush.bf16.msra.mxu0 0
      %4191 = vmatpush.bf16.msra.mxu0 %v4182
      %4192 = vmatmul.bf16.gmra.mxu0 %v4134
      %v4193 = vpop.f32.mrf.mxu0
      %v4194 = vadd.f32 0.0, %v4193
      %v4195 = vpop.f32.mrf.mxu0
      %v4196 = vadd.f32 0.0, %v4195
      %4197 = vmatmul.bf16.gmra.mxu0 %v4137
      %v4198 = vpop.f32.mrf.mxu0
      %v4199 = vadd.f32 0.0, %v4198
      %v4200 = vpop.f32.mrf.mxu0
      %v4201 = vadd.f32 0.0, %v4200
      %4202 = vmatmul.bf16.gmra.mxu0 %v4140
      %v4203 = vpop.f32.mrf.mxu0
      %v4204 = vadd.f32 0.0, %v4203
      %v4205 = vpop.f32.mrf.mxu0
      %v4206 = vadd.f32 0.0, %v4205
      %4207 = vmatmul.bf16.gmra.mxu0 %v4143
      %v4208 = vpop.f32.mrf.mxu0
      %v4209 = vadd.f32 0.0, %v4208
      %v4210 = vpop.f32.mrf.mxu0
      %v4211 = vadd.f32 0.0, %v4210
      %4212 = vmatmul.bf16.gmra.mxu0 %v4146
      %v4213 = vpop.f32.mrf.mxu0
      %v4214 = vadd.f32 0.0, %v4213
      %v4215 = vpop.f32.mrf.mxu0
      %v4216 = vadd.f32 0.0, %v4215
      %4217 = vmatmul.bf16.gmra.mxu0 %v4149
      %v4218 = vpop.f32.mrf.mxu0
      %v4219 = vadd.f32 0.0, %v4218
      %v4220 = vpop.f32.mrf.mxu0
      %v4221 = vadd.f32 0.0, %v4220
      %4222 = vmatmul.bf16.gmra.mxu0 %v4152
      %v4223 = vpop.f32.mrf.mxu0
      %v4224 = vadd.f32 0.0, %v4223
      %v4225 = vpop.f32.mrf.mxu0
      %v4226 = vadd.f32 0.0, %v4225
      %4227 = vmatmul.bf16.gmra.mxu0 %v4155
      %v4228 = vpop.f32.mrf.mxu0
      %v4229 = vadd.f32 0.0, %v4228
      %v4230 = vpop.f32.mrf.mxu0
      %v4231 = vadd.f32 0.0, %v4230
      %4232 = vmatmul.bf16.gmra.mxu0 %v4158
      %v4233 = vpop.f32.mrf.mxu0
      %v4234 = vadd.f32 0.0, %v4233
      %v4235 = vpop.f32.mrf.mxu0
      %v4236 = vadd.f32 0.0, %v4235
      %4237 = vmatmul.bf16.gmra.mxu0 %v4161
      %v4238 = vpop.f32.mrf.mxu0
      %v4239 = vadd.f32 0.0, %v4238
      %v4240 = vpop.f32.mrf.mxu0
      %v4241 = vadd.f32 0.0, %v4240
      %4242 = vmatmul.bf16.gmra.mxu0 %v4164
      %v4243 = vpop.f32.mrf.mxu0
      %v4244 = vadd.f32 0.0, %v4243
      %v4245 = vpop.f32.mrf.mxu0
      %v4246 = vadd.f32 0.0, %v4245
      %4247 = vmatmul.bf16.gmra.mxu0 %v4167
      %v4248 = vpop.f32.mrf.mxu0
      %v4249 = vadd.f32 0.0, %v4248
      %v4250 = vpop.f32.mrf.mxu0
      %v4251 = vadd.f32 0.0, %v4250
      %4252 = vmatmul.bf16.gmra.mxu0 %v4170
      %v4253 = vpop.f32.mrf.mxu0
      %v4254 = vadd.f32 0.0, %v4253
      %v4255 = vpop.f32.mrf.mxu0
      %v4256 = vadd.f32 0.0, %v4255
      %4257 = vmatmul.bf16.gmra.mxu0 %v4173
      %v4258 = vpop.f32.mrf.mxu0
      %v4259 = vadd.f32 0.0, %v4258
      %v4260 = vpop.f32.mrf.mxu0
      %v4261 = vadd.f32 0.0, %v4260
      %4262 = vmatmul.bf16.gmra.mxu0 %v4176
      %v4263 = vpop.f32.mrf.mxu0
      %v4264 = vadd.f32 0.0, %v4263
      %v4265 = vpop.f32.mrf.mxu0
      %v4266 = vadd.f32 0.0, %v4265
      %4267 = vmatmul.bf16.gmra.mxu0 %v4179
      %v4268 = vpop.f32.mrf.mxu0
      %v4269 = vadd.f32 0.0, %v4268
      %v4270 = vpop.f32.mrf.mxu0
      %v4271 = vadd.f32 0.0, %v4270
      %4272 = vdwg.mxu0
      %v4273 = vadd.f32 %v3875, %v4194
      %v4274 = vadd.f32 %v3876, %v4196
      %v4275 = vadd.f32 %v3877, %v4199
      %v4276 = vadd.f32 %v3878, %v4201
      %v4277 = vadd.f32 %v3879, %v4204
      %v4278 = vadd.f32 %v3880, %v4206
      %v4279 = vadd.f32 %v3881, %v4209
      %v4280 = vadd.f32 %v3882, %v4211
      %v4281 = vadd.f32 %v3883, %v4214
      %v4282 = vadd.f32 %v3884, %v4216
      %v4283 = vadd.f32 %v3885, %v4219
      %v4284 = vadd.f32 %v3886, %v4221
      %v4285 = vadd.f32 %v3887, %v4224
      %v4286 = vadd.f32 %v3888, %v4226
      %v4287 = vadd.f32 %v3889, %v4229
      %v4288 = vadd.f32 %v3890, %v4231
      %v4289 = vadd.f32 %v3891, %v4234
      %v4290 = vadd.f32 %v3892, %v4236
      %v4291 = vadd.f32 %v3893, %v4239
      %v4292 = vadd.f32 %v3894, %v4241
      %v4293 = vadd.f32 %v3895, %v4244
      %v4294 = vadd.f32 %v3896, %v4246
      %v4295 = vadd.f32 %v3897, %v4249
      %v4296 = vadd.f32 %v3898, %v4251
      %v4297 = vadd.f32 %v3899, %v4254
      %v4298 = vadd.f32 %v3900, %v4256
      %v4299 = vadd.f32 %v3901, %v4259
      %v4300 = vadd.f32 %v3902, %v4261
      %v4301 = vadd.f32 %v3903, %v4264
      %v4302 = vadd.f32 %v3904, %v4266
      %v4303 = vadd.f32 %v3905, %v4269
      %v4304 = vadd.f32 %v3906, %v4271
      %s4305 = scalar_lea.vmem [#allocation2], 24
      %v4306 = vld [vmem:[%s4305] sm:$0xf]
      %v4307 = vld [vmem:[%s4305 + $0x4] sm:$0xf]
      %v4308 = vld [vmem:[%s4305 + $0xc] sm:$0xf]
      %v4309 = vld [vmem:[%s4305 + $0x10] sm:$0xf]
      %v4310 = vld [vmem:[%s4305 + $0x18] sm:$0xf]
      %v4311 = vld [vmem:[%s4305 + $0x1c] sm:$0xf]
      %v4312 = vld [vmem:[%s4305 + $0x24] sm:$0xf]
      %v4313 = vld [vmem:[%s4305 + $0x28] sm:$0xf]
      %v4314 = vld [vmem:[%s4305 + $0x30] sm:$0xf]
      %v4315 = vld [vmem:[%s4305 + $0x34] sm:$0xf]
      %v4316 = vld [vmem:[%s4305 + $0x3c] sm:$0xf]
      %v4317 = vld [vmem:[%s4305 + $0x40] sm:$0xf]
      %v4318 = vld [vmem:[%s4305 + $0x48] sm:$0xf]
      %v4319 = vld [vmem:[%s4305 + $0x4c] sm:$0xf]
      %v4320 = vld [vmem:[%s4305 + $0x54] sm:$0xf]
      %v4321 = vld [vmem:[%s4305 + $0x58] sm:$0xf]
      %v4322 = vld [vmem:[%s4305 + $0x60] sm:$0xf]
      %v4323 = vld [vmem:[%s4305 + $0x64] sm:$0xf]
      %v4324 = vld [vmem:[%s4305 + $0x6c] sm:$0xf]
      %v4325 = vld [vmem:[%s4305 + $0x70] sm:$0xf]
      %v4326 = vld [vmem:[%s4305 + $0x78] sm:$0xf]
      %v4327 = vld [vmem:[%s4305 + $0x7c] sm:$0xf]
      %v4328 = vld [vmem:[%s4305 + $0x84] sm:$0xf]
      %v4329 = vld [vmem:[%s4305 + $0x88] sm:$0xf]
      %v4330 = vld [vmem:[%s4305 + $0x90] sm:$0xf]
      %v4331 = vld [vmem:[%s4305 + $0x94] sm:$0xf]
      %v4332 = vld [vmem:[%s4305 + $0x9c] sm:$0xf]
      %v4333 = vld [vmem:[%s4305 + $0xa0] sm:$0xf]
      %v4334 = vld [vmem:[%s4305 + $0xa8] sm:$0xf]
      %v4335 = vld [vmem:[%s4305 + $0xac] sm:$0xf]
      %v4336 = vld [vmem:[%s4305 + $0xb4] sm:$0xf]
      %v4337 = vld [vmem:[%s4305 + $0xb8] sm:$0xf]
      %s4338 = scalar_lea.vmem %s6, 12
      %v4339 = vld [vmem:[%s4338] sm:$0x3]
      %v4372 = vunpack.c.l.b16 %v4306
      %v4373 = vunpack.c.l.b16 %v4307
      %v4374 = vunpack.c.l.b16 %v4308
      %v4375 = vunpack.c.l.b16 %v4309
      %v4376 = vunpack.c.l.b16 %v4310
      %v4377 = vunpack.c.l.b16 %v4311
      %v4378 = vunpack.c.l.b16 %v4312
      %v4379 = vunpack.c.l.b16 %v4313
      %v4380 = vunpack.c.l.b16 %v4314
      %v4381 = vunpack.c.l.b16 %v4315
      %v4382 = vunpack.c.l.b16 %v4316
      %v4383 = vunpack.c.l.b16 %v4317
      %v4384 = vunpack.c.l.b16 %v4318
      %v4385 = vunpack.c.l.b16 %v4319
      %v4386 = vunpack.c.l.b16 %v4320
      %v4387 = vunpack.c.l.b16 %v4321
      %v4388 = vunpack.c.l.b16 %v4322
      %v4389 = vunpack.c.l.b16 %v4323
      %v4390 = vunpack.c.l.b16 %v4324
      %v4391 = vunpack.c.l.b16 %v4325
      %v4392 = vunpack.c.l.b16 %v4326
      %v4393 = vunpack.c.l.b16 %v4327
      %v4394 = vunpack.c.l.b16 %v4328
      %v4395 = vunpack.c.l.b16 %v4329
      %v4396 = vunpack.c.l.b16 %v4330
      %v4397 = vunpack.c.l.b16 %v4331
      %v4398 = vunpack.c.l.b16 %v4332
      %v4399 = vunpack.c.l.b16 %v4333
      %v4400 = vunpack.c.l.b16 %v4334
      %v4401 = vunpack.c.l.b16 %v4335
      %v4402 = vunpack.c.l.b16 %v4336
      %v4403 = vunpack.c.l.b16 %v4337
      %v4404 = vpack.c.b16 %v4373, %v4372
      %v4405 = vpack.c.b16 %v4375, %v4374
      %v4406 = vpack.c.b16 %v4377, %v4376
      %v4407 = vpack.c.b16 %v4379, %v4378
      %v4408 = vpack.c.b16 %v4381, %v4380
      %v4409 = vpack.c.b16 %v4383, %v4382
      %v4410 = vpack.c.b16 %v4385, %v4384
      %v4411 = vpack.c.b16 %v4387, %v4386
      %v4412 = vpack.c.b16 %v4389, %v4388
      %v4413 = vpack.c.b16 %v4391, %v4390
      %v4414 = vpack.c.b16 %v4393, %v4392
      %v4415 = vpack.c.b16 %v4395, %v4394
      %v4416 = vpack.c.b16 %v4397, %v4396
      %v4417 = vpack.c.b16 %v4399, %v4398
      %v4418 = vpack.c.b16 %v4401, %v4400
      %v4419 = vpack.c.b16 %v4403, %v4402
      %v4421 = vsel %vm629, %v4404, 0
      %v4424 = vsel %vm629, %v4405, 0
      %v4427 = vsel %vm629, %v4406, 0
      %v4430 = vsel %vm629, %v4407, 0
      %v4433 = vsel %vm629, %v4408, 0
      %v4436 = vsel %vm629, %v4409, 0
      %v4439 = vsel %vm629, %v4410, 0
      %v4442 = vsel %vm629, %v4411, 0
      %v4445 = vsel %vm629, %v4412, 0
      %v4448 = vsel %vm629, %v4413, 0
      %v4451 = vsel %vm629, %v4414, 0
      %v4454 = vsel %vm629, %v4415, 0
      %v4457 = vsel %vm629, %v4416, 0
      %v4460 = vsel %vm629, %v4417, 0
      %v4463 = vsel %vm629, %v4418, 0
      %v4466 = vsel %vm629, %v4419, 0
      %v4469 = vsel %vm684, %v4339, 0
      %4471 = vmatpush.bf16.msra.mxu0 0
      %4472 = vmatpush.bf16.msra.mxu0 0
      %4473 = vmatpush.bf16.msra.mxu0 0
      %4474 = vmatpush.bf16.msra.mxu0 0
      %4475 = vmatpush.bf16.msra.mxu0 0
      %4476 = vmatpush.bf16.msra.mxu0 0
      %4477 = vmatpush.bf16.msra.mxu0 0
      %4478 = vmatpush.bf16.msra.mxu0 %v4469
      %4479 = vmatmul.bf16.gmra.mxu0 %v4421
      %v4480 = vpop.f32.mrf.mxu0
      %v4481 = vadd.f32 0.0, %v4480
      %v4482 = vpop.f32.mrf.mxu0
      %v4483 = vadd.f32 0.0, %v4482
      %4484 = vmatmul.bf16.gmra.mxu0 %v4424
      %v4485 = vpop.f32.mrf.mxu0
      %v4486 = vadd.f32 0.0, %v4485
      %v4487 = vpop.f32.mrf.mxu0
      %v4488 = vadd.f32 0.0, %v4487
      %4489 = vmatmul.bf16.gmra.mxu0 %v4427
      %v4490 = vpop.f32.mrf.mxu0
      %v4491 = vadd.f32 0.0, %v4490
      %v4492 = vpop.f32.mrf.mxu0
      %v4493 = vadd.f32 0.0, %v4492
      %4494 = vmatmul.bf16.gmra.mxu0 %v4430
      %v4495 = vpop.f32.mrf.mxu0
      %v4496 = vadd.f32 0.0, %v4495
      %v4497 = vpop.f32.mrf.mxu0
      %v4498 = vadd.f32 0.0, %v4497
      %4499 = vmatmul.bf16.gmra.mxu0 %v4433
      %v4500 = vpop.f32.mrf.mxu0
      %v4501 = vadd.f32 0.0, %v4500
      %v4502 = vpop.f32.mrf.mxu0
      %v4503 = vadd.f32 0.0, %v4502
      %4504 = vmatmul.bf16.gmra.mxu0 %v4436
      %v4505 = vpop.f32.mrf.mxu0
      %v4506 = vadd.f32 0.0, %v4505
      %v4507 = vpop.f32.mrf.mxu0
      %v4508 = vadd.f32 0.0, %v4507
      %4509 = vmatmul.bf16.gmra.mxu0 %v4439
      %v4510 = vpop.f32.mrf.mxu0
      %v4511 = vadd.f32 0.0, %v4510
      %v4512 = vpop.f32.mrf.mxu0
      %v4513 = vadd.f32 0.0, %v4512
      %4514 = vmatmul.bf16.gmra.mxu0 %v4442
      %v4515 = vpop.f32.mrf.mxu0
      %v4516 = vadd.f32 0.0, %v4515
      %v4517 = vpop.f32.mrf.mxu0
      %v4518 = vadd.f32 0.0, %v4517
      %4519 = vmatmul.bf16.gmra.mxu0 %v4445
      %v4520 = vpop.f32.mrf.mxu0
      %v4521 = vadd.f32 0.0, %v4520
      %v4522 = vpop.f32.mrf.mxu0
      %v4523 = vadd.f32 0.0, %v4522
      %4524 = vmatmul.bf16.gmra.mxu0 %v4448
      %v4525 = vpop.f32.mrf.mxu0
      %v4526 = vadd.f32 0.0, %v4525
      %v4527 = vpop.f32.mrf.mxu0
      %v4528 = vadd.f32 0.0, %v4527
      %4529 = vmatmul.bf16.gmra.mxu0 %v4451
      %v4530 = vpop.f32.mrf.mxu0
      %v4531 = vadd.f32 0.0, %v4530
      %v4532 = vpop.f32.mrf.mxu0
      %v4533 = vadd.f32 0.0, %v4532
      %4534 = vmatmul.bf16.gmra.mxu0 %v4454
      %v4535 = vpop.f32.mrf.mxu0
      %v4536 = vadd.f32 0.0, %v4535
      %v4537 = vpop.f32.mrf.mxu0
      %v4538 = vadd.f32 0.0, %v4537
      %4539 = vmatmul.bf16.gmra.mxu0 %v4457
      %v4540 = vpop.f32.mrf.mxu0
      %v4541 = vadd.f32 0.0, %v4540
      %v4542 = vpop.f32.mrf.mxu0
      %v4543 = vadd.f32 0.0, %v4542
      %4544 = vmatmul.bf16.gmra.mxu0 %v4460
      %v4545 = vpop.f32.mrf.mxu0
      %v4546 = vadd.f32 0.0, %v4545
      %v4547 = vpop.f32.mrf.mxu0
      %v4548 = vadd.f32 0.0, %v4547
      %4549 = vmatmul.bf16.gmra.mxu0 %v4463
      %v4550 = vpop.f32.mrf.mxu0
      %v4551 = vadd.f32 0.0, %v4550
      %v4552 = vpop.f32.mrf.mxu0
      %v4553 = vadd.f32 0.0, %v4552
      %4554 = vmatmul.bf16.gmra.mxu0 %v4466
      %v4555 = vpop.f32.mrf.mxu0
      %v4556 = vadd.f32 0.0, %v4555
      %v4557 = vpop.f32.mrf.mxu0
      %v4558 = vadd.f32 0.0, %v4557
      %4559 = vdwg.mxu0
      %v4560 = vadd.f32 %v4273, %v4481
      %v4561 = vadd.f32 %v4274, %v4483
      %v4562 = vadd.f32 %v4275, %v4486
      %v4563 = vadd.f32 %v4276, %v4488
      %v4564 = vadd.f32 %v4277, %v4491
      %v4565 = vadd.f32 %v4278, %v4493
      %v4566 = vadd.f32 %v4279, %v4496
      %v4567 = vadd.f32 %v4280, %v4498
      %v4568 = vadd.f32 %v4281, %v4501
      %v4569 = vadd.f32 %v4282, %v4503
      %v4570 = vadd.f32 %v4283, %v4506
      %v4571 = vadd.f32 %v4284, %v4508
      %v4572 = vadd.f32 %v4285, %v4511
      %v4573 = vadd.f32 %v4286, %v4513
      %v4574 = vadd.f32 %v4287, %v4516
      %v4575 = vadd.f32 %v4288, %v4518
      %v4576 = vadd.f32 %v4289, %v4521
      %v4577 = vadd.f32 %v4290, %v4523
      %v4578 = vadd.f32 %v4291, %v4526
      %v4579 = vadd.f32 %v4292, %v4528
      %v4580 = vadd.f32 %v4293, %v4531
      %v4581 = vadd.f32 %v4294, %v4533
      %v4582 = vadd.f32 %v4295, %v4536
      %v4583 = vadd.f32 %v4296, %v4538
      %v4584 = vadd.f32 %v4297, %v4541
      %v4585 = vadd.f32 %v4298, %v4543
      %v4586 = vadd.f32 %v4299, %v4546
      %v4587 = vadd.f32 %v4300, %v4548
      %v4588 = vadd.f32 %v4301, %v4551
      %v4589 = vadd.f32 %v4302, %v4553
      %v4590 = vadd.f32 %v4303, %v4556
      %v4591 = vadd.f32 %v4304, %v4558
      %v4592 = vld [vmem:[%s4305] sm:$0xf]
      %v4593 = vld [vmem:[%s4305 + $0x4] sm:$0xf]
      %v4594 = vld [vmem:[%s4305 + $0x8] sm:$0x1]
      %v4595 = vld [vmem:[%s4305 + $0xc] sm:$0xf]
      %v4596 = vld [vmem:[%s4305 + $0x10] sm:$0xf]
      %v4597 = vld [vmem:[%s4305 + $0x14] sm:$0x1]
      %v4598 = vld [vmem:[%s4305 + $0x18] sm:$0xf]
      %v4599 = vld [vmem:[%s4305 + $0x1c] sm:$0xf]
      %v4600 = vld [vmem:[%s4305 + $0x20] sm:$0x1]
      %v4601 = vld [vmem:[%s4305 + $0x24] sm:$0xf]
      %v4602 = vld [vmem:[%s4305 + $0x28] sm:$0xf]
      %v4603 = vld [vmem:[%s4305 + $0x2c] sm:$0x1]
      %v4604 = vld [vmem:[%s4305 + $0x30] sm:$0xf]
      %v4605 = vld [vmem:[%s4305 + $0x34] sm:$0xf]
      %v4606 = vld [vmem:[%s4305 + $0x38] sm:$0x1]
      %v4607 = vld [vmem:[%s4305 + $0x3c] sm:$0xf]
      %v4608 = vld [vmem:[%s4305 + $0x40] sm:$0xf]
      %v4609 = vld [vmem:[%s4305 + $0x44] sm:$0x1]
      %v4610 = vld [vmem:[%s4305 + $0x48] sm:$0xf]
      %v4611 = vld [vmem:[%s4305 + $0x4c] sm:$0xf]
      %v4612 = vld [vmem:[%s4305 + $0x50] sm:$0x1]
      %v4613 = vld [vmem:[%s4305 + $0x54] sm:$0xf]
      %v4614 = vld [vmem:[%s4305 + $0x58] sm:$0xf]
      %v4615 = vld [vmem:[%s4305 + $0x5c] sm:$0x1]
      %v4616 = vld [vmem:[%s4305 + $0x60] sm:$0xf]
      %v4617 = vld [vmem:[%s4305 + $0x64] sm:$0xf]
      %v4618 = vld [vmem:[%s4305 + $0x68] sm:$0x1]
      %v4619 = vld [vmem:[%s4305 + $0x6c] sm:$0xf]
      %v4620 = vld [vmem:[%s4305 + $0x70] sm:$0xf]
      %v4621 = vld [vmem:[%s4305 + $0x74] sm:$0x1]
      %v4622 = vld [vmem:[%s4305 + $0x78] sm:$0xf]
      %v4623 = vld [vmem:[%s4305 + $0x7c] sm:$0xf]
      %v4624 = vld [vmem:[%s4305 + $0x80] sm:$0x1]
      %v4625 = vld [vmem:[%s4305 + $0x84] sm:$0xf]
      %v4626 = vld [vmem:[%s4305 + $0x88] sm:$0xf]
      %v4627 = vld [vmem:[%s4305 + $0x8c] sm:$0x1]
      %v4628 = vld [vmem:[%s4305 + $0x90] sm:$0xf]
      %v4629 = vld [vmem:[%s4305 + $0x94] sm:$0xf]
      %v4630 = vld [vmem:[%s4305 + $0x98] sm:$0x1]
      %v4631 = vld [vmem:[%s4305 + $0x9c] sm:$0xf]
      %v4632 = vld [vmem:[%s4305 + $0xa0] sm:$0xf]
      %v4633 = vld [vmem:[%s4305 + $0xa4] sm:$0x1]
      %v4634 = vld [vmem:[%s4305 + $0xa8] sm:$0xf]
      %v4635 = vld [vmem:[%s4305 + $0xac] sm:$0xf]
      %v4636 = vld [vmem:[%s4305 + $0xb0] sm:$0x1]
      %v4637 = vld [vmem:[%s4305 + $0xb4] sm:$0xf]
      %v4638 = vld [vmem:[%s4305 + $0xb8] sm:$0xf]
      %v4639 = vld [vmem:[%s4305 + $0xbc] sm:$0x1]
      %v4641 = vshrl.u32 %v4592, 16
      %v4643 = vrot.slane %v4641, 4
      %v4644 = vshll.u32 %v4592, 16
      %v4646 = vrot.slane %v4644, 5
      %v4647 = vor.u32 %v4643, %v4646
      %v4648 = vrot.slane %v4647, 4
      %v4650 = vshll.u32 %v4593, 16
      %v4652 = vrot.slane %v4650, 5
      %v4653 = vsel %vm1786, %v4648, %v4652
      %v4654 = vshrl.u32 %v4593, 16
      %v4656 = vrot.slane %v4654, 4
      %v4657 = vor.u32 %v4656, %v4652
      %v4658 = vrot.slane %v4657, 4
      %v4660 = vshll.u32 %v4594, 16
      %v4662 = vrot.slane %v4660, 5
      %v4663 = vsel %vm1786, %v4658, %v4662
      %v4665 = vshrl.u32 %v4595, 16
      %v4667 = vrot.slane %v4665, 4
      %v4668 = vshll.u32 %v4595, 16
      %v4670 = vrot.slane %v4668, 5
      %v4671 = vor.u32 %v4667, %v4670
      %v4672 = vrot.slane %v4671, 4
      %v4674 = vshll.u32 %v4596, 16
      %v4676 = vrot.slane %v4674, 5
      %v4677 = vsel %vm1786, %v4672, %v4676
      %v4678 = vshrl.u32 %v4596, 16
      %v4680 = vrot.slane %v4678, 4
      %v4681 = vor.u32 %v4680, %v4676
      %v4682 = vrot.slane %v4681, 4
      %v4684 = vshll.u32 %v4597, 16
      %v4686 = vrot.slane %v4684, 5
      %v4687 = vsel %vm1786, %v4682, %v4686
      %v4689 = vshrl.u32 %v4598, 16
      %v4691 = vrot.slane %v4689, 4
      %v4692 = vshll.u32 %v4598, 16
      %v4694 = vrot.slane %v4692, 5
      %v4695 = vor.u32 %v4691, %v4694
      %v4696 = vrot.slane %v4695, 4
      %v4698 = vshll.u32 %v4599, 16
      %v4700 = vrot.slane %v4698, 5
      %v4701 = vsel %vm1786, %v4696, %v4700
      %v4702 = vshrl.u32 %v4599, 16
      %v4704 = vrot.slane %v4702, 4
      %v4705 = vor.u32 %v4704, %v4700
      %v4706 = vrot.slane %v4705, 4
      %v4708 = vshll.u32 %v4600, 16
      %v4710 = vrot.slane %v4708, 5
      %v4711 = vsel %vm1786, %v4706, %v4710
      %v4713 = vshrl.u32 %v4601, 16
      %v4715 = vrot.slane %v4713, 4
      %v4716 = vshll.u32 %v4601, 16
      %v4718 = vrot.slane %v4716, 5
      %v4719 = vor.u32 %v4715, %v4718
      %v4720 = vrot.slane %v4719, 4
      %v4722 = vshll.u32 %v4602, 16
      %v4724 = vrot.slane %v4722, 5
      %v4725 = vsel %vm1786, %v4720, %v4724
      %v4726 = vshrl.u32 %v4602, 16
      %v4728 = vrot.slane %v4726, 4
      %v4729 = vor.u32 %v4728, %v4724
      %v4730 = vrot.slane %v4729, 4
      %v4732 = vshll.u32 %v4603, 16
      %v4734 = vrot.slane %v4732, 5
      %v4735 = vsel %vm1786, %v4730, %v4734
      %v4737 = vshrl.u32 %v4604, 16
      %v4739 = vrot.slane %v4737, 4
      %v4740 = vshll.u32 %v4604, 16
      %v4742 = vrot.slane %v4740, 5
      %v4743 = vor.u32 %v4739, %v4742
      %v4744 = vrot.slane %v4743, 4
      %v4746 = vshll.u32 %v4605, 16
      %v4748 = vrot.slane %v4746, 5
      %v4749 = vsel %vm1786, %v4744, %v4748
      %v4750 = vshrl.u32 %v4605, 16
      %v4752 = vrot.slane %v4750, 4
      %v4753 = vor.u32 %v4752, %v4748
      %v4754 = vrot.slane %v4753, 4
      %v4756 = vshll.u32 %v4606, 16
      %v4758 = vrot.slane %v4756, 5
      %v4759 = vsel %vm1786, %v4754, %v4758
      %v4761 = vshrl.u32 %v4607, 16
      %v4763 = vrot.slane %v4761, 4
      %v4764 = vshll.u32 %v4607, 16
      %v4766 = vrot.slane %v4764, 5
      %v4767 = vor.u32 %v4763, %v4766
      %v4768 = vrot.slane %v4767, 4
      %v4770 = vshll.u32 %v4608, 16
      %v4772 = vrot.slane %v4770, 5
      %v4773 = vsel %vm1786, %v4768, %v4772
      %v4774 = vshrl.u32 %v4608, 16
      %v4776 = vrot.slane %v4774, 4
      %v4777 = vor.u32 %v4776, %v4772
      %v4778 = vrot.slane %v4777, 4
      %v4780 = vshll.u32 %v4609, 16
      %v4782 = vrot.slane %v4780, 5
      %v4783 = vsel %vm1786, %v4778, %v4782
      %v4785 = vshrl.u32 %v4610, 16
      %v4787 = vrot.slane %v4785, 4
      %v4788 = vshll.u32 %v4610, 16
      %v4790 = vrot.slane %v4788, 5
      %v4791 = vor.u32 %v4787, %v4790
      %v4792 = vrot.slane %v4791, 4
      %v4794 = vshll.u32 %v4611, 16
      %v4796 = vrot.slane %v4794, 5
      %v4797 = vsel %vm1786, %v4792, %v4796
      %v4798 = vshrl.u32 %v4611, 16
      %v4800 = vrot.slane %v4798, 4
      %v4801 = vor.u32 %v4800, %v4796
      %v4802 = vrot.slane %v4801, 4
      %v4804 = vshll.u32 %v4612, 16
      %v4806 = vrot.slane %v4804, 5
      %v4807 = vsel %vm1786, %v4802, %v4806
      %v4809 = vshrl.u32 %v4613, 16
      %v4811 = vrot.slane %v4809, 4
      %v4812 = vshll.u32 %v4613, 16
      %v4814 = vrot.slane %v4812, 5
      %v4815 = vor.u32 %v4811, %v4814
      %v4816 = vrot.slane %v4815, 4
      %v4818 = vshll.u32 %v4614, 16
      %v4820 = vrot.slane %v4818, 5
      %v4821 = vsel %vm1786, %v4816, %v4820
      %v4822 = vshrl.u32 %v4614, 16
      %v4824 = vrot.slane %v4822, 4
      %v4825 = vor.u32 %v4824, %v4820
      %v4826 = vrot.slane %v4825, 4
      %v4828 = vshll.u32 %v4615, 16
      %v4830 = vrot.slane %v4828, 5
      %v4831 = vsel %vm1786, %v4826, %v4830
      %v4833 = vshrl.u32 %v4616, 16
      %v4835 = vrot.slane %v4833, 4
      %v4836 = vshll.u32 %v4616, 16
      %v4838 = vrot.slane %v4836, 5
      %v4839 = vor.u32 %v4835, %v4838
      %v4840 = vrot.slane %v4839, 4
      %v4842 = vshll.u32 %v4617, 16
      %v4844 = vrot.slane %v4842, 5
      %v4845 = vsel %vm1786, %v4840, %v4844
      %v4846 = vshrl.u32 %v4617, 16
      %v4848 = vrot.slane %v4846, 4
      %v4849 = vor.u32 %v4848, %v4844
      %v4850 = vrot.slane %v4849, 4
      %v4852 = vshll.u32 %v4618, 16
      %v4854 = vrot.slane %v4852, 5
      %v4855 = vsel %vm1786, %v4850, %v4854
      %v4857 = vshrl.u32 %v4619, 16
      %v4859 = vrot.slane %v4857, 4
      %v4860 = vshll.u32 %v4619, 16
      %v4862 = vrot.slane %v4860, 5
      %v4863 = vor.u32 %v4859, %v4862
      %v4864 = vrot.slane %v4863, 4
      %v4866 = vshll.u32 %v4620, 16
      %v4868 = vrot.slane %v4866, 5
      %v4869 = vsel %vm1786, %v4864, %v4868
      %v4870 = vshrl.u32 %v4620, 16
      %v4872 = vrot.slane %v4870, 4
      %v4873 = vor.u32 %v4872, %v4868
      %v4874 = vrot.slane %v4873, 4
      %v4876 = vshll.u32 %v4621, 16
      %v4878 = vrot.slane %v4876, 5
      %v4879 = vsel %vm1786, %v4874, %v4878
      %v4881 = vshrl.u32 %v4622, 16
      %v4883 = vrot.slane %v4881, 4
      %v4884 = vshll.u32 %v4622, 16
      %v4886 = vrot.slane %v4884, 5
      %v4887 = vor.u32 %v4883, %v4886
      %v4888 = vrot.slane %v4887, 4
      %v4890 = vshll.u32 %v4623, 16
      %v4892 = vrot.slane %v4890, 5
      %v4893 = vsel %vm1786, %v4888, %v4892
      %v4894 = vshrl.u32 %v4623, 16
      %v4896 = vrot.slane %v4894, 4
      %v4897 = vor.u32 %v4896, %v4892
      %v4898 = vrot.slane %v4897, 4
      %v4900 = vshll.u32 %v4624, 16
      %v4902 = vrot.slane %v4900, 5
      %v4903 = vsel %vm1786, %v4898, %v4902
      %v4905 = vshrl.u32 %v4625, 16
      %v4907 = vrot.slane %v4905, 4
      %v4908 = vshll.u32 %v4625, 16
      %v4910 = vrot.slane %v4908, 5
      %v4911 = vor.u32 %v4907, %v4910
      %v4912 = vrot.slane %v4911, 4
      %v4914 = vshll.u32 %v4626, 16
      %v4916 = vrot.slane %v4914, 5
      %v4917 = vsel %vm1786, %v4912, %v4916
      %v4918 = vshrl.u32 %v4626, 16
      %v4920 = vrot.slane %v4918, 4
      %v4921 = vor.u32 %v4920, %v4916
      %v4922 = vrot.slane %v4921, 4
      %v4924 = vshll.u32 %v4627, 16
      %v4926 = vrot.slane %v4924, 5
      %v4927 = vsel %vm1786, %v4922, %v4926
      %v4929 = vshrl.u32 %v4628, 16
      %v4931 = vrot.slane %v4929, 4
      %v4932 = vshll.u32 %v4628, 16
      %v4934 = vrot.slane %v4932, 5
      %v4935 = vor.u32 %v4931, %v4934
      %v4936 = vrot.slane %v4935, 4
      %v4938 = vshll.u32 %v4629, 16
      %v4940 = vrot.slane %v4938, 5
      %v4941 = vsel %vm1786, %v4936, %v4940
      %v4942 = vshrl.u32 %v4629, 16
      %v4944 = vrot.slane %v4942, 4
      %v4945 = vor.u32 %v4944, %v4940
      %v4946 = vrot.slane %v4945, 4
      %v4948 = vshll.u32 %v4630, 16
      %v4950 = vrot.slane %v4948, 5
      %v4951 = vsel %vm1786, %v4946, %v4950
      %v4953 = vshrl.u32 %v4631, 16
      %v4955 = vrot.slane %v4953, 4
      %v4956 = vshll.u32 %v4631, 16
      %v4958 = vrot.slane %v4956, 5
      %v4959 = vor.u32 %v4955, %v4958
      %v4960 = vrot.slane %v4959, 4
      %v4962 = vshll.u32 %v4632, 16
      %v4964 = vrot.slane %v4962, 5
      %v4965 = vsel %vm1786, %v4960, %v4964
      %v4966 = vshrl.u32 %v4632, 16
      %v4968 = vrot.slane %v4966, 4
      %v4969 = vor.u32 %v4968, %v4964
      %v4970 = vrot.slane %v4969, 4
      %v4972 = vshll.u32 %v4633, 16
      %v4974 = vrot.slane %v4972, 5
      %v4975 = vsel %vm1786, %v4970, %v4974
      %v4977 = vshrl.u32 %v4634, 16
      %v4979 = vrot.slane %v4977, 4
      %v4980 = vshll.u32 %v4634, 16
      %v4982 = vrot.slane %v4980, 5
      %v4983 = vor.u32 %v4979, %v4982
      %v4984 = vrot.slane %v4983, 4
      %v4986 = vshll.u32 %v4635, 16
      %v4988 = vrot.slane %v4986, 5
      %v4989 = vsel %vm1786, %v4984, %v4988
      %v4990 = vshrl.u32 %v4635, 16
      %v4992 = vrot.slane %v4990, 4
      %v4993 = vor.u32 %v4992, %v4988
      %v4994 = vrot.slane %v4993, 4
      %v4996 = vshll.u32 %v4636, 16
      %v4998 = vrot.slane %v4996, 5
      %v4999 = vsel %vm1786, %v4994, %v4998
      %v5001 = vshrl.u32 %v4637, 16
      %v5003 = vrot.slane %v5001, 4
      %v5004 = vshll.u32 %v4637, 16
      %v5006 = vrot.slane %v5004, 5
      %v5007 = vor.u32 %v5003, %v5006
      %v5008 = vrot.slane %v5007, 4
      %v5010 = vshll.u32 %v4638, 16
      %v5012 = vrot.slane %v5010, 5
      %v5013 = vsel %vm1786, %v5008, %v5012
      %v5014 = vshrl.u32 %v4638, 16
      %v5016 = vrot.slane %v5014, 4
      %v5017 = vor.u32 %v5016, %v5012
      %v5018 = vrot.slane %v5017, 4
      %v5020 = vshll.u32 %v4639, 16
      %v5022 = vrot.slane %v5020, 5
      %v5023 = vsel %vm1786, %v5018, %v5022
      %s5024 = scalar_lea.vmem %s6, 14
      %v5025 = vld [vmem:[%s5024] sm:$0x3]
      %v5026 = vunpack.c.l.b16 %v4653
      %v5027 = vunpack.c.l.b16 %v4663
      %v5028 = vunpack.c.l.b16 %v4677
      %v5029 = vunpack.c.l.b16 %v4687
      %v5030 = vunpack.c.l.b16 %v4701
      %v5031 = vunpack.c.l.b16 %v4711
      %v5032 = vunpack.c.l.b16 %v4725
      %v5033 = vunpack.c.l.b16 %v4735
      %v5034 = vunpack.c.l.b16 %v4749
      %v5035 = vunpack.c.l.b16 %v4759
      %v5036 = vunpack.c.l.b16 %v4773
      %v5037 = vunpack.c.l.b16 %v4783
      %v5038 = vunpack.c.l.b16 %v4797
      %v5039 = vunpack.c.l.b16 %v4807
      %v5040 = vunpack.c.l.b16 %v4821
      %v5041 = vunpack.c.l.b16 %v4831
      %v5042 = vunpack.c.l.b16 %v4845
      %v5043 = vunpack.c.l.b16 %v4855
      %v5044 = vunpack.c.l.b16 %v4869
      %v5045 = vunpack.c.l.b16 %v4879
      %v5046 = vunpack.c.l.b16 %v4893
      %v5047 = vunpack.c.l.b16 %v4903
      %v5048 = vunpack.c.l.b16 %v4917
      %v5049 = vunpack.c.l.b16 %v4927
      %v5050 = vunpack.c.l.b16 %v4941
      %v5051 = vunpack.c.l.b16 %v4951
      %v5052 = vunpack.c.l.b16 %v4965
      %v5053 = vunpack.c.l.b16 %v4975
      %v5054 = vunpack.c.l.b16 %v4989
      %v5055 = vunpack.c.l.b16 %v4999
      %v5056 = vunpack.c.l.b16 %v5013
      %v5057 = vunpack.c.l.b16 %v5023
      %v5058 = vpack.c.b16 %v5027, %v5026
      %v5059 = vpack.c.b16 %v5029, %v5028
      %v5060 = vpack.c.b16 %v5031, %v5030
      %v5061 = vpack.c.b16 %v5033, %v5032
      %v5062 = vpack.c.b16 %v5035, %v5034
      %v5063 = vpack.c.b16 %v5037, %v5036
      %v5064 = vpack.c.b16 %v5039, %v5038
      %v5065 = vpack.c.b16 %v5041, %v5040
      %v5066 = vpack.c.b16 %v5043, %v5042
      %v5067 = vpack.c.b16 %v5045, %v5044
      %v5068 = vpack.c.b16 %v5047, %v5046
      %v5069 = vpack.c.b16 %v5049, %v5048
      %v5070 = vpack.c.b16 %v5051, %v5050
      %v5071 = vpack.c.b16 %v5053, %v5052
      %v5072 = vpack.c.b16 %v5055, %v5054
      %v5073 = vpack.c.b16 %v5057, %v5056
      %v5075 = vsel %vm629, %v5058, 0
      %v5078 = vsel %vm629, %v5059, 0
      %v5081 = vsel %vm629, %v5060, 0
      %v5084 = vsel %vm629, %v5061, 0
      %v5087 = vsel %vm629, %v5062, 0
      %v5090 = vsel %vm629, %v5063, 0
      %v5093 = vsel %vm629, %v5064, 0
      %v5096 = vsel %vm629, %v5065, 0
      %v5099 = vsel %vm629, %v5066, 0
      %v5102 = vsel %vm629, %v5067, 0
      %v5105 = vsel %vm629, %v5068, 0
      %v5108 = vsel %vm629, %v5069, 0
      %v5111 = vsel %vm629, %v5070, 0
      %v5114 = vsel %vm629, %v5071, 0
      %v5117 = vsel %vm629, %v5072, 0
      %v5120 = vsel %vm629, %v5073, 0
      %v5123 = vsel %vm684, %v5025, 0
      %5125 = vmatpush.bf16.msra.mxu0 0
      %5126 = vmatpush.bf16.msra.mxu0 0
      %5127 = vmatpush.bf16.msra.mxu0 0
      %5128 = vmatpush.bf16.msra.mxu0 0
      %5129 = vmatpush.bf16.msra.mxu0 0
      %5130 = vmatpush.bf16.msra.mxu0 0
      %5131 = vmatpush.bf16.msra.mxu0 0
      %5132 = vmatpush.bf16.msra.mxu0 %v5123
      %5133 = vmatmul.bf16.gmra.mxu0 %v5075
      %v5134 = vpop.f32.mrf.mxu0
      %v5135 = vadd.f32 0.0, %v5134
      %v5136 = vpop.f32.mrf.mxu0
      %v5137 = vadd.f32 0.0, %v5136
      %5138 = vmatmul.bf16.gmra.mxu0 %v5078
      %v5139 = vpop.f32.mrf.mxu0
      %v5140 = vadd.f32 0.0, %v5139
      %v5141 = vpop.f32.mrf.mxu0
      %v5142 = vadd.f32 0.0, %v5141
      %5143 = vmatmul.bf16.gmra.mxu0 %v5081
      %v5144 = vpop.f32.mrf.mxu0
      %v5145 = vadd.f32 0.0, %v5144
      %v5146 = vpop.f32.mrf.mxu0
      %v5147 = vadd.f32 0.0, %v5146
      %5148 = vmatmul.bf16.gmra.mxu0 %v5084
      %v5149 = vpop.f32.mrf.mxu0
      %v5150 = vadd.f32 0.0, %v5149
      %v5151 = vpop.f32.mrf.mxu0
      %v5152 = vadd.f32 0.0, %v5151
      %5153 = vmatmul.bf16.gmra.mxu0 %v5087
      %v5154 = vpop.f32.mrf.mxu0
      %v5155 = vadd.f32 0.0, %v5154
      %v5156 = vpop.f32.mrf.mxu0
      %v5157 = vadd.f32 0.0, %v5156
      %5158 = vmatmul.bf16.gmra.mxu0 %v5090
      %v5159 = vpop.f32.mrf.mxu0
      %v5160 = vadd.f32 0.0, %v5159
      %v5161 = vpop.f32.mrf.mxu0
      %v5162 = vadd.f32 0.0, %v5161
      %5163 = vmatmul.bf16.gmra.mxu0 %v5093
      %v5164 = vpop.f32.mrf.mxu0
      %v5165 = vadd.f32 0.0, %v5164
      %v5166 = vpop.f32.mrf.mxu0
      %v5167 = vadd.f32 0.0, %v5166
      %5168 = vmatmul.bf16.gmra.mxu0 %v5096
      %v5169 = vpop.f32.mrf.mxu0
      %v5170 = vadd.f32 0.0, %v5169
      %v5171 = vpop.f32.mrf.mxu0
      %v5172 = vadd.f32 0.0, %v5171
      %5173 = vmatmul.bf16.gmra.mxu0 %v5099
      %v5174 = vpop.f32.mrf.mxu0
      %v5175 = vadd.f32 0.0, %v5174
      %v5176 = vpop.f32.mrf.mxu0
      %v5177 = vadd.f32 0.0, %v5176
      %5178 = vmatmul.bf16.gmra.mxu0 %v5102
      %v5179 = vpop.f32.mrf.mxu0
      %v5180 = vadd.f32 0.0, %v5179
      %v5181 = vpop.f32.mrf.mxu0
      %v5182 = vadd.f32 0.0, %v5181
      %5183 = vmatmul.bf16.gmra.mxu0 %v5105
      %v5184 = vpop.f32.mrf.mxu0
      %v5185 = vadd.f32 0.0, %v5184
      %v5186 = vpop.f32.mrf.mxu0
      %v5187 = vadd.f32 0.0, %v5186
      %5188 = vmatmul.bf16.gmra.mxu0 %v5108
      %v5189 = vpop.f32.mrf.mxu0
      %v5190 = vadd.f32 0.0, %v5189
      %v5191 = vpop.f32.mrf.mxu0
      %v5192 = vadd.f32 0.0, %v5191
      %5193 = vmatmul.bf16.gmra.mxu0 %v5111
      %v5194 = vpop.f32.mrf.mxu0
      %v5195 = vadd.f32 0.0, %v5194
      %v5196 = vpop.f32.mrf.mxu0
      %v5197 = vadd.f32 0.0, %v5196
      %5198 = vmatmul.bf16.gmra.mxu0 %v5114
      %v5199 = vpop.f32.mrf.mxu0
      %v5200 = vadd.f32 0.0, %v5199
      %v5201 = vpop.f32.mrf.mxu0
      %v5202 = vadd.f32 0.0, %v5201
      %5203 = vmatmul.bf16.gmra.mxu0 %v5117
      %v5204 = vpop.f32.mrf.mxu0
      %v5205 = vadd.f32 0.0, %v5204
      %v5206 = vpop.f32.mrf.mxu0
      %v5207 = vadd.f32 0.0, %v5206
      %5208 = vmatmul.bf16.gmra.mxu0 %v5120
      %v5209 = vpop.f32.mrf.mxu0
      %v5210 = vadd.f32 0.0, %v5209
      %v5211 = vpop.f32.mrf.mxu0
      %v5212 = vadd.f32 0.0, %v5211
      %5213 = vdwg.mxu0
      %v5214 = vadd.f32 %v4560, %v5135
      %v5215 = vadd.f32 %v4561, %v5137
      %v5216 = vadd.f32 %v4562, %v5140
      %v5217 = vadd.f32 %v4563, %v5142
      %v5218 = vadd.f32 %v4564, %v5145
      %v5219 = vadd.f32 %v4565, %v5147
      %v5220 = vadd.f32 %v4566, %v5150
      %v5221 = vadd.f32 %v4567, %v5152
      %v5222 = vadd.f32 %v4568, %v5155
      %v5223 = vadd.f32 %v4569, %v5157
      %v5224 = vadd.f32 %v4570, %v5160
      %v5225 = vadd.f32 %v4571, %v5162
      %v5226 = vadd.f32 %v4572, %v5165
      %v5227 = vadd.f32 %v4573, %v5167
      %v5228 = vadd.f32 %v4574, %v5170
      %v5229 = vadd.f32 %v4575, %v5172
      %v5230 = vadd.f32 %v4576, %v5175
      %v5231 = vadd.f32 %v4577, %v5177
      %v5232 = vadd.f32 %v4578, %v5180
      %v5233 = vadd.f32 %v4579, %v5182
      %v5234 = vadd.f32 %v4580, %v5185
      %v5235 = vadd.f32 %v4581, %v5187
      %v5236 = vadd.f32 %v4582, %v5190
      %v5237 = vadd.f32 %v4583, %v5192
      %v5238 = vadd.f32 %v4584, %v5195
      %v5239 = vadd.f32 %v4585, %v5197
      %v5240 = vadd.f32 %v4586, %v5200
      %v5241 = vadd.f32 %v4587, %v5202
      %v5242 = vadd.f32 %v4588, %v5205
      %v5243 = vadd.f32 %v4589, %v5207
      %v5244 = vadd.f32 %v4590, %v5210
      %v5245 = vadd.f32 %v4591, %v5212
      %v5246 = vld [vmem:[%s4305] sm:$0xe]
      %v5247 = vld [vmem:[%s4305 + $0xc] sm:$0xe]
      %v5248 = vld [vmem:[%s4305 + $0x18] sm:$0xe]
      %v5249 = vld [vmem:[%s4305 + $0x24] sm:$0xe]
      %v5250 = vld [vmem:[%s4305 + $0x30] sm:$0xe]
      %v5251 = vld [vmem:[%s4305 + $0x3c] sm:$0xe]
      %v5252 = vld [vmem:[%s4305 + $0x48] sm:$0xe]
      %v5253 = vld [vmem:[%s4305 + $0x54] sm:$0xe]
      %v5254 = vld [vmem:[%s4305 + $0x60] sm:$0xe]
      %v5255 = vld [vmem:[%s4305 + $0x6c] sm:$0xe]
      %v5256 = vld [vmem:[%s4305 + $0x78] sm:$0xe]
      %v5257 = vld [vmem:[%s4305 + $0x84] sm:$0xe]
      %v5258 = vld [vmem:[%s4305 + $0x90] sm:$0xe]
      %v5259 = vld [vmem:[%s4305 + $0x9c] sm:$0xe]
      %v5260 = vld [vmem:[%s4305 + $0xa8] sm:$0xe]
      %v5261 = vld [vmem:[%s4305 + $0xb4] sm:$0xe]
      %v5310 = vrot.slane %v5246, 5
      %v5311 = vrot.slane %v5310, 4
      %v5312 = vrot.slane %v4593, 5
      %v5313 = vsel %vm2631, %v5311, %v5312
      %v5314 = vrot.slane %v5312, 4
      %v5315 = vrot.slane %v4594, 5
      %v5316 = vsel %vm2631, %v5314, %v5315
      %v5317 = vrot.slane %v5247, 5
      %v5318 = vrot.slane %v5317, 4
      %v5319 = vrot.slane %v4596, 5
      %v5320 = vsel %vm2631, %v5318, %v5319
      %v5321 = vrot.slane %v5319, 4
      %v5322 = vrot.slane %v4597, 5
      %v5323 = vsel %vm2631, %v5321, %v5322
      %v5324 = vrot.slane %v5248, 5
      %v5325 = vrot.slane %v5324, 4
      %v5326 = vrot.slane %v4599, 5
      %v5327 = vsel %vm2631, %v5325, %v5326
      %v5328 = vrot.slane %v5326, 4
      %v5329 = vrot.slane %v4600, 5
      %v5330 = vsel %vm2631, %v5328, %v5329
      %v5331 = vrot.slane %v5249, 5
      %v5332 = vrot.slane %v5331, 4
      %v5333 = vrot.slane %v4602, 5
      %v5334 = vsel %vm2631, %v5332, %v5333
      %v5335 = vrot.slane %v5333, 4
      %v5336 = vrot.slane %v4603, 5
      %v5337 = vsel %vm2631, %v5335, %v5336
      %v5338 = vrot.slane %v5250, 5
      %v5339 = vrot.slane %v5338, 4
      %v5340 = vrot.slane %v4605, 5
      %v5341 = vsel %vm2631, %v5339, %v5340
      %v5342 = vrot.slane %v5340, 4
      %v5343 = vrot.slane %v4606, 5
      %v5344 = vsel %vm2631, %v5342, %v5343
      %v5345 = vrot.slane %v5251, 5
      %v5346 = vrot.slane %v5345, 4
      %v5347 = vrot.slane %v4608, 5
      %v5348 = vsel %vm2631, %v5346, %v5347
      %v5349 = vrot.slane %v5347, 4
      %v5350 = vrot.slane %v4609, 5
      %v5351 = vsel %vm2631, %v5349, %v5350
      %v5352 = vrot.slane %v5252, 5
      %v5353 = vrot.slane %v5352, 4
      %v5354 = vrot.slane %v4611, 5
      %v5355 = vsel %vm2631, %v5353, %v5354
      %v5356 = vrot.slane %v5354, 4
      %v5357 = vrot.slane %v4612, 5
      %v5358 = vsel %vm2631, %v5356, %v5357
      %v5359 = vrot.slane %v5253, 5
      %v5360 = vrot.slane %v5359, 4
      %v5361 = vrot.slane %v4614, 5
      %v5362 = vsel %vm2631, %v5360, %v5361
      %v5363 = vrot.slane %v5361, 4
      %v5364 = vrot.slane %v4615, 5
      %v5365 = vsel %vm2631, %v5363, %v5364
      %v5366 = vrot.slane %v5254, 5
      %v5367 = vrot.slane %v5366, 4
      %v5368 = vrot.slane %v4617, 5
      %v5369 = vsel %vm2631, %v5367, %v5368
      %v5370 = vrot.slane %v5368, 4
      %v5371 = vrot.slane %v4618, 5
      %v5372 = vsel %vm2631, %v5370, %v5371
      %v5373 = vrot.slane %v5255, 5
      %v5374 = vrot.slane %v5373, 4
      %v5375 = vrot.slane %v4620, 5
      %v5376 = vsel %vm2631, %v5374, %v5375
      %v5377 = vrot.slane %v5375, 4
      %v5378 = vrot.slane %v4621, 5
      %v5379 = vsel %vm2631, %v5377, %v5378
      %v5380 = vrot.slane %v5256, 5
      %v5381 = vrot.slane %v5380, 4
      %v5382 = vrot.slane %v4623, 5
      %v5383 = vsel %vm2631, %v5381, %v5382
      %v5384 = vrot.slane %v5382, 4
      %v5385 = vrot.slane %v4624, 5
      %v5386 = vsel %vm2631, %v5384, %v5385
      %v5387 = vrot.slane %v5257, 5
      %v5388 = vrot.slane %v5387, 4
      %v5389 = vrot.slane %v4626, 5
      %v5390 = vsel %vm2631, %v5388, %v5389
      %v5391 = vrot.slane %v5389, 4
      %v5392 = vrot.slane %v4627, 5
      %v5393 = vsel %vm2631, %v5391, %v5392
      %v5394 = vrot.slane %v5258, 5
      %v5395 = vrot.slane %v5394, 4
      %v5396 = vrot.slane %v4629, 5
      %v5397 = vsel %vm2631, %v5395, %v5396
      %v5398 = vrot.slane %v5396, 4
      %v5399 = vrot.slane %v4630, 5
      %v5400 = vsel %vm2631, %v5398, %v5399
      %v5401 = vrot.slane %v5259, 5
      %v5402 = vrot.slane %v5401, 4
      %v5403 = vrot.slane %v4632, 5
      %v5404 = vsel %vm2631, %v5402, %v5403
      %v5405 = vrot.slane %v5403, 4
      %v5406 = vrot.slane %v4633, 5
      %v5407 = vsel %vm2631, %v5405, %v5406
      %v5408 = vrot.slane %v5260, 5
      %v5409 = vrot.slane %v5408, 4
      %v5410 = vrot.slane %v4635, 5
      %v5411 = vsel %vm2631, %v5409, %v5410
      %v5412 = vrot.slane %v5410, 4
      %v5413 = vrot.slane %v4636, 5
      %v5414 = vsel %vm2631, %v5412, %v5413
      %v5415 = vrot.slane %v5261, 5
      %v5416 = vrot.slane %v5415, 4
      %v5417 = vrot.slane %v4638, 5
      %v5418 = vsel %vm2631, %v5416, %v5417
      %v5419 = vrot.slane %v5417, 4
      %v5420 = vrot.slane %v4639, 5
      %v5421 = vsel %vm2631, %v5419, %v5420
      %s5422 = scalar_lea.vmem %s6, 16
      %v5423 = vld [vmem:[%s5422] sm:$0x3]
      %v5424 = vunpack.c.l.b16 %v5313
      %v5425 = vunpack.c.l.b16 %v5316
      %v5426 = vunpack.c.l.b16 %v5320
      %v5427 = vunpack.c.l.b16 %v5323
      %v5428 = vunpack.c.l.b16 %v5327
      %v5429 = vunpack.c.l.b16 %v5330
      %v5430 = vunpack.c.l.b16 %v5334
      %v5431 = vunpack.c.l.b16 %v5337
      %v5432 = vunpack.c.l.b16 %v5341
      %v5433 = vunpack.c.l.b16 %v5344
      %v5434 = vunpack.c.l.b16 %v5348
      %v5435 = vunpack.c.l.b16 %v5351
      %v5436 = vunpack.c.l.b16 %v5355
      %v5437 = vunpack.c.l.b16 %v5358
      %v5438 = vunpack.c.l.b16 %v5362
      %v5439 = vunpack.c.l.b16 %v5365
      %v5440 = vunpack.c.l.b16 %v5369
      %v5441 = vunpack.c.l.b16 %v5372
      %v5442 = vunpack.c.l.b16 %v5376
      %v5443 = vunpack.c.l.b16 %v5379
      %v5444 = vunpack.c.l.b16 %v5383
      %v5445 = vunpack.c.l.b16 %v5386
      %v5446 = vunpack.c.l.b16 %v5390
      %v5447 = vunpack.c.l.b16 %v5393
      %v5448 = vunpack.c.l.b16 %v5397
      %v5449 = vunpack.c.l.b16 %v5400
      %v5450 = vunpack.c.l.b16 %v5404
      %v5451 = vunpack.c.l.b16 %v5407
      %v5452 = vunpack.c.l.b16 %v5411
      %v5453 = vunpack.c.l.b16 %v5414
      %v5454 = vunpack.c.l.b16 %v5418
      %v5455 = vunpack.c.l.b16 %v5421
      %v5456 = vpack.c.b16 %v5425, %v5424
      %v5457 = vpack.c.b16 %v5427, %v5426
      %v5458 = vpack.c.b16 %v5429, %v5428
      %v5459 = vpack.c.b16 %v5431, %v5430
      %v5460 = vpack.c.b16 %v5433, %v5432
      %v5461 = vpack.c.b16 %v5435, %v5434
      %v5462 = vpack.c.b16 %v5437, %v5436
      %v5463 = vpack.c.b16 %v5439, %v5438
      %v5464 = vpack.c.b16 %v5441, %v5440
      %v5465 = vpack.c.b16 %v5443, %v5442
      %v5466 = vpack.c.b16 %v5445, %v5444
      %v5467 = vpack.c.b16 %v5447, %v5446
      %v5468 = vpack.c.b16 %v5449, %v5448
      %v5469 = vpack.c.b16 %v5451, %v5450
      %v5470 = vpack.c.b16 %v5453, %v5452
      %v5471 = vpack.c.b16 %v5455, %v5454
      %v5473 = vsel %vm629, %v5456, 0
      %v5476 = vsel %vm629, %v5457, 0
      %v5479 = vsel %vm629, %v5458, 0
      %v5482 = vsel %vm629, %v5459, 0
      %v5485 = vsel %vm629, %v5460, 0
      %v5488 = vsel %vm629, %v5461, 0
      %v5491 = vsel %vm629, %v5462, 0
      %v5494 = vsel %vm629, %v5463, 0
      %v5497 = vsel %vm629, %v5464, 0
      %v5500 = vsel %vm629, %v5465, 0
      %v5503 = vsel %vm629, %v5466, 0
      %v5506 = vsel %vm629, %v5467, 0
      %v5509 = vsel %vm629, %v5468, 0
      %v5512 = vsel %vm629, %v5469, 0
      %v5515 = vsel %vm629, %v5470, 0
      %v5518 = vsel %vm629, %v5471, 0
      %v5521 = vsel %vm684, %v5423, 0
      %5523 = vmatpush.bf16.msra.mxu0 0
      %5524 = vmatpush.bf16.msra.mxu0 0
      %5525 = vmatpush.bf16.msra.mxu0 0
      %5526 = vmatpush.bf16.msra.mxu0 0
      %5527 = vmatpush.bf16.msra.mxu0 0
      %5528 = vmatpush.bf16.msra.mxu0 0
      %5529 = vmatpush.bf16.msra.mxu0 0
      %5530 = vmatpush.bf16.msra.mxu0 %v5521
      %5531 = vmatmul.bf16.gmra.mxu0 %v5473
      %v5532 = vpop.f32.mrf.mxu0
      %v5533 = vadd.f32 0.0, %v5532
      %v5534 = vpop.f32.mrf.mxu0
      %v5535 = vadd.f32 0.0, %v5534
      %5536 = vmatmul.bf16.gmra.mxu0 %v5476
      %v5537 = vpop.f32.mrf.mxu0
      %v5538 = vadd.f32 0.0, %v5537
      %v5539 = vpop.f32.mrf.mxu0
      %v5540 = vadd.f32 0.0, %v5539
      %5541 = vmatmul.bf16.gmra.mxu0 %v5479
      %v5542 = vpop.f32.mrf.mxu0
      %v5543 = vadd.f32 0.0, %v5542
      %v5544 = vpop.f32.mrf.mxu0
      %v5545 = vadd.f32 0.0, %v5544
      %5546 = vmatmul.bf16.gmra.mxu0 %v5482
      %v5547 = vpop.f32.mrf.mxu0
      %v5548 = vadd.f32 0.0, %v5547
      %v5549 = vpop.f32.mrf.mxu0
      %v5550 = vadd.f32 0.0, %v5549
      %5551 = vmatmul.bf16.gmra.mxu0 %v5485
      %v5552 = vpop.f32.mrf.mxu0
      %v5553 = vadd.f32 0.0, %v5552
      %v5554 = vpop.f32.mrf.mxu0
      %v5555 = vadd.f32 0.0, %v5554
      %5556 = vmatmul.bf16.gmra.mxu0 %v5488
      %v5557 = vpop.f32.mrf.mxu0
      %v5558 = vadd.f32 0.0, %v5557
      %v5559 = vpop.f32.mrf.mxu0
      %v5560 = vadd.f32 0.0, %v5559
      %5561 = vmatmul.bf16.gmra.mxu0 %v5491
      %v5562 = vpop.f32.mrf.mxu0
      %v5563 = vadd.f32 0.0, %v5562
      %v5564 = vpop.f32.mrf.mxu0
      %v5565 = vadd.f32 0.0, %v5564
      %5566 = vmatmul.bf16.gmra.mxu0 %v5494
      %v5567 = vpop.f32.mrf.mxu0
      %v5568 = vadd.f32 0.0, %v5567
      %v5569 = vpop.f32.mrf.mxu0
      %v5570 = vadd.f32 0.0, %v5569
      %5571 = vmatmul.bf16.gmra.mxu0 %v5497
      %v5572 = vpop.f32.mrf.mxu0
      %v5573 = vadd.f32 0.0, %v5572
      %v5574 = vpop.f32.mrf.mxu0
      %v5575 = vadd.f32 0.0, %v5574
      %5576 = vmatmul.bf16.gmra.mxu0 %v5500
      %v5577 = vpop.f32.mrf.mxu0
      %v5578 = vadd.f32 0.0, %v5577
      %v5579 = vpop.f32.mrf.mxu0
      %v5580 = vadd.f32 0.0, %v5579
      %5581 = vmatmul.bf16.gmra.mxu0 %v5503
      %v5582 = vpop.f32.mrf.mxu0
      %v5583 = vadd.f32 0.0, %v5582
      %v5584 = vpop.f32.mrf.mxu0
      %v5585 = vadd.f32 0.0, %v5584
      %5586 = vmatmul.bf16.gmra.mxu0 %v5506
      %v5587 = vpop.f32.mrf.mxu0
      %v5588 = vadd.f32 0.0, %v5587
      %v5589 = vpop.f32.mrf.mxu0
      %v5590 = vadd.f32 0.0, %v5589
      %5591 = vmatmul.bf16.gmra.mxu0 %v5509
      %v5592 = vpop.f32.mrf.mxu0
      %v5593 = vadd.f32 0.0, %v5592
      %v5594 = vpop.f32.mrf.mxu0
      %v5595 = vadd.f32 0.0, %v5594
      %5596 = vmatmul.bf16.gmra.mxu0 %v5512
      %v5597 = vpop.f32.mrf.mxu0
      %v5598 = vadd.f32 0.0, %v5597
      %v5599 = vpop.f32.mrf.mxu0
      %v5600 = vadd.f32 0.0, %v5599
      %5601 = vmatmul.bf16.gmra.mxu0 %v5515
      %v5602 = vpop.f32.mrf.mxu0
      %v5603 = vadd.f32 0.0, %v5602
      %v5604 = vpop.f32.mrf.mxu0
      %v5605 = vadd.f32 0.0, %v5604
      %5606 = vmatmul.bf16.gmra.mxu0 %v5518
      %v5607 = vpop.f32.mrf.mxu0
      %v5608 = vadd.f32 0.0, %v5607
      %v5609 = vpop.f32.mrf.mxu0
      %v5610 = vadd.f32 0.0, %v5609
      %5611 = vdwg.mxu0
      %v5612 = vadd.f32 %v5214, %v5533
      %v5613 = vadd.f32 %v5215, %v5535
      %v5614 = vadd.f32 %v5216, %v5538
      %v5615 = vadd.f32 %v5217, %v5540
      %v5616 = vadd.f32 %v5218, %v5543
      %v5617 = vadd.f32 %v5219, %v5545
      %v5618 = vadd.f32 %v5220, %v5548
      %v5619 = vadd.f32 %v5221, %v5550
      %v5620 = vadd.f32 %v5222, %v5553
      %v5621 = vadd.f32 %v5223, %v5555
      %v5622 = vadd.f32 %v5224, %v5558
      %v5623 = vadd.f32 %v5225, %v5560
      %v5624 = vadd.f32 %v5226, %v5563
      %v5625 = vadd.f32 %v5227, %v5565
      %v5626 = vadd.f32 %v5228, %v5568
      %v5627 = vadd.f32 %v5229, %v5570
      %v5628 = vadd.f32 %v5230, %v5573
      %v5629 = vadd.f32 %v5231, %v5575
      %v5630 = vadd.f32 %v5232, %v5578
      %v5631 = vadd.f32 %v5233, %v5580
      %v5632 = vadd.f32 %v5234, %v5583
      %v5633 = vadd.f32 %v5235, %v5585
      %v5634 = vadd.f32 %v5236, %v5588
      %v5635 = vadd.f32 %v5237, %v5590
      %v5636 = vadd.f32 %v5238, %v5593
      %v5637 = vadd.f32 %v5239, %v5595
      %v5638 = vadd.f32 %v5240, %v5598
      %v5639 = vadd.f32 %v5241, %v5600
      %v5640 = vadd.f32 %v5242, %v5603
      %v5641 = vadd.f32 %v5243, %v5605
      %v5642 = vadd.f32 %v5244, %v5608
      %v5643 = vadd.f32 %v5245, %v5610
      %v5644 = vld [vmem:[%s7] sm:$0x1]
      %v5646 = vperm.slane %v5644, 0
      %v5648 = vmul.f32 %v5612, %v5646
      %v5649 = vmul.f32 %v5613, %v5646
      %v5650 = vmul.f32 %v5614, %v5646
      %v5651 = vmul.f32 %v5615, %v5646
      %v5652 = vmul.f32 %v5616, %v5646
      %v5653 = vmul.f32 %v5617, %v5646
      %v5654 = vmul.f32 %v5618, %v5646
      %v5655 = vmul.f32 %v5619, %v5646
      %v5656 = vmul.f32 %v5620, %v5646
      %v5657 = vmul.f32 %v5621, %v5646
      %v5658 = vmul.f32 %v5622, %v5646
      %v5659 = vmul.f32 %v5623, %v5646
      %v5660 = vmul.f32 %v5624, %v5646
      %v5661 = vmul.f32 %v5625, %v5646
      %v5662 = vmul.f32 %v5626, %v5646
      %v5663 = vmul.f32 %v5627, %v5646
      %v5664 = vmul.f32 %v5628, %v5646
      %v5665 = vmul.f32 %v5629, %v5646
      %v5666 = vmul.f32 %v5630, %v5646
      %v5667 = vmul.f32 %v5631, %v5646
      %v5668 = vmul.f32 %v5632, %v5646
      %v5669 = vmul.f32 %v5633, %v5646
      %v5670 = vmul.f32 %v5634, %v5646
      %v5671 = vmul.f32 %v5635, %v5646
      %v5672 = vmul.f32 %v5636, %v5646
      %v5673 = vmul.f32 %v5637, %v5646
      %v5674 = vmul.f32 %v5638, %v5646
      %v5675 = vmul.f32 %v5639, %v5646
      %v5676 = vmul.f32 %v5640, %v5646
      %v5677 = vmul.f32 %v5641, %v5646
      %v5678 = vmul.f32 %v5642, %v5646
      %v5679 = vmul.f32 %v5643, %v5646
      %v5680 = vld [vmem:[%s8] sm:$0x1]
      %v5682 = vperm.slane %v5680, 0
      %v5684 = vadd.f32 %v5648, %v5682
      %v5685 = vadd.f32 %v5649, %v5682
      %v5686 = vadd.f32 %v5650, %v5682
      %v5687 = vadd.f32 %v5651, %v5682
      %v5688 = vadd.f32 %v5652, %v5682
      %v5689 = vadd.f32 %v5653, %v5682
      %v5690 = vadd.f32 %v5654, %v5682
      %v5691 = vadd.f32 %v5655, %v5682
      %v5692 = vadd.f32 %v5656, %v5682
      %v5693 = vadd.f32 %v5657, %v5682
      %v5694 = vadd.f32 %v5658, %v5682
      %v5695 = vadd.f32 %v5659, %v5682
      %v5696 = vadd.f32 %v5660, %v5682
      %v5697 = vadd.f32 %v5661, %v5682
      %v5698 = vadd.f32 %v5662, %v5682
      %v5699 = vadd.f32 %v5663, %v5682
      %v5700 = vadd.f32 %v5664, %v5682
      %v5701 = vadd.f32 %v5665, %v5682
      %v5702 = vadd.f32 %v5666, %v5682
      %v5703 = vadd.f32 %v5667, %v5682
      %v5704 = vadd.f32 %v5668, %v5682
      %v5705 = vadd.f32 %v5669, %v5682
      %v5706 = vadd.f32 %v5670, %v5682
      %v5707 = vadd.f32 %v5671, %v5682
      %v5708 = vadd.f32 %v5672, %v5682
      %v5709 = vadd.f32 %v5673, %v5682
      %v5710 = vadd.f32 %v5674, %v5682
      %v5711 = vadd.f32 %v5675, %v5682
      %v5712 = vadd.f32 %v5676, %v5682
      %v5713 = vadd.f32 %v5677, %v5682
      %v5714 = vadd.f32 %v5678, %v5682
      %v5715 = vadd.f32 %v5679, %v5682
      %v5716 = vsub.f32 0.0, %v5684
      %v5717 = vsub.f32 0.0, %v5685
      %v5718 = vsub.f32 0.0, %v5686
      %v5719 = vsub.f32 0.0, %v5687
      %v5720 = vsub.f32 0.0, %v5688
      %v5721 = vsub.f32 0.0, %v5689
      %v5722 = vsub.f32 0.0, %v5690
      %v5723 = vsub.f32 0.0, %v5691
      %v5724 = vsub.f32 0.0, %v5692
      %v5725 = vsub.f32 0.0, %v5693
      %v5726 = vsub.f32 0.0, %v5694
      %v5727 = vsub.f32 0.0, %v5695
      %v5728 = vsub.f32 0.0, %v5696
      %v5729 = vsub.f32 0.0, %v5697
      %v5730 = vsub.f32 0.0, %v5698
      %v5731 = vsub.f32 0.0, %v5699
      %v5732 = vsub.f32 0.0, %v5700
      %v5733 = vsub.f32 0.0, %v5701
      %v5734 = vsub.f32 0.0, %v5702
      %v5735 = vsub.f32 0.0, %v5703
      %v5736 = vsub.f32 0.0, %v5704
      %v5737 = vsub.f32 0.0, %v5705
      %v5738 = vsub.f32 0.0, %v5706
      %v5739 = vsub.f32 0.0, %v5707
      %v5740 = vsub.f32 0.0, %v5708
      %v5741 = vsub.f32 0.0, %v5709
      %v5742 = vsub.f32 0.0, %v5710
      %v5743 = vsub.f32 0.0, %v5711
      %v5744 = vsub.f32 0.0, %v5712
      %v5745 = vsub.f32 0.0, %v5713
      %v5746 = vsub.f32 0.0, %v5714
      %v5747 = vsub.f32 0.0, %v5715
      %v5748 = vmul.f32 %v5716, 1.442695
      %v5749 = vpow.pop %v5748
      %v5750 = vmul.f32 %v5717, 1.442695
      %v5751 = vpow.pop %v5750
      %v5752 = vmul.f32 %v5718, 1.442695
      %v5753 = vpow.pop %v5752
      %v5754 = vmul.f32 %v5719, 1.442695
      %v5755 = vpow.pop %v5754
      %v5756 = vmul.f32 %v5720, 1.442695
      %v5757 = vpow.pop %v5756
      %v5758 = vmul.f32 %v5721, 1.442695
      %v5759 = vpow.pop %v5758
      %v5760 = vmul.f32 %v5722, 1.442695
      %v5761 = vpow.pop %v5760
      %v5762 = vmul.f32 %v5723, 1.442695
      %v5763 = vpow.pop %v5762
      %v5764 = vmul.f32 %v5724, 1.442695
      %v5765 = vpow.pop %v5764
      %v5766 = vmul.f32 %v5725, 1.442695
      %v5767 = vpow.pop %v5766
      %v5768 = vmul.f32 %v5726, 1.442695
      %v5769 = vpow.pop %v5768
      %v5770 = vmul.f32 %v5727, 1.442695
      %v5771 = vpow.pop %v5770
      %v5772 = vmul.f32 %v5728, 1.442695
      %v5773 = vpow.pop %v5772
      %v5774 = vmul.f32 %v5729, 1.442695
      %v5775 = vpow.pop %v5774
      %v5776 = vmul.f32 %v5730, 1.442695
      %v5777 = vpow.pop %v5776
      %v5778 = vmul.f32 %v5731, 1.442695
      %v5779 = vpow.pop %v5778
      %v5780 = vmul.f32 %v5732, 1.442695
      %v5781 = vpow.pop %v5780
      %v5782 = vmul.f32 %v5733, 1.442695
      %v5783 = vpow.pop %v5782
      %v5784 = vmul.f32 %v5734, 1.442695
      %v5785 = vpow.pop %v5784
      %v5786 = vmul.f32 %v5735, 1.442695
      %v5787 = vpow.pop %v5786
      %v5788 = vmul.f32 %v5736, 1.442695
      %v5789 = vpow.pop %v5788
      %v5790 = vmul.f32 %v5737, 1.442695
      %v5791 = vpow.pop %v5790
      %v5792 = vmul.f32 %v5738, 1.442695
      %v5793 = vpow.pop %v5792
      %v5794 = vmul.f32 %v5739, 1.442695
      %v5795 = vpow.pop %v5794
      %v5796 = vmul.f32 %v5740, 1.442695
      %v5797 = vpow.pop %v5796
      %v5798 = vmul.f32 %v5741, 1.442695
      %v5799 = vpow.pop %v5798
      %v5800 = vmul.f32 %v5742, 1.442695
      %v5801 = vpow.pop %v5800
      %v5802 = vmul.f32 %v5743, 1.442695
      %v5803 = vpow.pop %v5802
      %v5804 = vmul.f32 %v5744, 1.442695
      %v5805 = vpow.pop %v5804
      %v5806 = vmul.f32 %v5745, 1.442695
      %v5807 = vpow.pop %v5806
      %v5808 = vmul.f32 %v5746, 1.442695
      %v5809 = vpow.pop %v5808
      %v5810 = vmul.f32 %v5747, 1.442695
      %v5811 = vpow.pop %v5810
      %v5812 = vadd.f32 %v5749, 1.0
      %v5813 = vadd.f32 %v5751, 1.0
      %v5814 = vadd.f32 %v5753, 1.0
      %v5815 = vadd.f32 %v5755, 1.0
      %v5816 = vadd.f32 %v5757, 1.0
      %v5817 = vadd.f32 %v5759, 1.0
      %v5818 = vadd.f32 %v5761, 1.0
      %v5819 = vadd.f32 %v5763, 1.0
      %v5820 = vadd.f32 %v5765, 1.0
      %v5821 = vadd.f32 %v5767, 1.0
      %v5822 = vadd.f32 %v5769, 1.0
      %v5823 = vadd.f32 %v5771, 1.0
      %v5824 = vadd.f32 %v5773, 1.0
      %v5825 = vadd.f32 %v5775, 1.0
      %v5826 = vadd.f32 %v5777, 1.0
      %v5827 = vadd.f32 %v5779, 1.0
      %v5828 = vadd.f32 %v5781, 1.0
      %v5829 = vadd.f32 %v5783, 1.0
      %v5830 = vadd.f32 %v5785, 1.0
      %v5831 = vadd.f32 %v5787, 1.0
      %v5832 = vadd.f32 %v5789, 1.0
      %v5833 = vadd.f32 %v5791, 1.0
      %v5834 = vadd.f32 %v5793, 1.0
      %v5835 = vadd.f32 %v5795, 1.0
      %v5836 = vadd.f32 %v5797, 1.0
      %v5837 = vadd.f32 %v5799, 1.0
      %v5838 = vadd.f32 %v5801, 1.0
      %v5839 = vadd.f32 %v5803, 1.0
      %v5840 = vadd.f32 %v5805, 1.0
      %v5841 = vadd.f32 %v5807, 1.0
      %v5842 = vadd.f32 %v5809, 1.0
      %v5843 = vadd.f32 %v5811, 1.0
      %v5844 = vrcp.pop %v5812
      %v5845 = vrcp.pop %v5813
      %v5846 = vrcp.pop %v5814
      %v5847 = vrcp.pop %v5815
      %v5848 = vrcp.pop %v5816
      %v5849 = vrcp.pop %v5817
      %v5850 = vrcp.pop %v5818
      %v5851 = vrcp.pop %v5819
      %v5852 = vrcp.pop %v5820
      %v5853 = vrcp.pop %v5821
      %v5854 = vrcp.pop %v5822
      %v5855 = vrcp.pop %v5823
      %v5856 = vrcp.pop %v5824
      %v5857 = vrcp.pop %v5825
      %v5858 = vrcp.pop %v5826
      %v5859 = vrcp.pop %v5827
      %v5860 = vrcp.pop %v5828
      %v5861 = vrcp.pop %v5829
      %v5862 = vrcp.pop %v5830
      %v5863 = vrcp.pop %v5831
      %v5864 = vrcp.pop %v5832
      %v5865 = vrcp.pop %v5833
      %v5866 = vrcp.pop %v5834
      %v5867 = vrcp.pop %v5835
      %v5868 = vrcp.pop %v5836
      %v5869 = vrcp.pop %v5837
      %v5870 = vrcp.pop %v5838
      %v5871 = vrcp.pop %v5839
      %v5872 = vrcp.pop %v5840
      %v5873 = vrcp.pop %v5841
      %v5874 = vrcp.pop %v5842
      %v5875 = vrcp.pop %v5843
      %v5876 = vmul.f32 %v5684, %v5844
      %v5877 = vmul.f32 %v5685, %v5845
      %v5878 = vmul.f32 %v5686, %v5846
      %v5879 = vmul.f32 %v5687, %v5847
      %v5880 = vmul.f32 %v5688, %v5848
      %v5881 = vmul.f32 %v5689, %v5849
      %v5882 = vmul.f32 %v5690, %v5850
      %v5883 = vmul.f32 %v5691, %v5851
      %v5884 = vmul.f32 %v5692, %v5852
      %v5885 = vmul.f32 %v5693, %v5853
      %v5886 = vmul.f32 %v5694, %v5854
      %v5887 = vmul.f32 %v5695, %v5855
      %v5888 = vmul.f32 %v5696, %v5856
      %v5889 = vmul.f32 %v5697, %v5857
      %v5890 = vmul.f32 %v5698, %v5858
      %v5891 = vmul.f32 %v5699, %v5859
      %v5892 = vmul.f32 %v5700, %v5860
      %v5893 = vmul.f32 %v5701, %v5861
      %v5894 = vmul.f32 %v5702, %v5862
      %v5895 = vmul.f32 %v5703, %v5863
      %v5896 = vmul.f32 %v5704, %v5864
      %v5897 = vmul.f32 %v5705, %v5865
      %v5898 = vmul.f32 %v5706, %v5866
      %v5899 = vmul.f32 %v5707, %v5867
      %v5900 = vmul.f32 %v5708, %v5868
      %v5901 = vmul.f32 %v5709, %v5869
      %v5902 = vmul.f32 %v5710, %v5870
      %v5903 = vmul.f32 %v5711, %v5871
      %v5904 = vmul.f32 %v5712, %v5872
      %v5905 = vmul.f32 %v5713, %v5873
      %v5906 = vmul.f32 %v5714, %v5874
      %v5907 = vmul.f32 %v5715, %v5875
      %v5908 = vld [vmem:[%s471] sm:$0xf]
      %v5909 = vld [vmem:[%s471 + $0x4] sm:$0xf]
      %v5910 = vld [vmem:[%s471 + $0x8] sm:$0xf]
      %v5911 = vld [vmem:[%s471 + $0xc] sm:$0xf]
      %v5912 = vld [vmem:[%s471 + $0x10] sm:$0xf]
      %v5913 = vld [vmem:[%s471 + $0x14] sm:$0xf]
      %v5914 = vld [vmem:[%s471 + $0x18] sm:$0xf]
      %v5915 = vld [vmem:[%s471 + $0x1c] sm:$0xf]
      %v5916 = vld [vmem:[%s471 + $0x20] sm:$0xf]
      %v5917 = vld [vmem:[%s471 + $0x24] sm:$0xf]
      %v5918 = vld [vmem:[%s471 + $0x28] sm:$0xf]
      %v5919 = vld [vmem:[%s471 + $0x2c] sm:$0xf]
      %v5920 = vld [vmem:[%s471 + $0x30] sm:$0xf]
      %v5921 = vld [vmem:[%s471 + $0x34] sm:$0xf]
      %v5922 = vld [vmem:[%s471 + $0x38] sm:$0xf]
      %v5923 = vld [vmem:[%s471 + $0x3c] sm:$0xf]
      %v5924 = vld [vmem:[%s471 + $0x40] sm:$0xf]
      %v5925 = vld [vmem:[%s471 + $0x44] sm:$0xf]
      %v5926 = vld [vmem:[%s471 + $0x48] sm:$0xf]
      %v5927 = vld [vmem:[%s471 + $0x4c] sm:$0xf]
      %v5928 = vld [vmem:[%s471 + $0x50] sm:$0xf]
      %v5929 = vld [vmem:[%s471 + $0x54] sm:$0xf]
      %v5930 = vld [vmem:[%s471 + $0x58] sm:$0xf]
      %v5931 = vld [vmem:[%s471 + $0x5c] sm:$0xf]
      %v5932 = vld [vmem:[%s471 + $0x60] sm:$0xf]
      %v5933 = vld [vmem:[%s471 + $0x64] sm:$0xf]
      %v5934 = vld [vmem:[%s471 + $0x68] sm:$0xf]
      %v5935 = vld [vmem:[%s471 + $0x6c] sm:$0xf]
      %v5936 = vld [vmem:[%s471 + $0x70] sm:$0xf]
      %v5937 = vld [vmem:[%s471 + $0x74] sm:$0xf]
      %v5938 = vld [vmem:[%s471 + $0x78] sm:$0xf]
      %v5939 = vld [vmem:[%s471 + $0x7c] sm:$0xf]
      %v5940 = vunpack.c.l.bf16 %v5908
      %v5941 = vunpack.c.l.bf16 %v5909
      %v5942 = vunpack.c.l.bf16 %v5910
      %v5943 = vunpack.c.l.bf16 %v5911
      %v5944 = vunpack.c.l.bf16 %v5912
      %v5945 = vunpack.c.l.bf16 %v5913
      %v5946 = vunpack.c.l.bf16 %v5914
      %v5947 = vunpack.c.l.bf16 %v5915
      %v5948 = vunpack.c.l.bf16 %v5916
      %v5949 = vunpack.c.l.bf16 %v5917
      %v5950 = vunpack.c.l.bf16 %v5918
      %v5951 = vunpack.c.l.bf16 %v5919
      %v5952 = vunpack.c.l.bf16 %v5920
      %v5953 = vunpack.c.l.bf16 %v5921
      %v5954 = vunpack.c.l.bf16 %v5922
      %v5955 = vunpack.c.l.bf16 %v5923
      %v5956 = vunpack.c.l.bf16 %v5924
      %v5957 = vunpack.c.l.bf16 %v5925
      %v5958 = vunpack.c.l.bf16 %v5926
      %v5959 = vunpack.c.l.bf16 %v5927
      %v5960 = vunpack.c.l.bf16 %v5928
      %v5961 = vunpack.c.l.bf16 %v5929
      %v5962 = vunpack.c.l.bf16 %v5930
      %v5963 = vunpack.c.l.bf16 %v5931
      %v5964 = vunpack.c.l.bf16 %v5932
      %v5965 = vunpack.c.l.bf16 %v5933
      %v5966 = vunpack.c.l.bf16 %v5934
      %v5967 = vunpack.c.l.bf16 %v5935
      %v5968 = vunpack.c.l.bf16 %v5936
      %v5969 = vunpack.c.l.bf16 %v5937
      %v5970 = vunpack.c.l.bf16 %v5938
      %v5971 = vunpack.c.l.bf16 %v5939
      %v5972 = vadd.f32 %v5876, %v5940
      %v5973 = vadd.f32 %v5877, %v5941
      %v5974 = vadd.f32 %v5878, %v5942
      %v5975 = vadd.f32 %v5879, %v5943
      %v5976 = vadd.f32 %v5880, %v5944
      %v5977 = vadd.f32 %v5881, %v5945
      %v5978 = vadd.f32 %v5882, %v5946
      %v5979 = vadd.f32 %v5883, %v5947
      %v5980 = vadd.f32 %v5884, %v5948
      %v5981 = vadd.f32 %v5885, %v5949
      %v5982 = vadd.f32 %v5886, %v5950
      %v5983 = vadd.f32 %v5887, %v5951
      %v5984 = vadd.f32 %v5888, %v5952
      %v5985 = vadd.f32 %v5889, %v5953
      %v5986 = vadd.f32 %v5890, %v5954
      %v5987 = vadd.f32 %v5891, %v5955
      %v5988 = vadd.f32 %v5892, %v5956
      %v5989 = vadd.f32 %v5893, %v5957
      %v5990 = vadd.f32 %v5894, %v5958
      %v5991 = vadd.f32 %v5895, %v5959
      %v5992 = vadd.f32 %v5896, %v5960
      %v5993 = vadd.f32 %v5897, %v5961
      %v5994 = vadd.f32 %v5898, %v5962
      %v5995 = vadd.f32 %v5899, %v5963
      %v5996 = vadd.f32 %v5900, %v5964
      %v5997 = vadd.f32 %v5901, %v5965
      %v5998 = vadd.f32 %v5902, %v5966
      %v5999 = vadd.f32 %v5903, %v5967
      %v6000 = vadd.f32 %v5904, %v5968
      %v6001 = vadd.f32 %v5905, %v5969
      %v6002 = vadd.f32 %v5906, %v5970
      %v6003 = vadd.f32 %v5907, %v5971
      %v6004 = vpack.c.bf16 %v5972, %v5972
      %v6005 = vpack.c.bf16 %v5973, %v5973
      %v6006 = vpack.c.bf16 %v5974, %v5974
      %v6007 = vpack.c.bf16 %v5975, %v5975
      %v6008 = vpack.c.bf16 %v5976, %v5976
      %v6009 = vpack.c.bf16 %v5977, %v5977
      %v6010 = vpack.c.bf16 %v5978, %v5978
      %v6011 = vpack.c.bf16 %v5979, %v5979
      %v6012 = vpack.c.bf16 %v5980, %v5980
      %v6013 = vpack.c.bf16 %v5981, %v5981
      %v6014 = vpack.c.bf16 %v5982, %v5982
      %v6015 = vpack.c.bf16 %v5983, %v5983
      %v6016 = vpack.c.bf16 %v5984, %v5984
      %v6017 = vpack.c.bf16 %v5985, %v5985
      %v6018 = vpack.c.bf16 %v5986, %v5986
      %v6019 = vpack.c.bf16 %v5987, %v5987
      %v6020 = vpack.c.bf16 %v5988, %v5988
      %v6021 = vpack.c.bf16 %v5989, %v5989
      %v6022 = vpack.c.bf16 %v5990, %v5990
      %v6023 = vpack.c.bf16 %v5991, %v5991
      %v6024 = vpack.c.bf16 %v5992, %v5992
      %v6025 = vpack.c.bf16 %v5993, %v5993
      %v6026 = vpack.c.bf16 %v5994, %v5994
      %v6027 = vpack.c.bf16 %v5995, %v5995
      %v6028 = vpack.c.bf16 %v5996, %v5996
      %v6029 = vpack.c.bf16 %v5997, %v5997
      %v6030 = vpack.c.bf16 %v5998, %v5998
      %v6031 = vpack.c.bf16 %v5999, %v5999
      %v6032 = vpack.c.bf16 %v6000, %v6000
      %v6033 = vpack.c.bf16 %v6001, %v6001
      %v6034 = vpack.c.bf16 %v6002, %v6002
      %v6035 = vpack.c.bf16 %v6003, %v6003
      %6036 = vst.msk [vmem:[%s499] sm:$0xf] %vm1488, %v6004
      %6037 = vst.msk [vmem:[%s499 + $0x4] sm:$0xf] %vm1488, %v6005
      %6038 = vst.msk [vmem:[%s499 + $0x8] sm:$0xf] %vm1488, %v6006
      %6039 = vst.msk [vmem:[%s499 + $0xc] sm:$0xf] %vm1488, %v6007
      %6040 = vst.msk [vmem:[%s499 + $0x10] sm:$0xf] %vm1488, %v6008
      %6041 = vst.msk [vmem:[%s499 + $0x14] sm:$0xf] %vm1488, %v6009
      %6042 = vst.msk [vmem:[%s499 + $0x18] sm:$0xf] %vm1488, %v6010
      %6043 = vst.msk [vmem:[%s499 + $0x1c] sm:$0xf] %vm1488, %v6011
      %6044 = vst.msk [vmem:[%s499 + $0x20] sm:$0xf] %vm1488, %v6012
      %6045 = vst.msk [vmem:[%s499 + $0x24] sm:$0xf] %vm1488, %v6013
      %6046 = vst.msk [vmem:[%s499 + $0x28] sm:$0xf] %vm1488, %v6014
      %6047 = vst.msk [vmem:[%s499 + $0x2c] sm:$0xf] %vm1488, %v6015
      %6048 = vst.msk [vmem:[%s499 + $0x30] sm:$0xf] %vm1488, %v6016
      %6049 = vst.msk [vmem:[%s499 + $0x34] sm:$0xf] %vm1488, %v6017
      %6050 = vst.msk [vmem:[%s499 + $0x38] sm:$0xf] %vm1488, %v6018
      %6051 = vst.msk [vmem:[%s499 + $0x3c] sm:$0xf] %vm1488, %v6019
      %6052 = vst.msk [vmem:[%s499 + $0x40] sm:$0xf] %vm1488, %v6020
      %6053 = vst.msk [vmem:[%s499 + $0x44] sm:$0xf] %vm1488, %v6021
      %6054 = vst.msk [vmem:[%s499 + $0x48] sm:$0xf] %vm1488, %v6022
      %6055 = vst.msk [vmem:[%s499 + $0x4c] sm:$0xf] %vm1488, %v6023
      %6056 = vst.msk [vmem:[%s499 + $0x50] sm:$0xf] %vm1488, %v6024
      %6057 = vst.msk [vmem:[%s499 + $0x54] sm:$0xf] %vm1488, %v6025
      %6058 = vst.msk [vmem:[%s499 + $0x58] sm:$0xf] %vm1488, %v6026
      %6059 = vst.msk [vmem:[%s499 + $0x5c] sm:$0xf] %vm1488, %v6027
      %6060 = vst.msk [vmem:[%s499 + $0x60] sm:$0xf] %vm1488, %v6028
      %6061 = vst.msk [vmem:[%s499 + $0x64] sm:$0xf] %vm1488, %v6029
      %6062 = vst.msk [vmem:[%s499 + $0x68] sm:$0xf] %vm1488, %v6030
      %6063 = vst.msk [vmem:[%s499 + $0x6c] sm:$0xf] %vm1488, %v6031
      %6064 = vst.msk [vmem:[%s499 + $0x70] sm:$0xf] %vm1488, %v6032
      %6065 = vst.msk [vmem:[%s499 + $0x74] sm:$0xf] %vm1488, %v6033
      %6066 = vst.msk [vmem:[%s499 + $0x78] sm:$0xf] %vm1488, %v6034
      %6067 = vst.msk [vmem:[%s499 + $0x7c] sm:$0xf] %vm1488, %v6035
      %s6068 = smul.u32 16, %s25
      %p6069 = scmp.lt.s32.totalorder %s24, 1
      %s6070 = scalar_select %p6069, %s24, 1
      %p6071 = scmp.lt.s32.totalorder %s6068, 15
      %s6072 = scalar_select %p6071, %s6068, 15
      %s6073 = smul.addr %s6072, 2
      %s6074 = smul.addr %s6070, 32
      %s6075 = sadd.s32 %s6073, %s6074
      %s6076 = smul.addr %s6075, 4
      %s6077 = scalar_lea.vmem %s9, %s6076
      // Predicated region
      $region61: #{csp_layer_forward.4} parent=55 // pred_check
        %p6078 = pneg %p278
      $region62: #{csp_layer_forward.4} parent=55 // pred_check_branch
        %6080 = sbr.rel (%p6078) target = $region64
      $region63: #{csp_layer_forward.4} parent=55 // pred_region
        %s6081 = smul.u32 16, %s25
      $region64: #{csp_layer_forward.4} parent=55 // pred_fallthru
        _
    $region56: #{csp_layer_forward.4} parent=5 // pred_fallthru
      _
    %p6082 = scmp.le.s32.totalorder 2, %s15
    // Predicated region
    $region65: #{csp_layer_forward.4} parent=5 // pred_check
      %p6083 = pneg %p6082
    $region66: #{csp_layer_forward.4} parent=5 // pred_check_branch
      %6085 = sbr.rel (%p6083) target = $region68
    $region67: #{csp_layer_forward.4} parent=5 // pred_region
      %s6086 = ssub.s32 %s15, 2
      // Predicated region
      $region69: #{csp_layer_forward.4} parent=67 // pred_check
        %p6087 = pneg %p284
      $region70: #{csp_layer_forward.4} parent=67 // pred_check_branch
        %6089 = sbr.rel (%p6087) target = $region72
      $region71: #{csp_layer_forward.4} parent=67 // pred_region
        %s6090 = smul.u32 16, %s27
        %p6091 = scmp.lt.s32.totalorder %s26, 1
        %s6092 = scalar_select %p6091, %s26, 1
        %p6093 = scmp.lt.s32.totalorder %s6090, 15
        %s6094 = scalar_select %p6093, %s6090, 15
        %s6095 = smul.addr %s6094, 2
        %s6096 = smul.addr %s6092, 32
        %s6097 = sadd.s32 %s6095, %s6096
        %s6098 = smul.addr %s6097, 4
        %s6099 = scalar_lea.vmem %s9, %s6098
      $region72: #{csp_layer_forward.4} parent=67 // pred_fallthru
        _
    $region68: #{csp_layer_forward.4} parent=5 // pred_fallthru
      _
  $region6: #{csp_layer_forward.4} parent=0 // loop_footer
    %s19 = sadd.s32 1, %s15
  $region7: #{csp_layer_forward.4} parent=0 // loop_footer_branch
    %14 = sbr.rel target = $region3
  $region8: #{csp_layer_forward.4} parent=0 // loop_exit
    _

</llo_original>
